<compile_context>
chip_gen: v7x
topology: tpu7x:2x2x1
jax: 0.10.0
libtpu: 0.0.40
codegen_flags: <defaults>
</compile_context>

<pallas_src>
import functools

import jax
import jax.numpy as jnp
from jax import lax
from jax.experimental import pallas as pl
from jax.experimental.pallas import tpu as pltpu

NEG_SLOPE = 0.01  # nn.LeakyReLU default


def _leaky(x):
    return jnp.where(x >= 0, x, NEG_SLOPE * x)


# ----------------------------------------------------------------------------
# Pallas kernels
# ----------------------------------------------------------------------------
def _conv_matmul_kernel(apply_act, w_ref, a_ref, b_ref, o_ref):
    """o[Cout_pad, TM] = w[Cout_pad, K] @ a[K, TM] + b; optional LeakyReLU.

    w/a are bf16, accumulation + epilogue are f32, store is bf16 (lane-dense).
    """
    acc = jnp.dot(w_ref[...], a_ref[...], preferred_element_type=jnp.float32)
    acc = acc + b_ref[...]
    if apply_act:
        acc = _leaky(acc)
    o_ref[...] = acc.astype(o_ref.dtype)


def _pool_relu_kernel(ee_ref, eo_ref, oe_ref, oo_ref, o_ref):
    """2x2 MaxPool + LeakyReLU over four parity slabs; lane-dense store."""
    ee = ee_ref[...].astype(jnp.float32)
    eo = eo_ref[...].astype(jnp.float32)
    oe = oe_ref[...].astype(jnp.float32)
    oo = oo_ref[...].astype(jnp.float32)
    m = jnp.maximum(jnp.maximum(ee, eo), jnp.maximum(oe, oo))
    o_ref[...] = _leaky(m).astype(o_ref.dtype)


def _tail_kernel(ee_ref, eo_ref, oe_ref, oo_ref, w3_ref, b3_ref,
                 w4_ref, b4_ref, s_ref, t_ref, w5_ref, b5_ref, o_ref):
    """Fused pool3 -> LeakyReLU -> conv3(full window) -> LeakyReLU -> fc1
    -> LeakyReLU -> BN(eval) -> LeakyReLU -> fc2, all in VMEM."""
    ee = ee_ref[...].astype(jnp.float32)
    eo = eo_ref[...].astype(jnp.float32)
    oe = oe_ref[...].astype(jnp.float32)
    oo = oo_ref[...].astype(jnp.float32)
    x = _leaky(jnp.maximum(jnp.maximum(ee, eo), jnp.maximum(oe, oo)))  # pool3+relu
    h = jnp.dot(x, w3_ref[...], preferred_element_type=jnp.float32)
    h = _leaky(h + b3_ref[...])                       # conv3 + LeakyReLU
    h = jnp.dot(h, w4_ref[...], preferred_element_type=jnp.float32)
    h = _leaky(h + b4_ref[...])                       # fc1 + LeakyReLU
    h = _leaky(h * s_ref[...] + t_ref[...])           # BN (eval, folded) + LeakyReLU
    o = jnp.dot(h, w5_ref[...], preferred_element_type=jnp.float32)
    o_ref[...] = (o + b5_ref[...]).astype(o_ref.dtype)


# ----------------------------------------------------------------------------
# Pallas wrappers
# ----------------------------------------------------------------------------
def conv_matmul(w, a_t, b, *, relu=False, tm_cap=2048):
    """w:(Cout,K) @ a_t:(K,M) + b:(Cout,) -> (Cout_pad, M) bf16, tiled over M."""
    cout, k = w.shape
    k2, m = a_t.shape
    assert k == k2
    cout_pad = ((cout + 7) // 8) * 8                 # sublane-dense output rows
    if cout_pad != cout:
        w = jnp.pad(w, ((0, cout_pad - cout), (0, 0)))
        b = jnp.pad(b, ((0, cout_pad - cout),))
    # Big lane tiles (amortize ~0.35us/step), but >=2 grid steps when M allows
    # so both v7x TensorCores get work.
    tm = min(tm_cap, max(128, pl.cdiv(m, 256) * 128))
    grid = (pl.cdiv(m, tm),)                          # uneven last block: no pad copy
    return pl.pallas_call(
        functools.partial(_conv_matmul_kernel, relu),
        out_shape=jax.ShapeDtypeStruct((cout_pad, m), jnp.bfloat16),
        grid=grid,
        in_specs=[
            pl.BlockSpec((cout_pad, k), lambda i: (0, 0)),
            pl.BlockSpec((k, tm), lambda i: (0, i)),
            pl.BlockSpec((cout_pad, 1), lambda i: (0, 0)),
        ],
        out_specs=pl.BlockSpec((cout_pad, tm), lambda i: (0, i)),
        compiler_params=pltpu.CompilerParams(
            dimension_semantics=("parallel",)),
    )(w.astype(jnp.bfloat16), a_t.astype(jnp.bfloat16),
      b.reshape(cout_pad, 1).astype(jnp.float32))


def conv2d_cm(x, w, b, *, stride=1, padding=0, input_layout="CNHW"):
    """PyTorch-semantics Conv2d. Output (Cout_pad, N, OH, OW) bf16."""
    cout, cin, kh, kw = w.shape
    patches = lax.conv_general_dilated_patches(
        x.astype(jnp.bfloat16), (kh, kw), (stride, stride),
        ((padding, padding), (padding, padding)),
        dimension_numbers=(input_layout, "OIHW", "CNHW"))
    k, n, oh, ow = patches.shape                      # (Cin*KH*KW, N, OH, OW)
    a_t = patches.reshape(k, n * oh * ow)
    wm = w.reshape(cout, cin * kh * kw)               # K ordered (cin, kh, kw)
    out = conv_matmul(wm, a_t, b, relu=relu_false())  # (Cout_pad, N*OH*OW)
    return out.reshape(out.shape[0], n, oh, ow)


def relu_false():
    return False


def maxpool2_leakyrelu(x, c_real):
    """MaxPool2d(2) + LeakyReLU on a (C_pad, N, H, W) activation.

    Four parity slabs of shape (c_real*N, PH*PW) -> lane-dense elementwise
    kernel; padded channels are dropped for free in the slab copies.
    """
    _, n, h, w = x.shape
    ph, pw = h // 2, w // 2

    def slab(i, j):
        return x[:c_real, :, i:2 * ph:2, j:2 * pw:2].reshape(c_real * n, ph * pw)

    ee, eo, oe, oo = slab(0, 0), slab(0, 1), slab(1, 0), slab(1, 1)
    rows, lanes = c_real * n, ph * pw
    tr = rows if rows <= 512 else 512                 # VMEM-safe even on v7x
    spec = pl.BlockSpec((tr, lanes), lambda i: (i, 0))
    out = pl.pallas_call(
        _pool_relu_kernel,
        out_shape=jax.ShapeDtypeStruct((rows, lanes), jnp.bfloat16),
        grid=(pl.cdiv(rows, tr),),
        in_specs=[spec] * 4,
        out_specs=spec,
        compiler_params=pltpu.CompilerParams(
            dimension_semantics=("parallel",)),
    )(ee, eo, oe, oo)
    return out.reshape(c_real, n, ph, pw)


def fused_tail(y2, p):
    """pool3 + LeakyReLU + conv3 + LeakyReLU + fc1 + LeakyReLU + BN(eval)
    + LeakyReLU + fc2, in one pallas_call.  y2: (16, N, 10, 10) bf16."""
    c, n, h, w = y2.shape
    ph, pw = h // 2, w // 2
    feat = c * ph * pw                                # 400, ordered (c, ph, pw)

    def slab(i, j):
        s = y2[:, :, i:2 * ph:2, j:2 * pw:2]          # (C, N, PH, PW)
        return s.transpose(1, 0, 2, 3).reshape(n, feat)

    ee, eo, oe, oo = slab(0, 0), slab(0, 1), slab(1, 0), slab(1, 1)
    f = p["fw1"].shape[1]
    num = p["fw2"].shape[1]
    w3m = p["w3"].reshape(p["w3"].shape[0], -1).T     # (400, 120), K=(cin,kh,kw)

    tr = n if n <= 256 else 256
    row_spec = pl.BlockSpec((tr, feat), lambda i: (i, 0))

    def bcast(shape):
        return pl.BlockSpec(shape, lambda i: (0, 0))

    return pl.pallas_call(
        _tail_kernel,
        out_shape=jax.ShapeDtypeStruct((n, num), jnp.float32),
        grid=(pl.cdiv(n, tr),),
        in_specs=[row_spec] * 4 + [
            bcast(w3m.shape), bcast((1, w3m.shape[1])),
            bcast(p["fw1"].shape), bcast((1, f)),
            bcast((1, f)), bcast((1, f)),
            bcast(p["fw2"].shape), bcast((1, num)),
        ],
        out_specs=pl.BlockSpec((tr, num), lambda i: (i, 0)),
        compiler_params=pltpu.CompilerParams(
            dimension_semantics=("parallel",)),
    )(ee, eo, oe, oo,
      w3m, p["b3"].reshape(1, -1),
      p["fw1"], p["fb1"].reshape(1, -1),
      p["bn_scale"].reshape(1, -1), p["bn_shift"].reshape(1, -1),
      p["fw2"], p["fb2"].reshape(1, -1))


# ----------------------------------------------------------------------------
# Parameters (deterministic, PyTorch-default-style uniform init)
# ----------------------------------------------------------------------------
def _uniform(key, shape, fan_in):
    bound = 1.0 / jnp.sqrt(jnp.float32(fan_in))
    return jax.random.uniform(key, shape, jnp.float32, -bound, bound)


def init_params(key, num=2, f=60):
    keys = jax.random.split(key, 12)
    p = {}
    # Conv2d(3, 3, k=12, pad=2, stride=2)
    p["w0"] = _uniform(keys[0], (3, 3, 12, 12), 3 * 12 * 12)
    p["b0"] = _uniform(keys[1], (3,), 3 * 12 * 12)
    # Conv2d(3, 6, k=5, pad=2)
    p["w1"] = _uniform(keys[2], (6, 3, 5, 5), 3 * 5 * 5)
    p["b1"] = _uniform(keys[3], (6,), 3 * 5 * 5)
    # Conv2d(6, 16, k=5)
    p["w2"] = _uniform(keys[4], (16, 6, 5, 5), 6 * 5 * 5)
    p["b2"] = _uniform(keys[5], (16,), 6 * 5 * 5)
    # Conv2d(16, 120, k=5)
    p["w3"] = _uniform(keys[6], (120, 16, 5, 5), 16 * 5 * 5)
    p["b3"] = _uniform(keys[7], (120,), 16 * 5 * 5)
    # Linear(120, f)
    p["fw1"] = _uniform(keys[8], (120, f), 120)
    p["fb1"] = _uniform(keys[9], (f,), 120)
    # Linear(f, num)
    p["fw2"] = _uniform(keys[10], (f, num), f)
    p["fb2"] = _uniform(keys[11], (num,), f)
    # BatchNorm1d(f): fresh-module defaults (weight=1, bias=0, mean=0, var=1)
    # TODO(synk): BatchNorm1d implemented in eval mode (running stats), not
    # train-mode batch statistics.
    eps = 1e-5
    gamma = jnp.ones((f,), jnp.float32)
    beta = jnp.zeros((f,), jnp.float32)
    rmean = jnp.zeros((f,), jnp.float32)
    rvar = jnp.ones((f,), jnp.float32)
    p["bn_scale"] = gamma / jnp.sqrt(rvar + eps)
    p["bn_shift"] = beta - rmean * p["bn_scale"]
    return p


# ----------------------------------------------------------------------------
# Full forward pass (Pallas path)
# ----------------------------------------------------------------------------
def cnn_forward(x, params):
    n = x.shape[0]
    if x.shape[-1] != 120 or x.shape[-2] != 120:
        # glue: F.interpolate(..., mode='bilinear', align_corners=False)
        x = jax.image.resize(x, (n, x.shape[1], 120, 120), method="bilinear",
                             antialias=False)
    y = conv2d_cm(x, params["w0"], params["b0"], stride=2, padding=2,
                  input_layout="NCHW")                  # (8, N, 57, 57), 3 real
    y = maxpool2_leakyrelu(y, 3)                        # (3, N, 28, 28)
    y = conv2d_cm(y, params["w1"], params["b1"], padding=2)  # (8, N, 28, 28), 6 real
    y = maxpool2_leakyrelu(y, 6)                        # (6, N, 14, 14)
    y = conv2d_cm(y, params["w2"], params["b2"])        # (16, N, 10, 10)
    return fused_tail(y, params)                        # (N, num)


# ----------------------------------------------------------------------------
# Pure-JAX f32 reference (guards the im2col K-ordering and pool refactor)
# ----------------------------------------------------------------------------
def cnn_forward_ref(x, p):
    n = x.shape[0]
    if x.shape[-1] != 120 or x.shape[-2] != 120:
        x = jax.image.resize(x, (n, x.shape[1], 120, 120), method="bilinear",
                             antialias=False)

    def conv(h, w, b, stride=1, pad=0):
        o = lax.conv_general_dilated(
            h, w, (stride, stride), ((pad, pad), (pad, pad)),
            dimension_numbers=("NCHW", "OIHW", "NCHW"))
        return o + b.reshape(1, -1, 1, 1)

    def pool(h):
        nb, cb, hh, ww = h.shape
        hh2, ww2 = (hh // 2) * 2, (ww // 2) * 2
        h = h[:, :, :hh2, :ww2]
        return h.reshape(nb, cb, hh2 // 2, 2, ww2 // 2, 2).max(axis=(3, 5))

    y = _leaky(pool(conv(x, p["w0"], p["b0"], 2, 2)))
    y = _leaky(pool(conv(y, p["w1"], p["b1"], 1, 2)))
    y = _leaky(pool(conv(y, p["w2"], p["b2"], 1, 0)))
    y = _leaky(conv(y, p["w3"], p["b3"]))
    y = y.reshape(n, -1)
    y = _leaky(y @ p["fw1"] + p["fb1"])
    y = _leaky(y * p["bn_scale"] + p["bn_shift"])
    return y @ p["fw2"] + p["fb2"]


if __name__ == "__main__":
    key = jax.random.PRNGKey(0)
    kx, kp = jax.random.split(key)
    x = jax.random.normal(kx, (2, 3, 32, 32), dtype=jnp.float32)  # resized to 120x120
    params = init_params(kp, num=2, f=60)

    out = jax.block_until_ready(jax.jit(cnn_forward)(x, params))
    assert out.shape == (2, 2), out.shape
    assert bool(jnp.all(jnp.isfinite(out)))

    ref = jax.block_until_ready(jax.jit(cnn_forward_ref)(x, params))
    max_err = float(jnp.max(jnp.abs(out - ref)))
    assert max_err < 5e-2, f"max |kernel - ref| = {max_err}"

    print("KERNEL_OK")
</pallas_src>

<mosaic_0001>
module attributes {stable_mosaic.version = 11 : i64} {
  func.func @_conv_matmul_kernel(%arg0: i32, %arg1: memref<8x432xbf16, #tpu.memory_space<vmem>>, %arg2: memref<432x2048xbf16, #tpu.memory_space<vmem>>, %arg3: memref<8x1xf32, #tpu.memory_space<vmem>>, %arg4: memref<8x2048xbf16, #tpu.memory_space<vmem>>) attributes {dimension_semantics = [#tpu.dimension_semantics<parallel>], iteration_bounds = array<i64: 4>, scalar_prefetch = 0 : i64, scratch_operands = 0 : i64, tpu.core_type = #tpu.core_type<tc>, window_params = [{pipeline_mode = #tpu.pipeline_mode<synchronous>, transform_indices = @transform_0, window_bounds = array<i64: 8, 432>}, {transform_indices = @transform_1, window_bounds = array<i64: 432, 2048>}, {pipeline_mode = #tpu.pipeline_mode<synchronous>, transform_indices = @transform_2, window_bounds = array<i64: 8, 1>}, {transform_indices = @transform_3, window_bounds = array<i64: 8, 2048>}]} {
    %c0 = arith.constant 0 : index
    %c0_0 = arith.constant 0 : index
    %0 = vector.load %arg1[%c0, %c0_0] : memref<8x432xbf16, #tpu.memory_space<vmem>>, vector<8x432xbf16>
    %c0_1 = arith.constant 0 : index
    %c0_2 = arith.constant 0 : index
    %1 = vector.load %arg2[%c0_1, %c0_2] : memref<432x2048xbf16, #tpu.memory_space<vmem>>, vector<432x2048xbf16>
    %cst = arith.constant dense<0.000000e+00> : vector<8x2048xf32>
    %2 = tpu.matmul %0, %1, %cst {dimension_numbers = #tpu.dot_dimension_numbers<[1], [0], [0], [1], [0, 0, 1, 1], [], []>} : vector<8x432xbf16>, vector<432x2048xbf16>, vector<8x2048xf32> -> vector<8x2048xf32>
    %c0_3 = arith.constant 0 : index
    %c0_4 = arith.constant 0 : index
    %3 = vector.load %arg3[%c0_3, %c0_4] : memref<8x1xf32, #tpu.memory_space<vmem>>, vector<8x1xf32>
    %4 = vector.broadcast %3 : vector<8x1xf32> to vector<8x2048xf32>
    %5 = arith.addf %2, %4 : vector<8x2048xf32>
    %6 = arith.truncf %5 : vector<8x2048xf32> to vector<8x2048xbf16>
    %c0_5 = arith.constant 0 : index
    %c0_6 = arith.constant 0 : index
    %7 = vector.load %arg4[%c0_5, %c0_6] : memref<8x2048xbf16, #tpu.memory_space<vmem>>, vector<8x2048xbf16>
    tpu.vector_store %arg4[%c0_5, %c0_6], %6 {strides = array<i32>} : memref<8x2048xbf16, #tpu.memory_space<vmem>>, vector<8x2048xbf16>,
    return
  }
  func.func @transform_0(%arg0: i32) -> (i32, i32) {
    %c0_i32 = arith.constant 0 : i32
    %c0_i32_0 = arith.constant 0 : i32
    %c0_i32_1 = arith.constant 0 : i32
    return %c0_i32, %c0_i32_0 : i32, i32
  }
  func.func @transform_1(%arg0: i32) -> (i32, i32) {
    %c0_i32 = arith.constant 0 : i32
    %c0_i32_0 = arith.constant 0 : i32
    return %c0_i32, %arg0 : i32, i32
  }
  func.func @transform_2(%arg0: i32) -> (i32, i32) {
    %c0_i32 = arith.constant 0 : i32
    %c0_i32_0 = arith.constant 0 : i32
    %c0_i32_1 = arith.constant 0 : i32
    return %c0_i32, %c0_i32_0 : i32, i32
  }
  func.func @transform_3(%arg0: i32) -> (i32, i32) {
    %c0_i32 = arith.constant 0 : i32
    %c0_i32_0 = arith.constant 0 : i32
    return %c0_i32, %arg0 : i32, i32
  }
}

module attributes {stable_mosaic.version = 11 : i64} {
  func.func @_pool_relu_kernel(%arg0: i32, %arg1: memref<6x784xbf16, #tpu.memory_space<vmem>>, %arg2: memref<6x784xbf16, #tpu.memory_space<vmem>>, %arg3: memref<6x784xbf16, #tpu.memory_space<vmem>>, %arg4: memref<6x784xbf16, #tpu.memory_space<vmem>>, %arg5: memref<6x784xbf16, #tpu.memory_space<vmem>>) attributes {dimension_semantics = [#tpu.dimension_semantics<parallel>], iteration_bounds = array<i64: 1>, scalar_prefetch = 0 : i64, scratch_operands = 0 : i64, tpu.core_type = #tpu.core_type<tc>, window_params = [{transform_indices = @transform_0, window_bounds = array<i64: 6, 784>}, {transform_indices = @transform_1, window_bounds = array<i64: 6, 784>}, {transform_indices = @transform_2, window_bounds = array<i64: 6, 784>}, {transform_indices = @transform_3, window_bounds = array<i64: 6, 784>}, {transform_indices = @transform_4, window_bounds = array<i64: 6, 784>}]} {
    %c0 = arith.constant 0 : index
    %c0_0 = arith.constant 0 : index
    %0 = vector.load %arg1[%c0, %c0_0] : memref<6x784xbf16, #tpu.memory_space<vmem>>, vector<6x784xbf16>
    %1 = arith.extf %0 : vector<6x784xbf16> to vector<6x784xf32>
    %c0_1 = arith.constant 0 : index
    %c0_2 = arith.constant 0 : index
    %2 = vector.load %arg2[%c0_1, %c0_2] : memref<6x784xbf16, #tpu.memory_space<vmem>>, vector<6x784xbf16>
    %3 = arith.extf %2 : vector<6x784xbf16> to vector<6x784xf32>
    %c0_3 = arith.constant 0 : index
    %c0_4 = arith.constant 0 : index
    %4 = vector.load %arg3[%c0_3, %c0_4] : memref<6x784xbf16, #tpu.memory_space<vmem>>, vector<6x784xbf16>
    %5 = arith.extf %4 : vector<6x784xbf16> to vector<6x784xf32>
    %c0_5 = arith.constant 0 : index
    %c0_6 = arith.constant 0 : index
    %6 = vector.load %arg4[%c0_5, %c0_6] : memref<6x784xbf16, #tpu.memory_space<vmem>>, vector<6x784xbf16>
    %7 = arith.extf %6 : vector<6x784xbf16> to vector<6x784xf32>
    %8 = arith.maximumf %1, %3 : vector<6x784xf32>
    %9 = arith.maximumf %5, %7 : vector<6x784xf32>
    %10 = arith.maximumf %8, %9 : vector<6x784xf32>
    %cst = arith.constant 0.000000e+00 : f32
    %11 = vector.broadcast %cst : f32 to vector<6x784xf32>
    %12 = arith.cmpf oge, %10, %11 : vector<6x784xf32>
    %cst_7 = arith.constant 0.00999999977 : f32
    %13 = vector.broadcast %cst_7 : f32 to vector<6x784xf32>
    %14 = arith.mulf %13, %10 : vector<6x784xf32>
    %15 = arith.select %12, %10, %14 : vector<6x784xi1>, vector<6x784xf32>
    %16 = arith.truncf %15 : vector<6x784xf32> to vector<6x784xbf16>
    %c0_8 = arith.constant 0 : index
    %c0_9 = arith.constant 0 : index
    %17 = vector.load %arg5[%c0_8, %c0_9] : memref<6x784xbf16, #tpu.memory_space<vmem>>, vector<6x784xbf16>
    tpu.vector_store %arg5[%c0_8, %c0_9], %16 {strides = array<i32>} : memref<6x784xbf16, #tpu.memory_space<vmem>>, vector<6x784xbf16>,
    return
  }
  func.func @transform_0(%arg0: i32) -> (i32, i32) {
    %c0_i32 = arith.constant 0 : i32
    %c0_i32_0 = arith.constant 0 : i32
    return %arg0, %c0_i32 : i32, i32
  }
  func.func @transform_1(%arg0: i32) -> (i32, i32) {
    %c0_i32 = arith.constant 0 : i32
    %c0_i32_0 = arith.constant 0 : i32
    return %arg0, %c0_i32 : i32, i32
  }
  func.func @transform_2(%arg0: i32) -> (i32, i32) {
    %c0_i32 = arith.constant 0 : i32
    %c0_i32_0 = arith.constant 0 : i32
    return %arg0, %c0_i32 : i32, i32
  }
  func.func @transform_3(%arg0: i32) -> (i32, i32) {
    %c0_i32 = arith.constant 0 : i32
    %c0_i32_0 = arith.constant 0 : i32
    return %arg0, %c0_i32 : i32, i32
  }
  func.func @transform_4(%arg0: i32) -> (i32, i32) {
    %c0_i32 = arith.constant 0 : i32
    %c0_i32_0 = arith.constant 0 : i32
    return %arg0, %c0_i32 : i32, i32
  }
}

module attributes {stable_mosaic.version = 11 : i64} {
  func.func @_conv_matmul_kernel(%arg0: i32, %arg1: memref<8x75xbf16, #tpu.memory_space<vmem>>, %arg2: memref<75x896xbf16, #tpu.memory_space<vmem>>, %arg3: memref<8x1xf32, #tpu.memory_space<vmem>>, %arg4: memref<8x896xbf16, #tpu.memory_space<vmem>>) attributes {dimension_semantics = [#tpu.dimension_semantics<parallel>], iteration_bounds = array<i64: 2>, scalar_prefetch = 0 : i64, scratch_operands = 0 : i64, tpu.core_type = #tpu.core_type<tc>, window_params = [{pipeline_mode = #tpu.pipeline_mode<synchronous>, transform_indices = @transform_0, window_bounds = array<i64: 8, 75>}, {transform_indices = @transform_1, window_bounds = array<i64: 75, 896>}, {pipeline_mode = #tpu.pipeline_mode<synchronous>, transform_indices = @transform_2, window_bounds = array<i64: 8, 1>}, {transform_indices = @transform_3, window_bounds = array<i64: 8, 896>}]} {
    %c0 = arith.constant 0 : index
    %c0_0 = arith.constant 0 : index
    %0 = vector.load %arg1[%c0, %c0_0] : memref<8x75xbf16, #tpu.memory_space<vmem>>, vector<8x75xbf16>
    %c0_1 = arith.constant 0 : index
    %c0_2 = arith.constant 0 : index
    %1 = vector.load %arg2[%c0_1, %c0_2] : memref<75x896xbf16, #tpu.memory_space<vmem>>, vector<75x896xbf16>
    %cst = arith.constant dense<0.000000e+00> : vector<8x896xf32>
    %2 = tpu.matmul %0, %1, %cst {dimension_numbers = #tpu.dot_dimension_numbers<[1], [0], [0], [1], [0, 0, 1, 1], [], []>} : vector<8x75xbf16>, vector<75x896xbf16>, vector<8x896xf32> -> vector<8x896xf32>
    %c0_3 = arith.constant 0 : index
    %c0_4 = arith.constant 0 : index
    %3 = vector.load %arg3[%c0_3, %c0_4] : memref<8x1xf32, #tpu.memory_space<vmem>>, vector<8x1xf32>
    %4 = vector.broadcast %3 : vector<8x1xf32> to vector<8x896xf32>
    %5 = arith.addf %2, %4 : vector<8x896xf32>
    %6 = arith.truncf %5 : vector<8x896xf32> to vector<8x896xbf16>
    %c0_5 = arith.constant 0 : index
    %c0_6 = arith.constant 0 : index
    %7 = vector.load %arg4[%c0_5, %c0_6] : memref<8x896xbf16, #tpu.memory_space<vmem>>, vector<8x896xbf16>
    tpu.vector_store %arg4[%c0_5, %c0_6], %6 {strides = array<i32>} : memref<8x896xbf16, #tpu.memory_space<vmem>>, vector<8x896xbf16>,
    return
  }
  func.func @transform_0(%arg0: i32) -> (i32, i32) {
    %c0_i32 = arith.constant 0 : i32
    %c0_i32_0 = arith.constant 0 : i32
    %c0_i32_1 = arith.constant 0 : i32
    return %c0_i32, %c0_i32_0 : i32, i32
  }
  func.func @transform_1(%arg0: i32) -> (i32, i32) {
    %c0_i32 = arith.constant 0 : i32
    %c0_i32_0 = arith.constant 0 : i32
    return %c0_i32, %arg0 : i32, i32
  }
  func.func @transform_2(%arg0: i32) -> (i32, i32) {
    %c0_i32 = arith.constant 0 : i32
    %c0_i32_0 = arith.constant 0 : i32
    %c0_i32_1 = arith.constant 0 : i32
    return %c0_i32, %c0_i32_0 : i32, i32
  }
  func.func @transform_3(%arg0: i32) -> (i32, i32) {
    %c0_i32 = arith.constant 0 : i32
    %c0_i32_0 = arith.constant 0 : i32
    return %c0_i32, %arg0 : i32, i32
  }
}

module attributes {stable_mosaic.version = 11 : i64} {
  func.func @_pool_relu_kernel(%arg0: i32, %arg1: memref<12x196xbf16, #tpu.memory_space<vmem>>, %arg2: memref<12x196xbf16, #tpu.memory_space<vmem>>, %arg3: memref<12x196xbf16, #tpu.memory_space<vmem>>, %arg4: memref<12x196xbf16, #tpu.memory_space<vmem>>, %arg5: memref<12x196xbf16, #tpu.memory_space<vmem>>) attributes {dimension_semantics = [#tpu.dimension_semantics<parallel>], iteration_bounds = array<i64: 1>, scalar_prefetch = 0 : i64, scratch_operands = 0 : i64, tpu.core_type = #tpu.core_type<tc>, window_params = [{transform_indices = @transform_0, window_bounds = array<i64: 12, 196>}, {transform_indices = @transform_1, window_bounds = array<i64: 12, 196>}, {transform_indices = @transform_2, window_bounds = array<i64: 12, 196>}, {transform_indices = @transform_3, window_bounds = array<i64: 12, 196>}, {transform_indices = @transform_4, window_bounds = array<i64: 12, 196>}]} {
    %c0 = arith.constant 0 : index
    %c0_0 = arith.constant 0 : index
    %0 = vector.load %arg1[%c0, %c0_0] : memref<12x196xbf16, #tpu.memory_space<vmem>>, vector<12x196xbf16>
    %1 = arith.extf %0 : vector<12x196xbf16> to vector<12x196xf32>
    %c0_1 = arith.constant 0 : index
    %c0_2 = arith.constant 0 : index
    %2 = vector.load %arg2[%c0_1, %c0_2] : memref<12x196xbf16, #tpu.memory_space<vmem>>, vector<12x196xbf16>
    %3 = arith.extf %2 : vector<12x196xbf16> to vector<12x196xf32>
    %c0_3 = arith.constant 0 : index
    %c0_4 = arith.constant 0 : index
    %4 = vector.load %arg3[%c0_3, %c0_4] : memref<12x196xbf16, #tpu.memory_space<vmem>>, vector<12x196xbf16>
    %5 = arith.extf %4 : vector<12x196xbf16> to vector<12x196xf32>
    %c0_5 = arith.constant 0 : index
    %c0_6 = arith.constant 0 : index
    %6 = vector.load %arg4[%c0_5, %c0_6] : memref<12x196xbf16, #tpu.memory_space<vmem>>, vector<12x196xbf16>
    %7 = arith.extf %6 : vector<12x196xbf16> to vector<12x196xf32>
    %8 = arith.maximumf %1, %3 : vector<12x196xf32>
    %9 = arith.maximumf %5, %7 : vector<12x196xf32>
    %10 = arith.maximumf %8, %9 : vector<12x196xf32>
    %cst = arith.constant 0.000000e+00 : f32
    %11 = vector.broadcast %cst : f32 to vector<12x196xf32>
    %12 = arith.cmpf oge, %10, %11 : vector<12x196xf32>
    %cst_7 = arith.constant 0.00999999977 : f32
    %13 = vector.broadcast %cst_7 : f32 to vector<12x196xf32>
    %14 = arith.mulf %13, %10 : vector<12x196xf32>
    %15 = arith.select %12, %10, %14 : vector<12x196xi1>, vector<12x196xf32>
    %16 = arith.truncf %15 : vector<12x196xf32> to vector<12x196xbf16>
    %c0_8 = arith.constant 0 : index
    %c0_9 = arith.constant 0 : index
    %17 = vector.load %arg5[%c0_8, %c0_9] : memref<12x196xbf16, #tpu.memory_space<vmem>>, vector<12x196xbf16>
    tpu.vector_store %arg5[%c0_8, %c0_9], %16 {strides = array<i32>} : memref<12x196xbf16, #tpu.memory_space<vmem>>, vector<12x196xbf16>,
    return
  }
  func.func @transform_0(%arg0: i32) -> (i32, i32) {
    %c0_i32 = arith.constant 0 : i32
    %c0_i32_0 = arith.constant 0 : i32
    return %arg0, %c0_i32 : i32, i32
  }
  func.func @transform_1(%arg0: i32) -> (i32, i32) {
    %c0_i32 = arith.constant 0 : i32
    %c0_i32_0 = arith.constant 0 : i32
    return %arg0, %c0_i32 : i32, i32
  }
  func.func @transform_2(%arg0: i32) -> (i32, i32) {
    %c0_i32 = arith.constant 0 : i32
    %c0_i32_0 = arith.constant 0 : i32
    return %arg0, %c0_i32 : i32, i32
  }
  func.func @transform_3(%arg0: i32) -> (i32, i32) {
    %c0_i32 = arith.constant 0 : i32
    %c0_i32_0 = arith.constant 0 : i32
    return %arg0, %c0_i32 : i32, i32
  }
  func.func @transform_4(%arg0: i32) -> (i32, i32) {
    %c0_i32 = arith.constant 0 : i32
    %c0_i32_0 = arith.constant 0 : i32
    return %arg0, %c0_i32 : i32, i32
  }
}

module attributes {stable_mosaic.version = 11 : i64} {
  func.func @_conv_matmul_kernel(%arg0: i32, %arg1: memref<16x150xbf16, #tpu.memory_space<vmem>>, %arg2: memref<150x128xbf16, #tpu.memory_space<vmem>>, %arg3: memref<16x1xf32, #tpu.memory_space<vmem>>, %arg4: memref<16x128xbf16, #tpu.memory_space<vmem>>) attributes {dimension_semantics = [#tpu.dimension_semantics<parallel>], iteration_bounds = array<i64: 2>, scalar_prefetch = 0 : i64, scratch_operands = 0 : i64, tpu.core_type = #tpu.core_type<tc>, window_params = [{pipeline_mode = #tpu.pipeline_mode<synchronous>, transform_indices = @transform_0, window_bounds = array<i64: 16, 150>}, {transform_indices = @transform_1, window_bounds = array<i64: 150, 128>}, {pipeline_mode = #tpu.pipeline_mode<synchronous>, transform_indices = @transform_2, window_bounds = array<i64: 16, 1>}, {transform_indices = @transform_3, window_bounds = array<i64: 16, 128>}]} {
    %c0 = arith.constant 0 : index
    %c0_0 = arith.constant 0 : index
    %0 = vector.load %arg1[%c0, %c0_0] : memref<16x150xbf16, #tpu.memory_space<vmem>>, vector<16x150xbf16>
    %c0_1 = arith.constant 0 : index
    %c0_2 = arith.constant 0 : index
    %1 = vector.load %arg2[%c0_1, %c0_2] : memref<150x128xbf16, #tpu.memory_space<vmem>>, vector<150x128xbf16>
    %cst = arith.constant dense<0.000000e+00> : vector<16x128xf32>
    %2 = tpu.matmul %0, %1, %cst {dimension_numbers = #tpu.dot_dimension_numbers<[1], [0], [0], [1], [0, 0, 1, 1], [], []>} : vector<16x150xbf16>, vector<150x128xbf16>, vector<16x128xf32> -> vector<16x128xf32>
    %c0_3 = arith.constant 0 : index
    %c0_4 = arith.constant 0 : index
    %3 = vector.load %arg3[%c0_3, %c0_4] : memref<16x1xf32, #tpu.memory_space<vmem>>, vector<16x1xf32>
    %4 = vector.broadcast %3 : vector<16x1xf32> to vector<16x128xf32>
    %5 = arith.addf %2, %4 : vector<16x128xf32>
    %6 = arith.truncf %5 : vector<16x128xf32> to vector<16x128xbf16>
    %c0_5 = arith.constant 0 : index
    %c0_6 = arith.constant 0 : index
    %7 = vector.load %arg4[%c0_5, %c0_6] : memref<16x128xbf16, #tpu.memory_space<vmem>>, vector<16x128xbf16>
    tpu.vector_store %arg4[%c0_5, %c0_6], %6 {strides = array<i32>} : memref<16x128xbf16, #tpu.memory_space<vmem>>, vector<16x128xbf16>,
    return
  }
  func.func @transform_0(%arg0: i32) -> (i32, i32) {
    %c0_i32 = arith.constant 0 : i32
    %c0_i32_0 = arith.constant 0 : i32
    %c0_i32_1 = arith.constant 0 : i32
    return %c0_i32, %c0_i32_0 : i32, i32
  }
  func.func @transform_1(%arg0: i32) -> (i32, i32) {
    %c0_i32 = arith.constant 0 : i32
    %c0_i32_0 = arith.constant 0 : i32
    return %c0_i32, %arg0 : i32, i32
  }
  func.func @transform_2(%arg0: i32) -> (i32, i32) {
    %c0_i32 = arith.constant 0 : i32
    %c0_i32_0 = arith.constant 0 : i32
    %c0_i32_1 = arith.constant 0 : i32
    return %c0_i32, %c0_i32_0 : i32, i32
  }
  func.func @transform_3(%arg0: i32) -> (i32, i32) {
    %c0_i32 = arith.constant 0 : i32
    %c0_i32_0 = arith.constant 0 : i32
    return %c0_i32, %arg0 : i32, i32
  }
}

module attributes {stable_mosaic.version = 11 : i64} {
  func.func @_tail_kernel(%arg0: i32, %arg1: memref<2x400xbf16, #tpu.memory_space<vmem>>, %arg2: memref<2x400xbf16, #tpu.memory_space<vmem>>, %arg3: memref<2x400xbf16, #tpu.memory_space<vmem>>, %arg4: memref<2x400xbf16, #tpu.memory_space<vmem>>, %arg5: memref<400x120xf32, #tpu.memory_space<vmem>>, %arg6: memref<1x120xf32, #tpu.memory_space<vmem>>, %arg7: memref<120x60xf32, #tpu.memory_space<vmem>>, %arg8: memref<1x60xf32, #tpu.memory_space<vmem>>, %arg9: memref<1x60xf32, #tpu.memory_space<vmem>>, %arg10: memref<1x60xf32, #tpu.memory_space<vmem>>, %arg11: memref<60x2xf32, #tpu.memory_space<vmem>>, %arg12: memref<1x2xf32, #tpu.memory_space<vmem>>, %arg13: memref<2x2xf32, #tpu.memory_space<vmem>>) attributes {dimension_semantics = [#tpu.dimension_semantics<parallel>], iteration_bounds = array<i64: 1>, scalar_prefetch = 0 : i64, scratch_operands = 0 : i64, tpu.core_type = #tpu.core_type<tc>, window_params = [{transform_indices = @transform_0, window_bounds = array<i64: 2, 400>}, {transform_indices = @transform_1, window_bounds = array<i64: 2, 400>}, {transform_indices = @transform_2, window_bounds = array<i64: 2, 400>}, {transform_indices = @transform_3, window_bounds = array<i64: 2, 400>}, {pipeline_mode = #tpu.pipeline_mode<synchronous>, transform_indices = @transform_4, window_bounds = array<i64: 400, 120>}, {pipeline_mode = #tpu.pipeline_mode<synchronous>, transform_indices = @transform_5, window_bounds = array<i64: 1, 120>}, {pipeline_mode = #tpu.pipeline_mode<synchronous>, transform_indices = @transform_6, window_bounds = array<i64: 120, 60>}, {pipeline_mode = #tpu.pipeline_mode<synchronous>, transform_indices = @transform_7, window_bounds = array<i64: 1, 60>}, {pipeline_mode = #tpu.pipeline_mode<synchronous>, transform_indices = @transform_8, window_bounds = array<i64: 1, 60>}, {pipeline_mode = #tpu.pipeline_mode<synchronous>, transform_indices = @transform_9, window_bounds = array<i64: 1, 60>}, {pipeline_mode = #tpu.pipeline_mode<synchronous>, transform_indices = @transform_10, window_bounds = array<i64: 60, 2>}, {pipeline_mode = #tpu.pipeline_mode<synchronous>, transform_indices = @transform_11, window_bounds = array<i64: 1, 2>}, {transform_indices = @transform_12, window_bounds = array<i64: 2, 2>}]} {
    %c0 = arith.constant 0 : index
    %c0_0 = arith.constant 0 : index
    %0 = vector.load %arg1[%c0, %c0_0] : memref<2x400xbf16, #tpu.memory_space<vmem>>, vector<2x400xbf16>
    %1 = arith.extf %0 : vector<2x400xbf16> to vector<2x400xf32>
    %c0_1 = arith.constant 0 : index
    %c0_2 = arith.constant 0 : index
    %2 = vector.load %arg2[%c0_1, %c0_2] : memref<2x400xbf16, #tpu.memory_space<vmem>>, vector<2x400xbf16>
    %3 = arith.extf %2 : vector<2x400xbf16> to vector<2x400xf32>
    %c0_3 = arith.constant 0 : index
    %c0_4 = arith.constant 0 : index
    %4 = vector.load %arg3[%c0_3, %c0_4] : memref<2x400xbf16, #tpu.memory_space<vmem>>, vector<2x400xbf16>
    %5 = arith.extf %4 : vector<2x400xbf16> to vector<2x400xf32>
    %c0_5 = arith.constant 0 : index
    %c0_6 = arith.constant 0 : index
    %6 = vector.load %arg4[%c0_5, %c0_6] : memref<2x400xbf16, #tpu.memory_space<vmem>>, vector<2x400xbf16>
    %7 = arith.extf %6 : vector<2x400xbf16> to vector<2x400xf32>
    %8 = arith.maximumf %1, %3 : vector<2x400xf32>
    %9 = arith.maximumf %5, %7 : vector<2x400xf32>
    %10 = arith.maximumf %8, %9 : vector<2x400xf32>
    %cst = arith.constant 0.000000e+00 : f32
    %11 = vector.broadcast %cst : f32 to vector<2x400xf32>
    %12 = arith.cmpf oge, %10, %11 : vector<2x400xf32>
    %cst_7 = arith.constant 0.00999999977 : f32
    %13 = vector.broadcast %cst_7 : f32 to vector<2x400xf32>
    %14 = arith.mulf %13, %10 : vector<2x400xf32>
    %15 = arith.select %12, %10, %14 : vector<2x400xi1>, vector<2x400xf32>
    %c0_8 = arith.constant 0 : index
    %c0_9 = arith.constant 0 : index
    %16 = vector.load %arg5[%c0_8, %c0_9] : memref<400x120xf32, #tpu.memory_space<vmem>>, vector<400x120xf32>
    %cst_10 = arith.constant dense<0.000000e+00> : vector<2x120xf32>
    %17 = tpu.matmul %15, %16, %cst_10 {dimension_numbers = #tpu.dot_dimension_numbers<[1], [0], [0], [1], [0, 0, 1, 1], [], []>} : vector<2x400xf32>, vector<400x120xf32>, vector<2x120xf32> -> vector<2x120xf32>
    %c0_11 = arith.constant 0 : index
    %c0_12 = arith.constant 0 : index
    %18 = vector.load %arg6[%c0_11, %c0_12] : memref<1x120xf32, #tpu.memory_space<vmem>>, vector<1x120xf32>
    %19 = vector.broadcast %18 : vector<1x120xf32> to vector<2x120xf32>
    %20 = arith.addf %17, %19 : vector<2x120xf32>
    %cst_13 = arith.constant 0.000000e+00 : f32
    %21 = vector.broadcast %cst_13 : f32 to vector<2x120xf32>
    %22 = arith.cmpf oge, %20, %21 : vector<2x120xf32>
    %cst_14 = arith.constant 0.00999999977 : f32
    %23 = vector.broadcast %cst_14 : f32 to vector<2x120xf32>
    %24 = arith.mulf %23, %20 : vector<2x120xf32>
    %25 = arith.select %22, %20, %24 : vector<2x120xi1>, vector<2x120xf32>
    %c0_15 = arith.constant 0 : index
    %c0_16 = arith.constant 0 : index
    %26 = vector.load %arg7[%c0_15, %c0_16] : memref<120x60xf32, #tpu.memory_space<vmem>>, vector<120x60xf32>
    %cst_17 = arith.constant dense<0.000000e+00> : vector<2x60xf32>
    %27 = tpu.matmul %25, %26, %cst_17 {dimension_numbers = #tpu.dot_dimension_numbers<[1], [0], [0], [1], [0, 0, 1, 1], [], []>} : vector<2x120xf32>, vector<120x60xf32>, vector<2x60xf32> -> vector<2x60xf32>
    %c0_18 = arith.constant 0 : index
    %c0_19 = arith.constant 0 : index
    %28 = vector.load %arg8[%c0_18, %c0_19] : memref<1x60xf32, #tpu.memory_space<vmem>>, vector<1x60xf32>
    %29 = vector.broadcast %28 : vector<1x60xf32> to vector<2x60xf32>
    %30 = arith.addf %27, %29 : vector<2x60xf32>
    %cst_20 = arith.constant 0.000000e+00 : f32
    %31 = vector.broadcast %cst_20 : f32 to vector<2x60xf32>
    %32 = arith.cmpf oge, %30, %31 : vector<2x60xf32>
    %cst_21 = arith.constant 0.00999999977 : f32
    %33 = vector.broadcast %cst_21 : f32 to vector<2x60xf32>
    %34 = arith.mulf %33, %30 : vector<2x60xf32>
    %35 = arith.select %32, %30, %34 : vector<2x60xi1>, vector<2x60xf32>
    %c0_22 = arith.constant 0 : index
    %c0_23 = arith.constant 0 : index
    %36 = vector.load %arg9[%c0_22, %c0_23] : memref<1x60xf32, #tpu.memory_space<vmem>>, vector<1x60xf32>
    %37 = vector.broadcast %36 : vector<1x60xf32> to vector<2x60xf32>
    %38 = arith.mulf %35, %37 : vector<2x60xf32>
    %c0_24 = arith.constant 0 : index
    %c0_25 = arith.constant 0 : index
    %39 = vector.load %arg10[%c0_24, %c0_25] : memref<1x60xf32, #tpu.memory_space<vmem>>, vector<1x60xf32>
    %40 = vector.broadcast %39 : vector<1x60xf32> to vector<2x60xf32>
    %41 = arith.addf %38, %40 : vector<2x60xf32>
    %cst_26 = arith.constant 0.000000e+00 : f32
    %42 = vector.broadcast %cst_26 : f32 to vector<2x60xf32>
    %43 = arith.cmpf oge, %41, %42 : vector<2x60xf32>
    %cst_27 = arith.constant 0.00999999977 : f32
    %44 = vector.broadcast %cst_27 : f32 to vector<2x60xf32>
    %45 = arith.mulf %44, %41 : vector<2x60xf32>
    %46 = arith.select %43, %41, %45 : vector<2x60xi1>, vector<2x60xf32>
    %c0_28 = arith.constant 0 : index
    %c0_29 = arith.constant 0 : index
    %47 = vector.load %arg11[%c0_28, %c0_29] : memref<60x2xf32, #tpu.memory_space<vmem>>, vector<60x2xf32>
    %cst_30 = arith.constant dense<0.000000e+00> : vector<2x2xf32>
    %48 = tpu.matmul %46, %47, %cst_30 {dimension_numbers = #tpu.dot_dimension_numbers<[1], [0], [0], [1], [0, 0, 1, 1], [], []>} : vector<2x60xf32>, vector<60x2xf32>, vector<2x2xf32> -> vector<2x2xf32>
    %c0_31 = arith.constant 0 : index
    %c0_32 = arith.constant 0 : index
    %49 = vector.load %arg12[%c0_31, %c0_32] : memref<1x2xf32, #tpu.memory_space<vmem>>, vector<1x2xf32>
    %50 = vector.broadcast %49 : vector<1x2xf32> to vector<2x2xf32>
    %51 = arith.addf %48, %50 : vector<2x2xf32>
    %c0_33 = arith.constant 0 : index
    %c0_34 = arith.constant 0 : index
    %52 = vector.load %arg13[%c0_33, %c0_34] : memref<2x2xf32, #tpu.memory_space<vmem>>, vector<2x2xf32>
    tpu.vector_store %arg13[%c0_33, %c0_34], %51 {strides = array<i32>} : memref<2x2xf32, #tpu.memory_space<vmem>>, vector<2x2xf32>,
    return
  }
  func.func @transform_0(%arg0: i32) -> (i32, i32) {
    %c0_i32 = arith.constant 0 : i32
    %c0_i32_0 = arith.constant 0 : i32
    return %arg0, %c0_i32 : i32, i32
  }
  func.func @transform_1(%arg0: i32) -> (i32, i32) {
    %c0_i32 = arith.constant 0 : i32
    %c0_i32_0 = arith.constant 0 : i32
    return %arg0, %c0_i32 : i32, i32
  }
  func.func @transform_2(%arg0: i32) -> (i32, i32) {
    %c0_i32 = arith.constant 0 : i32
    %c0_i32_0 = arith.constant 0 : i32
    return %arg0, %c0_i32 : i32, i32
  }
  func.func @transform_3(%arg0: i32) -> (i32, i32) {
    %c0_i32 = arith.constant 0 : i32
    %c0_i32_0 = arith.constant 0 : i32
    return %arg0, %c0_i32 : i32, i32
  }
  func.func @transform_4(%arg0: i32) -> (i32, i32) {
    %c0_i32 = arith.constant 0 : i32
    %c0_i32_0 = arith.constant 0 : i32
    %c0_i32_1 = arith.constant 0 : i32
    return %c0_i32, %c0_i32_0 : i32, i32
  }
  func.func @transform_5(%arg0: i32) -> (i32, i32) {
    %c0_i32 = arith.constant 0 : i32
    %c0_i32_0 = arith.constant 0 : i32
    %c0_i32_1 = arith.constant 0 : i32
    return %c0_i32, %c0_i32_0 : i32, i32
  }
  func.func @transform_6(%arg0: i32) -> (i32, i32) {
    %c0_i32 = arith.constant 0 : i32
    %c0_i32_0 = arith.constant 0 : i32
    %c0_i32_1 = arith.constant 0 : i32
    return %c0_i32, %c0_i32_0 : i32, i32
  }
  func.func @transform_7(%arg0: i32) -> (i32, i32) {
    %c0_i32 = arith.constant 0 : i32
    %c0_i32_0 = arith.constant 0 : i32
    %c0_i32_1 = arith.constant 0 : i32
    return %c0_i32, %c0_i32_0 : i32, i32
  }
  func.func @transform_8(%arg0: i32) -> (i32, i32) {
    %c0_i32 = arith.constant 0 : i32
    %c0_i32_0 = arith.constant 0 : i32
    %c0_i32_1 = arith.constant 0 : i32
    return %c0_i32, %c0_i32_0 : i32, i32
  }
  func.func @transform_9(%arg0: i32) -> (i32, i32) {
    %c0_i32 = arith.constant 0 : i32
    %c0_i32_0 = arith.constant 0 : i32
    %c0_i32_1 = arith.constant 0 : i32
    return %c0_i32, %c0_i32_0 : i32, i32
  }
  func.func @transform_10(%arg0: i32) -> (i32, i32) {
    %c0_i32 = arith.constant 0 : i32
    %c0_i32_0 = arith.constant 0 : i32
    %c0_i32_1 = arith.constant 0 : i32
    return %c0_i32, %c0_i32_0 : i32, i32
  }
  func.func @transform_11(%arg0: i32) -> (i32, i32) {
    %c0_i32 = arith.constant 0 : i32
    %c0_i32_0 = arith.constant 0 : i32
    %c0_i32_1 = arith.constant 0 : i32
    return %c0_i32, %c0_i32_0 : i32, i32
  }
  func.func @transform_12(%arg0: i32) -> (i32, i32) {
    %c0_i32 = arith.constant 0 : i32
    %c0_i32_0 = arith.constant 0 : i32
    return %arg0, %c0_i32 : i32, i32
  }
}

</mosaic_0001>

<llo_original>
// kernel: cnn_forward.6
$region0: #{cnn_forward.6}
  #allocation0 [shape = 'u32[]', space=smem, size = 0x4, offset = 0x4, fixed_abs, tag = 'smem constant byte address 0x4 - core index']
  #allocation1 [shape = 'u32[144,128]{1,0:T(1,128)}', space=vmem, size = 0x12000, scoped, tag = 'internal scratch']
  %s0 = inlined_call_operand.vmem [shape: bf16[8,432], index: 0, kind: input, shape index: {}]
  %s1 = inlined_call_operand.vmem [shape: bf16[432,6498], index: 1, kind: input, shape index: {}]
  %s2 = inlined_call_operand.vmem [shape: f32[8,1], index: 2, kind: input, shape index: {}]
  %s3 = inlined_call_operand.vmem [shape: bf16[8,6498], index: 3, kind: output, shape index: {}]
  %s4 = sld [smem:[#allocation0]]
  $region173: #{cnn_forward.6} parent=0
    _
  %s6 = ssub.s32 1, %s4
  %s7 = scalar_select 0, %s6, %s4
  $region1: #{cnn_forward.6} parent=0
    #allocation2 [shape = 'u8[3538944]{0}', space=vmem, size = 0x360000, scoped, tag = 'input window, operand 1']
    #allocation3 [shape = 'u8[65536]{0}', space=vmem, size = 0x10000, scoped, tag = 'output window, operand 0']
    loop: start=0, step=1, limit=6
    $region2: #{cnn_forward.6} parent=1 // loop_pre_header
      _
    $region3: #{cnn_forward.6} parent=1 // loop_header
      %s9 = sphi 0, %s13
      %p10 = scmp.ge.s32.totalorder %s9, 6
      %s17 = sphi 0, %s17
      %s19 = sphi 0, %s17
      %s20 = sphi 0, %s19
      %s34 = sphi 0, %s20
      %s40 = sphi 0, %s42
      %s43 = sphi 0, %s40
      %s44 = sphi 0, %s43
      %s60 = sphi 0, %s44
      %s64 = sphi 0, %s64
      %s66 = sphi 0, %s64
      %s67 = sphi 0, %s66
      %s81 = sphi 0, %s67
      %s87 = sphi 0, %s89
      %s90 = sphi 0, %s87
      %s91 = sphi 0, %s90
      %s107 = sphi 0, %s91
    $region4: #{cnn_forward.6} parent=1 // loop_header_branch
      %12 = sbr.rel (%p10) target = $region8
    $region5: #{cnn_forward.6} parent=1 // loop_body
      %s14 = ssub.s32 %s9, 1
      %s15 = ssub.s32 %s9, 2
      %s16 = sadd.s32 %s9, 1
      %s18 = sadd.s32 %s17, 1
      %p21 = scmp.eq.s32.totalorder %s9, 3
      %p22 = scmp.ne.s32.totalorder %s17, %s19
      %p23 = scmp.eq.s32.totalorder %s9, 0
      %p24 = por %p22, %p23
      %p25 = scmp.ne.s32.totalorder %s17, %s19
      %p26 = scmp.eq.s32.totalorder %s14, 3
      %p27 = por %p25, %p26
      %p28 = scmp.ne.s32.totalorder %s19, %s20
      %p29 = scmp.eq.s32.totalorder %s14, 0
      %p30 = por %p28, %p29
      %p31 = scmp.ne.s32.totalorder %s19, %s20
      %p32 = scmp.eq.s32.totalorder %s15, 3
      %p33 = por %p31, %p32
      %p35 = scmp.ne.s32.totalorder %s20, %s34
      %p36 = scmp.eq.s32.totalorder %s15, 0
      %p37 = por %p35, %p36
      %s38 = ssub.s32 %s9, %s16
      %p39 = scmp.eq.s32.totalorder %s38, 0
      %s41 = sadd.s32 %s40, 1
      %s42 = scalar_select %p39, %s40, %s41
      %p45 = pneg %p39
      %p46 = scmp.eq.s32.totalorder %s9, 3
      %p47 = por %p45, %p46
      %p48 = scmp.ne.s32.totalorder %s40, %s43
      %p49 = scmp.eq.s32.totalorder %s9, 0
      %p50 = por %p48, %p49
      %p51 = scmp.ne.s32.totalorder %s40, %s43
      %p52 = scmp.eq.s32.totalorder %s14, 3
      %p53 = por %p51, %p52
      %p54 = scmp.ne.s32.totalorder %s43, %s44
      %p55 = scmp.eq.s32.totalorder %s14, 0
      %p56 = por %p54, %p55
      %p57 = scmp.ne.s32.totalorder %s43, %s44
      %p58 = scmp.eq.s32.totalorder %s15, 3
      %p59 = por %p57, %p58
      %p61 = scmp.ne.s32.totalorder %s44, %s60
      %p62 = scmp.eq.s32.totalorder %s15, 0
      %p63 = por %p61, %p62
      %s65 = sadd.s32 %s64, 1
      %p68 = scmp.eq.s32.totalorder %s9, 3
      %p69 = scmp.ne.s32.totalorder %s64, %s66
      %p70 = scmp.eq.s32.totalorder %s9, 0
      %p71 = por %p69, %p70
      %p72 = scmp.ne.s32.totalorder %s64, %s66
      %p73 = scmp.eq.s32.totalorder %s14, 3
      %p74 = por %p72, %p73
      %p75 = scmp.ne.s32.totalorder %s66, %s67
      %p76 = scmp.eq.s32.totalorder %s14, 0
      %p77 = por %p75, %p76
      %p78 = scmp.ne.s32.totalorder %s66, %s67
      %p79 = scmp.eq.s32.totalorder %s15, 3
      %p80 = por %p78, %p79
      %p82 = scmp.ne.s32.totalorder %s67, %s81
      %p83 = scmp.eq.s32.totalorder %s15, 0
      %p84 = por %p82, %p83
      %s85 = ssub.s32 %s9, %s16
      %p86 = scmp.eq.s32.totalorder %s85, 0
      %s88 = sadd.s32 %s87, 1
      %s89 = scalar_select %p86, %s87, %s88
      %p92 = pneg %p86
      %p93 = scmp.eq.s32.totalorder %s9, 3
      %p94 = por %p92, %p93
      %p95 = scmp.ne.s32.totalorder %s87, %s90
      %p96 = scmp.eq.s32.totalorder %s9, 0
      %p97 = por %p95, %p96
      %p98 = scmp.ne.s32.totalorder %s87, %s90
      %p99 = scmp.eq.s32.totalorder %s14, 3
      %p100 = por %p98, %p99
      %p101 = scmp.ne.s32.totalorder %s90, %s91
      %p102 = scmp.eq.s32.totalorder %s14, 0
      %p103 = por %p101, %p102
      %p104 = scmp.ne.s32.totalorder %s90, %s91
      %p105 = scmp.eq.s32.totalorder %s15, 3
      %p106 = por %p104, %p105
      %p108 = scmp.ne.s32.totalorder %s91, %s107
      %p109 = scmp.eq.s32.totalorder %s15, 0
      %p110 = por %p108, %p109
      %p111 = scmp.le.s32.totalorder 1, %s9
      %p112 = scmp.lt.s32.totalorder %s9, 5
      %p113 = pnand %p111, %p112
      %p114 = pneg %p113
      // Predicated region
      $region9: #{cnn_forward.6} parent=5 // pred_check
        _
      $region10: #{cnn_forward.6} parent=5 // pred_check_branch
        %116 = sbr.rel (%p113) target = $region12
      $region11: #{cnn_forward.6} parent=5 // pred_region
        %s117 = ssub.s32 %s9, 1
        // Predicated region
        $region13: #{cnn_forward.6} parent=11 // pred_check
          %p118 = pneg %p30
        $region14: #{cnn_forward.6} parent=11 // pred_check_branch
          %120 = sbr.rel (%p118) target = $region16
        $region15: #{cnn_forward.6} parent=11 // pred_region
          _
        $region16: #{cnn_forward.6} parent=11 // pred_fallthru
          _
        // Predicated region
        $region17: #{cnn_forward.6} parent=11 // pred_check
          %p121 = pneg %p77
        $region18: #{cnn_forward.6} parent=11 // pred_check_branch
          %123 = sbr.rel (%p121) target = $region20
        $region19: #{cnn_forward.6} parent=11 // pred_region
          _
        $region20: #{cnn_forward.6} parent=11 // pred_fallthru
          _
      $region12: #{cnn_forward.6} parent=5 // pred_fallthru
        _
      %p124 = scmp.lt.s32.totalorder %s9, 4
      // Predicated region
      $region21: #{cnn_forward.6} parent=5 // pred_check
        %p125 = pneg %p124
      $region22: #{cnn_forward.6} parent=5 // pred_check_branch
        %127 = sbr.rel (%p125) target = $region24
      $region23: #{cnn_forward.6} parent=5 // pred_region
        // Predicated region
        $region25: #{cnn_forward.6} parent=23 // pred_check
          %p128 = pneg %p50
        $region26: #{cnn_forward.6} parent=23 // pred_check_branch
          %130 = sbr.rel (%p128) target = $region28
        $region27: #{cnn_forward.6} parent=23 // pred_region
          %s131 = sand.u32 %s40, 1
          %s132 = sand.u32 %s40, 1
          %s133 = smul.addr %s132, 3456
          %s134 = scalar_lea.vmem [#allocation2], %s133
          %s135 = smul.u32 16, %s9
          %s136 = ssub.s32 51, %s135
          %p137 = scmp.lt.s32.totalorder %s136, 16
          %s138 = scalar_select %p137, %s136, 16
          %s139 = smul.u32 3456, %s138
          %p140 = scmp.ne.s32.totalorder 0, %s139
          %s141 = smul.addr %s135, 4
          %s142 = scalar_lea.vmem %s1, %s141
          %s143 = smul.u32 %s138, 4
          // Predicated region
          $region29: #{cnn_forward.6} parent=27 // pred_check
            %p144 = pneg %p140
          $region30: #{cnn_forward.6} parent=27 // pred_check_branch
            %146 = sbr.rel (%p144) target = $region32
          $region31: #{cnn_forward.6} parent=27 // pred_region
            %p147 = scmp.lt.u32.totalorder %s143, 8
            %p148 = pneg %p147
            // Predicated region
            $region33: #{cnn_forward.6} parent=31 // pred_check
              _
            $region34: #{cnn_forward.6} parent=31 // pred_check_branch
              %150 = sbr.rel (%p147) target = $region36
            $region35: #{cnn_forward.6} parent=31 // pred_region
              %s271 = sand.u32 %s143, 7
              %p272 = scmp.eq.s32.totalorder %s271, 0
              // Predicated region
              $region48: #{cnn_forward.6} parent=35 // pred_check
                %p273 = pneg %p272
              $region49: #{cnn_forward.6} parent=35 // pred_check_branch
                %275 = sbr.rel (%p273) target = $region51
              $region50: #{cnn_forward.6} parent=35 // pred_region
                %s276 = sshrl.u32 %s143, 3
                %s277 = sshrl.u32 %s276, 1
                // While loop
                $region52: #{cnn_forward.6} parent=50 // loop_pre_header
                  _
                $region53: #{cnn_forward.6} parent=50 // loop_header
                  %s281 = sphi 0, %s283
                  %p282 = scmp.ge.s32.totalorder %s281, %s277
                  %s286 = sphi 0, %s507
                  %s287 = sphi %s142, %s510
                  %s288 = sphi %s134, %s511
                $region54: #{cnn_forward.6} parent=50 // loop_header_branch
                  %285 = sbr.rel (%p282) target = $region58
                $region55: #{cnn_forward.6} parent=50 // loop_body
                  %v289 = vld [vmem:[%s287] sm:$0xff]
                  %290 = vst [vmem:[%s288] sm:$0xff] %v289
                  %v291 = vld [vmem:[%s287 + $0x8] sm:$0xff]
                  %292 = vst [vmem:[%s288 + $0x8] sm:$0xff] %v291
                  %v293 = vld [vmem:[%s287 + $0xcc] sm:$0xff]
                  %294 = vst [vmem:[%s288 + $0x40] sm:$0xff] %v293
                  %v295 = vld [vmem:[%s287 + $0xd4] sm:$0xff]
                  %296 = vst [vmem:[%s288 + $0x48] sm:$0xff] %v295
                  %v297 = vld [vmem:[%s287 + $0x198] sm:$0xff]
                  %298 = vst [vmem:[%s288 + $0x80] sm:$0xff] %v297
                  %v299 = vld [vmem:[%s287 + $0x1a0] sm:$0xff]
                  %300 = vst [vmem:[%s288 + $0x88] sm:$0xff] %v299
                  %v301 = vld [vmem:[%s287 + $0x264] sm:$0xff]
                  %302 = vst [vmem:[%s288 + $0xc0] sm:$0xff] %v301
                  %v303 = vld [vmem:[%s287 + $0x26c] sm:$0xff]
                  %304 = vst [vmem:[%s288 + $0xc8] sm:$0xff] %v303
                  %v305 = vld [vmem:[%s287 + $0x330] sm:$0xff]
                  %306 = vst [vmem:[%s288 + $0x100] sm:$0xff] %v305
                  %v307 = vld [vmem:[%s287 + $0x338] sm:$0xff]
                  %308 = vst [vmem:[%s288 + $0x108] sm:$0xff] %v307
                  %v309 = vld [vmem:[%s287 + $0x3fc] sm:$0xff]
                  %310 = vst [vmem:[%s288 + $0x140] sm:$0xff] %v309
                  %v311 = vld [vmem:[%s287 + $0x404] sm:$0xff]
                  %312 = vst [vmem:[%s288 + $0x148] sm:$0xff] %v311
                  %v313 = vld [vmem:[%s287 + $0x4c8] sm:$0xff]
                  %314 = vst [vmem:[%s288 + $0x180] sm:$0xff] %v313
                  %v315 = vld [vmem:[%s287 + $0x4d0] sm:$0xff]
                  %316 = vst [vmem:[%s288 + $0x188] sm:$0xff] %v315
                  %v317 = vld [vmem:[%s287 + $0x594] sm:$0xff]
                  %318 = vst [vmem:[%s288 + $0x1c0] sm:$0xff] %v317
                  %v319 = vld [vmem:[%s287 + $0x59c] sm:$0xff]
                  %320 = vst [vmem:[%s288 + $0x1c8] sm:$0xff] %v319
                  %v321 = vld [vmem:[%s287 + $0x660] sm:$0xff]
                  %322 = vst [vmem:[%s288 + $0x200] sm:$0xff] %v321
                  %v323 = vld [vmem:[%s287 + $0x668] sm:$0xff]
                  %324 = vst [vmem:[%s288 + $0x208] sm:$0xff] %v323
                  %v325 = vld [vmem:[%s287 + $0x72c] sm:$0xff]
                  %326 = vst [vmem:[%s288 + $0x240] sm:$0xff] %v325
                  %v327 = vld [vmem:[%s287 + $0x734] sm:$0xff]
                  %328 = vst [vmem:[%s288 + $0x248] sm:$0xff] %v327
                  %v329 = vld [vmem:[%s287 + $0x7f8] sm:$0xff]
                  %330 = vst [vmem:[%s288 + $0x280] sm:$0xff] %v329
                  %v331 = vld [vmem:[%s287 + $0x800] sm:$0xff]
                  %332 = vst [vmem:[%s288 + $0x288] sm:$0xff] %v331
                  %v333 = vld [vmem:[%s287 + $0x8c4] sm:$0xff]
                  %334 = vst [vmem:[%s288 + $0x2c0] sm:$0xff] %v333
                  %v335 = vld [vmem:[%s287 + $0x8cc] sm:$0xff]
                  %336 = vst [vmem:[%s288 + $0x2c8] sm:$0xff] %v335
                  %v337 = vld [vmem:[%s287 + $0x990] sm:$0xff]
                  %338 = vst [vmem:[%s288 + $0x300] sm:$0xff] %v337
                  %v339 = vld [vmem:[%s287 + $0x998] sm:$0xff]
                  %340 = vst [vmem:[%s288 + $0x308] sm:$0xff] %v339
                  %v341 = vld [vmem:[%s287 + $0xa5c] sm:$0xff]
                  %342 = vst [vmem:[%s288 + $0x340] sm:$0xff] %v341
                  %v343 = vld [vmem:[%s287 + $0xa64] sm:$0xff]
                  %344 = vst [vmem:[%s288 + $0x348] sm:$0xff] %v343
                  %v345 = vld [vmem:[%s287 + $0xb28] sm:$0xff]
                  %346 = vst [vmem:[%s288 + $0x380] sm:$0xff] %v345
                  %v347 = vld [vmem:[%s287 + $0xb30] sm:$0xff]
                  %348 = vst [vmem:[%s288 + $0x388] sm:$0xff] %v347
                  %v349 = vld [vmem:[%s287 + $0xbf4] sm:$0xff]
                  %350 = vst [vmem:[%s288 + $0x3c0] sm:$0xff] %v349
                  %v351 = vld [vmem:[%s287 + $0xbfc] sm:$0xff]
                  %352 = vst [vmem:[%s288 + $0x3c8] sm:$0xff] %v351
                  %v353 = vld [vmem:[%s287 + $0xcc0] sm:$0xff]
                  %354 = vst [vmem:[%s288 + $0x400] sm:$0xff] %v353
                  %v355 = vld [vmem:[%s287 + $0xcc8] sm:$0xff]
                  %356 = vst [vmem:[%s288 + $0x408] sm:$0xff] %v355
                  %v357 = vld [vmem:[%s287 + $0xd8c] sm:$0xff]
                  %358 = vst [vmem:[%s288 + $0x440] sm:$0xff] %v357
                  %v359 = vld [vmem:[%s287 + $0xd94] sm:$0xff]
                  %360 = vst [vmem:[%s288 + $0x448] sm:$0xff] %v359
                  %v361 = vld [vmem:[%s287 + $0xe58] sm:$0xff]
                  %362 = vst [vmem:[%s288 + $0x480] sm:$0xff] %v361
                  %v363 = vld [vmem:[%s287 + $0xe60] sm:$0xff]
                  %364 = vst [vmem:[%s288 + $0x488] sm:$0xff] %v363
                  %v365 = vld [vmem:[%s287 + $0xf24] sm:$0xff]
                  %366 = vst [vmem:[%s288 + $0x4c0] sm:$0xff] %v365
                  %v367 = vld [vmem:[%s287 + $0xf2c] sm:$0xff]
                  %368 = vst [vmem:[%s288 + $0x4c8] sm:$0xff] %v367
                  %v369 = vld [vmem:[%s287 + $0xff0] sm:$0xff]
                  %370 = vst [vmem:[%s288 + $0x500] sm:$0xff] %v369
                  %v371 = vld [vmem:[%s287 + $0xff8] sm:$0xff]
                  %372 = vst [vmem:[%s288 + $0x508] sm:$0xff] %v371
                  %v373 = vld [vmem:[%s287 + $0x10bc] sm:$0xff]
                  %374 = vst [vmem:[%s288 + $0x540] sm:$0xff] %v373
                  %v375 = vld [vmem:[%s287 + $0x10c4] sm:$0xff]
                  %376 = vst [vmem:[%s288 + $0x548] sm:$0xff] %v375
                  %v377 = vld [vmem:[%s287 + $0x1188] sm:$0xff]
                  %378 = vst [vmem:[%s288 + $0x580] sm:$0xff] %v377
                  %v379 = vld [vmem:[%s287 + $0x1190] sm:$0xff]
                  %380 = vst [vmem:[%s288 + $0x588] sm:$0xff] %v379
                  %v381 = vld [vmem:[%s287 + $0x1254] sm:$0xff]
                  %382 = vst [vmem:[%s288 + $0x5c0] sm:$0xff] %v381
                  %v383 = vld [vmem:[%s287 + $0x125c] sm:$0xff]
                  %384 = vst [vmem:[%s288 + $0x5c8] sm:$0xff] %v383
                  %v385 = vld [vmem:[%s287 + $0x1320] sm:$0xff]
                  %386 = vst [vmem:[%s288 + $0x600] sm:$0xff] %v385
                  %v387 = vld [vmem:[%s287 + $0x1328] sm:$0xff]
                  %388 = vst [vmem:[%s288 + $0x608] sm:$0xff] %v387
                  %v389 = vld [vmem:[%s287 + $0x13ec] sm:$0xff]
                  %390 = vst [vmem:[%s288 + $0x640] sm:$0xff] %v389
                  %v391 = vld [vmem:[%s287 + $0x13f4] sm:$0xff]
                  %392 = vst [vmem:[%s288 + $0x648] sm:$0xff] %v391
                  %v393 = vld [vmem:[%s287 + $0x14b8] sm:$0xff]
                  %394 = vst [vmem:[%s288 + $0x680] sm:$0xff] %v393
                  %v395 = vld [vmem:[%s287 + $0x14c0] sm:$0xff]
                  %396 = vst [vmem:[%s288 + $0x688] sm:$0xff] %v395
                  %v397 = vld [vmem:[%s287 + $0x1584] sm:$0xff]
                  %398 = vst [vmem:[%s288 + $0x6c0] sm:$0xff] %v397
                  %v399 = vld [vmem:[%s287 + $0x158c] sm:$0xff]
                  %400 = vst [vmem:[%s288 + $0x6c8] sm:$0xff] %v399
                  %v401 = vld [vmem:[%s287 + $0x1650] sm:$0xff]
                  %402 = vst [vmem:[%s288 + $0x700] sm:$0xff] %v401
                  %v403 = vld [vmem:[%s287 + $0x1658] sm:$0xff]
                  %404 = vst [vmem:[%s288 + $0x708] sm:$0xff] %v403
                  %v405 = vld [vmem:[%s287 + $0x171c] sm:$0xff]
                  %406 = vst [vmem:[%s288 + $0x740] sm:$0xff] %v405
                  %v407 = vld [vmem:[%s287 + $0x1724] sm:$0xff]
                  %408 = vst [vmem:[%s288 + $0x748] sm:$0xff] %v407
                  %v409 = vld [vmem:[%s287 + $0x17e8] sm:$0xff]
                  %410 = vst [vmem:[%s288 + $0x780] sm:$0xff] %v409
                  %v411 = vld [vmem:[%s287 + $0x17f0] sm:$0xff]
                  %412 = vst [vmem:[%s288 + $0x788] sm:$0xff] %v411
                  %v413 = vld [vmem:[%s287 + $0x18b4] sm:$0xff]
                  %414 = vst [vmem:[%s288 + $0x7c0] sm:$0xff] %v413
                  %v415 = vld [vmem:[%s287 + $0x18bc] sm:$0xff]
                  %416 = vst [vmem:[%s288 + $0x7c8] sm:$0xff] %v415
                  %v417 = vld [vmem:[%s287 + $0x1980] sm:$0xff]
                  %418 = vst [vmem:[%s288 + $0x800] sm:$0xff] %v417
                  %v419 = vld [vmem:[%s287 + $0x1988] sm:$0xff]
                  %420 = vst [vmem:[%s288 + $0x808] sm:$0xff] %v419
                  %v421 = vld [vmem:[%s287 + $0x1a4c] sm:$0xff]
                  %422 = vst [vmem:[%s288 + $0x840] sm:$0xff] %v421
                  %v423 = vld [vmem:[%s287 + $0x1a54] sm:$0xff]
                  %424 = vst [vmem:[%s288 + $0x848] sm:$0xff] %v423
                  %v425 = vld [vmem:[%s287 + $0x1b18] sm:$0xff]
                  %426 = vst [vmem:[%s288 + $0x880] sm:$0xff] %v425
                  %v427 = vld [vmem:[%s287 + $0x1b20] sm:$0xff]
                  %428 = vst [vmem:[%s288 + $0x888] sm:$0xff] %v427
                  %v429 = vld [vmem:[%s287 + $0x1be4] sm:$0xff]
                  %430 = vst [vmem:[%s288 + $0x8c0] sm:$0xff] %v429
                  %v431 = vld [vmem:[%s287 + $0x1bec] sm:$0xff]
                  %432 = vst [vmem:[%s288 + $0x8c8] sm:$0xff] %v431
                  %v433 = vld [vmem:[%s287 + $0x1cb0] sm:$0xff]
                  %434 = vst [vmem:[%s288 + $0x900] sm:$0xff] %v433
                  %v435 = vld [vmem:[%s287 + $0x1cb8] sm:$0xff]
                  %436 = vst [vmem:[%s288 + $0x908] sm:$0xff] %v435
                  %v437 = vld [vmem:[%s287 + $0x1d7c] sm:$0xff]
                  %438 = vst [vmem:[%s288 + $0x940] sm:$0xff] %v437
                  %v439 = vld [vmem:[%s287 + $0x1d84] sm:$0xff]
                  %440 = vst [vmem:[%s288 + $0x948] sm:$0xff] %v439
                  %v441 = vld [vmem:[%s287 + $0x1e48] sm:$0xff]
                  %442 = vst [vmem:[%s288 + $0x980] sm:$0xff] %v441
                  %v443 = vld [vmem:[%s287 + $0x1e50] sm:$0xff]
                  %444 = vst [vmem:[%s288 + $0x988] sm:$0xff] %v443
                  %v445 = vld [vmem:[%s287 + $0x1f14] sm:$0xff]
                  %446 = vst [vmem:[%s288 + $0x9c0] sm:$0xff] %v445
                  %v447 = vld [vmem:[%s287 + $0x1f1c] sm:$0xff]
                  %448 = vst [vmem:[%s288 + $0x9c8] sm:$0xff] %v447
                  %v449 = vld [vmem:[%s287 + $0x1fe0] sm:$0xff]
                  %450 = vst [vmem:[%s288 + $0xa00] sm:$0xff] %v449
                  %v451 = vld [vmem:[%s287 + $0x1fe8] sm:$0xff]
                  %452 = vst [vmem:[%s288 + $0xa08] sm:$0xff] %v451
                  %v453 = vld [vmem:[%s287 + $0x20ac] sm:$0xff]
                  %454 = vst [vmem:[%s288 + $0xa40] sm:$0xff] %v453
                  %v455 = vld [vmem:[%s287 + $0x20b4] sm:$0xff]
                  %456 = vst [vmem:[%s288 + $0xa48] sm:$0xff] %v455
                  %v457 = vld [vmem:[%s287 + $0x2178] sm:$0xff]
                  %458 = vst [vmem:[%s288 + $0xa80] sm:$0xff] %v457
                  %v459 = vld [vmem:[%s287 + $0x2180] sm:$0xff]
                  %460 = vst [vmem:[%s288 + $0xa88] sm:$0xff] %v459
                  %v461 = vld [vmem:[%s287 + $0x2244] sm:$0xff]
                  %462 = vst [vmem:[%s288 + $0xac0] sm:$0xff] %v461
                  %v463 = vld [vmem:[%s287 + $0x224c] sm:$0xff]
                  %464 = vst [vmem:[%s288 + $0xac8] sm:$0xff] %v463
                  %v465 = vld [vmem:[%s287 + $0x2310] sm:$0xff]
                  %466 = vst [vmem:[%s288 + $0xb00] sm:$0xff] %v465
                  %v467 = vld [vmem:[%s287 + $0x2318] sm:$0xff]
                  %468 = vst [vmem:[%s288 + $0xb08] sm:$0xff] %v467
                  %v469 = vld [vmem:[%s287 + $0x23dc] sm:$0xff]
                  %470 = vst [vmem:[%s288 + $0xb40] sm:$0xff] %v469
                  %v471 = vld [vmem:[%s287 + $0x23e4] sm:$0xff]
                  %472 = vst [vmem:[%s288 + $0xb48] sm:$0xff] %v471
                  %v473 = vld [vmem:[%s287 + $0x24a8] sm:$0xff]
                  %474 = vst [vmem:[%s288 + $0xb80] sm:$0xff] %v473
                  %v475 = vld [vmem:[%s287 + $0x24b0] sm:$0xff]
                  %476 = vst [vmem:[%s288 + $0xb88] sm:$0xff] %v475
                  %v477 = vld [vmem:[%s287 + $0x2574] sm:$0xff]
                  %478 = vst [vmem:[%s288 + $0xbc0] sm:$0xff] %v477
                  %v479 = vld [vmem:[%s287 + $0x257c] sm:$0xff]
                  %480 = vst [vmem:[%s288 + $0xbc8] sm:$0xff] %v479
                  %v481 = vld [vmem:[%s287 + $0x2640] sm:$0xff]
                  %482 = vst [vmem:[%s288 + $0xc00] sm:$0xff] %v481
                  %v483 = vld [vmem:[%s287 + $0x2648] sm:$0xff]
                  %484 = vst [vmem:[%s288 + $0xc08] sm:$0xff] %v483
                  %v485 = vld [vmem:[%s287 + $0x270c] sm:$0xff]
                  %486 = vst [vmem:[%s288 + $0xc40] sm:$0xff] %v485
                  %v487 = vld [vmem:[%s287 + $0x2714] sm:$0xff]
                  %488 = vst [vmem:[%s288 + $0xc48] sm:$0xff] %v487
                  %v489 = vld [vmem:[%s287 + $0x27d8] sm:$0xff]
                  %490 = vst [vmem:[%s288 + $0xc80] sm:$0xff] %v489
                  %v491 = vld [vmem:[%s287 + $0x27e0] sm:$0xff]
                  %492 = vst [vmem:[%s288 + $0xc88] sm:$0xff] %v491
                  %v493 = vld [vmem:[%s287 + $0x28a4] sm:$0xff]
                  %494 = vst [vmem:[%s288 + $0xcc0] sm:$0xff] %v493
                  %v495 = vld [vmem:[%s287 + $0x28ac] sm:$0xff]
                  %496 = vst [vmem:[%s288 + $0xcc8] sm:$0xff] %v495
                  %v497 = vld [vmem:[%s287 + $0x2970] sm:$0xff]
                  %498 = vst [vmem:[%s288 + $0xd00] sm:$0xff] %v497
                  %v499 = vld [vmem:[%s287 + $0x2978] sm:$0xff]
                  %500 = vst [vmem:[%s288 + $0xd08] sm:$0xff] %v499
                  %v501 = vld [vmem:[%s287 + $0x2a3c] sm:$0xff]
                  %502 = vst [vmem:[%s288 + $0xd40] sm:$0xff] %v501
                  %v503 = vld [vmem:[%s287 + $0x2a44] sm:$0xff]
                  %504 = vst [vmem:[%s288 + $0xd48] sm:$0xff] %v503
                  %s505 = sadd.s32 1, %s286
                  %p506 = scmp.ge.s32.totalorder %s505, %s277
                  %s507 = scalar_select %p506, 0, %s505
                  %s508 = smul.u32 %s507, 16
                  %s509 = smul.u32 %s507, 16
                  %s510 = scalar_lea.vmem %s142, %s508
                  %s511 = scalar_lea.vmem %s134, %s509 [#allocation2]
                $region56: #{cnn_forward.6} parent=50 // loop_footer
                  %s283 = sadd.s32 %s281, 1
                $region57: #{cnn_forward.6} parent=50 // loop_footer_branch
                  %280 = sbr.rel target = $region53
                $region58: #{cnn_forward.6} parent=50 // loop_exit
                  _
                %s512 = sshrl.u32 %s276, 1
                %s513 = sand.u32 %s276, 1
                %s514 = smul.u32 %s512, 2
                %s515 = smul.u32 128, %s514
                %s516 = sshra.s32 %s515, 4
                %s517 = scalar_lea.vmem %s142, %s516
                %s518 = smul.u32 128, %s514
                %s519 = sshra.s32 %s518, 4
                %s520 = scalar_lea.vmem %s134, %s519 [#allocation2]
                // While loop
                $region59: #{cnn_forward.6} parent=50 // loop_pre_header
                  _
                $region60: #{cnn_forward.6} parent=50 // loop_header
                  %s524 = sphi 0, %s526
                  %p525 = scmp.ge.s32.totalorder %s524, %s513
                  %s529 = sphi 0, %s642
                  %s530 = sphi %s517, %s645
                  %s531 = sphi %s520, %s646
                $region61: #{cnn_forward.6} parent=50 // loop_header_branch
                  %528 = sbr.rel (%p525) target = $region65
                $region62: #{cnn_forward.6} parent=50 // loop_body
                  %v532 = vld [vmem:[%s530] sm:$0xff]
                  %533 = vst [vmem:[%s531] sm:$0xff] %v532
                  %v534 = vld [vmem:[%s530 + $0xcc] sm:$0xff]
                  %535 = vst [vmem:[%s531 + $0x40] sm:$0xff] %v534
                  %v536 = vld [vmem:[%s530 + $0x198] sm:$0xff]
                  %537 = vst [vmem:[%s531 + $0x80] sm:$0xff] %v536
                  %v538 = vld [vmem:[%s530 + $0x264] sm:$0xff]
                  %539 = vst [vmem:[%s531 + $0xc0] sm:$0xff] %v538
                  %v540 = vld [vmem:[%s530 + $0x330] sm:$0xff]
                  %541 = vst [vmem:[%s531 + $0x100] sm:$0xff] %v540
                  %v542 = vld [vmem:[%s530 + $0x3fc] sm:$0xff]
                  %543 = vst [vmem:[%s531 + $0x140] sm:$0xff] %v542
                  %v544 = vld [vmem:[%s530 + $0x4c8] sm:$0xff]
                  %545 = vst [vmem:[%s531 + $0x180] sm:$0xff] %v544
                  %v546 = vld [vmem:[%s530 + $0x594] sm:$0xff]
                  %547 = vst [vmem:[%s531 + $0x1c0] sm:$0xff] %v546
                  %v548 = vld [vmem:[%s530 + $0x660] sm:$0xff]
                  %549 = vst [vmem:[%s531 + $0x200] sm:$0xff] %v548
                  %v550 = vld [vmem:[%s530 + $0x72c] sm:$0xff]
                  %551 = vst [vmem:[%s531 + $0x240] sm:$0xff] %v550
                  %v552 = vld [vmem:[%s530 + $0x7f8] sm:$0xff]
                  %553 = vst [vmem:[%s531 + $0x280] sm:$0xff] %v552
                  %v554 = vld [vmem:[%s530 + $0x8c4] sm:$0xff]
                  %555 = vst [vmem:[%s531 + $0x2c0] sm:$0xff] %v554
                  %v556 = vld [vmem:[%s530 + $0x990] sm:$0xff]
                  %557 = vst [vmem:[%s531 + $0x300] sm:$0xff] %v556
                  %v558 = vld [vmem:[%s530 + $0xa5c] sm:$0xff]
                  %559 = vst [vmem:[%s531 + $0x340] sm:$0xff] %v558
                  %v560 = vld [vmem:[%s530 + $0xb28] sm:$0xff]
                  %561 = vst [vmem:[%s531 + $0x380] sm:$0xff] %v560
                  %v562 = vld [vmem:[%s530 + $0xbf4] sm:$0xff]
                  %563 = vst [vmem:[%s531 + $0x3c0] sm:$0xff] %v562
                  %v564 = vld [vmem:[%s530 + $0xcc0] sm:$0xff]
                  %565 = vst [vmem:[%s531 + $0x400] sm:$0xff] %v564
                  %v566 = vld [vmem:[%s530 + $0xd8c] sm:$0xff]
                  %567 = vst [vmem:[%s531 + $0x440] sm:$0xff] %v566
                  %v568 = vld [vmem:[%s530 + $0xe58] sm:$0xff]
                  %569 = vst [vmem:[%s531 + $0x480] sm:$0xff] %v568
                  %v570 = vld [vmem:[%s530 + $0xf24] sm:$0xff]
                  %571 = vst [vmem:[%s531 + $0x4c0] sm:$0xff] %v570
                  %v572 = vld [vmem:[%s530 + $0xff0] sm:$0xff]
                  %573 = vst [vmem:[%s531 + $0x500] sm:$0xff] %v572
                  %v574 = vld [vmem:[%s530 + $0x10bc] sm:$0xff]
                  %575 = vst [vmem:[%s531 + $0x540] sm:$0xff] %v574
                  %v576 = vld [vmem:[%s530 + $0x1188] sm:$0xff]
                  %577 = vst [vmem:[%s531 + $0x580] sm:$0xff] %v576
                  %v578 = vld [vmem:[%s530 + $0x1254] sm:$0xff]
                  %579 = vst [vmem:[%s531 + $0x5c0] sm:$0xff] %v578
                  %v580 = vld [vmem:[%s530 + $0x1320] sm:$0xff]
                  %581 = vst [vmem:[%s531 + $0x600] sm:$0xff] %v580
                  %v582 = vld [vmem:[%s530 + $0x13ec] sm:$0xff]
                  %583 = vst [vmem:[%s531 + $0x640] sm:$0xff] %v582
                  %v584 = vld [vmem:[%s530 + $0x14b8] sm:$0xff]
                  %585 = vst [vmem:[%s531 + $0x680] sm:$0xff] %v584
                  %v586 = vld [vmem:[%s530 + $0x1584] sm:$0xff]
                  %587 = vst [vmem:[%s531 + $0x6c0] sm:$0xff] %v586
                  %v588 = vld [vmem:[%s530 + $0x1650] sm:$0xff]
                  %589 = vst [vmem:[%s531 + $0x700] sm:$0xff] %v588
                  %v590 = vld [vmem:[%s530 + $0x171c] sm:$0xff]
                  %591 = vst [vmem:[%s531 + $0x740] sm:$0xff] %v590
                  %v592 = vld [vmem:[%s530 + $0x17e8] sm:$0xff]
                  %593 = vst [vmem:[%s531 + $0x780] sm:$0xff] %v592
                  %v594 = vld [vmem:[%s530 + $0x18b4] sm:$0xff]
                  %595 = vst [vmem:[%s531 + $0x7c0] sm:$0xff] %v594
                  %v596 = vld [vmem:[%s530 + $0x1980] sm:$0xff]
                  %597 = vst [vmem:[%s531 + $0x800] sm:$0xff] %v596
                  %v598 = vld [vmem:[%s530 + $0x1a4c] sm:$0xff]
                  %599 = vst [vmem:[%s531 + $0x840] sm:$0xff] %v598
                  %v600 = vld [vmem:[%s530 + $0x1b18] sm:$0xff]
                  %601 = vst [vmem:[%s531 + $0x880] sm:$0xff] %v600
                  %v602 = vld [vmem:[%s530 + $0x1be4] sm:$0xff]
                  %603 = vst [vmem:[%s531 + $0x8c0] sm:$0xff] %v602
                  %v604 = vld [vmem:[%s530 + $0x1cb0] sm:$0xff]
                  %605 = vst [vmem:[%s531 + $0x900] sm:$0xff] %v604
                  %v606 = vld [vmem:[%s530 + $0x1d7c] sm:$0xff]
                  %607 = vst [vmem:[%s531 + $0x940] sm:$0xff] %v606
                  %v608 = vld [vmem:[%s530 + $0x1e48] sm:$0xff]
                  %609 = vst [vmem:[%s531 + $0x980] sm:$0xff] %v608
                  %v610 = vld [vmem:[%s530 + $0x1f14] sm:$0xff]
                  %611 = vst [vmem:[%s531 + $0x9c0] sm:$0xff] %v610
                  %v612 = vld [vmem:[%s530 + $0x1fe0] sm:$0xff]
                  %613 = vst [vmem:[%s531 + $0xa00] sm:$0xff] %v612
                  %v614 = vld [vmem:[%s530 + $0x20ac] sm:$0xff]
                  %615 = vst [vmem:[%s531 + $0xa40] sm:$0xff] %v614
                  %v616 = vld [vmem:[%s530 + $0x2178] sm:$0xff]
                  %617 = vst [vmem:[%s531 + $0xa80] sm:$0xff] %v616
                  %v618 = vld [vmem:[%s530 + $0x2244] sm:$0xff]
                  %619 = vst [vmem:[%s531 + $0xac0] sm:$0xff] %v618
                  %v620 = vld [vmem:[%s530 + $0x2310] sm:$0xff]
                  %621 = vst [vmem:[%s531 + $0xb00] sm:$0xff] %v620
                  %v622 = vld [vmem:[%s530 + $0x23dc] sm:$0xff]
                  %623 = vst [vmem:[%s531 + $0xb40] sm:$0xff] %v622
                  %v624 = vld [vmem:[%s530 + $0x24a8] sm:$0xff]
                  %625 = vst [vmem:[%s531 + $0xb80] sm:$0xff] %v624
                  %v626 = vld [vmem:[%s530 + $0x2574] sm:$0xff]
                  %627 = vst [vmem:[%s531 + $0xbc0] sm:$0xff] %v626
                  %v628 = vld [vmem:[%s530 + $0x2640] sm:$0xff]
                  %629 = vst [vmem:[%s531 + $0xc00] sm:$0xff] %v628
                  %v630 = vld [vmem:[%s530 + $0x270c] sm:$0xff]
                  %631 = vst [vmem:[%s531 + $0xc40] sm:$0xff] %v630
                  %v632 = vld [vmem:[%s530 + $0x27d8] sm:$0xff]
                  %633 = vst [vmem:[%s531 + $0xc80] sm:$0xff] %v632
                  %v634 = vld [vmem:[%s530 + $0x28a4] sm:$0xff]
                  %635 = vst [vmem:[%s531 + $0xcc0] sm:$0xff] %v634
                  %v636 = vld [vmem:[%s530 + $0x2970] sm:$0xff]
                  %637 = vst [vmem:[%s531 + $0xd00] sm:$0xff] %v636
                  %v638 = vld [vmem:[%s530 + $0x2a3c] sm:$0xff]
                  %639 = vst [vmem:[%s531 + $0xd40] sm:$0xff] %v638
                  %s640 = sadd.s32 1, %s529
                  %p641 = scmp.ge.s32.totalorder %s640, %s513
                  %s642 = scalar_select %p641, 0, %s640
                  %s643 = smul.u32 %s642, 8
                  %s644 = smul.u32 %s642, 8
                  %s645 = scalar_lea.vmem %s517, %s643
                  %s646 = scalar_lea.vmem %s520, %s644 [#allocation2]
                $region63: #{cnn_forward.6} parent=50 // loop_footer
                  %s526 = sadd.s32 %s524, 1
                $region64: #{cnn_forward.6} parent=50 // loop_footer_branch
                  %523 = sbr.rel target = $region60
                $region65: #{cnn_forward.6} parent=50 // loop_exit
                  _
              $region51: #{cnn_forward.6} parent=35 // pred_fallthru
                _
              %p647 = pneg %p272
              // Predicated region
              $region66: #{cnn_forward.6} parent=35 // pred_check
                _
              $region67: #{cnn_forward.6} parent=35 // pred_check_branch
                %649 = sbr.rel (%p272) target = $region69
              $region68: #{cnn_forward.6} parent=35 // pred_region
                %s650 = sand.u32 %s143, 7
                %s651 = ssub.s32 %s143, %s650
                %s652 = scalar_lea.vmem %s142, %s651
                %s653 = ssub.s32 %s143, %s650
                %s654 = scalar_lea.vmem %s134, %s653 [#allocation2]
                %s655 = sshrl.u32 %s143, 3
                %s656 = sshrl.u32 %s655, 1
                // While loop
                $region70: #{cnn_forward.6} parent=68 // loop_pre_header
                  _
                $region71: #{cnn_forward.6} parent=68 // loop_header
                  %s660 = sphi 0, %s662
                  %p661 = scmp.ge.s32.totalorder %s660, %s656
                  %s665 = sphi 0, %s886
                  %s666 = sphi %s142, %s889
                  %s667 = sphi %s134, %s890
                $region72: #{cnn_forward.6} parent=68 // loop_header_branch
                  %664 = sbr.rel (%p661) target = $region76
                $region73: #{cnn_forward.6} parent=68 // loop_body
                  %v668 = vld [vmem:[%s666] sm:$0xff]
                  %669 = vst [vmem:[%s667] sm:$0xff] %v668
                  %v670 = vld [vmem:[%s666 + $0x8] sm:$0xff]
                  %671 = vst [vmem:[%s667 + $0x8] sm:$0xff] %v670
                  %v672 = vld [vmem:[%s666 + $0xcc] sm:$0xff]
                  %673 = vst [vmem:[%s667 + $0x40] sm:$0xff] %v672
                  %v674 = vld [vmem:[%s666 + $0xd4] sm:$0xff]
                  %675 = vst [vmem:[%s667 + $0x48] sm:$0xff] %v674
                  %v676 = vld [vmem:[%s666 + $0x198] sm:$0xff]
                  %677 = vst [vmem:[%s667 + $0x80] sm:$0xff] %v676
                  %v678 = vld [vmem:[%s666 + $0x1a0] sm:$0xff]
                  %679 = vst [vmem:[%s667 + $0x88] sm:$0xff] %v678
                  %v680 = vld [vmem:[%s666 + $0x264] sm:$0xff]
                  %681 = vst [vmem:[%s667 + $0xc0] sm:$0xff] %v680
                  %v682 = vld [vmem:[%s666 + $0x26c] sm:$0xff]
                  %683 = vst [vmem:[%s667 + $0xc8] sm:$0xff] %v682
                  %v684 = vld [vmem:[%s666 + $0x330] sm:$0xff]
                  %685 = vst [vmem:[%s667 + $0x100] sm:$0xff] %v684
                  %v686 = vld [vmem:[%s666 + $0x338] sm:$0xff]
                  %687 = vst [vmem:[%s667 + $0x108] sm:$0xff] %v686
                  %v688 = vld [vmem:[%s666 + $0x3fc] sm:$0xff]
                  %689 = vst [vmem:[%s667 + $0x140] sm:$0xff] %v688
                  %v690 = vld [vmem:[%s666 + $0x404] sm:$0xff]
                  %691 = vst [vmem:[%s667 + $0x148] sm:$0xff] %v690
                  %v692 = vld [vmem:[%s666 + $0x4c8] sm:$0xff]
                  %693 = vst [vmem:[%s667 + $0x180] sm:$0xff] %v692
                  %v694 = vld [vmem:[%s666 + $0x4d0] sm:$0xff]
                  %695 = vst [vmem:[%s667 + $0x188] sm:$0xff] %v694
                  %v696 = vld [vmem:[%s666 + $0x594] sm:$0xff]
                  %697 = vst [vmem:[%s667 + $0x1c0] sm:$0xff] %v696
                  %v698 = vld [vmem:[%s666 + $0x59c] sm:$0xff]
                  %699 = vst [vmem:[%s667 + $0x1c8] sm:$0xff] %v698
                  %v700 = vld [vmem:[%s666 + $0x660] sm:$0xff]
                  %701 = vst [vmem:[%s667 + $0x200] sm:$0xff] %v700
                  %v702 = vld [vmem:[%s666 + $0x668] sm:$0xff]
                  %703 = vst [vmem:[%s667 + $0x208] sm:$0xff] %v702
                  %v704 = vld [vmem:[%s666 + $0x72c] sm:$0xff]
                  %705 = vst [vmem:[%s667 + $0x240] sm:$0xff] %v704
                  %v706 = vld [vmem:[%s666 + $0x734] sm:$0xff]
                  %707 = vst [vmem:[%s667 + $0x248] sm:$0xff] %v706
                  %v708 = vld [vmem:[%s666 + $0x7f8] sm:$0xff]
                  %709 = vst [vmem:[%s667 + $0x280] sm:$0xff] %v708
                  %v710 = vld [vmem:[%s666 + $0x800] sm:$0xff]
                  %711 = vst [vmem:[%s667 + $0x288] sm:$0xff] %v710
                  %v712 = vld [vmem:[%s666 + $0x8c4] sm:$0xff]
                  %713 = vst [vmem:[%s667 + $0x2c0] sm:$0xff] %v712
                  %v714 = vld [vmem:[%s666 + $0x8cc] sm:$0xff]
                  %715 = vst [vmem:[%s667 + $0x2c8] sm:$0xff] %v714
                  %v716 = vld [vmem:[%s666 + $0x990] sm:$0xff]
                  %717 = vst [vmem:[%s667 + $0x300] sm:$0xff] %v716
                  %v718 = vld [vmem:[%s666 + $0x998] sm:$0xff]
                  %719 = vst [vmem:[%s667 + $0x308] sm:$0xff] %v718
                  %v720 = vld [vmem:[%s666 + $0xa5c] sm:$0xff]
                  %721 = vst [vmem:[%s667 + $0x340] sm:$0xff] %v720
                  %v722 = vld [vmem:[%s666 + $0xa64] sm:$0xff]
                  %723 = vst [vmem:[%s667 + $0x348] sm:$0xff] %v722
                  %v724 = vld [vmem:[%s666 + $0xb28] sm:$0xff]
                  %725 = vst [vmem:[%s667 + $0x380] sm:$0xff] %v724
                  %v726 = vld [vmem:[%s666 + $0xb30] sm:$0xff]
                  %727 = vst [vmem:[%s667 + $0x388] sm:$0xff] %v726
                  %v728 = vld [vmem:[%s666 + $0xbf4] sm:$0xff]
                  %729 = vst [vmem:[%s667 + $0x3c0] sm:$0xff] %v728
                  %v730 = vld [vmem:[%s666 + $0xbfc] sm:$0xff]
                  %731 = vst [vmem:[%s667 + $0x3c8] sm:$0xff] %v730
                  %v732 = vld [vmem:[%s666 + $0xcc0] sm:$0xff]
                  %733 = vst [vmem:[%s667 + $0x400] sm:$0xff] %v732
                  %v734 = vld [vmem:[%s666 + $0xcc8] sm:$0xff]
                  %735 = vst [vmem:[%s667 + $0x408] sm:$0xff] %v734
                  %v736 = vld [vmem:[%s666 + $0xd8c] sm:$0xff]
                  %737 = vst [vmem:[%s667 + $0x440] sm:$0xff] %v736
                  %v738 = vld [vmem:[%s666 + $0xd94] sm:$0xff]
                  %739 = vst [vmem:[%s667 + $0x448] sm:$0xff] %v738
                  %v740 = vld [vmem:[%s666 + $0xe58] sm:$0xff]
                  %741 = vst [vmem:[%s667 + $0x480] sm:$0xff] %v740
                  %v742 = vld [vmem:[%s666 + $0xe60] sm:$0xff]
                  %743 = vst [vmem:[%s667 + $0x488] sm:$0xff] %v742
                  %v744 = vld [vmem:[%s666 + $0xf24] sm:$0xff]
                  %745 = vst [vmem:[%s667 + $0x4c0] sm:$0xff] %v744
                  %v746 = vld [vmem:[%s666 + $0xf2c] sm:$0xff]
                  %747 = vst [vmem:[%s667 + $0x4c8] sm:$0xff] %v746
                  %v748 = vld [vmem:[%s666 + $0xff0] sm:$0xff]
                  %749 = vst [vmem:[%s667 + $0x500] sm:$0xff] %v748
                  %v750 = vld [vmem:[%s666 + $0xff8] sm:$0xff]
                  %751 = vst [vmem:[%s667 + $0x508] sm:$0xff] %v750
                  %v752 = vld [vmem:[%s666 + $0x10bc] sm:$0xff]
                  %753 = vst [vmem:[%s667 + $0x540] sm:$0xff] %v752
                  %v754 = vld [vmem:[%s666 + $0x10c4] sm:$0xff]
                  %755 = vst [vmem:[%s667 + $0x548] sm:$0xff] %v754
                  %v756 = vld [vmem:[%s666 + $0x1188] sm:$0xff]
                  %757 = vst [vmem:[%s667 + $0x580] sm:$0xff] %v756
                  %v758 = vld [vmem:[%s666 + $0x1190] sm:$0xff]
                  %759 = vst [vmem:[%s667 + $0x588] sm:$0xff] %v758
                  %v760 = vld [vmem:[%s666 + $0x1254] sm:$0xff]
                  %761 = vst [vmem:[%s667 + $0x5c0] sm:$0xff] %v760
                  %v762 = vld [vmem:[%s666 + $0x125c] sm:$0xff]
                  %763 = vst [vmem:[%s667 + $0x5c8] sm:$0xff] %v762
                  %v764 = vld [vmem:[%s666 + $0x1320] sm:$0xff]
                  %765 = vst [vmem:[%s667 + $0x600] sm:$0xff] %v764
                  %v766 = vld [vmem:[%s666 + $0x1328] sm:$0xff]
                  %767 = vst [vmem:[%s667 + $0x608] sm:$0xff] %v766
                  %v768 = vld [vmem:[%s666 + $0x13ec] sm:$0xff]
                  %769 = vst [vmem:[%s667 + $0x640] sm:$0xff] %v768
                  %v770 = vld [vmem:[%s666 + $0x13f4] sm:$0xff]
                  %771 = vst [vmem:[%s667 + $0x648] sm:$0xff] %v770
                  %v772 = vld [vmem:[%s666 + $0x14b8] sm:$0xff]
                  %773 = vst [vmem:[%s667 + $0x680] sm:$0xff] %v772
                  %v774 = vld [vmem:[%s666 + $0x14c0] sm:$0xff]
                  %775 = vst [vmem:[%s667 + $0x688] sm:$0xff] %v774
                  %v776 = vld [vmem:[%s666 + $0x1584] sm:$0xff]
                  %777 = vst [vmem:[%s667 + $0x6c0] sm:$0xff] %v776
                  %v778 = vld [vmem:[%s666 + $0x158c] sm:$0xff]
                  %779 = vst [vmem:[%s667 + $0x6c8] sm:$0xff] %v778
                  %v780 = vld [vmem:[%s666 + $0x1650] sm:$0xff]
                  %781 = vst [vmem:[%s667 + $0x700] sm:$0xff] %v780
                  %v782 = vld [vmem:[%s666 + $0x1658] sm:$0xff]
                  %783 = vst [vmem:[%s667 + $0x708] sm:$0xff] %v782
                  %v784 = vld [vmem:[%s666 + $0x171c] sm:$0xff]
                  %785 = vst [vmem:[%s667 + $0x740] sm:$0xff] %v784
                  %v786 = vld [vmem:[%s666 + $0x1724] sm:$0xff]
                  %787 = vst [vmem:[%s667 + $0x748] sm:$0xff] %v786
                  %v788 = vld [vmem:[%s666 + $0x17e8] sm:$0xff]
                  %789 = vst [vmem:[%s667 + $0x780] sm:$0xff] %v788
                  %v790 = vld [vmem:[%s666 + $0x17f0] sm:$0xff]
                  %791 = vst [vmem:[%s667 + $0x788] sm:$0xff] %v790
                  %v792 = vld [vmem:[%s666 + $0x18b4] sm:$0xff]
                  %793 = vst [vmem:[%s667 + $0x7c0] sm:$0xff] %v792
                  %v794 = vld [vmem:[%s666 + $0x18bc] sm:$0xff]
                  %795 = vst [vmem:[%s667 + $0x7c8] sm:$0xff] %v794
                  %v796 = vld [vmem:[%s666 + $0x1980] sm:$0xff]
                  %797 = vst [vmem:[%s667 + $0x800] sm:$0xff] %v796
                  %v798 = vld [vmem:[%s666 + $0x1988] sm:$0xff]
                  %799 = vst [vmem:[%s667 + $0x808] sm:$0xff] %v798
                  %v800 = vld [vmem:[%s666 + $0x1a4c] sm:$0xff]
                  %801 = vst [vmem:[%s667 + $0x840] sm:$0xff] %v800
                  %v802 = vld [vmem:[%s666 + $0x1a54] sm:$0xff]
                  %803 = vst [vmem:[%s667 + $0x848] sm:$0xff] %v802
                  %v804 = vld [vmem:[%s666 + $0x1b18] sm:$0xff]
                  %805 = vst [vmem:[%s667 + $0x880] sm:$0xff] %v804
                  %v806 = vld [vmem:[%s666 + $0x1b20] sm:$0xff]
                  %807 = vst [vmem:[%s667 + $0x888] sm:$0xff] %v806
                  %v808 = vld [vmem:[%s666 + $0x1be4] sm:$0xff]
                  %809 = vst [vmem:[%s667 + $0x8c0] sm:$0xff] %v808
                  %v810 = vld [vmem:[%s666 + $0x1bec] sm:$0xff]
                  %811 = vst [vmem:[%s667 + $0x8c8] sm:$0xff] %v810
                  %v812 = vld [vmem:[%s666 + $0x1cb0] sm:$0xff]
                  %813 = vst [vmem:[%s667 + $0x900] sm:$0xff] %v812
                  %v814 = vld [vmem:[%s666 + $0x1cb8] sm:$0xff]
                  %815 = vst [vmem:[%s667 + $0x908] sm:$0xff] %v814
                  %v816 = vld [vmem:[%s666 + $0x1d7c] sm:$0xff]
                  %817 = vst [vmem:[%s667 + $0x940] sm:$0xff] %v816
                  %v818 = vld [vmem:[%s666 + $0x1d84] sm:$0xff]
                  %819 = vst [vmem:[%s667 + $0x948] sm:$0xff] %v818
                  %v820 = vld [vmem:[%s666 + $0x1e48] sm:$0xff]
                  %821 = vst [vmem:[%s667 + $0x980] sm:$0xff] %v820
                  %v822 = vld [vmem:[%s666 + $0x1e50] sm:$0xff]
                  %823 = vst [vmem:[%s667 + $0x988] sm:$0xff] %v822
                  %v824 = vld [vmem:[%s666 + $0x1f14] sm:$0xff]
                  %825 = vst [vmem:[%s667 + $0x9c0] sm:$0xff] %v824
                  %v826 = vld [vmem:[%s666 + $0x1f1c] sm:$0xff]
                  %827 = vst [vmem:[%s667 + $0x9c8] sm:$0xff] %v826
                  %v828 = vld [vmem:[%s666 + $0x1fe0] sm:$0xff]
                  %829 = vst [vmem:[%s667 + $0xa00] sm:$0xff] %v828
                  %v830 = vld [vmem:[%s666 + $0x1fe8] sm:$0xff]
                  %831 = vst [vmem:[%s667 + $0xa08] sm:$0xff] %v830
                  %v832 = vld [vmem:[%s666 + $0x20ac] sm:$0xff]
                  %833 = vst [vmem:[%s667 + $0xa40] sm:$0xff] %v832
                  %v834 = vld [vmem:[%s666 + $0x20b4] sm:$0xff]
                  %835 = vst [vmem:[%s667 + $0xa48] sm:$0xff] %v834
                  %v836 = vld [vmem:[%s666 + $0x2178] sm:$0xff]
                  %837 = vst [vmem:[%s667 + $0xa80] sm:$0xff] %v836
                  %v838 = vld [vmem:[%s666 + $0x2180] sm:$0xff]
                  %839 = vst [vmem:[%s667 + $0xa88] sm:$0xff] %v838
                  %v840 = vld [vmem:[%s666 + $0x2244] sm:$0xff]
                  %841 = vst [vmem:[%s667 + $0xac0] sm:$0xff] %v840
                  %v842 = vld [vmem:[%s666 + $0x224c] sm:$0xff]
                  %843 = vst [vmem:[%s667 + $0xac8] sm:$0xff] %v842
                  %v844 = vld [vmem:[%s666 + $0x2310] sm:$0xff]
                  %845 = vst [vmem:[%s667 + $0xb00] sm:$0xff] %v844
                  %v846 = vld [vmem:[%s666 + $0x2318] sm:$0xff]
                  %847 = vst [vmem:[%s667 + $0xb08] sm:$0xff] %v846
                  %v848 = vld [vmem:[%s666 + $0x23dc] sm:$0xff]
                  %849 = vst [vmem:[%s667 + $0xb40] sm:$0xff] %v848
                  %v850 = vld [vmem:[%s666 + $0x23e4] sm:$0xff]
                  %851 = vst [vmem:[%s667 + $0xb48] sm:$0xff] %v850
                  %v852 = vld [vmem:[%s666 + $0x24a8] sm:$0xff]
                  %853 = vst [vmem:[%s667 + $0xb80] sm:$0xff] %v852
                  %v854 = vld [vmem:[%s666 + $0x24b0] sm:$0xff]
                  %855 = vst [vmem:[%s667 + $0xb88] sm:$0xff] %v854
                  %v856 = vld [vmem:[%s666 + $0x2574] sm:$0xff]
                  %857 = vst [vmem:[%s667 + $0xbc0] sm:$0xff] %v856
                  %v858 = vld [vmem:[%s666 + $0x257c] sm:$0xff]
                  %859 = vst [vmem:[%s667 + $0xbc8] sm:$0xff] %v858
                  %v860 = vld [vmem:[%s666 + $0x2640] sm:$0xff]
                  %861 = vst [vmem:[%s667 + $0xc00] sm:$0xff] %v860
                  %v862 = vld [vmem:[%s666 + $0x2648] sm:$0xff]
                  %863 = vst [vmem:[%s667 + $0xc08] sm:$0xff] %v862
                  %v864 = vld [vmem:[%s666 + $0x270c] sm:$0xff]
                  %865 = vst [vmem:[%s667 + $0xc40] sm:$0xff] %v864
                  %v866 = vld [vmem:[%s666 + $0x2714] sm:$0xff]
                  %867 = vst [vmem:[%s667 + $0xc48] sm:$0xff] %v866
                  %v868 = vld [vmem:[%s666 + $0x27d8] sm:$0xff]
                  %869 = vst [vmem:[%s667 + $0xc80] sm:$0xff] %v868
                  %v870 = vld [vmem:[%s666 + $0x27e0] sm:$0xff]
                  %871 = vst [vmem:[%s667 + $0xc88] sm:$0xff] %v870
                  %v872 = vld [vmem:[%s666 + $0x28a4] sm:$0xff]
                  %873 = vst [vmem:[%s667 + $0xcc0] sm:$0xff] %v872
                  %v874 = vld [vmem:[%s666 + $0x28ac] sm:$0xff]
                  %875 = vst [vmem:[%s667 + $0xcc8] sm:$0xff] %v874
                  %v876 = vld [vmem:[%s666 + $0x2970] sm:$0xff]
                  %877 = vst [vmem:[%s667 + $0xd00] sm:$0xff] %v876
                  %v878 = vld [vmem:[%s666 + $0x2978] sm:$0xff]
                  %879 = vst [vmem:[%s667 + $0xd08] sm:$0xff] %v878
                  %v880 = vld [vmem:[%s666 + $0x2a3c] sm:$0xff]
                  %881 = vst [vmem:[%s667 + $0xd40] sm:$0xff] %v880
                  %v882 = vld [vmem:[%s666 + $0x2a44] sm:$0xff]
                  %883 = vst [vmem:[%s667 + $0xd48] sm:$0xff] %v882
                  %s884 = sadd.s32 1, %s665
                  %p885 = scmp.ge.s32.totalorder %s884, %s656
                  %s886 = scalar_select %p885, 0, %s884
                  %s887 = smul.u32 %s886, 16
                  %s888 = smul.u32 %s886, 16
                  %s889 = scalar_lea.vmem %s142, %s887
                  %s890 = scalar_lea.vmem %s134, %s888 [#allocation2]
                $region74: #{cnn_forward.6} parent=68 // loop_footer
                  %s662 = sadd.s32 %s660, 1
                $region75: #{cnn_forward.6} parent=68 // loop_footer_branch
                  %659 = sbr.rel target = $region71
                $region76: #{cnn_forward.6} parent=68 // loop_exit
                  _
                %s891 = sshrl.u32 %s655, 1
                %s892 = sand.u32 %s655, 1
                %s893 = smul.u32 %s891, 2
                %s894 = smul.u32 128, %s893
                %s895 = sshra.s32 %s894, 4
                %s896 = scalar_lea.vmem %s142, %s895
                %s897 = smul.u32 128, %s893
                %s898 = sshra.s32 %s897, 4
                %s899 = scalar_lea.vmem %s134, %s898 [#allocation2]
                // While loop
                $region77: #{cnn_forward.6} parent=68 // loop_pre_header
                  _
                $region78: #{cnn_forward.6} parent=68 // loop_header
                  %s903 = sphi 0, %s905
                  %p904 = scmp.ge.s32.totalorder %s903, %s892
                  %s908 = sphi 0, %s1021
                  %s909 = sphi %s896, %s1024
                  %s910 = sphi %s899, %s1025
                $region79: #{cnn_forward.6} parent=68 // loop_header_branch
                  %907 = sbr.rel (%p904) target = $region83
                $region80: #{cnn_forward.6} parent=68 // loop_body
                  %v911 = vld [vmem:[%s909] sm:$0xff]
                  %912 = vst [vmem:[%s910] sm:$0xff] %v911
                  %v913 = vld [vmem:[%s909 + $0xcc] sm:$0xff]
                  %914 = vst [vmem:[%s910 + $0x40] sm:$0xff] %v913
                  %v915 = vld [vmem:[%s909 + $0x198] sm:$0xff]
                  %916 = vst [vmem:[%s910 + $0x80] sm:$0xff] %v915
                  %v917 = vld [vmem:[%s909 + $0x264] sm:$0xff]
                  %918 = vst [vmem:[%s910 + $0xc0] sm:$0xff] %v917
                  %v919 = vld [vmem:[%s909 + $0x330] sm:$0xff]
                  %920 = vst [vmem:[%s910 + $0x100] sm:$0xff] %v919
                  %v921 = vld [vmem:[%s909 + $0x3fc] sm:$0xff]
                  %922 = vst [vmem:[%s910 + $0x140] sm:$0xff] %v921
                  %v923 = vld [vmem:[%s909 + $0x4c8] sm:$0xff]
                  %924 = vst [vmem:[%s910 + $0x180] sm:$0xff] %v923
                  %v925 = vld [vmem:[%s909 + $0x594] sm:$0xff]
                  %926 = vst [vmem:[%s910 + $0x1c0] sm:$0xff] %v925
                  %v927 = vld [vmem:[%s909 + $0x660] sm:$0xff]
                  %928 = vst [vmem:[%s910 + $0x200] sm:$0xff] %v927
                  %v929 = vld [vmem:[%s909 + $0x72c] sm:$0xff]
                  %930 = vst [vmem:[%s910 + $0x240] sm:$0xff] %v929
                  %v931 = vld [vmem:[%s909 + $0x7f8] sm:$0xff]
                  %932 = vst [vmem:[%s910 + $0x280] sm:$0xff] %v931
                  %v933 = vld [vmem:[%s909 + $0x8c4] sm:$0xff]
                  %934 = vst [vmem:[%s910 + $0x2c0] sm:$0xff] %v933
                  %v935 = vld [vmem:[%s909 + $0x990] sm:$0xff]
                  %936 = vst [vmem:[%s910 + $0x300] sm:$0xff] %v935
                  %v937 = vld [vmem:[%s909 + $0xa5c] sm:$0xff]
                  %938 = vst [vmem:[%s910 + $0x340] sm:$0xff] %v937
                  %v939 = vld [vmem:[%s909 + $0xb28] sm:$0xff]
                  %940 = vst [vmem:[%s910 + $0x380] sm:$0xff] %v939
                  %v941 = vld [vmem:[%s909 + $0xbf4] sm:$0xff]
                  %942 = vst [vmem:[%s910 + $0x3c0] sm:$0xff] %v941
                  %v943 = vld [vmem:[%s909 + $0xcc0] sm:$0xff]
                  %944 = vst [vmem:[%s910 + $0x400] sm:$0xff] %v943
                  %v945 = vld [vmem:[%s909 + $0xd8c] sm:$0xff]
                  %946 = vst [vmem:[%s910 + $0x440] sm:$0xff] %v945
                  %v947 = vld [vmem:[%s909 + $0xe58] sm:$0xff]
                  %948 = vst [vmem:[%s910 + $0x480] sm:$0xff] %v947
                  %v949 = vld [vmem:[%s909 + $0xf24] sm:$0xff]
                  %950 = vst [vmem:[%s910 + $0x4c0] sm:$0xff] %v949
                  %v951 = vld [vmem:[%s909 + $0xff0] sm:$0xff]
                  %952 = vst [vmem:[%s910 + $0x500] sm:$0xff] %v951
                  %v953 = vld [vmem:[%s909 + $0x10bc] sm:$0xff]
                  %954 = vst [vmem:[%s910 + $0x540] sm:$0xff] %v953
                  %v955 = vld [vmem:[%s909 + $0x1188] sm:$0xff]
                  %956 = vst [vmem:[%s910 + $0x580] sm:$0xff] %v955
                  %v957 = vld [vmem:[%s909 + $0x1254] sm:$0xff]
                  %958 = vst [vmem:[%s910 + $0x5c0] sm:$0xff] %v957
                  %v959 = vld [vmem:[%s909 + $0x1320] sm:$0xff]
                  %960 = vst [vmem:[%s910 + $0x600] sm:$0xff] %v959
                  %v961 = vld [vmem:[%s909 + $0x13ec] sm:$0xff]
                  %962 = vst [vmem:[%s910 + $0x640] sm:$0xff] %v961
                  %v963 = vld [vmem:[%s909 + $0x14b8] sm:$0xff]
                  %964 = vst [vmem:[%s910 + $0x680] sm:$0xff] %v963
                  %v965 = vld [vmem:[%s909 + $0x1584] sm:$0xff]
                  %966 = vst [vmem:[%s910 + $0x6c0] sm:$0xff] %v965
                  %v967 = vld [vmem:[%s909 + $0x1650] sm:$0xff]
                  %968 = vst [vmem:[%s910 + $0x700] sm:$0xff] %v967
                  %v969 = vld [vmem:[%s909 + $0x171c] sm:$0xff]
                  %970 = vst [vmem:[%s910 + $0x740] sm:$0xff] %v969
                  %v971 = vld [vmem:[%s909 + $0x17e8] sm:$0xff]
                  %972 = vst [vmem:[%s910 + $0x780] sm:$0xff] %v971
                  %v973 = vld [vmem:[%s909 + $0x18b4] sm:$0xff]
                  %974 = vst [vmem:[%s910 + $0x7c0] sm:$0xff] %v973
                  %v975 = vld [vmem:[%s909 + $0x1980] sm:$0xff]
                  %976 = vst [vmem:[%s910 + $0x800] sm:$0xff] %v975
                  %v977 = vld [vmem:[%s909 + $0x1a4c] sm:$0xff]
                  %978 = vst [vmem:[%s910 + $0x840] sm:$0xff] %v977
                  %v979 = vld [vmem:[%s909 + $0x1b18] sm:$0xff]
                  %980 = vst [vmem:[%s910 + $0x880] sm:$0xff] %v979
                  %v981 = vld [vmem:[%s909 + $0x1be4] sm:$0xff]
                  %982 = vst [vmem:[%s910 + $0x8c0] sm:$0xff] %v981
                  %v983 = vld [vmem:[%s909 + $0x1cb0] sm:$0xff]
                  %984 = vst [vmem:[%s910 + $0x900] sm:$0xff] %v983
                  %v985 = vld [vmem:[%s909 + $0x1d7c] sm:$0xff]
                  %986 = vst [vmem:[%s910 + $0x940] sm:$0xff] %v985
                  %v987 = vld [vmem:[%s909 + $0x1e48] sm:$0xff]
                  %988 = vst [vmem:[%s910 + $0x980] sm:$0xff] %v987
                  %v989 = vld [vmem:[%s909 + $0x1f14] sm:$0xff]
                  %990 = vst [vmem:[%s910 + $0x9c0] sm:$0xff] %v989
                  %v991 = vld [vmem:[%s909 + $0x1fe0] sm:$0xff]
                  %992 = vst [vmem:[%s910 + $0xa00] sm:$0xff] %v991
                  %v993 = vld [vmem:[%s909 + $0x20ac] sm:$0xff]
                  %994 = vst [vmem:[%s910 + $0xa40] sm:$0xff] %v993
                  %v995 = vld [vmem:[%s909 + $0x2178] sm:$0xff]
                  %996 = vst [vmem:[%s910 + $0xa80] sm:$0xff] %v995
                  %v997 = vld [vmem:[%s909 + $0x2244] sm:$0xff]
                  %998 = vst [vmem:[%s910 + $0xac0] sm:$0xff] %v997
                  %v999 = vld [vmem:[%s909 + $0x2310] sm:$0xff]
                  %1000 = vst [vmem:[%s910 + $0xb00] sm:$0xff] %v999
                  %v1001 = vld [vmem:[%s909 + $0x23dc] sm:$0xff]
                  %1002 = vst [vmem:[%s910 + $0xb40] sm:$0xff] %v1001
                  %v1003 = vld [vmem:[%s909 + $0x24a8] sm:$0xff]
                  %1004 = vst [vmem:[%s910 + $0xb80] sm:$0xff] %v1003
                  %v1005 = vld [vmem:[%s909 + $0x2574] sm:$0xff]
                  %1006 = vst [vmem:[%s910 + $0xbc0] sm:$0xff] %v1005
                  %v1007 = vld [vmem:[%s909 + $0x2640] sm:$0xff]
                  %1008 = vst [vmem:[%s910 + $0xc00] sm:$0xff] %v1007
                  %v1009 = vld [vmem:[%s909 + $0x270c] sm:$0xff]
                  %1010 = vst [vmem:[%s910 + $0xc40] sm:$0xff] %v1009
                  %v1011 = vld [vmem:[%s909 + $0x27d8] sm:$0xff]
                  %1012 = vst [vmem:[%s910 + $0xc80] sm:$0xff] %v1011
                  %v1013 = vld [vmem:[%s909 + $0x28a4] sm:$0xff]
                  %1014 = vst [vmem:[%s910 + $0xcc0] sm:$0xff] %v1013
                  %v1015 = vld [vmem:[%s909 + $0x2970] sm:$0xff]
                  %1016 = vst [vmem:[%s910 + $0xd00] sm:$0xff] %v1015
                  %v1017 = vld [vmem:[%s909 + $0x2a3c] sm:$0xff]
                  %1018 = vst [vmem:[%s910 + $0xd40] sm:$0xff] %v1017
                  %s1019 = sadd.s32 1, %s908
                  %p1020 = scmp.ge.s32.totalorder %s1019, %s892
                  %s1021 = scalar_select %p1020, 0, %s1019
                  %s1022 = smul.u32 %s1021, 8
                  %s1023 = smul.u32 %s1021, 8
                  %s1024 = scalar_lea.vmem %s896, %s1022
                  %s1025 = scalar_lea.vmem %s899, %s1023 [#allocation2]
                $region81: #{cnn_forward.6} parent=68 // loop_footer
                  %s905 = sadd.s32 %s903, 1
                $region82: #{cnn_forward.6} parent=68 // loop_footer_branch
                  %902 = sbr.rel target = $region78
                $region83: #{cnn_forward.6} parent=68 // loop_exit
                  _
                %s1026 = sshllo.u32 0, %s650
                loop: start=0, step=1, limit=1
                $region84: #{cnn_forward.6} parent=68 // loop_pre_header
                  _
                $region85: #{cnn_forward.6} parent=68 // loop_header
                  %s1028 = sphi 0, %s1032
                  %p1029 = scmp.ge.s32.totalorder %s1028, 1
                  %s1033 = sphi %s652, %s652
                  %s1034 = sphi %s654, %s654
                $region86: #{cnn_forward.6} parent=68 // loop_header_branch
                  %1031 = sbr.rel (%p1029) target = $region90
                $region87: #{cnn_forward.6} parent=68 // loop_body
                  %v1035 = vld [vmem:[%s1033] sm:%s1026]
                  %1036 = vst [vmem:[%s1034] sm:%s1026] %v1035
                  %v1037 = vld [vmem:[%s1033 + $0xcc] sm:%s1026]
                  %1038 = vst [vmem:[%s1034 + $0x40] sm:%s1026] %v1037
                  %v1039 = vld [vmem:[%s1033 + $0x198] sm:%s1026]
                  %1040 = vst [vmem:[%s1034 + $0x80] sm:%s1026] %v1039
                  %v1041 = vld [vmem:[%s1033 + $0x264] sm:%s1026]
                  %1042 = vst [vmem:[%s1034 + $0xc0] sm:%s1026] %v1041
                  %v1043 = vld [vmem:[%s1033 + $0x330] sm:%s1026]
                  %1044 = vst [vmem:[%s1034 + $0x100] sm:%s1026] %v1043
                  %v1045 = vld [vmem:[%s1033 + $0x3fc] sm:%s1026]
                  %1046 = vst [vmem:[%s1034 + $0x140] sm:%s1026] %v1045
                  %v1047 = vld [vmem:[%s1033 + $0x4c8] sm:%s1026]
                  %1048 = vst [vmem:[%s1034 + $0x180] sm:%s1026] %v1047
                  %v1049 = vld [vmem:[%s1033 + $0x594] sm:%s1026]
                  %1050 = vst [vmem:[%s1034 + $0x1c0] sm:%s1026] %v1049
                  %v1051 = vld [vmem:[%s1033 + $0x660] sm:%s1026]
                  %1052 = vst [vmem:[%s1034 + $0x200] sm:%s1026] %v1051
                  %v1053 = vld [vmem:[%s1033 + $0x72c] sm:%s1026]
                  %1054 = vst [vmem:[%s1034 + $0x240] sm:%s1026] %v1053
                  %v1055 = vld [vmem:[%s1033 + $0x7f8] sm:%s1026]
                  %1056 = vst [vmem:[%s1034 + $0x280] sm:%s1026] %v1055
                  %v1057 = vld [vmem:[%s1033 + $0x8c4] sm:%s1026]
                  %1058 = vst [vmem:[%s1034 + $0x2c0] sm:%s1026] %v1057
                  %v1059 = vld [vmem:[%s1033 + $0x990] sm:%s1026]
                  %1060 = vst [vmem:[%s1034 + $0x300] sm:%s1026] %v1059
                  %v1061 = vld [vmem:[%s1033 + $0xa5c] sm:%s1026]
                  %1062 = vst [vmem:[%s1034 + $0x340] sm:%s1026] %v1061
                  %v1063 = vld [vmem:[%s1033 + $0xb28] sm:%s1026]
                  %1064 = vst [vmem:[%s1034 + $0x380] sm:%s1026] %v1063
                  %v1065 = vld [vmem:[%s1033 + $0xbf4] sm:%s1026]
                  %1066 = vst [vmem:[%s1034 + $0x3c0] sm:%s1026] %v1065
                  %v1067 = vld [vmem:[%s1033 + $0xcc0] sm:%s1026]
                  %1068 = vst [vmem:[%s1034 + $0x400] sm:%s1026] %v1067
                  %v1069 = vld [vmem:[%s1033 + $0xd8c] sm:%s1026]
                  %1070 = vst [vmem:[%s1034 + $0x440] sm:%s1026] %v1069
                  %v1071 = vld [vmem:[%s1033 + $0xe58] sm:%s1026]
                  %1072 = vst [vmem:[%s1034 + $0x480] sm:%s1026] %v1071
                  %v1073 = vld [vmem:[%s1033 + $0xf24] sm:%s1026]
                  %1074 = vst [vmem:[%s1034 + $0x4c0] sm:%s1026] %v1073
                  %v1075 = vld [vmem:[%s1033 + $0xff0] sm:%s1026]
                  %1076 = vst [vmem:[%s1034 + $0x500] sm:%s1026] %v1075
                  %v1077 = vld [vmem:[%s1033 + $0x10bc] sm:%s1026]
                  %1078 = vst [vmem:[%s1034 + $0x540] sm:%s1026] %v1077
                  %v1079 = vld [vmem:[%s1033 + $0x1188] sm:%s1026]
                  %1080 = vst [vmem:[%s1034 + $0x580] sm:%s1026] %v1079
                  %v1081 = vld [vmem:[%s1033 + $0x1254] sm:%s1026]
                  %1082 = vst [vmem:[%s1034 + $0x5c0] sm:%s1026] %v1081
                  %v1083 = vld [vmem:[%s1033 + $0x1320] sm:%s1026]
                  %1084 = vst [vmem:[%s1034 + $0x600] sm:%s1026] %v1083
                  %v1085 = vld [vmem:[%s1033 + $0x13ec] sm:%s1026]
                  %1086 = vst [vmem:[%s1034 + $0x640] sm:%s1026] %v1085
                  %v1087 = vld [vmem:[%s1033 + $0x14b8] sm:%s1026]
                  %1088 = vst [vmem:[%s1034 + $0x680] sm:%s1026] %v1087
                  %v1089 = vld [vmem:[%s1033 + $0x1584] sm:%s1026]
                  %1090 = vst [vmem:[%s1034 + $0x6c0] sm:%s1026] %v1089
                  %v1091 = vld [vmem:[%s1033 + $0x1650] sm:%s1026]
                  %1092 = vst [vmem:[%s1034 + $0x700] sm:%s1026] %v1091
                  %v1093 = vld [vmem:[%s1033 + $0x171c] sm:%s1026]
                  %1094 = vst [vmem:[%s1034 + $0x740] sm:%s1026] %v1093
                  %v1095 = vld [vmem:[%s1033 + $0x17e8] sm:%s1026]
                  %1096 = vst [vmem:[%s1034 + $0x780] sm:%s1026] %v1095
                  %v1097 = vld [vmem:[%s1033 + $0x18b4] sm:%s1026]
                  %1098 = vst [vmem:[%s1034 + $0x7c0] sm:%s1026] %v1097
                  %v1099 = vld [vmem:[%s1033 + $0x1980] sm:%s1026]
                  %1100 = vst [vmem:[%s1034 + $0x800] sm:%s1026] %v1099
                  %v1101 = vld [vmem:[%s1033 + $0x1a4c] sm:%s1026]
                  %1102 = vst [vmem:[%s1034 + $0x840] sm:%s1026] %v1101
                  %v1103 = vld [vmem:[%s1033 + $0x1b18] sm:%s1026]
                  %1104 = vst [vmem:[%s1034 + $0x880] sm:%s1026] %v1103
                  %v1105 = vld [vmem:[%s1033 + $0x1be4] sm:%s1026]
                  %1106 = vst [vmem:[%s1034 + $0x8c0] sm:%s1026] %v1105
                  %v1107 = vld [vmem:[%s1033 + $0x1cb0] sm:%s1026]
                  %1108 = vst [vmem:[%s1034 + $0x900] sm:%s1026] %v1107
                  %v1109 = vld [vmem:[%s1033 + $0x1d7c] sm:%s1026]
                  %1110 = vst [vmem:[%s1034 + $0x940] sm:%s1026] %v1109
                  %v1111 = vld [vmem:[%s1033 + $0x1e48] sm:%s1026]
                  %1112 = vst [vmem:[%s1034 + $0x980] sm:%s1026] %v1111
                  %v1113 = vld [vmem:[%s1033 + $0x1f14] sm:%s1026]
                  %1114 = vst [vmem:[%s1034 + $0x9c0] sm:%s1026] %v1113
                  %v1115 = vld [vmem:[%s1033 + $0x1fe0] sm:%s1026]
                  %1116 = vst [vmem:[%s1034 + $0xa00] sm:%s1026] %v1115
                  %v1117 = vld [vmem:[%s1033 + $0x20ac] sm:%s1026]
                  %1118 = vst [vmem:[%s1034 + $0xa40] sm:%s1026] %v1117
                  %v1119 = vld [vmem:[%s1033 + $0x2178] sm:%s1026]
                  %1120 = vst [vmem:[%s1034 + $0xa80] sm:%s1026] %v1119
                  %v1121 = vld [vmem:[%s1033 + $0x2244] sm:%s1026]
                  %1122 = vst [vmem:[%s1034 + $0xac0] sm:%s1026] %v1121
                  %v1123 = vld [vmem:[%s1033 + $0x2310] sm:%s1026]
                  %1124 = vst [vmem:[%s1034 + $0xb00] sm:%s1026] %v1123
                  %v1125 = vld [vmem:[%s1033 + $0x23dc] sm:%s1026]
                  %1126 = vst [vmem:[%s1034 + $0xb40] sm:%s1026] %v1125
                  %v1127 = vld [vmem:[%s1033 + $0x24a8] sm:%s1026]
                  %1128 = vst [vmem:[%s1034 + $0xb80] sm:%s1026] %v1127
                  %v1129 = vld [vmem:[%s1033 + $0x2574] sm:%s1026]
                  %1130 = vst [vmem:[%s1034 + $0xbc0] sm:%s1026] %v1129
                  %v1131 = vld [vmem:[%s1033 + $0x2640] sm:%s1026]
                  %1132 = vst [vmem:[%s1034 + $0xc00] sm:%s1026] %v1131
                  %v1133 = vld [vmem:[%s1033 + $0x270c] sm:%s1026]
                  %1134 = vst [vmem:[%s1034 + $0xc40] sm:%s1026] %v1133
                  %v1135 = vld [vmem:[%s1033 + $0x27d8] sm:%s1026]
                  %1136 = vst [vmem:[%s1034 + $0xc80] sm:%s1026] %v1135
                  %v1137 = vld [vmem:[%s1033 + $0x28a4] sm:%s1026]
                  %1138 = vst [vmem:[%s1034 + $0xcc0] sm:%s1026] %v1137
                  %v1139 = vld [vmem:[%s1033 + $0x2970] sm:%s1026]
                  %1140 = vst [vmem:[%s1034 + $0xd00] sm:%s1026] %v1139
                  %v1141 = vld [vmem:[%s1033 + $0x2a3c] sm:%s1026]
                  %1142 = vst [vmem:[%s1034 + $0xd40] sm:%s1026] %v1141
                $region88: #{cnn_forward.6} parent=68 // loop_footer
                  %s1032 = sadd.s32 1, %s1028
                $region89: #{cnn_forward.6} parent=68 // loop_footer_branch
                  %1027 = sbr.rel target = $region85
                $region90: #{cnn_forward.6} parent=68 // loop_exit
                  _
              $region69: #{cnn_forward.6} parent=35 // pred_fallthru
                _
            $region36: #{cnn_forward.6} parent=31 // pred_fallthru
              _
            // Predicated region
            $region37: #{cnn_forward.6} parent=31 // pred_check
              %p151 = pneg %p147
            $region38: #{cnn_forward.6} parent=31 // pred_check_branch
              %153 = sbr.rel (%p151) target = $region40
            $region39: #{cnn_forward.6} parent=31 // pred_region
              %s154 = sshllo.u32 0, %s143
              loop: start=0, step=1, limit=1
              $region41: #{cnn_forward.6} parent=39 // loop_pre_header
                _
              $region42: #{cnn_forward.6} parent=39 // loop_header
                %s156 = sphi 0, %s160
                %p157 = scmp.ge.s32.totalorder %s156, 1
                %s161 = sphi %s142, %s142
                %s162 = sphi %s134, %s134
              $region43: #{cnn_forward.6} parent=39 // loop_header_branch
                %159 = sbr.rel (%p157) target = $region47
              $region44: #{cnn_forward.6} parent=39 // loop_body
                %v163 = vld [vmem:[%s161] sm:%s154]
                %164 = vst [vmem:[%s162] sm:%s154] %v163
                %v165 = vld [vmem:[%s161 + $0xcc] sm:%s154]
                %166 = vst [vmem:[%s162 + $0x40] sm:%s154] %v165
                %v167 = vld [vmem:[%s161 + $0x198] sm:%s154]
                %168 = vst [vmem:[%s162 + $0x80] sm:%s154] %v167
                %v169 = vld [vmem:[%s161 + $0x264] sm:%s154]
                %170 = vst [vmem:[%s162 + $0xc0] sm:%s154] %v169
                %v171 = vld [vmem:[%s161 + $0x330] sm:%s154]
                %172 = vst [vmem:[%s162 + $0x100] sm:%s154] %v171
                %v173 = vld [vmem:[%s161 + $0x3fc] sm:%s154]
                %174 = vst [vmem:[%s162 + $0x140] sm:%s154] %v173
                %v175 = vld [vmem:[%s161 + $0x4c8] sm:%s154]
                %176 = vst [vmem:[%s162 + $0x180] sm:%s154] %v175
                %v177 = vld [vmem:[%s161 + $0x594] sm:%s154]
                %178 = vst [vmem:[%s162 + $0x1c0] sm:%s154] %v177
                %v179 = vld [vmem:[%s161 + $0x660] sm:%s154]
                %180 = vst [vmem:[%s162 + $0x200] sm:%s154] %v179
                %v181 = vld [vmem:[%s161 + $0x72c] sm:%s154]
                %182 = vst [vmem:[%s162 + $0x240] sm:%s154] %v181
                %v183 = vld [vmem:[%s161 + $0x7f8] sm:%s154]
                %184 = vst [vmem:[%s162 + $0x280] sm:%s154] %v183
                %v185 = vld [vmem:[%s161 + $0x8c4] sm:%s154]
                %186 = vst [vmem:[%s162 + $0x2c0] sm:%s154] %v185
                %v187 = vld [vmem:[%s161 + $0x990] sm:%s154]
                %188 = vst [vmem:[%s162 + $0x300] sm:%s154] %v187
                %v189 = vld [vmem:[%s161 + $0xa5c] sm:%s154]
                %190 = vst [vmem:[%s162 + $0x340] sm:%s154] %v189
                %v191 = vld [vmem:[%s161 + $0xb28] sm:%s154]
                %192 = vst [vmem:[%s162 + $0x380] sm:%s154] %v191
                %v193 = vld [vmem:[%s161 + $0xbf4] sm:%s154]
                %194 = vst [vmem:[%s162 + $0x3c0] sm:%s154] %v193
                %v195 = vld [vmem:[%s161 + $0xcc0] sm:%s154]
                %196 = vst [vmem:[%s162 + $0x400] sm:%s154] %v195
                %v197 = vld [vmem:[%s161 + $0xd8c] sm:%s154]
                %198 = vst [vmem:[%s162 + $0x440] sm:%s154] %v197
                %v199 = vld [vmem:[%s161 + $0xe58] sm:%s154]
                %200 = vst [vmem:[%s162 + $0x480] sm:%s154] %v199
                %v201 = vld [vmem:[%s161 + $0xf24] sm:%s154]
                %202 = vst [vmem:[%s162 + $0x4c0] sm:%s154] %v201
                %v203 = vld [vmem:[%s161 + $0xff0] sm:%s154]
                %204 = vst [vmem:[%s162 + $0x500] sm:%s154] %v203
                %v205 = vld [vmem:[%s161 + $0x10bc] sm:%s154]
                %206 = vst [vmem:[%s162 + $0x540] sm:%s154] %v205
                %v207 = vld [vmem:[%s161 + $0x1188] sm:%s154]
                %208 = vst [vmem:[%s162 + $0x580] sm:%s154] %v207
                %v209 = vld [vmem:[%s161 + $0x1254] sm:%s154]
                %210 = vst [vmem:[%s162 + $0x5c0] sm:%s154] %v209
                %v211 = vld [vmem:[%s161 + $0x1320] sm:%s154]
                %212 = vst [vmem:[%s162 + $0x600] sm:%s154] %v211
                %v213 = vld [vmem:[%s161 + $0x13ec] sm:%s154]
                %214 = vst [vmem:[%s162 + $0x640] sm:%s154] %v213
                %v215 = vld [vmem:[%s161 + $0x14b8] sm:%s154]
                %216 = vst [vmem:[%s162 + $0x680] sm:%s154] %v215
                %v217 = vld [vmem:[%s161 + $0x1584] sm:%s154]
                %218 = vst [vmem:[%s162 + $0x6c0] sm:%s154] %v217
                %v219 = vld [vmem:[%s161 + $0x1650] sm:%s154]
                %220 = vst [vmem:[%s162 + $0x700] sm:%s154] %v219
                %v221 = vld [vmem:[%s161 + $0x171c] sm:%s154]
                %222 = vst [vmem:[%s162 + $0x740] sm:%s154] %v221
                %v223 = vld [vmem:[%s161 + $0x17e8] sm:%s154]
                %224 = vst [vmem:[%s162 + $0x780] sm:%s154] %v223
                %v225 = vld [vmem:[%s161 + $0x18b4] sm:%s154]
                %226 = vst [vmem:[%s162 + $0x7c0] sm:%s154] %v225
                %v227 = vld [vmem:[%s161 + $0x1980] sm:%s154]
                %228 = vst [vmem:[%s162 + $0x800] sm:%s154] %v227
                %v229 = vld [vmem:[%s161 + $0x1a4c] sm:%s154]
                %230 = vst [vmem:[%s162 + $0x840] sm:%s154] %v229
                %v231 = vld [vmem:[%s161 + $0x1b18] sm:%s154]
                %232 = vst [vmem:[%s162 + $0x880] sm:%s154] %v231
                %v233 = vld [vmem:[%s161 + $0x1be4] sm:%s154]
                %234 = vst [vmem:[%s162 + $0x8c0] sm:%s154] %v233
                %v235 = vld [vmem:[%s161 + $0x1cb0] sm:%s154]
                %236 = vst [vmem:[%s162 + $0x900] sm:%s154] %v235
                %v237 = vld [vmem:[%s161 + $0x1d7c] sm:%s154]
                %238 = vst [vmem:[%s162 + $0x940] sm:%s154] %v237
                %v239 = vld [vmem:[%s161 + $0x1e48] sm:%s154]
                %240 = vst [vmem:[%s162 + $0x980] sm:%s154] %v239
                %v241 = vld [vmem:[%s161 + $0x1f14] sm:%s154]
                %242 = vst [vmem:[%s162 + $0x9c0] sm:%s154] %v241
                %v243 = vld [vmem:[%s161 + $0x1fe0] sm:%s154]
                %244 = vst [vmem:[%s162 + $0xa00] sm:%s154] %v243
                %v245 = vld [vmem:[%s161 + $0x20ac] sm:%s154]
                %246 = vst [vmem:[%s162 + $0xa40] sm:%s154] %v245
                %v247 = vld [vmem:[%s161 + $0x2178] sm:%s154]
                %248 = vst [vmem:[%s162 + $0xa80] sm:%s154] %v247
                %v249 = vld [vmem:[%s161 + $0x2244] sm:%s154]
                %250 = vst [vmem:[%s162 + $0xac0] sm:%s154] %v249
                %v251 = vld [vmem:[%s161 + $0x2310] sm:%s154]
                %252 = vst [vmem:[%s162 + $0xb00] sm:%s154] %v251
                %v253 = vld [vmem:[%s161 + $0x23dc] sm:%s154]
                %254 = vst [vmem:[%s162 + $0xb40] sm:%s154] %v253
                %v255 = vld [vmem:[%s161 + $0x24a8] sm:%s154]
                %256 = vst [vmem:[%s162 + $0xb80] sm:%s154] %v255
                %v257 = vld [vmem:[%s161 + $0x2574] sm:%s154]
                %258 = vst [vmem:[%s162 + $0xbc0] sm:%s154] %v257
                %v259 = vld [vmem:[%s161 + $0x2640] sm:%s154]
                %260 = vst [vmem:[%s162 + $0xc00] sm:%s154] %v259
                %v261 = vld [vmem:[%s161 + $0x270c] sm:%s154]
                %262 = vst [vmem:[%s162 + $0xc40] sm:%s154] %v261
                %v263 = vld [vmem:[%s161 + $0x27d8] sm:%s154]
                %264 = vst [vmem:[%s162 + $0xc80] sm:%s154] %v263
                %v265 = vld [vmem:[%s161 + $0x28a4] sm:%s154]
                %266 = vst [vmem:[%s162 + $0xcc0] sm:%s154] %v265
                %v267 = vld [vmem:[%s161 + $0x2970] sm:%s154]
                %268 = vst [vmem:[%s162 + $0xd00] sm:%s154] %v267
                %v269 = vld [vmem:[%s161 + $0x2a3c] sm:%s154]
                %270 = vst [vmem:[%s162 + $0xd40] sm:%s154] %v269
              $region45: #{cnn_forward.6} parent=39 // loop_footer
                %s160 = sadd.s32 1, %s156
              $region46: #{cnn_forward.6} parent=39 // loop_footer_branch
                %155 = sbr.rel target = $region42
              $region47: #{cnn_forward.6} parent=39 // loop_exit
                _
            $region40: #{cnn_forward.6} parent=31 // pred_fallthru
              _
          $region32: #{cnn_forward.6} parent=27 // pred_fallthru
            _
          %1143 = vnop
        $region28: #{cnn_forward.6} parent=23 // pred_fallthru
          _
      $region24: #{cnn_forward.6} parent=5 // pred_fallthru
        _
      %p1144 = scmp.le.s32.totalorder 1, %s9
      %p1145 = scmp.lt.s32.totalorder %s9, 5
      %p1146 = pnand %p1144, %p1145
      %p1147 = pneg %p1146
      // Predicated region
      $region91: #{cnn_forward.6} parent=5 // pred_check
        _
      $region92: #{cnn_forward.6} parent=5 // pred_check_branch
        %1149 = sbr.rel (%p1146) target = $region94
      $region93: #{cnn_forward.6} parent=5 // pred_region
        %s1150 = ssub.s32 %s9, 1
        %s1151 = sand.u32 %s43, 1
        %s1152 = sand.u32 %s43, 1
        %s1153 = smul.addr %s1152, 3456
        %s1154 = scalar_lea.vmem [#allocation2], %s1153
        // Predicated region
        $region95: #{cnn_forward.6} parent=93 // pred_check
          %p1155 = pneg %p56
        $region96: #{cnn_forward.6} parent=93 // pred_check_branch
          %1157 = sbr.rel (%p1155) target = $region98
        $region97: #{cnn_forward.6} parent=93 // pred_region
          _
        $region98: #{cnn_forward.6} parent=93 // pred_fallthru
          _
        %p1158 = pneg %p30
        %p1159 = pneg %p27
        %s1160 = sand.u32 %s43, 1
        %s1161 = sand.u32 %s43, 1
        %s1162 = smul.addr %s1161, 3456
        %s1163 = scalar_lea.vmem [#allocation2], %s1162
        %p1164 = pneg %p56
        %p1165 = pneg %p53
        %p1166 = pneg %p77
        %p1167 = pneg %p74
        %p1168 = pneg %p103
        %p1169 = pneg %p100
        %s1170 = sand.u32 %s90, 1
        %s1171 = sand.u32 %s90, 1
        %s1172 = smul.addr %s1171, 64
        %s1173 = scalar_lea.vmem [#allocation3], %s1172
        %s1174 = smul.u32 16, %s14
        %s1175 = ssub.s32 51, %s1174
        %p1176 = scmp.lt.s32.totalorder %s1175, 16
        %s1177 = scalar_select %p1176, %s1175, 16
        %s1178 = smul.u32 3456, %s1177
        %s1179 = smul.u32 16, %s14
        %s1180 = ssub.s32 51, %s1179
        %p1181 = scmp.lt.s32.totalorder %s1180, 16
        %s1182 = scalar_select %p1181, %s1180, 16
        %s1183 = smul.u32 64, %s1182
        %v1185 = vld [vmem:[%s0] sm:$0xff]
        %v1186 = vld [vmem:[%s0 + $0x8] sm:$0xff]
        %v1187 = vld [vmem:[%s1154] sm:$0xff]
        %v1188 = vld [vmem:[%s1154 + $0x8] sm:$0xff]
        %v1189 = vld [vmem:[%s1154 + $0x10] sm:$0xff]
        %v1190 = vld [vmem:[%s1154 + $0x18] sm:$0xff]
        %v1191 = vld [vmem:[%s1154 + $0x20] sm:$0xff]
        %v1192 = vld [vmem:[%s1154 + $0x28] sm:$0xff]
        %v1193 = vld [vmem:[%s1154 + $0x30] sm:$0xff]
        %v1194 = vld [vmem:[%s1154 + $0x38] sm:$0xff]
        %v1195 = vld [vmem:[%s1154 + $0x40] sm:$0xff]
        %v1196 = vld [vmem:[%s1154 + $0x48] sm:$0xff]
        %v1197 = vld [vmem:[%s1154 + $0x50] sm:$0xff]
        %v1198 = vld [vmem:[%s1154 + $0x58] sm:$0xff]
        %v1199 = vld [vmem:[%s1154 + $0x60] sm:$0xff]
        %v1200 = vld [vmem:[%s1154 + $0x68] sm:$0xff]
        %v1201 = vld [vmem:[%s1154 + $0x70] sm:$0xff]
        %v1202 = vld [vmem:[%s1154 + $0x78] sm:$0xff]
        %v1203 = vld [vmem:[%s1154 + $0x80] sm:$0xff]
        %v1204 = vld [vmem:[%s1154 + $0x88] sm:$0xff]
        %v1205 = vld [vmem:[%s1154 + $0x90] sm:$0xff]
        %v1206 = vld [vmem:[%s1154 + $0x98] sm:$0xff]
        %v1207 = vld [vmem:[%s1154 + $0xa0] sm:$0xff]
        %v1208 = vld [vmem:[%s1154 + $0xa8] sm:$0xff]
        %v1209 = vld [vmem:[%s1154 + $0xb0] sm:$0xff]
        %v1210 = vld [vmem:[%s1154 + $0xb8] sm:$0xff]
        %v1211 = vld [vmem:[%s1154 + $0xc0] sm:$0xff]
        %v1212 = vld [vmem:[%s1154 + $0xc8] sm:$0xff]
        %v1213 = vld [vmem:[%s1154 + $0xd0] sm:$0xff]
        %v1214 = vld [vmem:[%s1154 + $0xd8] sm:$0xff]
        %v1215 = vld [vmem:[%s1154 + $0xe0] sm:$0xff]
        %v1216 = vld [vmem:[%s1154 + $0xe8] sm:$0xff]
        %v1217 = vld [vmem:[%s1154 + $0xf0] sm:$0xff]
        %v1218 = vld [vmem:[%s1154 + $0xf8] sm:$0xff]
        %v1219 = vld [vmem:[%s1154 + $0x100] sm:$0xff]
        %v1220 = vld [vmem:[%s1154 + $0x108] sm:$0xff]
        %v1221 = vld [vmem:[%s1154 + $0x110] sm:$0xff]
        %v1222 = vld [vmem:[%s1154 + $0x118] sm:$0xff]
        %v1223 = vld [vmem:[%s1154 + $0x120] sm:$0xff]
        %v1224 = vld [vmem:[%s1154 + $0x128] sm:$0xff]
        %v1225 = vld [vmem:[%s1154 + $0x130] sm:$0xff]
        %v1226 = vld [vmem:[%s1154 + $0x138] sm:$0xff]
        %v1227 = vld [vmem:[%s1154 + $0x140] sm:$0xff]
        %v1228 = vld [vmem:[%s1154 + $0x148] sm:$0xff]
        %v1229 = vld [vmem:[%s1154 + $0x150] sm:$0xff]
        %v1230 = vld [vmem:[%s1154 + $0x158] sm:$0xff]
        %v1231 = vld [vmem:[%s1154 + $0x160] sm:$0xff]
        %v1232 = vld [vmem:[%s1154 + $0x168] sm:$0xff]
        %v1233 = vld [vmem:[%s1154 + $0x170] sm:$0xff]
        %v1234 = vld [vmem:[%s1154 + $0x178] sm:$0xff]
        %v1235 = vld [vmem:[%s1154 + $0x180] sm:$0xff]
        %v1236 = vld [vmem:[%s1154 + $0x188] sm:$0xff]
        %v1237 = vld [vmem:[%s1154 + $0x190] sm:$0xff]
        %v1238 = vld [vmem:[%s1154 + $0x198] sm:$0xff]
        %v1239 = vld [vmem:[%s1154 + $0x1a0] sm:$0xff]
        %v1240 = vld [vmem:[%s1154 + $0x1a8] sm:$0xff]
        %v1241 = vld [vmem:[%s1154 + $0x1b0] sm:$0xff]
        %v1242 = vld [vmem:[%s1154 + $0x1b8] sm:$0xff]
        %v1243 = vld [vmem:[%s1154 + $0x1c0] sm:$0xff]
        %v1244 = vld [vmem:[%s1154 + $0x1c8] sm:$0xff]
        %v1245 = vld [vmem:[%s1154 + $0x1d0] sm:$0xff]
        %v1246 = vld [vmem:[%s1154 + $0x1d8] sm:$0xff]
        %v1247 = vld [vmem:[%s1154 + $0x1e0] sm:$0xff]
        %v1248 = vld [vmem:[%s1154 + $0x1e8] sm:$0xff]
        %v1249 = vld [vmem:[%s1154 + $0x1f0] sm:$0xff]
        %v1250 = vld [vmem:[%s1154 + $0x1f8] sm:$0xff]
        %v1251 = vld [vmem:[%s1154 + $0x200] sm:$0xff]
        %v1252 = vld [vmem:[%s1154 + $0x208] sm:$0xff]
        %v1253 = vld [vmem:[%s1154 + $0x210] sm:$0xff]
        %v1254 = vld [vmem:[%s1154 + $0x218] sm:$0xff]
        %v1255 = vld [vmem:[%s1154 + $0x220] sm:$0xff]
        %v1256 = vld [vmem:[%s1154 + $0x228] sm:$0xff]
        %v1257 = vld [vmem:[%s1154 + $0x230] sm:$0xff]
        %v1258 = vld [vmem:[%s1154 + $0x238] sm:$0xff]
        %v1259 = vld [vmem:[%s1154 + $0x240] sm:$0xff]
        %v1260 = vld [vmem:[%s1154 + $0x248] sm:$0xff]
        %v1261 = vld [vmem:[%s1154 + $0x250] sm:$0xff]
        %v1262 = vld [vmem:[%s1154 + $0x258] sm:$0xff]
        %v1263 = vld [vmem:[%s1154 + $0x260] sm:$0xff]
        %v1264 = vld [vmem:[%s1154 + $0x268] sm:$0xff]
        %v1265 = vld [vmem:[%s1154 + $0x270] sm:$0xff]
        %v1266 = vld [vmem:[%s1154 + $0x278] sm:$0xff]
        %v1267 = vld [vmem:[%s1154 + $0x280] sm:$0xff]
        %v1268 = vld [vmem:[%s1154 + $0x288] sm:$0xff]
        %v1269 = vld [vmem:[%s1154 + $0x290] sm:$0xff]
        %v1270 = vld [vmem:[%s1154 + $0x298] sm:$0xff]
        %v1271 = vld [vmem:[%s1154 + $0x2a0] sm:$0xff]
        %v1272 = vld [vmem:[%s1154 + $0x2a8] sm:$0xff]
        %v1273 = vld [vmem:[%s1154 + $0x2b0] sm:$0xff]
        %v1274 = vld [vmem:[%s1154 + $0x2b8] sm:$0xff]
        %v1275 = vld [vmem:[%s1154 + $0x2c0] sm:$0xff]
        %v1276 = vld [vmem:[%s1154 + $0x2c8] sm:$0xff]
        %v1277 = vld [vmem:[%s1154 + $0x2d0] sm:$0xff]
        %v1278 = vld [vmem:[%s1154 + $0x2d8] sm:$0xff]
        %v1279 = vld [vmem:[%s1154 + $0x2e0] sm:$0xff]
        %v1280 = vld [vmem:[%s1154 + $0x2e8] sm:$0xff]
        %v1281 = vld [vmem:[%s1154 + $0x2f0] sm:$0xff]
        %v1282 = vld [vmem:[%s1154 + $0x2f8] sm:$0xff]
        %v1283 = vld [vmem:[%s1154 + $0x300] sm:$0xff]
        %v1284 = vld [vmem:[%s1154 + $0x308] sm:$0xff]
        %v1285 = vld [vmem:[%s1154 + $0x310] sm:$0xff]
        %v1286 = vld [vmem:[%s1154 + $0x318] sm:$0xff]
        %v1287 = vld [vmem:[%s1154 + $0x320] sm:$0xff]
        %v1288 = vld [vmem:[%s1154 + $0x328] sm:$0xff]
        %v1289 = vld [vmem:[%s1154 + $0x330] sm:$0xff]
        %v1290 = vld [vmem:[%s1154 + $0x338] sm:$0xff]
        %v1291 = vld [vmem:[%s1154 + $0x340] sm:$0xff]
        %v1292 = vld [vmem:[%s1154 + $0x348] sm:$0xff]
        %v1293 = vld [vmem:[%s1154 + $0x350] sm:$0xff]
        %v1294 = vld [vmem:[%s1154 + $0x358] sm:$0xff]
        %v1295 = vld [vmem:[%s1154 + $0x360] sm:$0xff]
        %v1296 = vld [vmem:[%s1154 + $0x368] sm:$0xff]
        %v1297 = vld [vmem:[%s1154 + $0x370] sm:$0xff]
        %v1298 = vld [vmem:[%s1154 + $0x378] sm:$0xff]
        %v1299 = vld [vmem:[%s1154 + $0x380] sm:$0xff]
        %v1300 = vld [vmem:[%s1154 + $0x388] sm:$0xff]
        %v1301 = vld [vmem:[%s1154 + $0x390] sm:$0xff]
        %v1302 = vld [vmem:[%s1154 + $0x398] sm:$0xff]
        %v1303 = vld [vmem:[%s1154 + $0x3a0] sm:$0xff]
        %v1304 = vld [vmem:[%s1154 + $0x3a8] sm:$0xff]
        %v1305 = vld [vmem:[%s1154 + $0x3b0] sm:$0xff]
        %v1306 = vld [vmem:[%s1154 + $0x3b8] sm:$0xff]
        %v1307 = vld [vmem:[%s1154 + $0x3c0] sm:$0xff]
        %v1308 = vld [vmem:[%s1154 + $0x3c8] sm:$0xff]
        %v1309 = vld [vmem:[%s1154 + $0x3d0] sm:$0xff]
        %v1310 = vld [vmem:[%s1154 + $0x3d8] sm:$0xff]
        %v1311 = vld [vmem:[%s1154 + $0x3e0] sm:$0xff]
        %v1312 = vld [vmem:[%s1154 + $0x3e8] sm:$0xff]
        %v1313 = vld [vmem:[%s1154 + $0x3f0] sm:$0xff]
        %v1314 = vld [vmem:[%s1154 + $0x3f8] sm:$0xff]
        %v1315 = vld [vmem:[%s1154 + $0x400] sm:$0xff]
        %v1316 = vld [vmem:[%s1154 + $0x408] sm:$0xff]
        %v1317 = vld [vmem:[%s1154 + $0x410] sm:$0xff]
        %v1318 = vld [vmem:[%s1154 + $0x418] sm:$0xff]
        %v1319 = vld [vmem:[%s1154 + $0x420] sm:$0xff]
        %v1320 = vld [vmem:[%s1154 + $0x428] sm:$0xff]
        %v1321 = vld [vmem:[%s1154 + $0x430] sm:$0xff]
        %v1322 = vld [vmem:[%s1154 + $0x438] sm:$0xff]
        %v1323 = vld [vmem:[%s1154 + $0x440] sm:$0xff]
        %v1324 = vld [vmem:[%s1154 + $0x448] sm:$0xff]
        %v1325 = vld [vmem:[%s1154 + $0x450] sm:$0xff]
        %v1326 = vld [vmem:[%s1154 + $0x458] sm:$0xff]
        %v1327 = vld [vmem:[%s1154 + $0x460] sm:$0xff]
        %v1328 = vld [vmem:[%s1154 + $0x468] sm:$0xff]
        %v1329 = vld [vmem:[%s1154 + $0x470] sm:$0xff]
        %v1330 = vld [vmem:[%s1154 + $0x478] sm:$0xff]
        %v1331 = vld [vmem:[%s1154 + $0x480] sm:$0xff]
        %v1332 = vld [vmem:[%s1154 + $0x488] sm:$0xff]
        %v1333 = vld [vmem:[%s1154 + $0x490] sm:$0xff]
        %v1334 = vld [vmem:[%s1154 + $0x498] sm:$0xff]
        %v1335 = vld [vmem:[%s1154 + $0x4a0] sm:$0xff]
        %v1336 = vld [vmem:[%s1154 + $0x4a8] sm:$0xff]
        %v1337 = vld [vmem:[%s1154 + $0x4b0] sm:$0xff]
        %v1338 = vld [vmem:[%s1154 + $0x4b8] sm:$0xff]
        %v1339 = vld [vmem:[%s1154 + $0x4c0] sm:$0xff]
        %v1340 = vld [vmem:[%s1154 + $0x4c8] sm:$0xff]
        %v1341 = vld [vmem:[%s1154 + $0x4d0] sm:$0xff]
        %v1342 = vld [vmem:[%s1154 + $0x4d8] sm:$0xff]
        %v1343 = vld [vmem:[%s1154 + $0x4e0] sm:$0xff]
        %v1344 = vld [vmem:[%s1154 + $0x4e8] sm:$0xff]
        %v1345 = vld [vmem:[%s1154 + $0x4f0] sm:$0xff]
        %v1346 = vld [vmem:[%s1154 + $0x4f8] sm:$0xff]
        %v1347 = vld [vmem:[%s1154 + $0x500] sm:$0xff]
        %v1348 = vld [vmem:[%s1154 + $0x508] sm:$0xff]
        %v1349 = vld [vmem:[%s1154 + $0x510] sm:$0xff]
        %v1350 = vld [vmem:[%s1154 + $0x518] sm:$0xff]
        %v1351 = vld [vmem:[%s1154 + $0x520] sm:$0xff]
        %v1352 = vld [vmem:[%s1154 + $0x528] sm:$0xff]
        %v1353 = vld [vmem:[%s1154 + $0x530] sm:$0xff]
        %v1354 = vld [vmem:[%s1154 + $0x538] sm:$0xff]
        %v1355 = vld [vmem:[%s1154 + $0x540] sm:$0xff]
        %v1356 = vld [vmem:[%s1154 + $0x548] sm:$0xff]
        %v1357 = vld [vmem:[%s1154 + $0x550] sm:$0xff]
        %v1358 = vld [vmem:[%s1154 + $0x558] sm:$0xff]
        %v1359 = vld [vmem:[%s1154 + $0x560] sm:$0xff]
        %v1360 = vld [vmem:[%s1154 + $0x568] sm:$0xff]
        %v1361 = vld [vmem:[%s1154 + $0x570] sm:$0xff]
        %v1362 = vld [vmem:[%s1154 + $0x578] sm:$0xff]
        %v1363 = vld [vmem:[%s1154 + $0x580] sm:$0xff]
        %v1364 = vld [vmem:[%s1154 + $0x588] sm:$0xff]
        %v1365 = vld [vmem:[%s1154 + $0x590] sm:$0xff]
        %v1366 = vld [vmem:[%s1154 + $0x598] sm:$0xff]
        %v1367 = vld [vmem:[%s1154 + $0x5a0] sm:$0xff]
        %v1368 = vld [vmem:[%s1154 + $0x5a8] sm:$0xff]
        %v1369 = vld [vmem:[%s1154 + $0x5b0] sm:$0xff]
        %v1370 = vld [vmem:[%s1154 + $0x5b8] sm:$0xff]
        %v1371 = vld [vmem:[%s1154 + $0x5c0] sm:$0xff]
        %v1372 = vld [vmem:[%s1154 + $0x5c8] sm:$0xff]
        %v1373 = vld [vmem:[%s1154 + $0x5d0] sm:$0xff]
        %v1374 = vld [vmem:[%s1154 + $0x5d8] sm:$0xff]
        %v1375 = vld [vmem:[%s1154 + $0x5e0] sm:$0xff]
        %v1376 = vld [vmem:[%s1154 + $0x5e8] sm:$0xff]
        %v1377 = vld [vmem:[%s1154 + $0x5f0] sm:$0xff]
        %v1378 = vld [vmem:[%s1154 + $0x5f8] sm:$0xff]
        %v1379 = vld [vmem:[%s1154 + $0x600] sm:$0xff]
        %v1380 = vld [vmem:[%s1154 + $0x608] sm:$0xff]
        %v1381 = vld [vmem:[%s1154 + $0x610] sm:$0xff]
        %v1382 = vld [vmem:[%s1154 + $0x618] sm:$0xff]
        %v1383 = vld [vmem:[%s1154 + $0x620] sm:$0xff]
        %v1384 = vld [vmem:[%s1154 + $0x628] sm:$0xff]
        %v1385 = vld [vmem:[%s1154 + $0x630] sm:$0xff]
        %v1386 = vld [vmem:[%s1154 + $0x638] sm:$0xff]
        %v1387 = vld [vmem:[%s1154 + $0x640] sm:$0xff]
        %v1388 = vld [vmem:[%s1154 + $0x648] sm:$0xff]
        %v1389 = vld [vmem:[%s1154 + $0x650] sm:$0xff]
        %v1390 = vld [vmem:[%s1154 + $0x658] sm:$0xff]
        %v1391 = vld [vmem:[%s1154 + $0x660] sm:$0xff]
        %v1392 = vld [vmem:[%s1154 + $0x668] sm:$0xff]
        %v1393 = vld [vmem:[%s1154 + $0x670] sm:$0xff]
        %v1394 = vld [vmem:[%s1154 + $0x678] sm:$0xff]
        %v1395 = vld [vmem:[%s1154 + $0x680] sm:$0xff]
        %v1396 = vld [vmem:[%s1154 + $0x688] sm:$0xff]
        %v1397 = vld [vmem:[%s1154 + $0x690] sm:$0xff]
        %v1398 = vld [vmem:[%s1154 + $0x698] sm:$0xff]
        %v1399 = vld [vmem:[%s1154 + $0x6a0] sm:$0xff]
        %v1400 = vld [vmem:[%s1154 + $0x6a8] sm:$0xff]
        %v1401 = vld [vmem:[%s1154 + $0x6b0] sm:$0xff]
        %v1402 = vld [vmem:[%s1154 + $0x6b8] sm:$0xff]
        %v1403 = vld [vmem:[%s1154 + $0x6c0] sm:$0xff]
        %v1404 = vld [vmem:[%s1154 + $0x6c8] sm:$0xff]
        %v1405 = vld [vmem:[%s1154 + $0x6d0] sm:$0xff]
        %v1406 = vld [vmem:[%s1154 + $0x6d8] sm:$0xff]
        %v1407 = vld [vmem:[%s1154 + $0x6e0] sm:$0xff]
        %v1408 = vld [vmem:[%s1154 + $0x6e8] sm:$0xff]
        %v1409 = vld [vmem:[%s1154 + $0x6f0] sm:$0xff]
        %v1410 = vld [vmem:[%s1154 + $0x6f8] sm:$0xff]
        %v1411 = vld [vmem:[%s1154 + $0x700] sm:$0xff]
        %v1412 = vld [vmem:[%s1154 + $0x708] sm:$0xff]
        %v1413 = vld [vmem:[%s1154 + $0x710] sm:$0xff]
        %v1414 = vld [vmem:[%s1154 + $0x718] sm:$0xff]
        %v1415 = vld [vmem:[%s1154 + $0x720] sm:$0xff]
        %v1416 = vld [vmem:[%s1154 + $0x728] sm:$0xff]
        %v1417 = vld [vmem:[%s1154 + $0x730] sm:$0xff]
        %v1418 = vld [vmem:[%s1154 + $0x738] sm:$0xff]
        %v1419 = vld [vmem:[%s1154 + $0x740] sm:$0xff]
        %v1420 = vld [vmem:[%s1154 + $0x748] sm:$0xff]
        %v1421 = vld [vmem:[%s1154 + $0x750] sm:$0xff]
        %v1422 = vld [vmem:[%s1154 + $0x758] sm:$0xff]
        %v1423 = vld [vmem:[%s1154 + $0x760] sm:$0xff]
        %v1424 = vld [vmem:[%s1154 + $0x768] sm:$0xff]
        %v1425 = vld [vmem:[%s1154 + $0x770] sm:$0xff]
        %v1426 = vld [vmem:[%s1154 + $0x778] sm:$0xff]
        %v1427 = vld [vmem:[%s1154 + $0x780] sm:$0xff]
        %v1428 = vld [vmem:[%s1154 + $0x788] sm:$0xff]
        %v1429 = vld [vmem:[%s1154 + $0x790] sm:$0xff]
        %v1430 = vld [vmem:[%s1154 + $0x798] sm:$0xff]
        %v1431 = vld [vmem:[%s1154 + $0x7a0] sm:$0xff]
        %v1432 = vld [vmem:[%s1154 + $0x7a8] sm:$0xff]
        %v1433 = vld [vmem:[%s1154 + $0x7b0] sm:$0xff]
        %v1434 = vld [vmem:[%s1154 + $0x7b8] sm:$0xff]
        %v1435 = vld [vmem:[%s1154 + $0x7c0] sm:$0xff]
        %v1436 = vld [vmem:[%s1154 + $0x7c8] sm:$0xff]
        %v1437 = vld [vmem:[%s1154 + $0x7d0] sm:$0xff]
        %v1438 = vld [vmem:[%s1154 + $0x7d8] sm:$0xff]
        %v1439 = vld [vmem:[%s1154 + $0x7e0] sm:$0xff]
        %v1440 = vld [vmem:[%s1154 + $0x7e8] sm:$0xff]
        %v1441 = vld [vmem:[%s1154 + $0x7f0] sm:$0xff]
        %v1442 = vld [vmem:[%s1154 + $0x7f8] sm:$0xff]
        %v1443 = vld [vmem:[%s1154 + $0x800] sm:$0xff]
        %v1444 = vld [vmem:[%s1154 + $0x808] sm:$0xff]
        %v1445 = vld [vmem:[%s1154 + $0x810] sm:$0xff]
        %v1446 = vld [vmem:[%s1154 + $0x818] sm:$0xff]
        %v1447 = vld [vmem:[%s1154 + $0x820] sm:$0xff]
        %v1448 = vld [vmem:[%s1154 + $0x828] sm:$0xff]
        %v1449 = vld [vmem:[%s1154 + $0x830] sm:$0xff]
        %v1450 = vld [vmem:[%s1154 + $0x838] sm:$0xff]
        %v1451 = vld [vmem:[%s1154 + $0x840] sm:$0xff]
        %v1452 = vld [vmem:[%s1154 + $0x848] sm:$0xff]
        %v1453 = vld [vmem:[%s1154 + $0x850] sm:$0xff]
        %v1454 = vld [vmem:[%s1154 + $0x858] sm:$0xff]
        %v1455 = vld [vmem:[%s1154 + $0x860] sm:$0xff]
        %v1456 = vld [vmem:[%s1154 + $0x868] sm:$0xff]
        %v1457 = vld [vmem:[%s1154 + $0x870] sm:$0xff]
        %v1458 = vld [vmem:[%s1154 + $0x878] sm:$0xff]
        %v1459 = vld [vmem:[%s1154 + $0x880] sm:$0xff]
        %v1460 = vld [vmem:[%s1154 + $0x888] sm:$0xff]
        %v1461 = vld [vmem:[%s1154 + $0x890] sm:$0xff]
        %v1462 = vld [vmem:[%s1154 + $0x898] sm:$0xff]
        %v1463 = vld [vmem:[%s1154 + $0x8a0] sm:$0xff]
        %v1464 = vld [vmem:[%s1154 + $0x8a8] sm:$0xff]
        %v1465 = vld [vmem:[%s1154 + $0x8b0] sm:$0xff]
        %v1466 = vld [vmem:[%s1154 + $0x8b8] sm:$0xff]
        %v1467 = vld [vmem:[%s1154 + $0x8c0] sm:$0xff]
        %v1468 = vld [vmem:[%s1154 + $0x8c8] sm:$0xff]
        %v1469 = vld [vmem:[%s1154 + $0x8d0] sm:$0xff]
        %v1470 = vld [vmem:[%s1154 + $0x8d8] sm:$0xff]
        %v1471 = vld [vmem:[%s1154 + $0x8e0] sm:$0xff]
        %v1472 = vld [vmem:[%s1154 + $0x8e8] sm:$0xff]
        %v1473 = vld [vmem:[%s1154 + $0x8f0] sm:$0xff]
        %v1474 = vld [vmem:[%s1154 + $0x8f8] sm:$0xff]
        %v1475 = vld [vmem:[%s1154 + $0x900] sm:$0xff]
        %v1476 = vld [vmem:[%s1154 + $0x908] sm:$0xff]
        %v1477 = vld [vmem:[%s1154 + $0x910] sm:$0xff]
        %v1478 = vld [vmem:[%s1154 + $0x918] sm:$0xff]
        %v1479 = vld [vmem:[%s1154 + $0x920] sm:$0xff]
        %v1480 = vld [vmem:[%s1154 + $0x928] sm:$0xff]
        %v1481 = vld [vmem:[%s1154 + $0x930] sm:$0xff]
        %v1482 = vld [vmem:[%s1154 + $0x938] sm:$0xff]
        %v1483 = vld [vmem:[%s1154 + $0x940] sm:$0xff]
        %v1484 = vld [vmem:[%s1154 + $0x948] sm:$0xff]
        %v1485 = vld [vmem:[%s1154 + $0x950] sm:$0xff]
        %v1486 = vld [vmem:[%s1154 + $0x958] sm:$0xff]
        %v1487 = vld [vmem:[%s1154 + $0x960] sm:$0xff]
        %v1488 = vld [vmem:[%s1154 + $0x968] sm:$0xff]
        %v1489 = vld [vmem:[%s1154 + $0x970] sm:$0xff]
        %v1490 = vld [vmem:[%s1154 + $0x978] sm:$0xff]
        %v1491 = vld [vmem:[%s1154 + $0x980] sm:$0xff]
        %v1492 = vld [vmem:[%s1154 + $0x988] sm:$0xff]
        %v1493 = vld [vmem:[%s1154 + $0x990] sm:$0xff]
        %v1494 = vld [vmem:[%s1154 + $0x998] sm:$0xff]
        %v1495 = vld [vmem:[%s1154 + $0x9a0] sm:$0xff]
        %v1496 = vld [vmem:[%s1154 + $0x9a8] sm:$0xff]
        %v1497 = vld [vmem:[%s1154 + $0x9b0] sm:$0xff]
        %v1498 = vld [vmem:[%s1154 + $0x9b8] sm:$0xff]
        %v1499 = vld [vmem:[%s1154 + $0x9c0] sm:$0xff]
        %v1500 = vld [vmem:[%s1154 + $0x9c8] sm:$0xff]
        %v1501 = vld [vmem:[%s1154 + $0x9d0] sm:$0xff]
        %v1502 = vld [vmem:[%s1154 + $0x9d8] sm:$0xff]
        %v1503 = vld [vmem:[%s1154 + $0x9e0] sm:$0xff]
        %v1504 = vld [vmem:[%s1154 + $0x9e8] sm:$0xff]
        %v1505 = vld [vmem:[%s1154 + $0x9f0] sm:$0xff]
        %v1506 = vld [vmem:[%s1154 + $0x9f8] sm:$0xff]
        %v1507 = vld [vmem:[%s1154 + $0xa00] sm:$0xff]
        %v1508 = vld [vmem:[%s1154 + $0xa08] sm:$0xff]
        %v1509 = vld [vmem:[%s1154 + $0xa10] sm:$0xff]
        %v1510 = vld [vmem:[%s1154 + $0xa18] sm:$0xff]
        %v1511 = vld [vmem:[%s1154 + $0xa20] sm:$0xff]
        %v1512 = vld [vmem:[%s1154 + $0xa28] sm:$0xff]
        %v1513 = vld [vmem:[%s1154 + $0xa30] sm:$0xff]
        %v1514 = vld [vmem:[%s1154 + $0xa38] sm:$0xff]
        %v1515 = vld [vmem:[%s1154 + $0xa40] sm:$0xff]
        %v1516 = vld [vmem:[%s1154 + $0xa48] sm:$0xff]
        %v1517 = vld [vmem:[%s1154 + $0xa50] sm:$0xff]
        %v1518 = vld [vmem:[%s1154 + $0xa58] sm:$0xff]
        %v1519 = vld [vmem:[%s1154 + $0xa60] sm:$0xff]
        %v1520 = vld [vmem:[%s1154 + $0xa68] sm:$0xff]
        %v1521 = vld [vmem:[%s1154 + $0xa70] sm:$0xff]
        %v1522 = vld [vmem:[%s1154 + $0xa78] sm:$0xff]
        %v1523 = vld [vmem:[%s1154 + $0xa80] sm:$0xff]
        %v1524 = vld [vmem:[%s1154 + $0xa88] sm:$0xff]
        %v1525 = vld [vmem:[%s1154 + $0xa90] sm:$0xff]
        %v1526 = vld [vmem:[%s1154 + $0xa98] sm:$0xff]
        %v1527 = vld [vmem:[%s1154 + $0xaa0] sm:$0xff]
        %v1528 = vld [vmem:[%s1154 + $0xaa8] sm:$0xff]
        %v1529 = vld [vmem:[%s1154 + $0xab0] sm:$0xff]
        %v1530 = vld [vmem:[%s1154 + $0xab8] sm:$0xff]
        %v1531 = vld [vmem:[%s1154 + $0xac0] sm:$0xff]
        %v1532 = vld [vmem:[%s1154 + $0xac8] sm:$0xff]
        %v1533 = vld [vmem:[%s1154 + $0xad0] sm:$0xff]
        %v1534 = vld [vmem:[%s1154 + $0xad8] sm:$0xff]
        %v1535 = vld [vmem:[%s1154 + $0xae0] sm:$0xff]
        %v1536 = vld [vmem:[%s1154 + $0xae8] sm:$0xff]
        %v1537 = vld [vmem:[%s1154 + $0xaf0] sm:$0xff]
        %v1538 = vld [vmem:[%s1154 + $0xaf8] sm:$0xff]
        %v1539 = vld [vmem:[%s1154 + $0xb00] sm:$0xff]
        %v1540 = vld [vmem:[%s1154 + $0xb08] sm:$0xff]
        %v1541 = vld [vmem:[%s1154 + $0xb10] sm:$0xff]
        %v1542 = vld [vmem:[%s1154 + $0xb18] sm:$0xff]
        %v1543 = vld [vmem:[%s1154 + $0xb20] sm:$0xff]
        %v1544 = vld [vmem:[%s1154 + $0xb28] sm:$0xff]
        %v1545 = vld [vmem:[%s1154 + $0xb30] sm:$0xff]
        %v1546 = vld [vmem:[%s1154 + $0xb38] sm:$0xff]
        %v1547 = vld [vmem:[%s1154 + $0xb40] sm:$0xff]
        %v1548 = vld [vmem:[%s1154 + $0xb48] sm:$0xff]
        %v1549 = vld [vmem:[%s1154 + $0xb50] sm:$0xff]
        %v1550 = vld [vmem:[%s1154 + $0xb58] sm:$0xff]
        %v1551 = vld [vmem:[%s1154 + $0xb60] sm:$0xff]
        %v1552 = vld [vmem:[%s1154 + $0xb68] sm:$0xff]
        %v1553 = vld [vmem:[%s1154 + $0xb70] sm:$0xff]
        %v1554 = vld [vmem:[%s1154 + $0xb78] sm:$0xff]
        %v1555 = vld [vmem:[%s1154 + $0xb80] sm:$0xff]
        %v1556 = vld [vmem:[%s1154 + $0xb88] sm:$0xff]
        %v1557 = vld [vmem:[%s1154 + $0xb90] sm:$0xff]
        %v1558 = vld [vmem:[%s1154 + $0xb98] sm:$0xff]
        %v1559 = vld [vmem:[%s1154 + $0xba0] sm:$0xff]
        %v1560 = vld [vmem:[%s1154 + $0xba8] sm:$0xff]
        %v1561 = vld [vmem:[%s1154 + $0xbb0] sm:$0xff]
        %v1562 = vld [vmem:[%s1154 + $0xbb8] sm:$0xff]
        %v1563 = vld [vmem:[%s1154 + $0xbc0] sm:$0xff]
        %v1564 = vld [vmem:[%s1154 + $0xbc8] sm:$0xff]
        %v1565 = vld [vmem:[%s1154 + $0xbd0] sm:$0xff]
        %v1566 = vld [vmem:[%s1154 + $0xbd8] sm:$0xff]
        %v1567 = vld [vmem:[%s1154 + $0xbe0] sm:$0xff]
        %v1568 = vld [vmem:[%s1154 + $0xbe8] sm:$0xff]
        %v1569 = vld [vmem:[%s1154 + $0xbf0] sm:$0xff]
        %v1570 = vld [vmem:[%s1154 + $0xbf8] sm:$0xff]
        %v1571 = vld [vmem:[%s1154 + $0xc00] sm:$0xff]
        %v1572 = vld [vmem:[%s1154 + $0xc08] sm:$0xff]
        %v1573 = vld [vmem:[%s1154 + $0xc10] sm:$0xff]
        %v1574 = vld [vmem:[%s1154 + $0xc18] sm:$0xff]
        %v1575 = vld [vmem:[%s1154 + $0xc20] sm:$0xff]
        %v1576 = vld [vmem:[%s1154 + $0xc28] sm:$0xff]
        %v1577 = vld [vmem:[%s1154 + $0xc30] sm:$0xff]
        %v1578 = vld [vmem:[%s1154 + $0xc38] sm:$0xff]
        %v1579 = vld [vmem:[%s1154 + $0xc40] sm:$0xff]
        %v1580 = vld [vmem:[%s1154 + $0xc48] sm:$0xff]
        %v1581 = vld [vmem:[%s1154 + $0xc50] sm:$0xff]
        %v1582 = vld [vmem:[%s1154 + $0xc58] sm:$0xff]
        %v1583 = vld [vmem:[%s1154 + $0xc60] sm:$0xff]
        %v1584 = vld [vmem:[%s1154 + $0xc68] sm:$0xff]
        %v1585 = vld [vmem:[%s1154 + $0xc70] sm:$0xff]
        %v1586 = vld [vmem:[%s1154 + $0xc78] sm:$0xff]
        %v1587 = vld [vmem:[%s1154 + $0xc80] sm:$0xff]
        %v1588 = vld [vmem:[%s1154 + $0xc88] sm:$0xff]
        %v1589 = vld [vmem:[%s1154 + $0xc90] sm:$0xff]
        %v1590 = vld [vmem:[%s1154 + $0xc98] sm:$0xff]
        %v1591 = vld [vmem:[%s1154 + $0xca0] sm:$0xff]
        %v1592 = vld [vmem:[%s1154 + $0xca8] sm:$0xff]
        %v1593 = vld [vmem:[%s1154 + $0xcb0] sm:$0xff]
        %v1594 = vld [vmem:[%s1154 + $0xcb8] sm:$0xff]
        %v1595 = vld [vmem:[%s1154 + $0xcc0] sm:$0xff]
        %v1596 = vld [vmem:[%s1154 + $0xcc8] sm:$0xff]
        %v1597 = vld [vmem:[%s1154 + $0xcd0] sm:$0xff]
        %v1598 = vld [vmem:[%s1154 + $0xcd8] sm:$0xff]
        %v1599 = vld [vmem:[%s1154 + $0xce0] sm:$0xff]
        %v1600 = vld [vmem:[%s1154 + $0xce8] sm:$0xff]
        %v1601 = vld [vmem:[%s1154 + $0xcf0] sm:$0xff]
        %v1602 = vld [vmem:[%s1154 + $0xcf8] sm:$0xff]
        %v1603 = vld [vmem:[%s1154 + $0xd00] sm:$0xff]
        %v1604 = vld [vmem:[%s1154 + $0xd08] sm:$0xff]
        %v1605 = vld [vmem:[%s1154 + $0xd10] sm:$0xff]
        %v1606 = vld [vmem:[%s1154 + $0xd18] sm:$0xff]
        %v1607 = vld [vmem:[%s1154 + $0xd20] sm:$0xff]
        %v1608 = vld [vmem:[%s1154 + $0xd28] sm:$0xff]
        %v1609 = vld [vmem:[%s1154 + $0xd30] sm:$0xff]
        %v1610 = vld [vmem:[%s1154 + $0xd38] sm:$0xff]
        %v1611 = vld [vmem:[%s1154 + $0xd40] sm:$0xff]
        %v1612 = vld [vmem:[%s1154 + $0xd48] sm:$0xff]
        %v1613 = vld [vmem:[%s1154 + $0xd50] sm:$0xff]
        %v1614 = vld [vmem:[%s1154 + $0xd58] sm:$0xff]
        %v1615 = vld [vmem:[%s1154 + $0xd60] sm:$0xff]
        %v1616 = vld [vmem:[%s1154 + $0xd68] sm:$0xff]
        %v1617 = vld [vmem:[%s1154 + $0xd70] sm:$0xff]
        %v1618 = vld [vmem:[%s1154 + $0xd78] sm:$0xff]
        %v1619 = vld [vmem:[%s2] sm:$0xff]
        %1621 = vset.pattern.permute.xlu0 0
        %1622 = vperm.xlu0 %1621, %v1619
        %v1623 = vpop.permute.xlu0 %1622
        %v1627 = vunpack.c.l.b16 %v1185
        %v1628 = vunpack.c.h.b16 %v1185
        %v1629 = vunpack.c.l.b16 %v1186
        %v1630 = vunpack.c.h.b16 %v1186
        %v1631 = vpack.c.b16 %v1627, %v1627
        %v1632 = vpack.c.b16 %v1628, %v1628
        %v1633 = vpack.c.b16 %v1629, %v1629
        %v1634 = vpack.c.b16 %v1630, %v1630
        %v2070 = vunpack.c.l.b16 %v1187
        %v2071 = vunpack.c.h.b16 %v1187
        %v2072 = vunpack.c.l.b16 %v1188
        %v2073 = vunpack.c.h.b16 %v1188
        %v2074 = vunpack.c.l.b16 %v1189
        %v2075 = vunpack.c.h.b16 %v1189
        %v2076 = vunpack.c.l.b16 %v1190
        %v2077 = vunpack.c.h.b16 %v1190
        %v2078 = vunpack.c.l.b16 %v1191
        %v2079 = vunpack.c.h.b16 %v1191
        %v2080 = vunpack.c.l.b16 %v1192
        %v2081 = vunpack.c.h.b16 %v1192
        %v2082 = vunpack.c.l.b16 %v1193
        %v2083 = vunpack.c.h.b16 %v1193
        %v2084 = vunpack.c.l.b16 %v1194
        %v2085 = vunpack.c.h.b16 %v1194
        %v2086 = vunpack.c.l.b16 %v1195
        %v2087 = vunpack.c.h.b16 %v1195
        %v2088 = vunpack.c.l.b16 %v1196
        %v2089 = vunpack.c.h.b16 %v1196
        %v2090 = vunpack.c.l.b16 %v1197
        %v2091 = vunpack.c.h.b16 %v1197
        %v2092 = vunpack.c.l.b16 %v1198
        %v2093 = vunpack.c.h.b16 %v1198
        %v2094 = vunpack.c.l.b16 %v1199
        %v2095 = vunpack.c.h.b16 %v1199
        %v2096 = vunpack.c.l.b16 %v1200
        %v2097 = vunpack.c.h.b16 %v1200
        %v2098 = vunpack.c.l.b16 %v1201
        %v2099 = vunpack.c.h.b16 %v1201
        %v2100 = vunpack.c.l.b16 %v1202
        %v2101 = vunpack.c.h.b16 %v1202
        %v2102 = vunpack.c.l.b16 %v1203
        %v2103 = vunpack.c.h.b16 %v1203
        %v2104 = vunpack.c.l.b16 %v1204
        %v2105 = vunpack.c.h.b16 %v1204
        %v2106 = vunpack.c.l.b16 %v1205
        %v2107 = vunpack.c.h.b16 %v1205
        %v2108 = vunpack.c.l.b16 %v1206
        %v2109 = vunpack.c.h.b16 %v1206
        %v2110 = vunpack.c.l.b16 %v1207
        %v2111 = vunpack.c.h.b16 %v1207
        %v2112 = vunpack.c.l.b16 %v1208
        %v2113 = vunpack.c.h.b16 %v1208
        %v2114 = vunpack.c.l.b16 %v1209
        %v2115 = vunpack.c.h.b16 %v1209
        %v2116 = vunpack.c.l.b16 %v1210
        %v2117 = vunpack.c.h.b16 %v1210
        %v2118 = vunpack.c.l.b16 %v1211
        %v2119 = vunpack.c.h.b16 %v1211
        %v2120 = vunpack.c.l.b16 %v1212
        %v2121 = vunpack.c.h.b16 %v1212
        %v2122 = vunpack.c.l.b16 %v1213
        %v2123 = vunpack.c.h.b16 %v1213
        %v2124 = vunpack.c.l.b16 %v1214
        %v2125 = vunpack.c.h.b16 %v1214
        %v2126 = vunpack.c.l.b16 %v1215
        %v2127 = vunpack.c.h.b16 %v1215
        %v2128 = vunpack.c.l.b16 %v1216
        %v2129 = vunpack.c.h.b16 %v1216
        %v2130 = vunpack.c.l.b16 %v1217
        %v2131 = vunpack.c.h.b16 %v1217
        %v2132 = vunpack.c.l.b16 %v1218
        %v2133 = vunpack.c.h.b16 %v1218
        %v2134 = vunpack.c.l.b16 %v1219
        %v2135 = vunpack.c.h.b16 %v1219
        %v2136 = vunpack.c.l.b16 %v1220
        %v2137 = vunpack.c.h.b16 %v1220
        %v2138 = vunpack.c.l.b16 %v1221
        %v2139 = vunpack.c.h.b16 %v1221
        %v2140 = vunpack.c.l.b16 %v1222
        %v2141 = vunpack.c.h.b16 %v1222
        %v2142 = vunpack.c.l.b16 %v1223
        %v2143 = vunpack.c.h.b16 %v1223
        %v2144 = vunpack.c.l.b16 %v1224
        %v2145 = vunpack.c.h.b16 %v1224
        %v2146 = vunpack.c.l.b16 %v1225
        %v2147 = vunpack.c.h.b16 %v1225
        %v2148 = vunpack.c.l.b16 %v1226
        %v2149 = vunpack.c.h.b16 %v1226
        %v2150 = vunpack.c.l.b16 %v1227
        %v2151 = vunpack.c.h.b16 %v1227
        %v2152 = vunpack.c.l.b16 %v1228
        %v2153 = vunpack.c.h.b16 %v1228
        %v2154 = vunpack.c.l.b16 %v1229
        %v2155 = vunpack.c.h.b16 %v1229
        %v2156 = vunpack.c.l.b16 %v1230
        %v2157 = vunpack.c.h.b16 %v1230
        %v2158 = vunpack.c.l.b16 %v1231
        %v2159 = vunpack.c.h.b16 %v1231
        %v2160 = vunpack.c.l.b16 %v1232
        %v2161 = vunpack.c.h.b16 %v1232
        %v2162 = vunpack.c.l.b16 %v1233
        %v2163 = vunpack.c.h.b16 %v1233
        %v2164 = vunpack.c.l.b16 %v1234
        %v2165 = vunpack.c.h.b16 %v1234
        %v2166 = vunpack.c.l.b16 %v1235
        %v2167 = vunpack.c.h.b16 %v1235
        %v2168 = vunpack.c.l.b16 %v1236
        %v2169 = vunpack.c.h.b16 %v1236
        %v2170 = vunpack.c.l.b16 %v1237
        %v2171 = vunpack.c.h.b16 %v1237
        %v2172 = vunpack.c.l.b16 %v1238
        %v2173 = vunpack.c.h.b16 %v1238
        %v2174 = vunpack.c.l.b16 %v1239
        %v2175 = vunpack.c.h.b16 %v1239
        %v2176 = vunpack.c.l.b16 %v1240
        %v2177 = vunpack.c.h.b16 %v1240
        %v2178 = vunpack.c.l.b16 %v1241
        %v2179 = vunpack.c.h.b16 %v1241
        %v2180 = vunpack.c.l.b16 %v1242
        %v2181 = vunpack.c.h.b16 %v1242
        %v2182 = vunpack.c.l.b16 %v1243
        %v2183 = vunpack.c.h.b16 %v1243
        %v2184 = vunpack.c.l.b16 %v1244
        %v2185 = vunpack.c.h.b16 %v1244
        %v2186 = vunpack.c.l.b16 %v1245
        %v2187 = vunpack.c.h.b16 %v1245
        %v2188 = vunpack.c.l.b16 %v1246
        %v2189 = vunpack.c.h.b16 %v1246
        %v2190 = vunpack.c.l.b16 %v1247
        %v2191 = vunpack.c.h.b16 %v1247
        %v2192 = vunpack.c.l.b16 %v1248
        %v2193 = vunpack.c.h.b16 %v1248
        %v2194 = vunpack.c.l.b16 %v1249
        %v2195 = vunpack.c.h.b16 %v1249
        %v2196 = vunpack.c.l.b16 %v1250
        %v2197 = vunpack.c.h.b16 %v1250
        %v2198 = vunpack.c.l.b16 %v1251
        %v2199 = vunpack.c.h.b16 %v1251
        %v2200 = vunpack.c.l.b16 %v1252
        %v2201 = vunpack.c.h.b16 %v1252
        %v2202 = vunpack.c.l.b16 %v1253
        %v2203 = vunpack.c.h.b16 %v1253
        %v2204 = vunpack.c.l.b16 %v1254
        %v2205 = vunpack.c.h.b16 %v1254
        %v2206 = vunpack.c.l.b16 %v1255
        %v2207 = vunpack.c.h.b16 %v1255
        %v2208 = vunpack.c.l.b16 %v1256
        %v2209 = vunpack.c.h.b16 %v1256
        %v2210 = vunpack.c.l.b16 %v1257
        %v2211 = vunpack.c.h.b16 %v1257
        %v2212 = vunpack.c.l.b16 %v1258
        %v2213 = vunpack.c.h.b16 %v1258
        %v2214 = vunpack.c.l.b16 %v1259
        %v2215 = vunpack.c.h.b16 %v1259
        %v2216 = vunpack.c.l.b16 %v1260
        %v2217 = vunpack.c.h.b16 %v1260
        %v2218 = vunpack.c.l.b16 %v1261
        %v2219 = vunpack.c.h.b16 %v1261
        %v2220 = vunpack.c.l.b16 %v1262
        %v2221 = vunpack.c.h.b16 %v1262
        %v2222 = vunpack.c.l.b16 %v1263
        %v2223 = vunpack.c.h.b16 %v1263
        %v2224 = vunpack.c.l.b16 %v1264
        %v2225 = vunpack.c.h.b16 %v1264
        %v2226 = vunpack.c.l.b16 %v1265
        %v2227 = vunpack.c.h.b16 %v1265
        %v2228 = vunpack.c.l.b16 %v1266
        %v2229 = vunpack.c.h.b16 %v1266
        %v2230 = vunpack.c.l.b16 %v1267
        %v2231 = vunpack.c.h.b16 %v1267
        %v2232 = vunpack.c.l.b16 %v1268
        %v2233 = vunpack.c.h.b16 %v1268
        %v2234 = vunpack.c.l.b16 %v1269
        %v2235 = vunpack.c.h.b16 %v1269
        %v2236 = vunpack.c.l.b16 %v1270
        %v2237 = vunpack.c.h.b16 %v1270
        %v2238 = vunpack.c.l.b16 %v1271
        %v2239 = vunpack.c.h.b16 %v1271
        %v2240 = vunpack.c.l.b16 %v1272
        %v2241 = vunpack.c.h.b16 %v1272
        %v2242 = vunpack.c.l.b16 %v1273
        %v2243 = vunpack.c.h.b16 %v1273
        %v2244 = vunpack.c.l.b16 %v1274
        %v2245 = vunpack.c.h.b16 %v1274
        %v2246 = vunpack.c.l.b16 %v1275
        %v2247 = vunpack.c.h.b16 %v1275
        %v2248 = vunpack.c.l.b16 %v1276
        %v2249 = vunpack.c.h.b16 %v1276
        %v2250 = vunpack.c.l.b16 %v1277
        %v2251 = vunpack.c.h.b16 %v1277
        %v2252 = vunpack.c.l.b16 %v1278
        %v2253 = vunpack.c.h.b16 %v1278
        %v2254 = vunpack.c.l.b16 %v1279
        %v2255 = vunpack.c.h.b16 %v1279
        %v2256 = vunpack.c.l.b16 %v1280
        %v2257 = vunpack.c.h.b16 %v1280
        %v2258 = vunpack.c.l.b16 %v1281
        %v2259 = vunpack.c.h.b16 %v1281
        %v2260 = vunpack.c.l.b16 %v1282
        %v2261 = vunpack.c.h.b16 %v1282
        %v2262 = vunpack.c.l.b16 %v1283
        %v2263 = vunpack.c.h.b16 %v1283
        %v2264 = vunpack.c.l.b16 %v1284
        %v2265 = vunpack.c.h.b16 %v1284
        %v2266 = vunpack.c.l.b16 %v1285
        %v2267 = vunpack.c.h.b16 %v1285
        %v2268 = vunpack.c.l.b16 %v1286
        %v2269 = vunpack.c.h.b16 %v1286
        %v2270 = vunpack.c.l.b16 %v1287
        %v2271 = vunpack.c.h.b16 %v1287
        %v2272 = vunpack.c.l.b16 %v1288
        %v2273 = vunpack.c.h.b16 %v1288
        %v2274 = vunpack.c.l.b16 %v1289
        %v2275 = vunpack.c.h.b16 %v1289
        %v2276 = vunpack.c.l.b16 %v1290
        %v2277 = vunpack.c.h.b16 %v1290
        %v2278 = vunpack.c.l.b16 %v1291
        %v2279 = vunpack.c.h.b16 %v1291
        %v2280 = vunpack.c.l.b16 %v1292
        %v2281 = vunpack.c.h.b16 %v1292
        %v2282 = vunpack.c.l.b16 %v1293
        %v2283 = vunpack.c.h.b16 %v1293
        %v2284 = vunpack.c.l.b16 %v1294
        %v2285 = vunpack.c.h.b16 %v1294
        %v2286 = vunpack.c.l.b16 %v1295
        %v2287 = vunpack.c.h.b16 %v1295
        %v2288 = vunpack.c.l.b16 %v1296
        %v2289 = vunpack.c.h.b16 %v1296
        %v2290 = vunpack.c.l.b16 %v1297
        %v2291 = vunpack.c.h.b16 %v1297
        %v2292 = vunpack.c.l.b16 %v1298
        %v2293 = vunpack.c.h.b16 %v1298
        %v2294 = vunpack.c.l.b16 %v1299
        %v2295 = vunpack.c.h.b16 %v1299
        %v2296 = vunpack.c.l.b16 %v1300
        %v2297 = vunpack.c.h.b16 %v1300
        %v2298 = vunpack.c.l.b16 %v1301
        %v2299 = vunpack.c.h.b16 %v1301
        %v2300 = vunpack.c.l.b16 %v1302
        %v2301 = vunpack.c.h.b16 %v1302
        %v2302 = vunpack.c.l.b16 %v1303
        %v2303 = vunpack.c.h.b16 %v1303
        %v2304 = vunpack.c.l.b16 %v1304
        %v2305 = vunpack.c.h.b16 %v1304
        %v2306 = vunpack.c.l.b16 %v1305
        %v2307 = vunpack.c.h.b16 %v1305
        %v2308 = vunpack.c.l.b16 %v1306
        %v2309 = vunpack.c.h.b16 %v1306
        %v2310 = vunpack.c.l.b16 %v1307
        %v2311 = vunpack.c.h.b16 %v1307
        %v2312 = vunpack.c.l.b16 %v1308
        %v2313 = vunpack.c.h.b16 %v1308
        %v2314 = vunpack.c.l.b16 %v1309
        %v2315 = vunpack.c.h.b16 %v1309
        %v2316 = vunpack.c.l.b16 %v1310
        %v2317 = vunpack.c.h.b16 %v1310
        %v2318 = vunpack.c.l.b16 %v1311
        %v2319 = vunpack.c.h.b16 %v1311
        %v2320 = vunpack.c.l.b16 %v1312
        %v2321 = vunpack.c.h.b16 %v1312
        %v2322 = vunpack.c.l.b16 %v1313
        %v2323 = vunpack.c.h.b16 %v1313
        %v2324 = vunpack.c.l.b16 %v1314
        %v2325 = vunpack.c.h.b16 %v1314
        %v2326 = vunpack.c.l.b16 %v1315
        %v2327 = vunpack.c.h.b16 %v1315
        %v2328 = vunpack.c.l.b16 %v1316
        %v2329 = vunpack.c.h.b16 %v1316
        %v2330 = vunpack.c.l.b16 %v1317
        %v2331 = vunpack.c.h.b16 %v1317
        %v2332 = vunpack.c.l.b16 %v1318
        %v2333 = vunpack.c.h.b16 %v1318
        %v2334 = vunpack.c.l.b16 %v1319
        %v2335 = vunpack.c.h.b16 %v1319
        %v2336 = vunpack.c.l.b16 %v1320
        %v2337 = vunpack.c.h.b16 %v1320
        %v2338 = vunpack.c.l.b16 %v1321
        %v2339 = vunpack.c.h.b16 %v1321
        %v2340 = vunpack.c.l.b16 %v1322
        %v2341 = vunpack.c.h.b16 %v1322
        %v2342 = vunpack.c.l.b16 %v1323
        %v2343 = vunpack.c.h.b16 %v1323
        %v2344 = vunpack.c.l.b16 %v1324
        %v2345 = vunpack.c.h.b16 %v1324
        %v2346 = vunpack.c.l.b16 %v1325
        %v2347 = vunpack.c.h.b16 %v1325
        %v2348 = vunpack.c.l.b16 %v1326
        %v2349 = vunpack.c.h.b16 %v1326
        %v2350 = vunpack.c.l.b16 %v1327
        %v2351 = vunpack.c.h.b16 %v1327
        %v2352 = vunpack.c.l.b16 %v1328
        %v2353 = vunpack.c.h.b16 %v1328
        %v2354 = vunpack.c.l.b16 %v1329
        %v2355 = vunpack.c.h.b16 %v1329
        %v2356 = vunpack.c.l.b16 %v1330
        %v2357 = vunpack.c.h.b16 %v1330
        %v2358 = vunpack.c.l.b16 %v1331
        %v2359 = vunpack.c.h.b16 %v1331
        %v2360 = vunpack.c.l.b16 %v1332
        %v2361 = vunpack.c.h.b16 %v1332
        %v2362 = vunpack.c.l.b16 %v1333
        %v2363 = vunpack.c.h.b16 %v1333
        %v2364 = vunpack.c.l.b16 %v1334
        %v2365 = vunpack.c.h.b16 %v1334
        %v2366 = vunpack.c.l.b16 %v1335
        %v2367 = vunpack.c.h.b16 %v1335
        %v2368 = vunpack.c.l.b16 %v1336
        %v2369 = vunpack.c.h.b16 %v1336
        %v2370 = vunpack.c.l.b16 %v1337
        %v2371 = vunpack.c.h.b16 %v1337
        %v2372 = vunpack.c.l.b16 %v1338
        %v2373 = vunpack.c.h.b16 %v1338
        %v2374 = vunpack.c.l.b16 %v1339
        %v2375 = vunpack.c.h.b16 %v1339
        %v2376 = vunpack.c.l.b16 %v1340
        %v2377 = vunpack.c.h.b16 %v1340
        %v2378 = vunpack.c.l.b16 %v1341
        %v2379 = vunpack.c.h.b16 %v1341
        %v2380 = vunpack.c.l.b16 %v1342
        %v2381 = vunpack.c.h.b16 %v1342
        %v2382 = vunpack.c.l.b16 %v1343
        %v2383 = vunpack.c.h.b16 %v1343
        %v2384 = vunpack.c.l.b16 %v1344
        %v2385 = vunpack.c.h.b16 %v1344
        %v2386 = vunpack.c.l.b16 %v1345
        %v2387 = vunpack.c.h.b16 %v1345
        %v2388 = vunpack.c.l.b16 %v1346
        %v2389 = vunpack.c.h.b16 %v1346
        %v2390 = vunpack.c.l.b16 %v1347
        %v2391 = vunpack.c.h.b16 %v1347
        %v2392 = vunpack.c.l.b16 %v1348
        %v2393 = vunpack.c.h.b16 %v1348
        %v2394 = vunpack.c.l.b16 %v1349
        %v2395 = vunpack.c.h.b16 %v1349
        %v2396 = vunpack.c.l.b16 %v1350
        %v2397 = vunpack.c.h.b16 %v1350
        %v2398 = vunpack.c.l.b16 %v1351
        %v2399 = vunpack.c.h.b16 %v1351
        %v2400 = vunpack.c.l.b16 %v1352
        %v2401 = vunpack.c.h.b16 %v1352
        %v2402 = vunpack.c.l.b16 %v1353
        %v2403 = vunpack.c.h.b16 %v1353
        %v2404 = vunpack.c.l.b16 %v1354
        %v2405 = vunpack.c.h.b16 %v1354
        %v2406 = vunpack.c.l.b16 %v1355
        %v2407 = vunpack.c.h.b16 %v1355
        %v2408 = vunpack.c.l.b16 %v1356
        %v2409 = vunpack.c.h.b16 %v1356
        %v2410 = vunpack.c.l.b16 %v1357
        %v2411 = vunpack.c.h.b16 %v1357
        %v2412 = vunpack.c.l.b16 %v1358
        %v2413 = vunpack.c.h.b16 %v1358
        %v2414 = vunpack.c.l.b16 %v1359
        %v2415 = vunpack.c.h.b16 %v1359
        %v2416 = vunpack.c.l.b16 %v1360
        %v2417 = vunpack.c.h.b16 %v1360
        %v2418 = vunpack.c.l.b16 %v1361
        %v2419 = vunpack.c.h.b16 %v1361
        %v2420 = vunpack.c.l.b16 %v1362
        %v2421 = vunpack.c.h.b16 %v1362
        %v2422 = vunpack.c.l.b16 %v1363
        %v2423 = vunpack.c.h.b16 %v1363
        %v2424 = vunpack.c.l.b16 %v1364
        %v2425 = vunpack.c.h.b16 %v1364
        %v2426 = vunpack.c.l.b16 %v1365
        %v2427 = vunpack.c.h.b16 %v1365
        %v2428 = vunpack.c.l.b16 %v1366
        %v2429 = vunpack.c.h.b16 %v1366
        %v2430 = vunpack.c.l.b16 %v1367
        %v2431 = vunpack.c.h.b16 %v1367
        %v2432 = vunpack.c.l.b16 %v1368
        %v2433 = vunpack.c.h.b16 %v1368
        %v2434 = vunpack.c.l.b16 %v1369
        %v2435 = vunpack.c.h.b16 %v1369
        %v2436 = vunpack.c.l.b16 %v1370
        %v2437 = vunpack.c.h.b16 %v1370
        %v2438 = vunpack.c.l.b16 %v1371
        %v2439 = vunpack.c.h.b16 %v1371
        %v2440 = vunpack.c.l.b16 %v1372
        %v2441 = vunpack.c.h.b16 %v1372
        %v2442 = vunpack.c.l.b16 %v1373
        %v2443 = vunpack.c.h.b16 %v1373
        %v2444 = vunpack.c.l.b16 %v1374
        %v2445 = vunpack.c.h.b16 %v1374
        %v2446 = vunpack.c.l.b16 %v1375
        %v2447 = vunpack.c.h.b16 %v1375
        %v2448 = vunpack.c.l.b16 %v1376
        %v2449 = vunpack.c.h.b16 %v1376
        %v2450 = vunpack.c.l.b16 %v1377
        %v2451 = vunpack.c.h.b16 %v1377
        %v2452 = vunpack.c.l.b16 %v1378
        %v2453 = vunpack.c.h.b16 %v1378
        %v2454 = vunpack.c.l.b16 %v1379
        %v2455 = vunpack.c.h.b16 %v1379
        %v2456 = vunpack.c.l.b16 %v1380
        %v2457 = vunpack.c.h.b16 %v1380
        %v2458 = vunpack.c.l.b16 %v1381
        %v2459 = vunpack.c.h.b16 %v1381
        %v2460 = vunpack.c.l.b16 %v1382
        %v2461 = vunpack.c.h.b16 %v1382
        %v2462 = vunpack.c.l.b16 %v1383
        %v2463 = vunpack.c.h.b16 %v1383
        %v2464 = vunpack.c.l.b16 %v1384
        %v2465 = vunpack.c.h.b16 %v1384
        %v2466 = vunpack.c.l.b16 %v1385
        %v2467 = vunpack.c.h.b16 %v1385
        %v2468 = vunpack.c.l.b16 %v1386
        %v2469 = vunpack.c.h.b16 %v1386
        %v2470 = vunpack.c.l.b16 %v1387
        %v2471 = vunpack.c.h.b16 %v1387
        %v2472 = vunpack.c.l.b16 %v1388
        %v2473 = vunpack.c.h.b16 %v1388
        %v2474 = vunpack.c.l.b16 %v1389
        %v2475 = vunpack.c.h.b16 %v1389
        %v2476 = vunpack.c.l.b16 %v1390
        %v2477 = vunpack.c.h.b16 %v1390
        %v2478 = vunpack.c.l.b16 %v1391
        %v2479 = vunpack.c.h.b16 %v1391
        %v2480 = vunpack.c.l.b16 %v1392
        %v2481 = vunpack.c.h.b16 %v1392
        %v2482 = vunpack.c.l.b16 %v1393
        %v2483 = vunpack.c.h.b16 %v1393
        %v2484 = vunpack.c.l.b16 %v1394
        %v2485 = vunpack.c.h.b16 %v1394
        %v2486 = vunpack.c.l.b16 %v1395
        %v2487 = vunpack.c.h.b16 %v1395
        %v2488 = vunpack.c.l.b16 %v1396
        %v2489 = vunpack.c.h.b16 %v1396
        %v2490 = vunpack.c.l.b16 %v1397
        %v2491 = vunpack.c.h.b16 %v1397
        %v2492 = vunpack.c.l.b16 %v1398
        %v2493 = vunpack.c.h.b16 %v1398
        %v2494 = vunpack.c.l.b16 %v1399
        %v2495 = vunpack.c.h.b16 %v1399
        %v2496 = vunpack.c.l.b16 %v1400
        %v2497 = vunpack.c.h.b16 %v1400
        %v2498 = vunpack.c.l.b16 %v1401
        %v2499 = vunpack.c.h.b16 %v1401
        %v2500 = vunpack.c.l.b16 %v1402
        %v2501 = vunpack.c.h.b16 %v1402
        %v2502 = vunpack.c.l.b16 %v1403
        %v2503 = vunpack.c.h.b16 %v1403
        %v2504 = vunpack.c.l.b16 %v1404
        %v2505 = vunpack.c.h.b16 %v1404
        %v2506 = vunpack.c.l.b16 %v1405
        %v2507 = vunpack.c.h.b16 %v1405
        %v2508 = vunpack.c.l.b16 %v1406
        %v2509 = vunpack.c.h.b16 %v1406
        %v2510 = vunpack.c.l.b16 %v1407
        %v2511 = vunpack.c.h.b16 %v1407
        %v2512 = vunpack.c.l.b16 %v1408
        %v2513 = vunpack.c.h.b16 %v1408
        %v2514 = vunpack.c.l.b16 %v1409
        %v2515 = vunpack.c.h.b16 %v1409
        %v2516 = vunpack.c.l.b16 %v1410
        %v2517 = vunpack.c.h.b16 %v1410
        %v2518 = vunpack.c.l.b16 %v1411
        %v2519 = vunpack.c.h.b16 %v1411
        %v2520 = vunpack.c.l.b16 %v1412
        %v2521 = vunpack.c.h.b16 %v1412
        %v2522 = vunpack.c.l.b16 %v1413
        %v2523 = vunpack.c.h.b16 %v1413
        %v2524 = vunpack.c.l.b16 %v1414
        %v2525 = vunpack.c.h.b16 %v1414
        %v2526 = vunpack.c.l.b16 %v1415
        %v2527 = vunpack.c.h.b16 %v1415
        %v2528 = vunpack.c.l.b16 %v1416
        %v2529 = vunpack.c.h.b16 %v1416
        %v2530 = vunpack.c.l.b16 %v1417
        %v2531 = vunpack.c.h.b16 %v1417
        %v2532 = vunpack.c.l.b16 %v1418
        %v2533 = vunpack.c.h.b16 %v1418
        %v2534 = vunpack.c.l.b16 %v1419
        %v2535 = vunpack.c.h.b16 %v1419
        %v2536 = vunpack.c.l.b16 %v1420
        %v2537 = vunpack.c.h.b16 %v1420
        %v2538 = vunpack.c.l.b16 %v1421
        %v2539 = vunpack.c.h.b16 %v1421
        %v2540 = vunpack.c.l.b16 %v1422
        %v2541 = vunpack.c.h.b16 %v1422
        %v2542 = vunpack.c.l.b16 %v1423
        %v2543 = vunpack.c.h.b16 %v1423
        %v2544 = vunpack.c.l.b16 %v1424
        %v2545 = vunpack.c.h.b16 %v1424
        %v2546 = vunpack.c.l.b16 %v1425
        %v2547 = vunpack.c.h.b16 %v1425
        %v2548 = vunpack.c.l.b16 %v1426
        %v2549 = vunpack.c.h.b16 %v1426
        %v2550 = vunpack.c.l.b16 %v1427
        %v2551 = vunpack.c.h.b16 %v1427
        %v2552 = vunpack.c.l.b16 %v1428
        %v2553 = vunpack.c.h.b16 %v1428
        %v2554 = vunpack.c.l.b16 %v1429
        %v2555 = vunpack.c.h.b16 %v1429
        %v2556 = vunpack.c.l.b16 %v1430
        %v2557 = vunpack.c.h.b16 %v1430
        %v2558 = vunpack.c.l.b16 %v1431
        %v2559 = vunpack.c.h.b16 %v1431
        %v2560 = vunpack.c.l.b16 %v1432
        %v2561 = vunpack.c.h.b16 %v1432
        %v2562 = vunpack.c.l.b16 %v1433
        %v2563 = vunpack.c.h.b16 %v1433
        %v2564 = vunpack.c.l.b16 %v1434
        %v2565 = vunpack.c.h.b16 %v1434
        %v2566 = vunpack.c.l.b16 %v1435
        %v2567 = vunpack.c.h.b16 %v1435
        %v2568 = vunpack.c.l.b16 %v1436
        %v2569 = vunpack.c.h.b16 %v1436
        %v2570 = vunpack.c.l.b16 %v1437
        %v2571 = vunpack.c.h.b16 %v1437
        %v2572 = vunpack.c.l.b16 %v1438
        %v2573 = vunpack.c.h.b16 %v1438
        %v2574 = vunpack.c.l.b16 %v1439
        %v2575 = vunpack.c.h.b16 %v1439
        %v2576 = vunpack.c.l.b16 %v1440
        %v2577 = vunpack.c.h.b16 %v1440
        %v2578 = vunpack.c.l.b16 %v1441
        %v2579 = vunpack.c.h.b16 %v1441
        %v2580 = vunpack.c.l.b16 %v1442
        %v2581 = vunpack.c.h.b16 %v1442
        %v2582 = vunpack.c.l.b16 %v1443
        %v2583 = vunpack.c.h.b16 %v1443
        %v2584 = vunpack.c.l.b16 %v1444
        %v2585 = vunpack.c.h.b16 %v1444
        %v2586 = vunpack.c.l.b16 %v1445
        %v2587 = vunpack.c.h.b16 %v1445
        %v2588 = vunpack.c.l.b16 %v1446
        %v2589 = vunpack.c.h.b16 %v1446
        %v2590 = vunpack.c.l.b16 %v1447
        %v2591 = vunpack.c.h.b16 %v1447
        %v2592 = vunpack.c.l.b16 %v1448
        %v2593 = vunpack.c.h.b16 %v1448
        %v2594 = vunpack.c.l.b16 %v1449
        %v2595 = vunpack.c.h.b16 %v1449
        %v2596 = vunpack.c.l.b16 %v1450
        %v2597 = vunpack.c.h.b16 %v1450
        %v2598 = vunpack.c.l.b16 %v1451
        %v2599 = vunpack.c.h.b16 %v1451
        %v2600 = vunpack.c.l.b16 %v1452
        %v2601 = vunpack.c.h.b16 %v1452
        %v2602 = vunpack.c.l.b16 %v1453
        %v2603 = vunpack.c.h.b16 %v1453
        %v2604 = vunpack.c.l.b16 %v1454
        %v2605 = vunpack.c.h.b16 %v1454
        %v2606 = vunpack.c.l.b16 %v1455
        %v2607 = vunpack.c.h.b16 %v1455
        %v2608 = vunpack.c.l.b16 %v1456
        %v2609 = vunpack.c.h.b16 %v1456
        %v2610 = vunpack.c.l.b16 %v1457
        %v2611 = vunpack.c.h.b16 %v1457
        %v2612 = vunpack.c.l.b16 %v1458
        %v2613 = vunpack.c.h.b16 %v1458
        %v2614 = vunpack.c.l.b16 %v1459
        %v2615 = vunpack.c.h.b16 %v1459
        %v2616 = vunpack.c.l.b16 %v1460
        %v2617 = vunpack.c.h.b16 %v1460
        %v2618 = vunpack.c.l.b16 %v1461
        %v2619 = vunpack.c.h.b16 %v1461
        %v2620 = vunpack.c.l.b16 %v1462
        %v2621 = vunpack.c.h.b16 %v1462
        %v2622 = vunpack.c.l.b16 %v1463
        %v2623 = vunpack.c.h.b16 %v1463
        %v2624 = vunpack.c.l.b16 %v1464
        %v2625 = vunpack.c.h.b16 %v1464
        %v2626 = vunpack.c.l.b16 %v1465
        %v2627 = vunpack.c.h.b16 %v1465
        %v2628 = vunpack.c.l.b16 %v1466
        %v2629 = vunpack.c.h.b16 %v1466
        %v2630 = vunpack.c.l.b16 %v1467
        %v2631 = vunpack.c.h.b16 %v1467
        %v2632 = vunpack.c.l.b16 %v1468
        %v2633 = vunpack.c.h.b16 %v1468
        %v2634 = vunpack.c.l.b16 %v1469
        %v2635 = vunpack.c.h.b16 %v1469
        %v2636 = vunpack.c.l.b16 %v1470
        %v2637 = vunpack.c.h.b16 %v1470
        %v2638 = vunpack.c.l.b16 %v1471
        %v2639 = vunpack.c.h.b16 %v1471
        %v2640 = vunpack.c.l.b16 %v1472
        %v2641 = vunpack.c.h.b16 %v1472
        %v2642 = vunpack.c.l.b16 %v1473
        %v2643 = vunpack.c.h.b16 %v1473
        %v2644 = vunpack.c.l.b16 %v1474
        %v2645 = vunpack.c.h.b16 %v1474
        %v2646 = vunpack.c.l.b16 %v1475
        %v2647 = vunpack.c.h.b16 %v1475
        %v2648 = vunpack.c.l.b16 %v1476
        %v2649 = vunpack.c.h.b16 %v1476
        %v2650 = vunpack.c.l.b16 %v1477
        %v2651 = vunpack.c.h.b16 %v1477
        %v2652 = vunpack.c.l.b16 %v1478
        %v2653 = vunpack.c.h.b16 %v1478
        %v2654 = vunpack.c.l.b16 %v1479
        %v2655 = vunpack.c.h.b16 %v1479
        %v2656 = vunpack.c.l.b16 %v1480
        %v2657 = vunpack.c.h.b16 %v1480
        %v2658 = vunpack.c.l.b16 %v1481
        %v2659 = vunpack.c.h.b16 %v1481
        %v2660 = vunpack.c.l.b16 %v1482
        %v2661 = vunpack.c.h.b16 %v1482
        %v2662 = vunpack.c.l.b16 %v1483
        %v2663 = vunpack.c.h.b16 %v1483
        %v2664 = vunpack.c.l.b16 %v1484
        %v2665 = vunpack.c.h.b16 %v1484
        %v2666 = vunpack.c.l.b16 %v1485
        %v2667 = vunpack.c.h.b16 %v1485
        %v2668 = vunpack.c.l.b16 %v1486
        %v2669 = vunpack.c.h.b16 %v1486
        %v2670 = vunpack.c.l.b16 %v1487
        %v2671 = vunpack.c.h.b16 %v1487
        %v2672 = vunpack.c.l.b16 %v1488
        %v2673 = vunpack.c.h.b16 %v1488
        %v2674 = vunpack.c.l.b16 %v1489
        %v2675 = vunpack.c.h.b16 %v1489
        %v2676 = vunpack.c.l.b16 %v1490
        %v2677 = vunpack.c.h.b16 %v1490
        %v2678 = vunpack.c.l.b16 %v1491
        %v2679 = vunpack.c.h.b16 %v1491
        %v2680 = vunpack.c.l.b16 %v1492
        %v2681 = vunpack.c.h.b16 %v1492
        %v2682 = vunpack.c.l.b16 %v1493
        %v2683 = vunpack.c.h.b16 %v1493
        %v2684 = vunpack.c.l.b16 %v1494
        %v2685 = vunpack.c.h.b16 %v1494
        %v2686 = vunpack.c.l.b16 %v1495
        %v2687 = vunpack.c.h.b16 %v1495
        %v2688 = vunpack.c.l.b16 %v1496
        %v2689 = vunpack.c.h.b16 %v1496
        %v2690 = vunpack.c.l.b16 %v1497
        %v2691 = vunpack.c.h.b16 %v1497
        %v2692 = vunpack.c.l.b16 %v1498
        %v2693 = vunpack.c.h.b16 %v1498
        %v2694 = vunpack.c.l.b16 %v1499
        %v2695 = vunpack.c.h.b16 %v1499
        %v2696 = vunpack.c.l.b16 %v1500
        %v2697 = vunpack.c.h.b16 %v1500
        %v2698 = vunpack.c.l.b16 %v1501
        %v2699 = vunpack.c.h.b16 %v1501
        %v2700 = vunpack.c.l.b16 %v1502
        %v2701 = vunpack.c.h.b16 %v1502
        %v2702 = vunpack.c.l.b16 %v1503
        %v2703 = vunpack.c.h.b16 %v1503
        %v2704 = vunpack.c.l.b16 %v1504
        %v2705 = vunpack.c.h.b16 %v1504
        %v2706 = vunpack.c.l.b16 %v1505
        %v2707 = vunpack.c.h.b16 %v1505
        %v2708 = vunpack.c.l.b16 %v1506
        %v2709 = vunpack.c.h.b16 %v1506
        %v2710 = vunpack.c.l.b16 %v1507
        %v2711 = vunpack.c.h.b16 %v1507
        %v2712 = vunpack.c.l.b16 %v1508
        %v2713 = vunpack.c.h.b16 %v1508
        %v2714 = vunpack.c.l.b16 %v1509
        %v2715 = vunpack.c.h.b16 %v1509
        %v2716 = vunpack.c.l.b16 %v1510
        %v2717 = vunpack.c.h.b16 %v1510
        %v2718 = vunpack.c.l.b16 %v1511
        %v2719 = vunpack.c.h.b16 %v1511
        %v2720 = vunpack.c.l.b16 %v1512
        %v2721 = vunpack.c.h.b16 %v1512
        %v2722 = vunpack.c.l.b16 %v1513
        %v2723 = vunpack.c.h.b16 %v1513
        %v2724 = vunpack.c.l.b16 %v1514
        %v2725 = vunpack.c.h.b16 %v1514
        %v2726 = vunpack.c.l.b16 %v1515
        %v2727 = vunpack.c.h.b16 %v1515
        %v2728 = vunpack.c.l.b16 %v1516
        %v2729 = vunpack.c.h.b16 %v1516
        %v2730 = vunpack.c.l.b16 %v1517
        %v2731 = vunpack.c.h.b16 %v1517
        %v2732 = vunpack.c.l.b16 %v1518
        %v2733 = vunpack.c.h.b16 %v1518
        %v2734 = vunpack.c.l.b16 %v1519
        %v2735 = vunpack.c.h.b16 %v1519
        %v2736 = vunpack.c.l.b16 %v1520
        %v2737 = vunpack.c.h.b16 %v1520
        %v2738 = vunpack.c.l.b16 %v1521
        %v2739 = vunpack.c.h.b16 %v1521
        %v2740 = vunpack.c.l.b16 %v1522
        %v2741 = vunpack.c.h.b16 %v1522
        %v2742 = vunpack.c.l.b16 %v1523
        %v2743 = vunpack.c.h.b16 %v1523
        %v2744 = vunpack.c.l.b16 %v1524
        %v2745 = vunpack.c.h.b16 %v1524
        %v2746 = vunpack.c.l.b16 %v1525
        %v2747 = vunpack.c.h.b16 %v1525
        %v2748 = vunpack.c.l.b16 %v1526
        %v2749 = vunpack.c.h.b16 %v1526
        %v2750 = vunpack.c.l.b16 %v1527
        %v2751 = vunpack.c.h.b16 %v1527
        %v2752 = vunpack.c.l.b16 %v1528
        %v2753 = vunpack.c.h.b16 %v1528
        %v2754 = vunpack.c.l.b16 %v1529
        %v2755 = vunpack.c.h.b16 %v1529
        %v2756 = vunpack.c.l.b16 %v1530
        %v2757 = vunpack.c.h.b16 %v1530
        %v2758 = vunpack.c.l.b16 %v1531
        %v2759 = vunpack.c.h.b16 %v1531
        %v2760 = vunpack.c.l.b16 %v1532
        %v2761 = vunpack.c.h.b16 %v1532
        %v2762 = vunpack.c.l.b16 %v1533
        %v2763 = vunpack.c.h.b16 %v1533
        %v2764 = vunpack.c.l.b16 %v1534
        %v2765 = vunpack.c.h.b16 %v1534
        %v2766 = vunpack.c.l.b16 %v1535
        %v2767 = vunpack.c.h.b16 %v1535
        %v2768 = vunpack.c.l.b16 %v1536
        %v2769 = vunpack.c.h.b16 %v1536
        %v2770 = vunpack.c.l.b16 %v1537
        %v2771 = vunpack.c.h.b16 %v1537
        %v2772 = vunpack.c.l.b16 %v1538
        %v2773 = vunpack.c.h.b16 %v1538
        %v2774 = vunpack.c.l.b16 %v1539
        %v2775 = vunpack.c.h.b16 %v1539
        %v2776 = vunpack.c.l.b16 %v1540
        %v2777 = vunpack.c.h.b16 %v1540
        %v2778 = vunpack.c.l.b16 %v1541
        %v2779 = vunpack.c.h.b16 %v1541
        %v2780 = vunpack.c.l.b16 %v1542
        %v2781 = vunpack.c.h.b16 %v1542
        %v2782 = vunpack.c.l.b16 %v1543
        %v2783 = vunpack.c.h.b16 %v1543
        %v2784 = vunpack.c.l.b16 %v1544
        %v2785 = vunpack.c.h.b16 %v1544
        %v2786 = vunpack.c.l.b16 %v1545
        %v2787 = vunpack.c.h.b16 %v1545
        %v2788 = vunpack.c.l.b16 %v1546
        %v2789 = vunpack.c.h.b16 %v1546
        %v2790 = vunpack.c.l.b16 %v1547
        %v2791 = vunpack.c.h.b16 %v1547
        %v2792 = vunpack.c.l.b16 %v1548
        %v2793 = vunpack.c.h.b16 %v1548
        %v2794 = vunpack.c.l.b16 %v1549
        %v2795 = vunpack.c.h.b16 %v1549
        %v2796 = vunpack.c.l.b16 %v1550
        %v2797 = vunpack.c.h.b16 %v1550
        %v2798 = vunpack.c.l.b16 %v1551
        %v2799 = vunpack.c.h.b16 %v1551
        %v2800 = vunpack.c.l.b16 %v1552
        %v2801 = vunpack.c.h.b16 %v1552
        %v2802 = vunpack.c.l.b16 %v1553
        %v2803 = vunpack.c.h.b16 %v1553
        %v2804 = vunpack.c.l.b16 %v1554
        %v2805 = vunpack.c.h.b16 %v1554
        %v2806 = vunpack.c.l.b16 %v1555
        %v2807 = vunpack.c.h.b16 %v1555
        %v2808 = vunpack.c.l.b16 %v1556
        %v2809 = vunpack.c.h.b16 %v1556
        %v2810 = vunpack.c.l.b16 %v1557
        %v2811 = vunpack.c.h.b16 %v1557
        %v2812 = vunpack.c.l.b16 %v1558
        %v2813 = vunpack.c.h.b16 %v1558
        %v2814 = vunpack.c.l.b16 %v1559
        %v2815 = vunpack.c.h.b16 %v1559
        %v2816 = vunpack.c.l.b16 %v1560
        %v2817 = vunpack.c.h.b16 %v1560
        %v2818 = vunpack.c.l.b16 %v1561
        %v2819 = vunpack.c.h.b16 %v1561
        %v2820 = vunpack.c.l.b16 %v1562
        %v2821 = vunpack.c.h.b16 %v1562
        %v2822 = vunpack.c.l.b16 %v1563
        %v2823 = vunpack.c.h.b16 %v1563
        %v2824 = vunpack.c.l.b16 %v1564
        %v2825 = vunpack.c.h.b16 %v1564
        %v2826 = vunpack.c.l.b16 %v1565
        %v2827 = vunpack.c.h.b16 %v1565
        %v2828 = vunpack.c.l.b16 %v1566
        %v2829 = vunpack.c.h.b16 %v1566
        %v2830 = vunpack.c.l.b16 %v1567
        %v2831 = vunpack.c.h.b16 %v1567
        %v2832 = vunpack.c.l.b16 %v1568
        %v2833 = vunpack.c.h.b16 %v1568
        %v2834 = vunpack.c.l.b16 %v1569
        %v2835 = vunpack.c.h.b16 %v1569
        %v2836 = vunpack.c.l.b16 %v1570
        %v2837 = vunpack.c.h.b16 %v1570
        %v2838 = vunpack.c.l.b16 %v1571
        %v2839 = vunpack.c.h.b16 %v1571
        %v2840 = vunpack.c.l.b16 %v1572
        %v2841 = vunpack.c.h.b16 %v1572
        %v2842 = vunpack.c.l.b16 %v1573
        %v2843 = vunpack.c.h.b16 %v1573
        %v2844 = vunpack.c.l.b16 %v1574
        %v2845 = vunpack.c.h.b16 %v1574
        %v2846 = vunpack.c.l.b16 %v1575
        %v2847 = vunpack.c.h.b16 %v1575
        %v2848 = vunpack.c.l.b16 %v1576
        %v2849 = vunpack.c.h.b16 %v1576
        %v2850 = vunpack.c.l.b16 %v1577
        %v2851 = vunpack.c.h.b16 %v1577
        %v2852 = vunpack.c.l.b16 %v1578
        %v2853 = vunpack.c.h.b16 %v1578
        %v2854 = vunpack.c.l.b16 %v1579
        %v2855 = vunpack.c.h.b16 %v1579
        %v2856 = vunpack.c.l.b16 %v1580
        %v2857 = vunpack.c.h.b16 %v1580
        %v2858 = vunpack.c.l.b16 %v1581
        %v2859 = vunpack.c.h.b16 %v1581
        %v2860 = vunpack.c.l.b16 %v1582
        %v2861 = vunpack.c.h.b16 %v1582
        %v2862 = vunpack.c.l.b16 %v1583
        %v2863 = vunpack.c.h.b16 %v1583
        %v2864 = vunpack.c.l.b16 %v1584
        %v2865 = vunpack.c.h.b16 %v1584
        %v2866 = vunpack.c.l.b16 %v1585
        %v2867 = vunpack.c.h.b16 %v1585
        %v2868 = vunpack.c.l.b16 %v1586
        %v2869 = vunpack.c.h.b16 %v1586
        %v2870 = vunpack.c.l.b16 %v1587
        %v2871 = vunpack.c.h.b16 %v1587
        %v2872 = vunpack.c.l.b16 %v1588
        %v2873 = vunpack.c.h.b16 %v1588
        %v2874 = vunpack.c.l.b16 %v1589
        %v2875 = vunpack.c.h.b16 %v1589
        %v2876 = vunpack.c.l.b16 %v1590
        %v2877 = vunpack.c.h.b16 %v1590
        %v2878 = vunpack.c.l.b16 %v1591
        %v2879 = vunpack.c.h.b16 %v1591
        %v2880 = vunpack.c.l.b16 %v1592
        %v2881 = vunpack.c.h.b16 %v1592
        %v2882 = vunpack.c.l.b16 %v1593
        %v2883 = vunpack.c.h.b16 %v1593
        %v2884 = vunpack.c.l.b16 %v1594
        %v2885 = vunpack.c.h.b16 %v1594
        %v2886 = vunpack.c.l.b16 %v1595
        %v2887 = vunpack.c.h.b16 %v1595
        %v2888 = vunpack.c.l.b16 %v1596
        %v2889 = vunpack.c.h.b16 %v1596
        %v2890 = vunpack.c.l.b16 %v1597
        %v2891 = vunpack.c.h.b16 %v1597
        %v2892 = vunpack.c.l.b16 %v1598
        %v2893 = vunpack.c.h.b16 %v1598
        %v2894 = vunpack.c.l.b16 %v1599
        %v2895 = vunpack.c.h.b16 %v1599
        %v2896 = vunpack.c.l.b16 %v1600
        %v2897 = vunpack.c.h.b16 %v1600
        %v2898 = vunpack.c.l.b16 %v1601
        %v2899 = vunpack.c.h.b16 %v1601
        %v2900 = vunpack.c.l.b16 %v1602
        %v2901 = vunpack.c.h.b16 %v1602
        %v2902 = vunpack.c.l.b16 %v1603
        %v2903 = vunpack.c.h.b16 %v1603
        %v2904 = vunpack.c.l.b16 %v1604
        %v2905 = vunpack.c.h.b16 %v1604
        %v2906 = vunpack.c.l.b16 %v1605
        %v2907 = vunpack.c.h.b16 %v1605
        %v2908 = vunpack.c.l.b16 %v1606
        %v2909 = vunpack.c.h.b16 %v1606
        %v2910 = vunpack.c.l.b16 %v1607
        %v2911 = vunpack.c.h.b16 %v1607
        %v2912 = vunpack.c.l.b16 %v1608
        %v2913 = vunpack.c.h.b16 %v1608
        %v2914 = vunpack.c.l.b16 %v1609
        %v2915 = vunpack.c.h.b16 %v1609
        %v2916 = vunpack.c.l.b16 %v1610
        %v2917 = vunpack.c.h.b16 %v1610
        %v2918 = vunpack.c.l.b16 %v1611
        %v2919 = vunpack.c.h.b16 %v1611
        %v2920 = vunpack.c.l.b16 %v1612
        %v2921 = vunpack.c.h.b16 %v1612
        %v2922 = vunpack.c.l.b16 %v1613
        %v2923 = vunpack.c.h.b16 %v1613
        %v2924 = vunpack.c.l.b16 %v1614
        %v2925 = vunpack.c.h.b16 %v1614
        %v2926 = vunpack.c.l.b16 %v1615
        %v2927 = vunpack.c.h.b16 %v1615
        %v2928 = vunpack.c.l.b16 %v1616
        %v2929 = vunpack.c.h.b16 %v1616
        %v2930 = vunpack.c.l.b16 %v1617
        %v2931 = vunpack.c.h.b16 %v1617
        %v2932 = vunpack.c.l.b16 %v1618
        %v2933 = vunpack.c.h.b16 %v1618
        %v2934 = vpack.c.b16 %v2086, %v2070
        %v2935 = vpack.c.b16 %v2087, %v2071
        %v2936 = vpack.c.b16 %v2088, %v2072
        %v2937 = vpack.c.b16 %v2089, %v2073
        %v2938 = vpack.c.b16 %v2090, %v2074
        %v2939 = vpack.c.b16 %v2091, %v2075
        %v2940 = vpack.c.b16 %v2092, %v2076
        %v2941 = vpack.c.b16 %v2093, %v2077
        %v2942 = vpack.c.b16 %v2094, %v2078
        %v2943 = vpack.c.b16 %v2095, %v2079
        %v2944 = vpack.c.b16 %v2096, %v2080
        %v2945 = vpack.c.b16 %v2097, %v2081
        %v2946 = vpack.c.b16 %v2098, %v2082
        %v2947 = vpack.c.b16 %v2099, %v2083
        %v2948 = vpack.c.b16 %v2100, %v2084
        %v2949 = vpack.c.b16 %v2101, %v2085
        %v2950 = vpack.c.b16 %v2118, %v2102
        %v2951 = vpack.c.b16 %v2119, %v2103
        %v2952 = vpack.c.b16 %v2120, %v2104
        %v2953 = vpack.c.b16 %v2121, %v2105
        %v2954 = vpack.c.b16 %v2122, %v2106
        %v2955 = vpack.c.b16 %v2123, %v2107
        %v2956 = vpack.c.b16 %v2124, %v2108
        %v2957 = vpack.c.b16 %v2125, %v2109
        %v2958 = vpack.c.b16 %v2126, %v2110
        %v2959 = vpack.c.b16 %v2127, %v2111
        %v2960 = vpack.c.b16 %v2128, %v2112
        %v2961 = vpack.c.b16 %v2129, %v2113
        %v2962 = vpack.c.b16 %v2130, %v2114
        %v2963 = vpack.c.b16 %v2131, %v2115
        %v2964 = vpack.c.b16 %v2132, %v2116
        %v2965 = vpack.c.b16 %v2133, %v2117
        %v2966 = vpack.c.b16 %v2150, %v2134
        %v2967 = vpack.c.b16 %v2151, %v2135
        %v2968 = vpack.c.b16 %v2152, %v2136
        %v2969 = vpack.c.b16 %v2153, %v2137
        %v2970 = vpack.c.b16 %v2154, %v2138
        %v2971 = vpack.c.b16 %v2155, %v2139
        %v2972 = vpack.c.b16 %v2156, %v2140
        %v2973 = vpack.c.b16 %v2157, %v2141
        %v2974 = vpack.c.b16 %v2158, %v2142
        %v2975 = vpack.c.b16 %v2159, %v2143
        %v2976 = vpack.c.b16 %v2160, %v2144
        %v2977 = vpack.c.b16 %v2161, %v2145
        %v2978 = vpack.c.b16 %v2162, %v2146
        %v2979 = vpack.c.b16 %v2163, %v2147
        %v2980 = vpack.c.b16 %v2164, %v2148
        %v2981 = vpack.c.b16 %v2165, %v2149
        %v2982 = vpack.c.b16 %v2182, %v2166
        %v2983 = vpack.c.b16 %v2183, %v2167
        %v2984 = vpack.c.b16 %v2184, %v2168
        %v2985 = vpack.c.b16 %v2185, %v2169
        %v2986 = vpack.c.b16 %v2186, %v2170
        %v2987 = vpack.c.b16 %v2187, %v2171
        %v2988 = vpack.c.b16 %v2188, %v2172
        %v2989 = vpack.c.b16 %v2189, %v2173
        %v2990 = vpack.c.b16 %v2190, %v2174
        %v2991 = vpack.c.b16 %v2191, %v2175
        %v2992 = vpack.c.b16 %v2192, %v2176
        %v2993 = vpack.c.b16 %v2193, %v2177
        %v2994 = vpack.c.b16 %v2194, %v2178
        %v2995 = vpack.c.b16 %v2195, %v2179
        %v2996 = vpack.c.b16 %v2196, %v2180
        %v2997 = vpack.c.b16 %v2197, %v2181
        %v2998 = vpack.c.b16 %v2214, %v2198
        %v2999 = vpack.c.b16 %v2215, %v2199
        %v3000 = vpack.c.b16 %v2216, %v2200
        %v3001 = vpack.c.b16 %v2217, %v2201
        %v3002 = vpack.c.b16 %v2218, %v2202
        %v3003 = vpack.c.b16 %v2219, %v2203
        %v3004 = vpack.c.b16 %v2220, %v2204
        %v3005 = vpack.c.b16 %v2221, %v2205
        %v3006 = vpack.c.b16 %v2222, %v2206
        %v3007 = vpack.c.b16 %v2223, %v2207
        %v3008 = vpack.c.b16 %v2224, %v2208
        %v3009 = vpack.c.b16 %v2225, %v2209
        %v3010 = vpack.c.b16 %v2226, %v2210
        %v3011 = vpack.c.b16 %v2227, %v2211
        %v3012 = vpack.c.b16 %v2228, %v2212
        %v3013 = vpack.c.b16 %v2229, %v2213
        %v3014 = vpack.c.b16 %v2246, %v2230
        %v3015 = vpack.c.b16 %v2247, %v2231
        %v3016 = vpack.c.b16 %v2248, %v2232
        %v3017 = vpack.c.b16 %v2249, %v2233
        %v3018 = vpack.c.b16 %v2250, %v2234
        %v3019 = vpack.c.b16 %v2251, %v2235
        %v3020 = vpack.c.b16 %v2252, %v2236
        %v3021 = vpack.c.b16 %v2253, %v2237
        %v3022 = vpack.c.b16 %v2254, %v2238
        %v3023 = vpack.c.b16 %v2255, %v2239
        %v3024 = vpack.c.b16 %v2256, %v2240
        %v3025 = vpack.c.b16 %v2257, %v2241
        %v3026 = vpack.c.b16 %v2258, %v2242
        %v3027 = vpack.c.b16 %v2259, %v2243
        %v3028 = vpack.c.b16 %v2260, %v2244
        %v3029 = vpack.c.b16 %v2261, %v2245
        %v3030 = vpack.c.b16 %v2278, %v2262
        %v3031 = vpack.c.b16 %v2279, %v2263
        %v3032 = vpack.c.b16 %v2280, %v2264
        %v3033 = vpack.c.b16 %v2281, %v2265
        %v3034 = vpack.c.b16 %v2282, %v2266
        %v3035 = vpack.c.b16 %v2283, %v2267
        %v3036 = vpack.c.b16 %v2284, %v2268
        %v3037 = vpack.c.b16 %v2285, %v2269
        %v3038 = vpack.c.b16 %v2286, %v2270
        %v3039 = vpack.c.b16 %v2287, %v2271
        %v3040 = vpack.c.b16 %v2288, %v2272
        %v3041 = vpack.c.b16 %v2289, %v2273
        %v3042 = vpack.c.b16 %v2290, %v2274
        %v3043 = vpack.c.b16 %v2291, %v2275
        %v3044 = vpack.c.b16 %v2292, %v2276
        %v3045 = vpack.c.b16 %v2293, %v2277
        %v3046 = vpack.c.b16 %v2310, %v2294
        %v3047 = vpack.c.b16 %v2311, %v2295
        %v3048 = vpack.c.b16 %v2312, %v2296
        %v3049 = vpack.c.b16 %v2313, %v2297
        %v3050 = vpack.c.b16 %v2314, %v2298
        %v3051 = vpack.c.b16 %v2315, %v2299
        %v3052 = vpack.c.b16 %v2316, %v2300
        %v3053 = vpack.c.b16 %v2317, %v2301
        %v3054 = vpack.c.b16 %v2318, %v2302
        %v3055 = vpack.c.b16 %v2319, %v2303
        %v3056 = vpack.c.b16 %v2320, %v2304
        %v3057 = vpack.c.b16 %v2321, %v2305
        %v3058 = vpack.c.b16 %v2322, %v2306
        %v3059 = vpack.c.b16 %v2323, %v2307
        %v3060 = vpack.c.b16 %v2324, %v2308
        %v3061 = vpack.c.b16 %v2325, %v2309
        %v3062 = vpack.c.b16 %v2342, %v2326
        %v3063 = vpack.c.b16 %v2343, %v2327
        %v3064 = vpack.c.b16 %v2344, %v2328
        %v3065 = vpack.c.b16 %v2345, %v2329
        %v3066 = vpack.c.b16 %v2346, %v2330
        %v3067 = vpack.c.b16 %v2347, %v2331
        %v3068 = vpack.c.b16 %v2348, %v2332
        %v3069 = vpack.c.b16 %v2349, %v2333
        %v3070 = vpack.c.b16 %v2350, %v2334
        %v3071 = vpack.c.b16 %v2351, %v2335
        %v3072 = vpack.c.b16 %v2352, %v2336
        %v3073 = vpack.c.b16 %v2353, %v2337
        %v3074 = vpack.c.b16 %v2354, %v2338
        %v3075 = vpack.c.b16 %v2355, %v2339
        %v3076 = vpack.c.b16 %v2356, %v2340
        %v3077 = vpack.c.b16 %v2357, %v2341
        %v3078 = vpack.c.b16 %v2374, %v2358
        %v3079 = vpack.c.b16 %v2375, %v2359
        %v3080 = vpack.c.b16 %v2376, %v2360
        %v3081 = vpack.c.b16 %v2377, %v2361
        %v3082 = vpack.c.b16 %v2378, %v2362
        %v3083 = vpack.c.b16 %v2379, %v2363
        %v3084 = vpack.c.b16 %v2380, %v2364
        %v3085 = vpack.c.b16 %v2381, %v2365
        %v3086 = vpack.c.b16 %v2382, %v2366
        %v3087 = vpack.c.b16 %v2383, %v2367
        %v3088 = vpack.c.b16 %v2384, %v2368
        %v3089 = vpack.c.b16 %v2385, %v2369
        %v3090 = vpack.c.b16 %v2386, %v2370
        %v3091 = vpack.c.b16 %v2387, %v2371
        %v3092 = vpack.c.b16 %v2388, %v2372
        %v3093 = vpack.c.b16 %v2389, %v2373
        %v3094 = vpack.c.b16 %v2406, %v2390
        %v3095 = vpack.c.b16 %v2407, %v2391
        %v3096 = vpack.c.b16 %v2408, %v2392
        %v3097 = vpack.c.b16 %v2409, %v2393
        %v3098 = vpack.c.b16 %v2410, %v2394
        %v3099 = vpack.c.b16 %v2411, %v2395
        %v3100 = vpack.c.b16 %v2412, %v2396
        %v3101 = vpack.c.b16 %v2413, %v2397
        %v3102 = vpack.c.b16 %v2414, %v2398
        %v3103 = vpack.c.b16 %v2415, %v2399
        %v3104 = vpack.c.b16 %v2416, %v2400
        %v3105 = vpack.c.b16 %v2417, %v2401
        %v3106 = vpack.c.b16 %v2418, %v2402
        %v3107 = vpack.c.b16 %v2419, %v2403
        %v3108 = vpack.c.b16 %v2420, %v2404
        %v3109 = vpack.c.b16 %v2421, %v2405
        %v3110 = vpack.c.b16 %v2438, %v2422
        %v3111 = vpack.c.b16 %v2439, %v2423
        %v3112 = vpack.c.b16 %v2440, %v2424
        %v3113 = vpack.c.b16 %v2441, %v2425
        %v3114 = vpack.c.b16 %v2442, %v2426
        %v3115 = vpack.c.b16 %v2443, %v2427
        %v3116 = vpack.c.b16 %v2444, %v2428
        %v3117 = vpack.c.b16 %v2445, %v2429
        %v3118 = vpack.c.b16 %v2446, %v2430
        %v3119 = vpack.c.b16 %v2447, %v2431
        %v3120 = vpack.c.b16 %v2448, %v2432
        %v3121 = vpack.c.b16 %v2449, %v2433
        %v3122 = vpack.c.b16 %v2450, %v2434
        %v3123 = vpack.c.b16 %v2451, %v2435
        %v3124 = vpack.c.b16 %v2452, %v2436
        %v3125 = vpack.c.b16 %v2453, %v2437
        %v3126 = vpack.c.b16 %v2470, %v2454
        %v3127 = vpack.c.b16 %v2471, %v2455
        %v3128 = vpack.c.b16 %v2472, %v2456
        %v3129 = vpack.c.b16 %v2473, %v2457
        %v3130 = vpack.c.b16 %v2474, %v2458
        %v3131 = vpack.c.b16 %v2475, %v2459
        %v3132 = vpack.c.b16 %v2476, %v2460
        %v3133 = vpack.c.b16 %v2477, %v2461
        %v3134 = vpack.c.b16 %v2478, %v2462
        %v3135 = vpack.c.b16 %v2479, %v2463
        %v3136 = vpack.c.b16 %v2480, %v2464
        %v3137 = vpack.c.b16 %v2481, %v2465
        %v3138 = vpack.c.b16 %v2482, %v2466
        %v3139 = vpack.c.b16 %v2483, %v2467
        %v3140 = vpack.c.b16 %v2484, %v2468
        %v3141 = vpack.c.b16 %v2485, %v2469
        %v3142 = vpack.c.b16 %v2502, %v2486
        %v3143 = vpack.c.b16 %v2503, %v2487
        %v3144 = vpack.c.b16 %v2504, %v2488
        %v3145 = vpack.c.b16 %v2505, %v2489
        %v3146 = vpack.c.b16 %v2506, %v2490
        %v3147 = vpack.c.b16 %v2507, %v2491
        %v3148 = vpack.c.b16 %v2508, %v2492
        %v3149 = vpack.c.b16 %v2509, %v2493
        %v3150 = vpack.c.b16 %v2510, %v2494
        %v3151 = vpack.c.b16 %v2511, %v2495
        %v3152 = vpack.c.b16 %v2512, %v2496
        %v3153 = vpack.c.b16 %v2513, %v2497
        %v3154 = vpack.c.b16 %v2514, %v2498
        %v3155 = vpack.c.b16 %v2515, %v2499
        %v3156 = vpack.c.b16 %v2516, %v2500
        %v3157 = vpack.c.b16 %v2517, %v2501
        %v3158 = vpack.c.b16 %v2534, %v2518
        %v3159 = vpack.c.b16 %v2535, %v2519
        %v3160 = vpack.c.b16 %v2536, %v2520
        %v3161 = vpack.c.b16 %v2537, %v2521
        %v3162 = vpack.c.b16 %v2538, %v2522
        %v3163 = vpack.c.b16 %v2539, %v2523
        %v3164 = vpack.c.b16 %v2540, %v2524
        %v3165 = vpack.c.b16 %v2541, %v2525
        %v3166 = vpack.c.b16 %v2542, %v2526
        %v3167 = vpack.c.b16 %v2543, %v2527
        %v3168 = vpack.c.b16 %v2544, %v2528
        %v3169 = vpack.c.b16 %v2545, %v2529
        %v3170 = vpack.c.b16 %v2546, %v2530
        %v3171 = vpack.c.b16 %v2547, %v2531
        %v3172 = vpack.c.b16 %v2548, %v2532
        %v3173 = vpack.c.b16 %v2549, %v2533
        %v3174 = vpack.c.b16 %v2566, %v2550
        %v3175 = vpack.c.b16 %v2567, %v2551
        %v3176 = vpack.c.b16 %v2568, %v2552
        %v3177 = vpack.c.b16 %v2569, %v2553
        %v3178 = vpack.c.b16 %v2570, %v2554
        %v3179 = vpack.c.b16 %v2571, %v2555
        %v3180 = vpack.c.b16 %v2572, %v2556
        %v3181 = vpack.c.b16 %v2573, %v2557
        %v3182 = vpack.c.b16 %v2574, %v2558
        %v3183 = vpack.c.b16 %v2575, %v2559
        %v3184 = vpack.c.b16 %v2576, %v2560
        %v3185 = vpack.c.b16 %v2577, %v2561
        %v3186 = vpack.c.b16 %v2578, %v2562
        %v3187 = vpack.c.b16 %v2579, %v2563
        %v3188 = vpack.c.b16 %v2580, %v2564
        %v3189 = vpack.c.b16 %v2581, %v2565
        %v3190 = vpack.c.b16 %v2598, %v2582
        %v3191 = vpack.c.b16 %v2599, %v2583
        %v3192 = vpack.c.b16 %v2600, %v2584
        %v3193 = vpack.c.b16 %v2601, %v2585
        %v3194 = vpack.c.b16 %v2602, %v2586
        %v3195 = vpack.c.b16 %v2603, %v2587
        %v3196 = vpack.c.b16 %v2604, %v2588
        %v3197 = vpack.c.b16 %v2605, %v2589
        %v3198 = vpack.c.b16 %v2606, %v2590
        %v3199 = vpack.c.b16 %v2607, %v2591
        %v3200 = vpack.c.b16 %v2608, %v2592
        %v3201 = vpack.c.b16 %v2609, %v2593
        %v3202 = vpack.c.b16 %v2610, %v2594
        %v3203 = vpack.c.b16 %v2611, %v2595
        %v3204 = vpack.c.b16 %v2612, %v2596
        %v3205 = vpack.c.b16 %v2613, %v2597
        %v3206 = vpack.c.b16 %v2630, %v2614
        %v3207 = vpack.c.b16 %v2631, %v2615
        %v3208 = vpack.c.b16 %v2632, %v2616
        %v3209 = vpack.c.b16 %v2633, %v2617
        %v3210 = vpack.c.b16 %v2634, %v2618
        %v3211 = vpack.c.b16 %v2635, %v2619
        %v3212 = vpack.c.b16 %v2636, %v2620
        %v3213 = vpack.c.b16 %v2637, %v2621
        %v3214 = vpack.c.b16 %v2638, %v2622
        %v3215 = vpack.c.b16 %v2639, %v2623
        %v3216 = vpack.c.b16 %v2640, %v2624
        %v3217 = vpack.c.b16 %v2641, %v2625
        %v3218 = vpack.c.b16 %v2642, %v2626
        %v3219 = vpack.c.b16 %v2643, %v2627
        %v3220 = vpack.c.b16 %v2644, %v2628
        %v3221 = vpack.c.b16 %v2645, %v2629
        %v3222 = vpack.c.b16 %v2662, %v2646
        %v3223 = vpack.c.b16 %v2663, %v2647
        %v3224 = vpack.c.b16 %v2664, %v2648
        %v3225 = vpack.c.b16 %v2665, %v2649
        %v3226 = vpack.c.b16 %v2666, %v2650
        %v3227 = vpack.c.b16 %v2667, %v2651
        %v3228 = vpack.c.b16 %v2668, %v2652
        %v3229 = vpack.c.b16 %v2669, %v2653
        %v3230 = vpack.c.b16 %v2670, %v2654
        %v3231 = vpack.c.b16 %v2671, %v2655
        %v3232 = vpack.c.b16 %v2672, %v2656
        %v3233 = vpack.c.b16 %v2673, %v2657
        %v3234 = vpack.c.b16 %v2674, %v2658
        %v3235 = vpack.c.b16 %v2675, %v2659
        %v3236 = vpack.c.b16 %v2676, %v2660
        %v3237 = vpack.c.b16 %v2677, %v2661
        %v3238 = vpack.c.b16 %v2694, %v2678
        %v3239 = vpack.c.b16 %v2695, %v2679
        %v3240 = vpack.c.b16 %v2696, %v2680
        %v3241 = vpack.c.b16 %v2697, %v2681
        %v3242 = vpack.c.b16 %v2698, %v2682
        %v3243 = vpack.c.b16 %v2699, %v2683
        %v3244 = vpack.c.b16 %v2700, %v2684
        %v3245 = vpack.c.b16 %v2701, %v2685
        %v3246 = vpack.c.b16 %v2702, %v2686
        %v3247 = vpack.c.b16 %v2703, %v2687
        %v3248 = vpack.c.b16 %v2704, %v2688
        %v3249 = vpack.c.b16 %v2705, %v2689
        %v3250 = vpack.c.b16 %v2706, %v2690
        %v3251 = vpack.c.b16 %v2707, %v2691
        %v3252 = vpack.c.b16 %v2708, %v2692
        %v3253 = vpack.c.b16 %v2709, %v2693
        %v3254 = vpack.c.b16 %v2726, %v2710
        %v3255 = vpack.c.b16 %v2727, %v2711
        %v3256 = vpack.c.b16 %v2728, %v2712
        %v3257 = vpack.c.b16 %v2729, %v2713
        %v3258 = vpack.c.b16 %v2730, %v2714
        %v3259 = vpack.c.b16 %v2731, %v2715
        %v3260 = vpack.c.b16 %v2732, %v2716
        %v3261 = vpack.c.b16 %v2733, %v2717
        %v3262 = vpack.c.b16 %v2734, %v2718
        %v3263 = vpack.c.b16 %v2735, %v2719
        %v3264 = vpack.c.b16 %v2736, %v2720
        %v3265 = vpack.c.b16 %v2737, %v2721
        %v3266 = vpack.c.b16 %v2738, %v2722
        %v3267 = vpack.c.b16 %v2739, %v2723
        %v3268 = vpack.c.b16 %v2740, %v2724
        %v3269 = vpack.c.b16 %v2741, %v2725
        %v3270 = vpack.c.b16 %v2758, %v2742
        %v3271 = vpack.c.b16 %v2759, %v2743
        %v3272 = vpack.c.b16 %v2760, %v2744
        %v3273 = vpack.c.b16 %v2761, %v2745
        %v3274 = vpack.c.b16 %v2762, %v2746
        %v3275 = vpack.c.b16 %v2763, %v2747
        %v3276 = vpack.c.b16 %v2764, %v2748
        %v3277 = vpack.c.b16 %v2765, %v2749
        %v3278 = vpack.c.b16 %v2766, %v2750
        %v3279 = vpack.c.b16 %v2767, %v2751
        %v3280 = vpack.c.b16 %v2768, %v2752
        %v3281 = vpack.c.b16 %v2769, %v2753
        %v3282 = vpack.c.b16 %v2770, %v2754
        %v3283 = vpack.c.b16 %v2771, %v2755
        %v3284 = vpack.c.b16 %v2772, %v2756
        %v3285 = vpack.c.b16 %v2773, %v2757
        %v3286 = vpack.c.b16 %v2790, %v2774
        %v3287 = vpack.c.b16 %v2791, %v2775
        %v3288 = vpack.c.b16 %v2792, %v2776
        %v3289 = vpack.c.b16 %v2793, %v2777
        %v3290 = vpack.c.b16 %v2794, %v2778
        %v3291 = vpack.c.b16 %v2795, %v2779
        %v3292 = vpack.c.b16 %v2796, %v2780
        %v3293 = vpack.c.b16 %v2797, %v2781
        %v3294 = vpack.c.b16 %v2798, %v2782
        %v3295 = vpack.c.b16 %v2799, %v2783
        %v3296 = vpack.c.b16 %v2800, %v2784
        %v3297 = vpack.c.b16 %v2801, %v2785
        %v3298 = vpack.c.b16 %v2802, %v2786
        %v3299 = vpack.c.b16 %v2803, %v2787
        %v3300 = vpack.c.b16 %v2804, %v2788
        %v3301 = vpack.c.b16 %v2805, %v2789
        %v3302 = vpack.c.b16 %v2822, %v2806
        %v3303 = vpack.c.b16 %v2823, %v2807
        %v3304 = vpack.c.b16 %v2824, %v2808
        %v3305 = vpack.c.b16 %v2825, %v2809
        %v3306 = vpack.c.b16 %v2826, %v2810
        %v3307 = vpack.c.b16 %v2827, %v2811
        %v3308 = vpack.c.b16 %v2828, %v2812
        %v3309 = vpack.c.b16 %v2829, %v2813
        %v3310 = vpack.c.b16 %v2830, %v2814
        %v3311 = vpack.c.b16 %v2831, %v2815
        %v3312 = vpack.c.b16 %v2832, %v2816
        %v3313 = vpack.c.b16 %v2833, %v2817
        %v3314 = vpack.c.b16 %v2834, %v2818
        %v3315 = vpack.c.b16 %v2835, %v2819
        %v3316 = vpack.c.b16 %v2836, %v2820
        %v3317 = vpack.c.b16 %v2837, %v2821
        %v3318 = vpack.c.b16 %v2854, %v2838
        %v3319 = vpack.c.b16 %v2855, %v2839
        %v3320 = vpack.c.b16 %v2856, %v2840
        %v3321 = vpack.c.b16 %v2857, %v2841
        %v3322 = vpack.c.b16 %v2858, %v2842
        %v3323 = vpack.c.b16 %v2859, %v2843
        %v3324 = vpack.c.b16 %v2860, %v2844
        %v3325 = vpack.c.b16 %v2861, %v2845
        %v3326 = vpack.c.b16 %v2862, %v2846
        %v3327 = vpack.c.b16 %v2863, %v2847
        %v3328 = vpack.c.b16 %v2864, %v2848
        %v3329 = vpack.c.b16 %v2865, %v2849
        %v3330 = vpack.c.b16 %v2866, %v2850
        %v3331 = vpack.c.b16 %v2867, %v2851
        %v3332 = vpack.c.b16 %v2868, %v2852
        %v3333 = vpack.c.b16 %v2869, %v2853
        %v3334 = vpack.c.b16 %v2886, %v2870
        %v3335 = vpack.c.b16 %v2887, %v2871
        %v3336 = vpack.c.b16 %v2888, %v2872
        %v3337 = vpack.c.b16 %v2889, %v2873
        %v3338 = vpack.c.b16 %v2890, %v2874
        %v3339 = vpack.c.b16 %v2891, %v2875
        %v3340 = vpack.c.b16 %v2892, %v2876
        %v3341 = vpack.c.b16 %v2893, %v2877
        %v3342 = vpack.c.b16 %v2894, %v2878
        %v3343 = vpack.c.b16 %v2895, %v2879
        %v3344 = vpack.c.b16 %v2896, %v2880
        %v3345 = vpack.c.b16 %v2897, %v2881
        %v3346 = vpack.c.b16 %v2898, %v2882
        %v3347 = vpack.c.b16 %v2899, %v2883
        %v3348 = vpack.c.b16 %v2900, %v2884
        %v3349 = vpack.c.b16 %v2901, %v2885
        %v3350 = vpack.c.b16 %v2918, %v2902
        %v3351 = vpack.c.b16 %v2919, %v2903
        %v3352 = vpack.c.b16 %v2920, %v2904
        %v3353 = vpack.c.b16 %v2921, %v2905
        %v3354 = vpack.c.b16 %v2922, %v2906
        %v3355 = vpack.c.b16 %v2923, %v2907
        %v3356 = vpack.c.b16 %v2924, %v2908
        %v3357 = vpack.c.b16 %v2925, %v2909
        %v3358 = vpack.c.b16 %v2926, %v2910
        %v3359 = vpack.c.b16 %v2927, %v2911
        %v3360 = vpack.c.b16 %v2928, %v2912
        %v3361 = vpack.c.b16 %v2929, %v2913
        %v3362 = vpack.c.b16 %v2930, %v2914
        %v3363 = vpack.c.b16 %v2931, %v2915
        %v3364 = vpack.c.b16 %v2932, %v2916
        %v3365 = vpack.c.b16 %v2933, %v2917
        %vm3798 = vcmask 392192
        %v3800 = vsel %vm3798, %v1634, 0
        %3802 = vmatprep.subr.bf16.mxu0 %v2935
        %3803 = vmatpush1.bf16.msra.mxu0 %v2934
        %3804 = vmatprep.subr.bf16.mxu0 %v2951
        %3805 = vmatpush1.bf16.msra.mxu0 %v2950
        %3806 = vmatprep.subr.bf16.mxu0 %v2967
        %3807 = vmatpush1.bf16.msra.mxu0 %v2966
        %3808 = vmatprep.subr.bf16.mxu0 %v2983
        %3809 = vmatpush1.bf16.msra.mxu0 %v2982
        %3810 = vmatprep.subr.bf16.mxu0 %v2999
        %3811 = vmatpush1.bf16.msra.mxu0 %v2998
        %3812 = vmatprep.subr.bf16.mxu0 %v3015
        %3813 = vmatpush1.bf16.msra.mxu0 %v3014
        %3814 = vmatprep.subr.bf16.mxu0 %v3031
        %3815 = vmatpush1.bf16.msra.mxu0 %v3030
        %3816 = vmatprep.subr.bf16.mxu0 %v3047
        %3817 = vmatpush1.bf16.msra.mxu0 %v3046
        %3818 = vmatprep.subr.bf16.mxu0 %v3063
        %3819 = vmatpush1.bf16.msra.mxu0 %v3062
        %3820 = vmatprep.subr.bf16.mxu0 %v3079
        %3821 = vmatpush1.bf16.msra.mxu0 %v3078
        %3822 = vmatprep.subr.bf16.mxu0 %v3095
        %3823 = vmatpush1.bf16.msra.mxu0 %v3094
        %3824 = vmatprep.subr.bf16.mxu0 %v3111
        %3825 = vmatpush1.bf16.msra.mxu0 %v3110
        %3826 = vmatprep.subr.bf16.mxu0 %v3127
        %3827 = vmatpush1.bf16.msra.mxu0 %v3126
        %3828 = vmatprep.subr.bf16.mxu0 %v3143
        %3829 = vmatpush1.bf16.msra.mxu0 %v3142
        %3830 = vmatprep.subr.bf16.mxu0 %v3159
        %3831 = vmatpush1.bf16.msra.mxu0 %v3158
        %3832 = vmatprep.subr.bf16.mxu0 %v3175
        %3833 = vmatpush1.bf16.msra.mxu0 %v3174
        %3834 = vmatprep.mubr.bf16.mxu0 %v1632
        %3835 = vmatmul.mubr.bf16.gmra.mrb[0].mxu0 %v1631
        %v3836 = vpop.f32.mrb[0].mxu0
        %v3837 = vadd.f32 %v1623, %v3836
        %v3838 = vpop.f32.mrb[0].mxu0
        %v3839 = vadd.f32 %v1623, %v3838
        %v3840 = vpop.f32.mrb[0].mxu0
        %v3841 = vpop.f32.mrb[0].mxu0
        %3842 = vdwg.mxu0
        %3843 = vmatprep.subr.bf16.mxu0 %v3191
        %3844 = vmatpush1.bf16.msra.mxu0 %v3190
        %3845 = vmatprep.subr.bf16.mxu0 %v3207
        %3846 = vmatpush1.bf16.msra.mxu0 %v3206
        %3847 = vmatprep.subr.bf16.mxu0 %v3223
        %3848 = vmatpush1.bf16.msra.mxu0 %v3222
        %3849 = vmatprep.subr.bf16.mxu0 %v3239
        %3850 = vmatpush1.bf16.msra.mxu0 %v3238
        %3851 = vmatprep.subr.bf16.mxu0 %v3255
        %3852 = vmatpush1.bf16.msra.mxu0 %v3254
        %3853 = vmatprep.subr.bf16.mxu0 %v3271
        %3854 = vmatpush1.bf16.msra.mxu0 %v3270
        %3855 = vmatprep.subr.bf16.mxu0 %v3287
        %3856 = vmatpush1.bf16.msra.mxu0 %v3286
        %3857 = vmatprep.subr.bf16.mxu0 %v3303
        %3858 = vmatpush1.bf16.msra.mxu0 %v3302
        %3859 = vmatprep.subr.bf16.mxu0 %v3319
        %3860 = vmatpush1.bf16.msra.mxu0 %v3318
        %3861 = vmatprep.subr.bf16.mxu0 %v3335
        %3862 = vmatpush1.bf16.msra.mxu0 %v3334
        %3863 = vmatprep.subr.bf16.mxu0 %v3351
        %3864 = vmatpush1.bf16.msra.mxu0 %v3350
        %3865 = vmatprep.subr.bf16.mxu0 0
        %3866 = vmatpush1.bf16.msra.mxu0 0
        %3867 = vmatprep.subr.bf16.mxu0 0
        %3868 = vmatpush1.bf16.msra.mxu0 0
        %3869 = vmatprep.subr.bf16.mxu0 0
        %3870 = vmatpush1.bf16.msra.mxu0 0
        %3871 = vmatprep.subr.bf16.mxu0 0
        %3872 = vmatpush1.bf16.msra.mxu0 0
        %3873 = vmatprep.subr.bf16.mxu0 0
        %3874 = vmatpush1.bf16.msra.mxu0 0
        %3875 = vmatprep.mubr.bf16.mxu0 %v3800
        %3876 = vmatmul.mubr.bf16.gmra.mrb[0].mxu0 %v1633
        %v3877 = vpop.f32.mrb[0].mxu0
        %v3878 = vadd.f32 %v3837, %v3877
        %v3879 = vpop.f32.mrb[0].mxu0
        %v3880 = vadd.f32 %v3839, %v3879
        %v3881 = vpop.f32.mrb[0].mxu0
        %v3882 = vpop.f32.mrb[0].mxu0
        %3883 = vdwg.mxu0
        %3884 = vmatprep.subr.bf16.mxu0 %v2937
        %3885 = vmatpush1.bf16.msra.mxu0 %v2936
        %3886 = vmatprep.subr.bf16.mxu0 %v2953
        %3887 = vmatpush1.bf16.msra.mxu0 %v2952
        %3888 = vmatprep.subr.bf16.mxu0 %v2969
        %3889 = vmatpush1.bf16.msra.mxu0 %v2968
        %3890 = vmatprep.subr.bf16.mxu0 %v2985
        %3891 = vmatpush1.bf16.msra.mxu0 %v2984
        %3892 = vmatprep.subr.bf16.mxu0 %v3001
        %3893 = vmatpush1.bf16.msra.mxu0 %v3000
        %3894 = vmatprep.subr.bf16.mxu0 %v3017
        %3895 = vmatpush1.bf16.msra.mxu0 %v3016
        %3896 = vmatprep.subr.bf16.mxu0 %v3033
        %3897 = vmatpush1.bf16.msra.mxu0 %v3032
        %3898 = vmatprep.subr.bf16.mxu0 %v3049
        %3899 = vmatpush1.bf16.msra.mxu0 %v3048
        %3900 = vmatprep.subr.bf16.mxu0 %v3065
        %3901 = vmatpush1.bf16.msra.mxu0 %v3064
        %3902 = vmatprep.subr.bf16.mxu0 %v3081
        %3903 = vmatpush1.bf16.msra.mxu0 %v3080
        %3904 = vmatprep.subr.bf16.mxu0 %v3097
        %3905 = vmatpush1.bf16.msra.mxu0 %v3096
        %3906 = vmatprep.subr.bf16.mxu0 %v3113
        %3907 = vmatpush1.bf16.msra.mxu0 %v3112
        %3908 = vmatprep.subr.bf16.mxu0 %v3129
        %3909 = vmatpush1.bf16.msra.mxu0 %v3128
        %3910 = vmatprep.subr.bf16.mxu0 %v3145
        %3911 = vmatpush1.bf16.msra.mxu0 %v3144
        %3912 = vmatprep.subr.bf16.mxu0 %v3161
        %3913 = vmatpush1.bf16.msra.mxu0 %v3160
        %3914 = vmatprep.subr.bf16.mxu0 %v3177
        %3915 = vmatpush1.bf16.msra.mxu0 %v3176
        %3916 = vmatprep.mubr.bf16.mxu0 %v1632
        %3917 = vmatmul.mubr.bf16.gmra.mrb[0].mxu0 %v1631
        %v3918 = vpop.f32.mrb[0].mxu0
        %v3919 = vadd.f32 %v1623, %v3918
        %v3920 = vpop.f32.mrb[0].mxu0
        %v3921 = vadd.f32 %v1623, %v3920
        %v3922 = vpop.f32.mrb[0].mxu0
        %v3923 = vpop.f32.mrb[0].mxu0
        %3924 = vdwg.mxu0
        %3925 = vmatprep.subr.bf16.mxu0 %v3193
        %3926 = vmatpush1.bf16.msra.mxu0 %v3192
        %3927 = vmatprep.subr.bf16.mxu0 %v3209
        %3928 = vmatpush1.bf16.msra.mxu0 %v3208
        %3929 = vmatprep.subr.bf16.mxu0 %v3225
        %3930 = vmatpush1.bf16.msra.mxu0 %v3224
        %3931 = vmatprep.subr.bf16.mxu0 %v3241
        %3932 = vmatpush1.bf16.msra.mxu0 %v3240
        %3933 = vmatprep.subr.bf16.mxu0 %v3257
        %3934 = vmatpush1.bf16.msra.mxu0 %v3256
        %3935 = vmatprep.subr.bf16.mxu0 %v3273
        %3936 = vmatpush1.bf16.msra.mxu0 %v3272
        %3937 = vmatprep.subr.bf16.mxu0 %v3289
        %3938 = vmatpush1.bf16.msra.mxu0 %v3288
        %3939 = vmatprep.subr.bf16.mxu0 %v3305
        %3940 = vmatpush1.bf16.msra.mxu0 %v3304
        %3941 = vmatprep.subr.bf16.mxu0 %v3321
        %3942 = vmatpush1.bf16.msra.mxu0 %v3320
        %3943 = vmatprep.subr.bf16.mxu0 %v3337
        %3944 = vmatpush1.bf16.msra.mxu0 %v3336
        %3945 = vmatprep.subr.bf16.mxu0 %v3353
        %3946 = vmatpush1.bf16.msra.mxu0 %v3352
        %3947 = vmatprep.subr.bf16.mxu0 0
        %3948 = vmatpush1.bf16.msra.mxu0 0
        %3949 = vmatprep.subr.bf16.mxu0 0
        %3950 = vmatpush1.bf16.msra.mxu0 0
        %3951 = vmatprep.subr.bf16.mxu0 0
        %3952 = vmatpush1.bf16.msra.mxu0 0
        %3953 = vmatprep.subr.bf16.mxu0 0
        %3954 = vmatpush1.bf16.msra.mxu0 0
        %3955 = vmatprep.subr.bf16.mxu0 0
        %3956 = vmatpush1.bf16.msra.mxu0 0
        %3957 = vmatprep.mubr.bf16.mxu0 %v3800
        %3958 = vmatmul.mubr.bf16.gmra.mrb[0].mxu0 %v1633
        %v3959 = vpop.f32.mrb[0].mxu0
        %v3960 = vadd.f32 %v3919, %v3959
        %v3961 = vpop.f32.mrb[0].mxu0
        %v3962 = vadd.f32 %v3921, %v3961
        %v3963 = vpop.f32.mrb[0].mxu0
        %v3964 = vpop.f32.mrb[0].mxu0
        %3965 = vdwg.mxu0
        %3966 = vmatprep.subr.bf16.mxu0 %v2939
        %3967 = vmatpush1.bf16.msra.mxu0 %v2938
        %3968 = vmatprep.subr.bf16.mxu0 %v2955
        %3969 = vmatpush1.bf16.msra.mxu0 %v2954
        %3970 = vmatprep.subr.bf16.mxu0 %v2971
        %3971 = vmatpush1.bf16.msra.mxu0 %v2970
        %3972 = vmatprep.subr.bf16.mxu0 %v2987
        %3973 = vmatpush1.bf16.msra.mxu0 %v2986
        %3974 = vmatprep.subr.bf16.mxu0 %v3003
        %3975 = vmatpush1.bf16.msra.mxu0 %v3002
        %3976 = vmatprep.subr.bf16.mxu0 %v3019
        %3977 = vmatpush1.bf16.msra.mxu0 %v3018
        %3978 = vmatprep.subr.bf16.mxu0 %v3035
        %3979 = vmatpush1.bf16.msra.mxu0 %v3034
        %3980 = vmatprep.subr.bf16.mxu0 %v3051
        %3981 = vmatpush1.bf16.msra.mxu0 %v3050
        %3982 = vmatprep.subr.bf16.mxu0 %v3067
        %3983 = vmatpush1.bf16.msra.mxu0 %v3066
        %3984 = vmatprep.subr.bf16.mxu0 %v3083
        %3985 = vmatpush1.bf16.msra.mxu0 %v3082
        %3986 = vmatprep.subr.bf16.mxu0 %v3099
        %3987 = vmatpush1.bf16.msra.mxu0 %v3098
        %3988 = vmatprep.subr.bf16.mxu0 %v3115
        %3989 = vmatpush1.bf16.msra.mxu0 %v3114
        %3990 = vmatprep.subr.bf16.mxu0 %v3131
        %3991 = vmatpush1.bf16.msra.mxu0 %v3130
        %3992 = vmatprep.subr.bf16.mxu0 %v3147
        %3993 = vmatpush1.bf16.msra.mxu0 %v3146
        %3994 = vmatprep.subr.bf16.mxu0 %v3163
        %3995 = vmatpush1.bf16.msra.mxu0 %v3162
        %3996 = vmatprep.subr.bf16.mxu0 %v3179
        %3997 = vmatpush1.bf16.msra.mxu0 %v3178
        %3998 = vmatprep.mubr.bf16.mxu0 %v1632
        %3999 = vmatmul.mubr.bf16.gmra.mrb[0].mxu0 %v1631
        %v4000 = vpop.f32.mrb[0].mxu0
        %v4001 = vadd.f32 %v1623, %v4000
        %v4002 = vpop.f32.mrb[0].mxu0
        %v4003 = vadd.f32 %v1623, %v4002
        %v4004 = vpop.f32.mrb[0].mxu0
        %v4005 = vpop.f32.mrb[0].mxu0
        %4006 = vdwg.mxu0
        %4007 = vmatprep.subr.bf16.mxu0 %v3195
        %4008 = vmatpush1.bf16.msra.mxu0 %v3194
        %4009 = vmatprep.subr.bf16.mxu0 %v3211
        %4010 = vmatpush1.bf16.msra.mxu0 %v3210
        %4011 = vmatprep.subr.bf16.mxu0 %v3227
        %4012 = vmatpush1.bf16.msra.mxu0 %v3226
        %4013 = vmatprep.subr.bf16.mxu0 %v3243
        %4014 = vmatpush1.bf16.msra.mxu0 %v3242
        %4015 = vmatprep.subr.bf16.mxu0 %v3259
        %4016 = vmatpush1.bf16.msra.mxu0 %v3258
        %4017 = vmatprep.subr.bf16.mxu0 %v3275
        %4018 = vmatpush1.bf16.msra.mxu0 %v3274
        %4019 = vmatprep.subr.bf16.mxu0 %v3291
        %4020 = vmatpush1.bf16.msra.mxu0 %v3290
        %4021 = vmatprep.subr.bf16.mxu0 %v3307
        %4022 = vmatpush1.bf16.msra.mxu0 %v3306
        %4023 = vmatprep.subr.bf16.mxu0 %v3323
        %4024 = vmatpush1.bf16.msra.mxu0 %v3322
        %4025 = vmatprep.subr.bf16.mxu0 %v3339
        %4026 = vmatpush1.bf16.msra.mxu0 %v3338
        %4027 = vmatprep.subr.bf16.mxu0 %v3355
        %4028 = vmatpush1.bf16.msra.mxu0 %v3354
        %4029 = vmatprep.subr.bf16.mxu0 0
        %4030 = vmatpush1.bf16.msra.mxu0 0
        %4031 = vmatprep.subr.bf16.mxu0 0
        %4032 = vmatpush1.bf16.msra.mxu0 0
        %4033 = vmatprep.subr.bf16.mxu0 0
        %4034 = vmatpush1.bf16.msra.mxu0 0
        %4035 = vmatprep.subr.bf16.mxu0 0
        %4036 = vmatpush1.bf16.msra.mxu0 0
        %4037 = vmatprep.subr.bf16.mxu0 0
        %4038 = vmatpush1.bf16.msra.mxu0 0
        %4039 = vmatprep.mubr.bf16.mxu0 %v3800
        %4040 = vmatmul.mubr.bf16.gmra.mrb[0].mxu0 %v1633
        %v4041 = vpop.f32.mrb[0].mxu0
        %v4042 = vadd.f32 %v4001, %v4041
        %v4043 = vpop.f32.mrb[0].mxu0
        %v4044 = vadd.f32 %v4003, %v4043
        %v4045 = vpop.f32.mrb[0].mxu0
        %v4046 = vpop.f32.mrb[0].mxu0
        %4047 = vdwg.mxu0
        %4048 = vmatprep.subr.bf16.mxu0 %v2941
        %4049 = vmatpush1.bf16.msra.mxu0 %v2940
        %4050 = vmatprep.subr.bf16.mxu0 %v2957
        %4051 = vmatpush1.bf16.msra.mxu0 %v2956
        %4052 = vmatprep.subr.bf16.mxu0 %v2973
        %4053 = vmatpush1.bf16.msra.mxu0 %v2972
        %4054 = vmatprep.subr.bf16.mxu0 %v2989
        %4055 = vmatpush1.bf16.msra.mxu0 %v2988
        %4056 = vmatprep.subr.bf16.mxu0 %v3005
        %4057 = vmatpush1.bf16.msra.mxu0 %v3004
        %4058 = vmatprep.subr.bf16.mxu0 %v3021
        %4059 = vmatpush1.bf16.msra.mxu0 %v3020
        %4060 = vmatprep.subr.bf16.mxu0 %v3037
        %4061 = vmatpush1.bf16.msra.mxu0 %v3036
        %4062 = vmatprep.subr.bf16.mxu0 %v3053
        %4063 = vmatpush1.bf16.msra.mxu0 %v3052
        %4064 = vmatprep.subr.bf16.mxu0 %v3069
        %4065 = vmatpush1.bf16.msra.mxu0 %v3068
        %4066 = vmatprep.subr.bf16.mxu0 %v3085
        %4067 = vmatpush1.bf16.msra.mxu0 %v3084
        %4068 = vmatprep.subr.bf16.mxu0 %v3101
        %4069 = vmatpush1.bf16.msra.mxu0 %v3100
        %4070 = vmatprep.subr.bf16.mxu0 %v3117
        %4071 = vmatpush1.bf16.msra.mxu0 %v3116
        %4072 = vmatprep.subr.bf16.mxu0 %v3133
        %4073 = vmatpush1.bf16.msra.mxu0 %v3132
        %4074 = vmatprep.subr.bf16.mxu0 %v3149
        %4075 = vmatpush1.bf16.msra.mxu0 %v3148
        %4076 = vmatprep.subr.bf16.mxu0 %v3165
        %4077 = vmatpush1.bf16.msra.mxu0 %v3164
        %4078 = vmatprep.subr.bf16.mxu0 %v3181
        %4079 = vmatpush1.bf16.msra.mxu0 %v3180
        %4080 = vmatprep.mubr.bf16.mxu0 %v1632
        %4081 = vmatmul.mubr.bf16.gmra.mrb[0].mxu0 %v1631
        %v4082 = vpop.f32.mrb[0].mxu0
        %v4083 = vadd.f32 %v1623, %v4082
        %v4084 = vpop.f32.mrb[0].mxu0
        %v4085 = vadd.f32 %v1623, %v4084
        %v4086 = vpop.f32.mrb[0].mxu0
        %v4087 = vpop.f32.mrb[0].mxu0
        %4088 = vdwg.mxu0
        %4089 = vmatprep.subr.bf16.mxu0 %v3197
        %4090 = vmatpush1.bf16.msra.mxu0 %v3196
        %4091 = vmatprep.subr.bf16.mxu0 %v3213
        %4092 = vmatpush1.bf16.msra.mxu0 %v3212
        %4093 = vmatprep.subr.bf16.mxu0 %v3229
        %4094 = vmatpush1.bf16.msra.mxu0 %v3228
        %4095 = vmatprep.subr.bf16.mxu0 %v3245
        %4096 = vmatpush1.bf16.msra.mxu0 %v3244
        %4097 = vmatprep.subr.bf16.mxu0 %v3261
        %4098 = vmatpush1.bf16.msra.mxu0 %v3260
        %4099 = vmatprep.subr.bf16.mxu0 %v3277
        %4100 = vmatpush1.bf16.msra.mxu0 %v3276
        %4101 = vmatprep.subr.bf16.mxu0 %v3293
        %4102 = vmatpush1.bf16.msra.mxu0 %v3292
        %4103 = vmatprep.subr.bf16.mxu0 %v3309
        %4104 = vmatpush1.bf16.msra.mxu0 %v3308
        %4105 = vmatprep.subr.bf16.mxu0 %v3325
        %4106 = vmatpush1.bf16.msra.mxu0 %v3324
        %4107 = vmatprep.subr.bf16.mxu0 %v3341
        %4108 = vmatpush1.bf16.msra.mxu0 %v3340
        %4109 = vmatprep.subr.bf16.mxu0 %v3357
        %4110 = vmatpush1.bf16.msra.mxu0 %v3356
        %4111 = vmatprep.subr.bf16.mxu0 0
        %4112 = vmatpush1.bf16.msra.mxu0 0
        %4113 = vmatprep.subr.bf16.mxu0 0
        %4114 = vmatpush1.bf16.msra.mxu0 0
        %4115 = vmatprep.subr.bf16.mxu0 0
        %4116 = vmatpush1.bf16.msra.mxu0 0
        %4117 = vmatprep.subr.bf16.mxu0 0
        %4118 = vmatpush1.bf16.msra.mxu0 0
        %4119 = vmatprep.subr.bf16.mxu0 0
        %4120 = vmatpush1.bf16.msra.mxu0 0
        %4121 = vmatprep.mubr.bf16.mxu0 %v3800
        %4122 = vmatmul.mubr.bf16.gmra.mrb[0].mxu0 %v1633
        %v4123 = vpop.f32.mrb[0].mxu0
        %v4124 = vadd.f32 %v4083, %v4123
        %v4125 = vpop.f32.mrb[0].mxu0
        %v4126 = vadd.f32 %v4085, %v4125
        %v4127 = vpop.f32.mrb[0].mxu0
        %v4128 = vpop.f32.mrb[0].mxu0
        %4129 = vdwg.mxu0
        %4130 = vmatprep.subr.bf16.mxu0 %v2943
        %4131 = vmatpush1.bf16.msra.mxu0 %v2942
        %4132 = vmatprep.subr.bf16.mxu0 %v2959
        %4133 = vmatpush1.bf16.msra.mxu0 %v2958
        %4134 = vmatprep.subr.bf16.mxu0 %v2975
        %4135 = vmatpush1.bf16.msra.mxu0 %v2974
        %4136 = vmatprep.subr.bf16.mxu0 %v2991
        %4137 = vmatpush1.bf16.msra.mxu0 %v2990
        %4138 = vmatprep.subr.bf16.mxu0 %v3007
        %4139 = vmatpush1.bf16.msra.mxu0 %v3006
        %4140 = vmatprep.subr.bf16.mxu0 %v3023
        %4141 = vmatpush1.bf16.msra.mxu0 %v3022
        %4142 = vmatprep.subr.bf16.mxu0 %v3039
        %4143 = vmatpush1.bf16.msra.mxu0 %v3038
        %4144 = vmatprep.subr.bf16.mxu0 %v3055
        %4145 = vmatpush1.bf16.msra.mxu0 %v3054
        %4146 = vmatprep.subr.bf16.mxu0 %v3071
        %4147 = vmatpush1.bf16.msra.mxu0 %v3070
        %4148 = vmatprep.subr.bf16.mxu0 %v3087
        %4149 = vmatpush1.bf16.msra.mxu0 %v3086
        %4150 = vmatprep.subr.bf16.mxu0 %v3103
        %4151 = vmatpush1.bf16.msra.mxu0 %v3102
        %4152 = vmatprep.subr.bf16.mxu0 %v3119
        %4153 = vmatpush1.bf16.msra.mxu0 %v3118
        %4154 = vmatprep.subr.bf16.mxu0 %v3135
        %4155 = vmatpush1.bf16.msra.mxu0 %v3134
        %4156 = vmatprep.subr.bf16.mxu0 %v3151
        %4157 = vmatpush1.bf16.msra.mxu0 %v3150
        %4158 = vmatprep.subr.bf16.mxu0 %v3167
        %4159 = vmatpush1.bf16.msra.mxu0 %v3166
        %4160 = vmatprep.subr.bf16.mxu0 %v3183
        %4161 = vmatpush1.bf16.msra.mxu0 %v3182
        %4162 = vmatprep.mubr.bf16.mxu0 %v1632
        %4163 = vmatmul.mubr.bf16.gmra.mrb[0].mxu0 %v1631
        %v4164 = vpop.f32.mrb[0].mxu0
        %v4165 = vadd.f32 %v1623, %v4164
        %v4166 = vpop.f32.mrb[0].mxu0
        %v4167 = vadd.f32 %v1623, %v4166
        %v4168 = vpop.f32.mrb[0].mxu0
        %v4169 = vpop.f32.mrb[0].mxu0
        %4170 = vdwg.mxu0
        %4171 = vmatprep.subr.bf16.mxu0 %v3199
        %4172 = vmatpush1.bf16.msra.mxu0 %v3198
        %4173 = vmatprep.subr.bf16.mxu0 %v3215
        %4174 = vmatpush1.bf16.msra.mxu0 %v3214
        %4175 = vmatprep.subr.bf16.mxu0 %v3231
        %4176 = vmatpush1.bf16.msra.mxu0 %v3230
        %4177 = vmatprep.subr.bf16.mxu0 %v3247
        %4178 = vmatpush1.bf16.msra.mxu0 %v3246
        %4179 = vmatprep.subr.bf16.mxu0 %v3263
        %4180 = vmatpush1.bf16.msra.mxu0 %v3262
        %4181 = vmatprep.subr.bf16.mxu0 %v3279
        %4182 = vmatpush1.bf16.msra.mxu0 %v3278
        %4183 = vmatprep.subr.bf16.mxu0 %v3295
        %4184 = vmatpush1.bf16.msra.mxu0 %v3294
        %4185 = vmatprep.subr.bf16.mxu0 %v3311
        %4186 = vmatpush1.bf16.msra.mxu0 %v3310
        %4187 = vmatprep.subr.bf16.mxu0 %v3327
        %4188 = vmatpush1.bf16.msra.mxu0 %v3326
        %4189 = vmatprep.subr.bf16.mxu0 %v3343
        %4190 = vmatpush1.bf16.msra.mxu0 %v3342
        %4191 = vmatprep.subr.bf16.mxu0 %v3359
        %4192 = vmatpush1.bf16.msra.mxu0 %v3358
        %4193 = vmatprep.subr.bf16.mxu0 0
        %4194 = vmatpush1.bf16.msra.mxu0 0
        %4195 = vmatprep.subr.bf16.mxu0 0
        %4196 = vmatpush1.bf16.msra.mxu0 0
        %4197 = vmatprep.subr.bf16.mxu0 0
        %4198 = vmatpush1.bf16.msra.mxu0 0
        %4199 = vmatprep.subr.bf16.mxu0 0
        %4200 = vmatpush1.bf16.msra.mxu0 0
        %4201 = vmatprep.subr.bf16.mxu0 0
        %4202 = vmatpush1.bf16.msra.mxu0 0
        %4203 = vmatprep.mubr.bf16.mxu0 %v3800
        %4204 = vmatmul.mubr.bf16.gmra.mrb[0].mxu0 %v1633
        %v4205 = vpop.f32.mrb[0].mxu0
        %v4206 = vadd.f32 %v4165, %v4205
        %v4207 = vpop.f32.mrb[0].mxu0
        %v4208 = vadd.f32 %v4167, %v4207
        %v4209 = vpop.f32.mrb[0].mxu0
        %v4210 = vpop.f32.mrb[0].mxu0
        %4211 = vdwg.mxu0
        %4212 = vmatprep.subr.bf16.mxu0 %v2945
        %4213 = vmatpush1.bf16.msra.mxu0 %v2944
        %4214 = vmatprep.subr.bf16.mxu0 %v2961
        %4215 = vmatpush1.bf16.msra.mxu0 %v2960
        %4216 = vmatprep.subr.bf16.mxu0 %v2977
        %4217 = vmatpush1.bf16.msra.mxu0 %v2976
        %4218 = vmatprep.subr.bf16.mxu0 %v2993
        %4219 = vmatpush1.bf16.msra.mxu0 %v2992
        %4220 = vmatprep.subr.bf16.mxu0 %v3009
        %4221 = vmatpush1.bf16.msra.mxu0 %v3008
        %4222 = vmatprep.subr.bf16.mxu0 %v3025
        %4223 = vmatpush1.bf16.msra.mxu0 %v3024
        %4224 = vmatprep.subr.bf16.mxu0 %v3041
        %4225 = vmatpush1.bf16.msra.mxu0 %v3040
        %4226 = vmatprep.subr.bf16.mxu0 %v3057
        %4227 = vmatpush1.bf16.msra.mxu0 %v3056
        %4228 = vmatprep.subr.bf16.mxu0 %v3073
        %4229 = vmatpush1.bf16.msra.mxu0 %v3072
        %4230 = vmatprep.subr.bf16.mxu0 %v3089
        %4231 = vmatpush1.bf16.msra.mxu0 %v3088
        %4232 = vmatprep.subr.bf16.mxu0 %v3105
        %4233 = vmatpush1.bf16.msra.mxu0 %v3104
        %4234 = vmatprep.subr.bf16.mxu0 %v3121
        %4235 = vmatpush1.bf16.msra.mxu0 %v3120
        %4236 = vmatprep.subr.bf16.mxu0 %v3137
        %4237 = vmatpush1.bf16.msra.mxu0 %v3136
        %4238 = vmatprep.subr.bf16.mxu0 %v3153
        %4239 = vmatpush1.bf16.msra.mxu0 %v3152
        %4240 = vmatprep.subr.bf16.mxu0 %v3169
        %4241 = vmatpush1.bf16.msra.mxu0 %v3168
        %4242 = vmatprep.subr.bf16.mxu0 %v3185
        %4243 = vmatpush1.bf16.msra.mxu0 %v3184
        %4244 = vmatprep.mubr.bf16.mxu0 %v1632
        %4245 = vmatmul.mubr.bf16.gmra.mrb[0].mxu0 %v1631
        %v4246 = vpop.f32.mrb[0].mxu0
        %v4247 = vadd.f32 %v1623, %v4246
        %v4248 = vpop.f32.mrb[0].mxu0
        %v4249 = vadd.f32 %v1623, %v4248
        %v4250 = vpop.f32.mrb[0].mxu0
        %v4251 = vpop.f32.mrb[0].mxu0
        %4252 = vdwg.mxu0
        %4253 = vmatprep.subr.bf16.mxu0 %v3201
        %4254 = vmatpush1.bf16.msra.mxu0 %v3200
        %4255 = vmatprep.subr.bf16.mxu0 %v3217
        %4256 = vmatpush1.bf16.msra.mxu0 %v3216
        %4257 = vmatprep.subr.bf16.mxu0 %v3233
        %4258 = vmatpush1.bf16.msra.mxu0 %v3232
        %4259 = vmatprep.subr.bf16.mxu0 %v3249
        %4260 = vmatpush1.bf16.msra.mxu0 %v3248
        %4261 = vmatprep.subr.bf16.mxu0 %v3265
        %4262 = vmatpush1.bf16.msra.mxu0 %v3264
        %4263 = vmatprep.subr.bf16.mxu0 %v3281
        %4264 = vmatpush1.bf16.msra.mxu0 %v3280
        %4265 = vmatprep.subr.bf16.mxu0 %v3297
        %4266 = vmatpush1.bf16.msra.mxu0 %v3296
        %4267 = vmatprep.subr.bf16.mxu0 %v3313
        %4268 = vmatpush1.bf16.msra.mxu0 %v3312
        %4269 = vmatprep.subr.bf16.mxu0 %v3329
        %4270 = vmatpush1.bf16.msra.mxu0 %v3328
        %4271 = vmatprep.subr.bf16.mxu0 %v3345
        %4272 = vmatpush1.bf16.msra.mxu0 %v3344
        %4273 = vmatprep.subr.bf16.mxu0 %v3361
        %4274 = vmatpush1.bf16.msra.mxu0 %v3360
        %4275 = vmatprep.subr.bf16.mxu0 0
        %4276 = vmatpush1.bf16.msra.mxu0 0
        %4277 = vmatprep.subr.bf16.mxu0 0
        %4278 = vmatpush1.bf16.msra.mxu0 0
        %4279 = vmatprep.subr.bf16.mxu0 0
        %4280 = vmatpush1.bf16.msra.mxu0 0
        %4281 = vmatprep.subr.bf16.mxu0 0
        %4282 = vmatpush1.bf16.msra.mxu0 0
        %4283 = vmatprep.subr.bf16.mxu0 0
        %4284 = vmatpush1.bf16.msra.mxu0 0
        %4285 = vmatprep.mubr.bf16.mxu0 %v3800
        %4286 = vmatmul.mubr.bf16.gmra.mrb[0].mxu0 %v1633
        %v4287 = vpop.f32.mrb[0].mxu0
        %v4288 = vadd.f32 %v4247, %v4287
        %v4289 = vpop.f32.mrb[0].mxu0
        %v4290 = vadd.f32 %v4249, %v4289
        %v4291 = vpop.f32.mrb[0].mxu0
        %v4292 = vpop.f32.mrb[0].mxu0
        %4293 = vdwg.mxu0
        %4294 = vmatprep.subr.bf16.mxu0 %v2947
        %4295 = vmatpush1.bf16.msra.mxu0 %v2946
        %4296 = vmatprep.subr.bf16.mxu0 %v2963
        %4297 = vmatpush1.bf16.msra.mxu0 %v2962
        %4298 = vmatprep.subr.bf16.mxu0 %v2979
        %4299 = vmatpush1.bf16.msra.mxu0 %v2978
        %4300 = vmatprep.subr.bf16.mxu0 %v2995
        %4301 = vmatpush1.bf16.msra.mxu0 %v2994
        %4302 = vmatprep.subr.bf16.mxu0 %v3011
        %4303 = vmatpush1.bf16.msra.mxu0 %v3010
        %4304 = vmatprep.subr.bf16.mxu0 %v3027
        %4305 = vmatpush1.bf16.msra.mxu0 %v3026
        %4306 = vmatprep.subr.bf16.mxu0 %v3043
        %4307 = vmatpush1.bf16.msra.mxu0 %v3042
        %4308 = vmatprep.subr.bf16.mxu0 %v3059
        %4309 = vmatpush1.bf16.msra.mxu0 %v3058
        %4310 = vmatprep.subr.bf16.mxu0 %v3075
        %4311 = vmatpush1.bf16.msra.mxu0 %v3074
        %4312 = vmatprep.subr.bf16.mxu0 %v3091
        %4313 = vmatpush1.bf16.msra.mxu0 %v3090
        %4314 = vmatprep.subr.bf16.mxu0 %v3107
        %4315 = vmatpush1.bf16.msra.mxu0 %v3106
        %4316 = vmatprep.subr.bf16.mxu0 %v3123
        %4317 = vmatpush1.bf16.msra.mxu0 %v3122
        %4318 = vmatprep.subr.bf16.mxu0 %v3139
        %4319 = vmatpush1.bf16.msra.mxu0 %v3138
        %4320 = vmatprep.subr.bf16.mxu0 %v3155
        %4321 = vmatpush1.bf16.msra.mxu0 %v3154
        %4322 = vmatprep.subr.bf16.mxu0 %v3171
        %4323 = vmatpush1.bf16.msra.mxu0 %v3170
        %4324 = vmatprep.subr.bf16.mxu0 %v3187
        %4325 = vmatpush1.bf16.msra.mxu0 %v3186
        %4326 = vmatprep.mubr.bf16.mxu0 %v1632
        %4327 = vmatmul.mubr.bf16.gmra.mrb[0].mxu0 %v1631
        %v4328 = vpop.f32.mrb[0].mxu0
        %v4329 = vadd.f32 %v1623, %v4328
        %v4330 = vpop.f32.mrb[0].mxu0
        %v4331 = vadd.f32 %v1623, %v4330
        %v4332 = vpop.f32.mrb[0].mxu0
        %v4333 = vpop.f32.mrb[0].mxu0
        %4334 = vdwg.mxu0
        %4335 = vmatprep.subr.bf16.mxu0 %v3203
        %4336 = vmatpush1.bf16.msra.mxu0 %v3202
        %4337 = vmatprep.subr.bf16.mxu0 %v3219
        %4338 = vmatpush1.bf16.msra.mxu0 %v3218
        %4339 = vmatprep.subr.bf16.mxu0 %v3235
        %4340 = vmatpush1.bf16.msra.mxu0 %v3234
        %4341 = vmatprep.subr.bf16.mxu0 %v3251
        %4342 = vmatpush1.bf16.msra.mxu0 %v3250
        %4343 = vmatprep.subr.bf16.mxu0 %v3267
        %4344 = vmatpush1.bf16.msra.mxu0 %v3266
        %4345 = vmatprep.subr.bf16.mxu0 %v3283
        %4346 = vmatpush1.bf16.msra.mxu0 %v3282
        %4347 = vmatprep.subr.bf16.mxu0 %v3299
        %4348 = vmatpush1.bf16.msra.mxu0 %v3298
        %4349 = vmatprep.subr.bf16.mxu0 %v3315
        %4350 = vmatpush1.bf16.msra.mxu0 %v3314
        %4351 = vmatprep.subr.bf16.mxu0 %v3331
        %4352 = vmatpush1.bf16.msra.mxu0 %v3330
        %4353 = vmatprep.subr.bf16.mxu0 %v3347
        %4354 = vmatpush1.bf16.msra.mxu0 %v3346
        %4355 = vmatprep.subr.bf16.mxu0 %v3363
        %4356 = vmatpush1.bf16.msra.mxu0 %v3362
        %4357 = vmatprep.subr.bf16.mxu0 0
        %4358 = vmatpush1.bf16.msra.mxu0 0
        %4359 = vmatprep.subr.bf16.mxu0 0
        %4360 = vmatpush1.bf16.msra.mxu0 0
        %4361 = vmatprep.subr.bf16.mxu0 0
        %4362 = vmatpush1.bf16.msra.mxu0 0
        %4363 = vmatprep.subr.bf16.mxu0 0
        %4364 = vmatpush1.bf16.msra.mxu0 0
        %4365 = vmatprep.subr.bf16.mxu0 0
        %4366 = vmatpush1.bf16.msra.mxu0 0
        %4367 = vmatprep.mubr.bf16.mxu0 %v3800
        %4368 = vmatmul.mubr.bf16.gmra.mrb[0].mxu0 %v1633
        %v4369 = vpop.f32.mrb[0].mxu0
        %v4370 = vadd.f32 %v4329, %v4369
        %v4371 = vpop.f32.mrb[0].mxu0
        %v4372 = vadd.f32 %v4331, %v4371
        %v4373 = vpop.f32.mrb[0].mxu0
        %v4374 = vpop.f32.mrb[0].mxu0
        %4375 = vdwg.mxu0
        %4376 = vmatprep.subr.bf16.mxu0 %v2949
        %4377 = vmatpush1.bf16.msra.mxu0 %v2948
        %4378 = vmatprep.subr.bf16.mxu0 %v2965
        %4379 = vmatpush1.bf16.msra.mxu0 %v2964
        %4380 = vmatprep.subr.bf16.mxu0 %v2981
        %4381 = vmatpush1.bf16.msra.mxu0 %v2980
        %4382 = vmatprep.subr.bf16.mxu0 %v2997
        %4383 = vmatpush1.bf16.msra.mxu0 %v2996
        %4384 = vmatprep.subr.bf16.mxu0 %v3013
        %4385 = vmatpush1.bf16.msra.mxu0 %v3012
        %4386 = vmatprep.subr.bf16.mxu0 %v3029
        %4387 = vmatpush1.bf16.msra.mxu0 %v3028
        %4388 = vmatprep.subr.bf16.mxu0 %v3045
        %4389 = vmatpush1.bf16.msra.mxu0 %v3044
        %4390 = vmatprep.subr.bf16.mxu0 %v3061
        %4391 = vmatpush1.bf16.msra.mxu0 %v3060
        %4392 = vmatprep.subr.bf16.mxu0 %v3077
        %4393 = vmatpush1.bf16.msra.mxu0 %v3076
        %4394 = vmatprep.subr.bf16.mxu0 %v3093
        %4395 = vmatpush1.bf16.msra.mxu0 %v3092
        %4396 = vmatprep.subr.bf16.mxu0 %v3109
        %4397 = vmatpush1.bf16.msra.mxu0 %v3108
        %4398 = vmatprep.subr.bf16.mxu0 %v3125
        %4399 = vmatpush1.bf16.msra.mxu0 %v3124
        %4400 = vmatprep.subr.bf16.mxu0 %v3141
        %4401 = vmatpush1.bf16.msra.mxu0 %v3140
        %4402 = vmatprep.subr.bf16.mxu0 %v3157
        %4403 = vmatpush1.bf16.msra.mxu0 %v3156
        %4404 = vmatprep.subr.bf16.mxu0 %v3173
        %4405 = vmatpush1.bf16.msra.mxu0 %v3172
        %4406 = vmatprep.subr.bf16.mxu0 %v3189
        %4407 = vmatpush1.bf16.msra.mxu0 %v3188
        %4408 = vmatprep.mubr.bf16.mxu0 %v1632
        %4409 = vmatmul.mubr.bf16.gmra.mrb[0].mxu0 %v1631
        %v4410 = vpop.f32.mrb[0].mxu0
        %v4411 = vadd.f32 %v1623, %v4410
        %v4412 = vpop.f32.mrb[0].mxu0
        %v4413 = vadd.f32 %v1623, %v4412
        %v4414 = vpop.f32.mrb[0].mxu0
        %v4415 = vpop.f32.mrb[0].mxu0
        %4416 = vdwg.mxu0
        %4417 = vmatprep.subr.bf16.mxu0 %v3205
        %4418 = vmatpush1.bf16.msra.mxu0 %v3204
        %4419 = vmatprep.subr.bf16.mxu0 %v3221
        %4420 = vmatpush1.bf16.msra.mxu0 %v3220
        %4421 = vmatprep.subr.bf16.mxu0 %v3237
        %4422 = vmatpush1.bf16.msra.mxu0 %v3236
        %4423 = vmatprep.subr.bf16.mxu0 %v3253
        %4424 = vmatpush1.bf16.msra.mxu0 %v3252
        %4425 = vmatprep.subr.bf16.mxu0 %v3269
        %4426 = vmatpush1.bf16.msra.mxu0 %v3268
        %4427 = vmatprep.subr.bf16.mxu0 %v3285
        %4428 = vmatpush1.bf16.msra.mxu0 %v3284
        %4429 = vmatprep.subr.bf16.mxu0 %v3301
        %4430 = vmatpush1.bf16.msra.mxu0 %v3300
        %4431 = vmatprep.subr.bf16.mxu0 %v3317
        %4432 = vmatpush1.bf16.msra.mxu0 %v3316
        %4433 = vmatprep.subr.bf16.mxu0 %v3333
        %4434 = vmatpush1.bf16.msra.mxu0 %v3332
        %4435 = vmatprep.subr.bf16.mxu0 %v3349
        %4436 = vmatpush1.bf16.msra.mxu0 %v3348
        %4437 = vmatprep.subr.bf16.mxu0 %v3365
        %4438 = vmatpush1.bf16.msra.mxu0 %v3364
        %4439 = vmatprep.subr.bf16.mxu0 0
        %4440 = vmatpush1.bf16.msra.mxu0 0
        %4441 = vmatprep.subr.bf16.mxu0 0
        %4442 = vmatpush1.bf16.msra.mxu0 0
        %4443 = vmatprep.subr.bf16.mxu0 0
        %4444 = vmatpush1.bf16.msra.mxu0 0
        %4445 = vmatprep.subr.bf16.mxu0 0
        %4446 = vmatpush1.bf16.msra.mxu0 0
        %4447 = vmatprep.subr.bf16.mxu0 0
        %4448 = vmatpush1.bf16.msra.mxu0 0
        %4449 = vmatprep.mubr.bf16.mxu0 %v3800
        %4450 = vmatmul.mubr.bf16.gmra.mrb[0].mxu0 %v1633
        %v4451 = vpop.f32.mrb[0].mxu0
        %v4452 = vadd.f32 %v4411, %v4451
        %v4453 = vpop.f32.mrb[0].mxu0
        %v4454 = vadd.f32 %v4413, %v4453
        %v4455 = vpop.f32.mrb[0].mxu0
        %v4456 = vpop.f32.mrb[0].mxu0
        %4457 = vdwg.mxu0
        %v4458 = vpack.c.bf16 %v3878, %v3878
        %v4459 = vpack.c.bf16 %v3880, %v3880
        %v4460 = vpack.c.bf16 %v3960, %v3960
        %v4461 = vpack.c.bf16 %v3962, %v3962
        %v4462 = vpack.c.bf16 %v4042, %v4042
        %v4463 = vpack.c.bf16 %v4044, %v4044
        %v4464 = vpack.c.bf16 %v4124, %v4124
        %v4465 = vpack.c.bf16 %v4126, %v4126
        %v4466 = vpack.c.bf16 %v4206, %v4206
        %v4467 = vpack.c.bf16 %v4208, %v4208
        %v4468 = vpack.c.bf16 %v4288, %v4288
        %v4469 = vpack.c.bf16 %v4290, %v4290
        %v4470 = vpack.c.bf16 %v4370, %v4370
        %v4471 = vpack.c.bf16 %v4372, %v4372
        %v4472 = vpack.c.bf16 %v4452, %v4452
        %v4473 = vpack.c.bf16 %v4454, %v4454
        %v4490 = vunpack.c.l.b16 %v4458
        %v4491 = vunpack.c.l.b16 %v4459
        %v4492 = vunpack.c.l.b16 %v4460
        %v4493 = vunpack.c.l.b16 %v4461
        %v4494 = vunpack.c.l.b16 %v4462
        %v4495 = vunpack.c.l.b16 %v4463
        %v4496 = vunpack.c.l.b16 %v4464
        %v4497 = vunpack.c.l.b16 %v4465
        %v4498 = vunpack.c.l.b16 %v4466
        %v4499 = vunpack.c.l.b16 %v4467
        %v4500 = vunpack.c.l.b16 %v4468
        %v4501 = vunpack.c.l.b16 %v4469
        %v4502 = vunpack.c.l.b16 %v4470
        %v4503 = vunpack.c.l.b16 %v4471
        %v4504 = vunpack.c.l.b16 %v4472
        %v4505 = vunpack.c.l.b16 %v4473
        %v4506 = vpack.c.b16 %v4491, %v4490
        %v4507 = vpack.c.b16 %v4493, %v4492
        %v4508 = vpack.c.b16 %v4495, %v4494
        %v4509 = vpack.c.b16 %v4497, %v4496
        %v4510 = vpack.c.b16 %v4499, %v4498
        %v4511 = vpack.c.b16 %v4501, %v4500
        %v4512 = vpack.c.b16 %v4503, %v4502
        %v4513 = vpack.c.b16 %v4505, %v4504
        %4522 = vst [vmem:[%s1173] sm:$0xff] %v4506
        %4523 = vst [vmem:[%s1173 + $0x8] sm:$0xff] %v4507
        %4524 = vst [vmem:[%s1173 + $0x10] sm:$0xff] %v4508
        %4525 = vst [vmem:[%s1173 + $0x18] sm:$0xff] %v4509
        %4526 = vst [vmem:[%s1173 + $0x20] sm:$0xff] %v4510
        %4527 = vst [vmem:[%s1173 + $0x28] sm:$0xff] %v4511
        %4528 = vst [vmem:[%s1173 + $0x30] sm:$0xff] %v4512
        %4529 = vst [vmem:[%s1173 + $0x38] sm:$0xff] %v4513
        %s4530 = sand.u32 %s90, 1
        %s4531 = sand.u32 %s90, 1
        %s4532 = smul.addr %s4531, 64
        %s4533 = scalar_lea.vmem [#allocation3], %s4532
        // Predicated region
        $region99: #{cnn_forward.6} parent=93 // pred_check
          %p4534 = pneg %p100
        $region100: #{cnn_forward.6} parent=93 // pred_check_branch
          %4536 = sbr.rel (%p4534) target = $region102
        $region101: #{cnn_forward.6} parent=93 // pred_region
          %s4537 = smul.u32 16, %s14
          %s4538 = ssub.s32 51, %s4537
          %p4539 = scmp.lt.s32.totalorder %s4538, 16
          %s4540 = scalar_select %p4539, %s4538, 16
          %s4541 = smul.u32 64, %s4540
          %p4542 = scmp.ne.s32.totalorder 0, %s4541
          %s4543 = smul.addr %s4537, 4
          %s4544 = scalar_lea.vmem %s3, %s4543
          %s4545 = smul.u32 %s4540, 4
          // Predicated region
          $region103: #{cnn_forward.6} parent=101 // pred_check
            %p4546 = pneg %p4542
          $region104: #{cnn_forward.6} parent=101 // pred_check_branch
            %4548 = sbr.rel (%p4546) target = $region106
          $region105: #{cnn_forward.6} parent=101 // pred_region
            %p4549 = scmp.lt.u32.totalorder %s4545, 8
            %p4550 = pneg %p4549
            // Predicated region
            $region107: #{cnn_forward.6} parent=105 // pred_check
              _
            $region108: #{cnn_forward.6} parent=105 // pred_check_branch
              %4552 = sbr.rel (%p4549) target = $region110
            $region109: #{cnn_forward.6} parent=105 // pred_region
              %s4567 = sand.u32 %s4545, 7
              %p4568 = scmp.eq.s32.totalorder %s4567, 0
              // Predicated region
              $region122: #{cnn_forward.6} parent=109 // pred_check
                %p4569 = pneg %p4568
              $region123: #{cnn_forward.6} parent=109 // pred_check_branch
                %4571 = sbr.rel (%p4569) target = $region125
              $region124: #{cnn_forward.6} parent=109 // pred_region
                %s4572 = sshrl.u32 %s4545, 3
                %s4573 = sshrl.u32 %s4572, 6
                // While loop
                $region126: #{cnn_forward.6} parent=124 // loop_pre_header
                  _
                $region127: #{cnn_forward.6} parent=124 // loop_header
                  %s4577 = sphi 0, %s4579
                  %p4578 = scmp.ge.s32.totalorder %s4577, %s4573
                  %s4582 = sphi 0, %s4715
                  %s4583 = sphi %s4533, %s4718
                  %s4584 = sphi %s4544, %s4719
                $region128: #{cnn_forward.6} parent=124 // loop_header_branch
                  %4581 = sbr.rel (%p4578) target = $region132
                $region129: #{cnn_forward.6} parent=124 // loop_body
                  %v4585 = vld [vmem:[%s4583] sm:$0xff]
                  %4586 = vst [vmem:[%s4584] sm:$0xff] %v4585
                  %v4587 = vld [vmem:[%s4583 + $0x8] sm:$0xff]
                  %4588 = vst [vmem:[%s4584 + $0x8] sm:$0xff] %v4587
                  %v4589 = vld [vmem:[%s4583 + $0x10] sm:$0xff]
                  %4590 = vst [vmem:[%s4584 + $0x10] sm:$0xff] %v4589
                  %v4591 = vld [vmem:[%s4583 + $0x18] sm:$0xff]
                  %4592 = vst [vmem:[%s4584 + $0x18] sm:$0xff] %v4591
                  %v4593 = vld [vmem:[%s4583 + $0x20] sm:$0xff]
                  %4594 = vst [vmem:[%s4584 + $0x20] sm:$0xff] %v4593
                  %v4595 = vld [vmem:[%s4583 + $0x28] sm:$0xff]
                  %4596 = vst [vmem:[%s4584 + $0x28] sm:$0xff] %v4595
                  %v4597 = vld [vmem:[%s4583 + $0x30] sm:$0xff]
                  %4598 = vst [vmem:[%s4584 + $0x30] sm:$0xff] %v4597
                  %v4599 = vld [vmem:[%s4583 + $0x38] sm:$0xff]
                  %4600 = vst [vmem:[%s4584 + $0x38] sm:$0xff] %v4599
                  %v4601 = vld [vmem:[%s4583 + $0x40] sm:$0xff]
                  %4602 = vst [vmem:[%s4584 + $0x40] sm:$0xff] %v4601
                  %v4603 = vld [vmem:[%s4583 + $0x48] sm:$0xff]
                  %4604 = vst [vmem:[%s4584 + $0x48] sm:$0xff] %v4603
                  %v4605 = vld [vmem:[%s4583 + $0x50] sm:$0xff]
                  %4606 = vst [vmem:[%s4584 + $0x50] sm:$0xff] %v4605
                  %v4607 = vld [vmem:[%s4583 + $0x58] sm:$0xff]
                  %4608 = vst [vmem:[%s4584 + $0x58] sm:$0xff] %v4607
                  %v4609 = vld [vmem:[%s4583 + $0x60] sm:$0xff]
                  %4610 = vst [vmem:[%s4584 + $0x60] sm:$0xff] %v4609
                  %v4611 = vld [vmem:[%s4583 + $0x68] sm:$0xff]
                  %4612 = vst [vmem:[%s4584 + $0x68] sm:$0xff] %v4611
                  %v4613 = vld [vmem:[%s4583 + $0x70] sm:$0xff]
                  %4614 = vst [vmem:[%s4584 + $0x70] sm:$0xff] %v4613
                  %v4615 = vld [vmem:[%s4583 + $0x78] sm:$0xff]
                  %4616 = vst [vmem:[%s4584 + $0x78] sm:$0xff] %v4615
                  %v4617 = vld [vmem:[%s4583 + $0x80] sm:$0xff]
                  %4618 = vst [vmem:[%s4584 + $0x80] sm:$0xff] %v4617
                  %v4619 = vld [vmem:[%s4583 + $0x88] sm:$0xff]
                  %4620 = vst [vmem:[%s4584 + $0x88] sm:$0xff] %v4619
                  %v4621 = vld [vmem:[%s4583 + $0x90] sm:$0xff]
                  %4622 = vst [vmem:[%s4584 + $0x90] sm:$0xff] %v4621
                  %v4623 = vld [vmem:[%s4583 + $0x98] sm:$0xff]
                  %4624 = vst [vmem:[%s4584 + $0x98] sm:$0xff] %v4623
                  %v4625 = vld [vmem:[%s4583 + $0xa0] sm:$0xff]
                  %4626 = vst [vmem:[%s4584 + $0xa0] sm:$0xff] %v4625
                  %v4627 = vld [vmem:[%s4583 + $0xa8] sm:$0xff]
                  %4628 = vst [vmem:[%s4584 + $0xa8] sm:$0xff] %v4627
                  %v4629 = vld [vmem:[%s4583 + $0xb0] sm:$0xff]
                  %4630 = vst [vmem:[%s4584 + $0xb0] sm:$0xff] %v4629
                  %v4631 = vld [vmem:[%s4583 + $0xb8] sm:$0xff]
                  %4632 = vst [vmem:[%s4584 + $0xb8] sm:$0xff] %v4631
                  %v4633 = vld [vmem:[%s4583 + $0xc0] sm:$0xff]
                  %4634 = vst [vmem:[%s4584 + $0xc0] sm:$0xff] %v4633
                  %v4635 = vld [vmem:[%s4583 + $0xc8] sm:$0xff]
                  %4636 = vst [vmem:[%s4584 + $0xc8] sm:$0xff] %v4635
                  %v4637 = vld [vmem:[%s4583 + $0xd0] sm:$0xff]
                  %4638 = vst [vmem:[%s4584 + $0xd0] sm:$0xff] %v4637
                  %v4639 = vld [vmem:[%s4583 + $0xd8] sm:$0xff]
                  %4640 = vst [vmem:[%s4584 + $0xd8] sm:$0xff] %v4639
                  %v4641 = vld [vmem:[%s4583 + $0xe0] sm:$0xff]
                  %4642 = vst [vmem:[%s4584 + $0xe0] sm:$0xff] %v4641
                  %v4643 = vld [vmem:[%s4583 + $0xe8] sm:$0xff]
                  %4644 = vst [vmem:[%s4584 + $0xe8] sm:$0xff] %v4643
                  %v4645 = vld [vmem:[%s4583 + $0xf0] sm:$0xff]
                  %4646 = vst [vmem:[%s4584 + $0xf0] sm:$0xff] %v4645
                  %v4647 = vld [vmem:[%s4583 + $0xf8] sm:$0xff]
                  %4648 = vst [vmem:[%s4584 + $0xf8] sm:$0xff] %v4647
                  %v4649 = vld [vmem:[%s4583 + $0x100] sm:$0xff]
                  %4650 = vst [vmem:[%s4584 + $0x100] sm:$0xff] %v4649
                  %v4651 = vld [vmem:[%s4583 + $0x108] sm:$0xff]
                  %4652 = vst [vmem:[%s4584 + $0x108] sm:$0xff] %v4651
                  %v4653 = vld [vmem:[%s4583 + $0x110] sm:$0xff]
                  %4654 = vst [vmem:[%s4584 + $0x110] sm:$0xff] %v4653
                  %v4655 = vld [vmem:[%s4583 + $0x118] sm:$0xff]
                  %4656 = vst [vmem:[%s4584 + $0x118] sm:$0xff] %v4655
                  %v4657 = vld [vmem:[%s4583 + $0x120] sm:$0xff]
                  %4658 = vst [vmem:[%s4584 + $0x120] sm:$0xff] %v4657
                  %v4659 = vld [vmem:[%s4583 + $0x128] sm:$0xff]
                  %4660 = vst [vmem:[%s4584 + $0x128] sm:$0xff] %v4659
                  %v4661 = vld [vmem:[%s4583 + $0x130] sm:$0xff]
                  %4662 = vst [vmem:[%s4584 + $0x130] sm:$0xff] %v4661
                  %v4663 = vld [vmem:[%s4583 + $0x138] sm:$0xff]
                  %4664 = vst [vmem:[%s4584 + $0x138] sm:$0xff] %v4663
                  %v4665 = vld [vmem:[%s4583 + $0x140] sm:$0xff]
                  %4666 = vst [vmem:[%s4584 + $0x140] sm:$0xff] %v4665
                  %v4667 = vld [vmem:[%s4583 + $0x148] sm:$0xff]
                  %4668 = vst [vmem:[%s4584 + $0x148] sm:$0xff] %v4667
                  %v4669 = vld [vmem:[%s4583 + $0x150] sm:$0xff]
                  %4670 = vst [vmem:[%s4584 + $0x150] sm:$0xff] %v4669
                  %v4671 = vld [vmem:[%s4583 + $0x158] sm:$0xff]
                  %4672 = vst [vmem:[%s4584 + $0x158] sm:$0xff] %v4671
                  %v4673 = vld [vmem:[%s4583 + $0x160] sm:$0xff]
                  %4674 = vst [vmem:[%s4584 + $0x160] sm:$0xff] %v4673
                  %v4675 = vld [vmem:[%s4583 + $0x168] sm:$0xff]
                  %4676 = vst [vmem:[%s4584 + $0x168] sm:$0xff] %v4675
                  %v4677 = vld [vmem:[%s4583 + $0x170] sm:$0xff]
                  %4678 = vst [vmem:[%s4584 + $0x170] sm:$0xff] %v4677
                  %v4679 = vld [vmem:[%s4583 + $0x178] sm:$0xff]
                  %4680 = vst [vmem:[%s4584 + $0x178] sm:$0xff] %v4679
                  %v4681 = vld [vmem:[%s4583 + $0x180] sm:$0xff]
                  %4682 = vst [vmem:[%s4584 + $0x180] sm:$0xff] %v4681
                  %v4683 = vld [vmem:[%s4583 + $0x188] sm:$0xff]
                  %4684 = vst [vmem:[%s4584 + $0x188] sm:$0xff] %v4683
                  %v4685 = vld [vmem:[%s4583 + $0x190] sm:$0xff]
                  %4686 = vst [vmem:[%s4584 + $0x190] sm:$0xff] %v4685
                  %v4687 = vld [vmem:[%s4583 + $0x198] sm:$0xff]
                  %4688 = vst [vmem:[%s4584 + $0x198] sm:$0xff] %v4687
                  %v4689 = vld [vmem:[%s4583 + $0x1a0] sm:$0xff]
                  %4690 = vst [vmem:[%s4584 + $0x1a0] sm:$0xff] %v4689
                  %v4691 = vld [vmem:[%s4583 + $0x1a8] sm:$0xff]
                  %4692 = vst [vmem:[%s4584 + $0x1a8] sm:$0xff] %v4691
                  %v4693 = vld [vmem:[%s4583 + $0x1b0] sm:$0xff]
                  %4694 = vst [vmem:[%s4584 + $0x1b0] sm:$0xff] %v4693
                  %v4695 = vld [vmem:[%s4583 + $0x1b8] sm:$0xff]
                  %4696 = vst [vmem:[%s4584 + $0x1b8] sm:$0xff] %v4695
                  %v4697 = vld [vmem:[%s4583 + $0x1c0] sm:$0xff]
                  %4698 = vst [vmem:[%s4584 + $0x1c0] sm:$0xff] %v4697
                  %v4699 = vld [vmem:[%s4583 + $0x1c8] sm:$0xff]
                  %4700 = vst [vmem:[%s4584 + $0x1c8] sm:$0xff] %v4699
                  %v4701 = vld [vmem:[%s4583 + $0x1d0] sm:$0xff]
                  %4702 = vst [vmem:[%s4584 + $0x1d0] sm:$0xff] %v4701
                  %v4703 = vld [vmem:[%s4583 + $0x1d8] sm:$0xff]
                  %4704 = vst [vmem:[%s4584 + $0x1d8] sm:$0xff] %v4703
                  %v4705 = vld [vmem:[%s4583 + $0x1e0] sm:$0xff]
                  %4706 = vst [vmem:[%s4584 + $0x1e0] sm:$0xff] %v4705
                  %v4707 = vld [vmem:[%s4583 + $0x1e8] sm:$0xff]
                  %4708 = vst [vmem:[%s4584 + $0x1e8] sm:$0xff] %v4707
                  %v4709 = vld [vmem:[%s4583 + $0x1f0] sm:$0xff]
                  %4710 = vst [vmem:[%s4584 + $0x1f0] sm:$0xff] %v4709
                  %v4711 = vld [vmem:[%s4583 + $0x1f8] sm:$0xff]
                  %4712 = vst [vmem:[%s4584 + $0x1f8] sm:$0xff] %v4711
                  %s4713 = sadd.s32 1, %s4582
                  %p4714 = scmp.ge.s32.totalorder %s4713, %s4573
                  %s4715 = scalar_select %p4714, 0, %s4713
                  %s4716 = smul.u32 %s4715, 512
                  %s4717 = smul.u32 %s4715, 512
                  %s4718 = scalar_lea.vmem %s4533, %s4716 [#allocation3]
                  %s4719 = scalar_lea.vmem %s4544, %s4717
                $region130: #{cnn_forward.6} parent=124 // loop_footer
                  %s4579 = sadd.s32 %s4577, 1
                $region131: #{cnn_forward.6} parent=124 // loop_footer_branch
                  %4576 = sbr.rel target = $region127
                $region132: #{cnn_forward.6} parent=124 // loop_exit
                  _
                %s4720 = sshrl.u32 %s4572, 6
                %s4721 = sand.u32 %s4572, 63
                %s4722 = smul.u32 %s4720, 64
                %s4723 = smul.u32 128, %s4722
                %s4724 = sshra.s32 %s4723, 4
                %s4725 = scalar_lea.vmem %s4533, %s4724 [#allocation3]
                %s4726 = smul.u32 128, %s4722
                %s4727 = sshra.s32 %s4726, 4
                %s4728 = scalar_lea.vmem %s4544, %s4727
                // While loop
                $region133: #{cnn_forward.6} parent=124 // loop_pre_header
                  _
                $region134: #{cnn_forward.6} parent=124 // loop_header
                  %s4732 = sphi 0, %s4734
                  %p4733 = scmp.ge.s32.totalorder %s4732, %s4721
                  %s4737 = sphi 0, %s4744
                  %s4738 = sphi %s4725, %s4747
                  %s4739 = sphi %s4728, %s4748
                $region135: #{cnn_forward.6} parent=124 // loop_header_branch
                  %4736 = sbr.rel (%p4733) target = $region139
                $region136: #{cnn_forward.6} parent=124 // loop_body
                  %v4740 = vld [vmem:[%s4738] sm:$0xff]
                  %4741 = vst [vmem:[%s4739] sm:$0xff] %v4740
                  %s4742 = sadd.s32 1, %s4737
                  %p4743 = scmp.ge.s32.totalorder %s4742, %s4721
                  %s4744 = scalar_select %p4743, 0, %s4742
                  %s4745 = smul.u32 %s4744, 8
                  %s4746 = smul.u32 %s4744, 8
                  %s4747 = scalar_lea.vmem %s4725, %s4745 [#allocation3]
                  %s4748 = scalar_lea.vmem %s4728, %s4746
                $region137: #{cnn_forward.6} parent=124 // loop_footer
                  %s4734 = sadd.s32 %s4732, 1
                $region138: #{cnn_forward.6} parent=124 // loop_footer_branch
                  %4731 = sbr.rel target = $region134
                $region139: #{cnn_forward.6} parent=124 // loop_exit
                  _
              $region125: #{cnn_forward.6} parent=109 // pred_fallthru
                _
              %p4749 = pneg %p4568
              // Predicated region
              $region140: #{cnn_forward.6} parent=109 // pred_check
                _
              $region141: #{cnn_forward.6} parent=109 // pred_check_branch
                %4751 = sbr.rel (%p4568) target = $region143
              $region142: #{cnn_forward.6} parent=109 // pred_region
                %s4752 = sand.u32 %s4545, 7
                %s4753 = ssub.s32 %s4545, %s4752
                %s4754 = scalar_lea.vmem %s4533, %s4753 [#allocation3]
                %s4755 = ssub.s32 %s4545, %s4752
                %s4756 = scalar_lea.vmem %s4544, %s4755
                %s4757 = sshrl.u32 %s4545, 3
                %s4758 = sshrl.u32 %s4757, 6
                // While loop
                $region144: #{cnn_forward.6} parent=142 // loop_pre_header
                  _
                $region145: #{cnn_forward.6} parent=142 // loop_header
                  %s4762 = sphi 0, %s4764
                  %p4763 = scmp.ge.s32.totalorder %s4762, %s4758
                  %s4767 = sphi 0, %s4900
                  %s4768 = sphi %s4533, %s4903
                  %s4769 = sphi %s4544, %s4904
                $region146: #{cnn_forward.6} parent=142 // loop_header_branch
                  %4766 = sbr.rel (%p4763) target = $region150
                $region147: #{cnn_forward.6} parent=142 // loop_body
                  %v4770 = vld [vmem:[%s4768] sm:$0xff]
                  %4771 = vst [vmem:[%s4769] sm:$0xff] %v4770
                  %v4772 = vld [vmem:[%s4768 + $0x8] sm:$0xff]
                  %4773 = vst [vmem:[%s4769 + $0x8] sm:$0xff] %v4772
                  %v4774 = vld [vmem:[%s4768 + $0x10] sm:$0xff]
                  %4775 = vst [vmem:[%s4769 + $0x10] sm:$0xff] %v4774
                  %v4776 = vld [vmem:[%s4768 + $0x18] sm:$0xff]
                  %4777 = vst [vmem:[%s4769 + $0x18] sm:$0xff] %v4776
                  %v4778 = vld [vmem:[%s4768 + $0x20] sm:$0xff]
                  %4779 = vst [vmem:[%s4769 + $0x20] sm:$0xff] %v4778
                  %v4780 = vld [vmem:[%s4768 + $0x28] sm:$0xff]
                  %4781 = vst [vmem:[%s4769 + $0x28] sm:$0xff] %v4780
                  %v4782 = vld [vmem:[%s4768 + $0x30] sm:$0xff]
                  %4783 = vst [vmem:[%s4769 + $0x30] sm:$0xff] %v4782
                  %v4784 = vld [vmem:[%s4768 + $0x38] sm:$0xff]
                  %4785 = vst [vmem:[%s4769 + $0x38] sm:$0xff] %v4784
                  %v4786 = vld [vmem:[%s4768 + $0x40] sm:$0xff]
                  %4787 = vst [vmem:[%s4769 + $0x40] sm:$0xff] %v4786
                  %v4788 = vld [vmem:[%s4768 + $0x48] sm:$0xff]
                  %4789 = vst [vmem:[%s4769 + $0x48] sm:$0xff] %v4788
                  %v4790 = vld [vmem:[%s4768 + $0x50] sm:$0xff]
                  %4791 = vst [vmem:[%s4769 + $0x50] sm:$0xff] %v4790
                  %v4792 = vld [vmem:[%s4768 + $0x58] sm:$0xff]
                  %4793 = vst [vmem:[%s4769 + $0x58] sm:$0xff] %v4792
                  %v4794 = vld [vmem:[%s4768 + $0x60] sm:$0xff]
                  %4795 = vst [vmem:[%s4769 + $0x60] sm:$0xff] %v4794
                  %v4796 = vld [vmem:[%s4768 + $0x68] sm:$0xff]
                  %4797 = vst [vmem:[%s4769 + $0x68] sm:$0xff] %v4796
                  %v4798 = vld [vmem:[%s4768 + $0x70] sm:$0xff]
                  %4799 = vst [vmem:[%s4769 + $0x70] sm:$0xff] %v4798
                  %v4800 = vld [vmem:[%s4768 + $0x78] sm:$0xff]
                  %4801 = vst [vmem:[%s4769 + $0x78] sm:$0xff] %v4800
                  %v4802 = vld [vmem:[%s4768 + $0x80] sm:$0xff]
                  %4803 = vst [vmem:[%s4769 + $0x80] sm:$0xff] %v4802
                  %v4804 = vld [vmem:[%s4768 + $0x88] sm:$0xff]
                  %4805 = vst [vmem:[%s4769 + $0x88] sm:$0xff] %v4804
                  %v4806 = vld [vmem:[%s4768 + $0x90] sm:$0xff]
                  %4807 = vst [vmem:[%s4769 + $0x90] sm:$0xff] %v4806
                  %v4808 = vld [vmem:[%s4768 + $0x98] sm:$0xff]
                  %4809 = vst [vmem:[%s4769 + $0x98] sm:$0xff] %v4808
                  %v4810 = vld [vmem:[%s4768 + $0xa0] sm:$0xff]
                  %4811 = vst [vmem:[%s4769 + $0xa0] sm:$0xff] %v4810
                  %v4812 = vld [vmem:[%s4768 + $0xa8] sm:$0xff]
                  %4813 = vst [vmem:[%s4769 + $0xa8] sm:$0xff] %v4812
                  %v4814 = vld [vmem:[%s4768 + $0xb0] sm:$0xff]
                  %4815 = vst [vmem:[%s4769 + $0xb0] sm:$0xff] %v4814
                  %v4816 = vld [vmem:[%s4768 + $0xb8] sm:$0xff]
                  %4817 = vst [vmem:[%s4769 + $0xb8] sm:$0xff] %v4816
                  %v4818 = vld [vmem:[%s4768 + $0xc0] sm:$0xff]
                  %4819 = vst [vmem:[%s4769 + $0xc0] sm:$0xff] %v4818
                  %v4820 = vld [vmem:[%s4768 + $0xc8] sm:$0xff]
                  %4821 = vst [vmem:[%s4769 + $0xc8] sm:$0xff] %v4820
                  %v4822 = vld [vmem:[%s4768 + $0xd0] sm:$0xff]
                  %4823 = vst [vmem:[%s4769 + $0xd0] sm:$0xff] %v4822
                  %v4824 = vld [vmem:[%s4768 + $0xd8] sm:$0xff]
                  %4825 = vst [vmem:[%s4769 + $0xd8] sm:$0xff] %v4824
                  %v4826 = vld [vmem:[%s4768 + $0xe0] sm:$0xff]
                  %4827 = vst [vmem:[%s4769 + $0xe0] sm:$0xff] %v4826
                  %v4828 = vld [vmem:[%s4768 + $0xe8] sm:$0xff]
                  %4829 = vst [vmem:[%s4769 + $0xe8] sm:$0xff] %v4828
                  %v4830 = vld [vmem:[%s4768 + $0xf0] sm:$0xff]
                  %4831 = vst [vmem:[%s4769 + $0xf0] sm:$0xff] %v4830
                  %v4832 = vld [vmem:[%s4768 + $0xf8] sm:$0xff]
                  %4833 = vst [vmem:[%s4769 + $0xf8] sm:$0xff] %v4832
                  %v4834 = vld [vmem:[%s4768 + $0x100] sm:$0xff]
                  %4835 = vst [vmem:[%s4769 + $0x100] sm:$0xff] %v4834
                  %v4836 = vld [vmem:[%s4768 + $0x108] sm:$0xff]
                  %4837 = vst [vmem:[%s4769 + $0x108] sm:$0xff] %v4836
                  %v4838 = vld [vmem:[%s4768 + $0x110] sm:$0xff]
                  %4839 = vst [vmem:[%s4769 + $0x110] sm:$0xff] %v4838
                  %v4840 = vld [vmem:[%s4768 + $0x118] sm:$0xff]
                  %4841 = vst [vmem:[%s4769 + $0x118] sm:$0xff] %v4840
                  %v4842 = vld [vmem:[%s4768 + $0x120] sm:$0xff]
                  %4843 = vst [vmem:[%s4769 + $0x120] sm:$0xff] %v4842
                  %v4844 = vld [vmem:[%s4768 + $0x128] sm:$0xff]
                  %4845 = vst [vmem:[%s4769 + $0x128] sm:$0xff] %v4844
                  %v4846 = vld [vmem:[%s4768 + $0x130] sm:$0xff]
                  %4847 = vst [vmem:[%s4769 + $0x130] sm:$0xff] %v4846
                  %v4848 = vld [vmem:[%s4768 + $0x138] sm:$0xff]
                  %4849 = vst [vmem:[%s4769 + $0x138] sm:$0xff] %v4848
                  %v4850 = vld [vmem:[%s4768 + $0x140] sm:$0xff]
                  %4851 = vst [vmem:[%s4769 + $0x140] sm:$0xff] %v4850
                  %v4852 = vld [vmem:[%s4768 + $0x148] sm:$0xff]
                  %4853 = vst [vmem:[%s4769 + $0x148] sm:$0xff] %v4852
                  %v4854 = vld [vmem:[%s4768 + $0x150] sm:$0xff]
                  %4855 = vst [vmem:[%s4769 + $0x150] sm:$0xff] %v4854
                  %v4856 = vld [vmem:[%s4768 + $0x158] sm:$0xff]
                  %4857 = vst [vmem:[%s4769 + $0x158] sm:$0xff] %v4856
                  %v4858 = vld [vmem:[%s4768 + $0x160] sm:$0xff]
                  %4859 = vst [vmem:[%s4769 + $0x160] sm:$0xff] %v4858
                  %v4860 = vld [vmem:[%s4768 + $0x168] sm:$0xff]
                  %4861 = vst [vmem:[%s4769 + $0x168] sm:$0xff] %v4860
                  %v4862 = vld [vmem:[%s4768 + $0x170] sm:$0xff]
                  %4863 = vst [vmem:[%s4769 + $0x170] sm:$0xff] %v4862
                  %v4864 = vld [vmem:[%s4768 + $0x178] sm:$0xff]
                  %4865 = vst [vmem:[%s4769 + $0x178] sm:$0xff] %v4864
                  %v4866 = vld [vmem:[%s4768 + $0x180] sm:$0xff]
                  %4867 = vst [vmem:[%s4769 + $0x180] sm:$0xff] %v4866
                  %v4868 = vld [vmem:[%s4768 + $0x188] sm:$0xff]
                  %4869 = vst [vmem:[%s4769 + $0x188] sm:$0xff] %v4868
                  %v4870 = vld [vmem:[%s4768 + $0x190] sm:$0xff]
                  %4871 = vst [vmem:[%s4769 + $0x190] sm:$0xff] %v4870
                  %v4872 = vld [vmem:[%s4768 + $0x198] sm:$0xff]
                  %4873 = vst [vmem:[%s4769 + $0x198] sm:$0xff] %v4872
                  %v4874 = vld [vmem:[%s4768 + $0x1a0] sm:$0xff]
                  %4875 = vst [vmem:[%s4769 + $0x1a0] sm:$0xff] %v4874
                  %v4876 = vld [vmem:[%s4768 + $0x1a8] sm:$0xff]
                  %4877 = vst [vmem:[%s4769 + $0x1a8] sm:$0xff] %v4876
                  %v4878 = vld [vmem:[%s4768 + $0x1b0] sm:$0xff]
                  %4879 = vst [vmem:[%s4769 + $0x1b0] sm:$0xff] %v4878
                  %v4880 = vld [vmem:[%s4768 + $0x1b8] sm:$0xff]
                  %4881 = vst [vmem:[%s4769 + $0x1b8] sm:$0xff] %v4880
                  %v4882 = vld [vmem:[%s4768 + $0x1c0] sm:$0xff]
                  %4883 = vst [vmem:[%s4769 + $0x1c0] sm:$0xff] %v4882
                  %v4884 = vld [vmem:[%s4768 + $0x1c8] sm:$0xff]
                  %4885 = vst [vmem:[%s4769 + $0x1c8] sm:$0xff] %v4884
                  %v4886 = vld [vmem:[%s4768 + $0x1d0] sm:$0xff]
                  %4887 = vst [vmem:[%s4769 + $0x1d0] sm:$0xff] %v4886
                  %v4888 = vld [vmem:[%s4768 + $0x1d8] sm:$0xff]
                  %4889 = vst [vmem:[%s4769 + $0x1d8] sm:$0xff] %v4888
                  %v4890 = vld [vmem:[%s4768 + $0x1e0] sm:$0xff]
                  %4891 = vst [vmem:[%s4769 + $0x1e0] sm:$0xff] %v4890
                  %v4892 = vld [vmem:[%s4768 + $0x1e8] sm:$0xff]
                  %4893 = vst [vmem:[%s4769 + $0x1e8] sm:$0xff] %v4892
                  %v4894 = vld [vmem:[%s4768 + $0x1f0] sm:$0xff]
                  %4895 = vst [vmem:[%s4769 + $0x1f0] sm:$0xff] %v4894
                  %v4896 = vld [vmem:[%s4768 + $0x1f8] sm:$0xff]
                  %4897 = vst [vmem:[%s4769 + $0x1f8] sm:$0xff] %v4896
                  %s4898 = sadd.s32 1, %s4767
                  %p4899 = scmp.ge.s32.totalorder %s4898, %s4758
                  %s4900 = scalar_select %p4899, 0, %s4898
                  %s4901 = smul.u32 %s4900, 512
                  %s4902 = smul.u32 %s4900, 512
                  %s4903 = scalar_lea.vmem %s4533, %s4901 [#allocation3]
                  %s4904 = scalar_lea.vmem %s4544, %s4902
                $region148: #{cnn_forward.6} parent=142 // loop_footer
                  %s4764 = sadd.s32 %s4762, 1
                $region149: #{cnn_forward.6} parent=142 // loop_footer_branch
                  %4761 = sbr.rel target = $region145
                $region150: #{cnn_forward.6} parent=142 // loop_exit
                  _
                %s4905 = sshrl.u32 %s4757, 6
                %s4906 = sand.u32 %s4757, 63
                %s4907 = smul.u32 %s4905, 64
                %s4908 = smul.u32 128, %s4907
                %s4909 = sshra.s32 %s4908, 4
                %s4910 = scalar_lea.vmem %s4533, %s4909 [#allocation3]
                %s4911 = smul.u32 128, %s4907
                %s4912 = sshra.s32 %s4911, 4
                %s4913 = scalar_lea.vmem %s4544, %s4912
                // While loop
                $region151: #{cnn_forward.6} parent=142 // loop_pre_header
                  _
                $region152: #{cnn_forward.6} parent=142 // loop_header
                  %s4917 = sphi 0, %s4919
                  %p4918 = scmp.ge.s32.totalorder %s4917, %s4906
                  %s4922 = sphi 0, %s4929
                  %s4923 = sphi %s4910, %s4932
                  %s4924 = sphi %s4913, %s4933
                $region153: #{cnn_forward.6} parent=142 // loop_header_branch
                  %4921 = sbr.rel (%p4918) target = $region157
                $region154: #{cnn_forward.6} parent=142 // loop_body
                  %v4925 = vld [vmem:[%s4923] sm:$0xff]
                  %4926 = vst [vmem:[%s4924] sm:$0xff] %v4925
                  %s4927 = sadd.s32 1, %s4922
                  %p4928 = scmp.ge.s32.totalorder %s4927, %s4906
                  %s4929 = scalar_select %p4928, 0, %s4927
                  %s4930 = smul.u32 %s4929, 8
                  %s4931 = smul.u32 %s4929, 8
                  %s4932 = scalar_lea.vmem %s4910, %s4930 [#allocation3]
                  %s4933 = scalar_lea.vmem %s4913, %s4931
                $region155: #{cnn_forward.6} parent=142 // loop_footer
                  %s4919 = sadd.s32 %s4917, 1
                $region156: #{cnn_forward.6} parent=142 // loop_footer_branch
                  %4916 = sbr.rel target = $region152
                $region157: #{cnn_forward.6} parent=142 // loop_exit
                  _
                %s4934 = sshllo.u32 0, %s4752
                loop: start=0, step=1, limit=1
                $region158: #{cnn_forward.6} parent=142 // loop_pre_header
                  _
                $region159: #{cnn_forward.6} parent=142 // loop_header
                  %s4936 = sphi 0, %s4940
                  %p4937 = scmp.ge.s32.totalorder %s4936, 1
                  %s4941 = sphi %s4754, %s4754
                  %s4942 = sphi %s4756, %s4756
                $region160: #{cnn_forward.6} parent=142 // loop_header_branch
                  %4939 = sbr.rel (%p4937) target = $region164
                $region161: #{cnn_forward.6} parent=142 // loop_body
                  %v4943 = vld [vmem:[%s4941] sm:%s4934]
                  %4944 = vst [vmem:[%s4942] sm:%s4934] %v4943
                $region162: #{cnn_forward.6} parent=142 // loop_footer
                  %s4940 = sadd.s32 1, %s4936
                $region163: #{cnn_forward.6} parent=142 // loop_footer_branch
                  %4935 = sbr.rel target = $region159
                $region164: #{cnn_forward.6} parent=142 // loop_exit
                  _
              $region143: #{cnn_forward.6} parent=109 // pred_fallthru
                _
            $region110: #{cnn_forward.6} parent=105 // pred_fallthru
              _
            // Predicated region
            $region111: #{cnn_forward.6} parent=105 // pred_check
              %p4553 = pneg %p4549
            $region112: #{cnn_forward.6} parent=105 // pred_check_branch
              %4555 = sbr.rel (%p4553) target = $region114
            $region113: #{cnn_forward.6} parent=105 // pred_region
              %s4556 = sshllo.u32 0, %s4545
              loop: start=0, step=1, limit=1
              $region115: #{cnn_forward.6} parent=113 // loop_pre_header
                _
              $region116: #{cnn_forward.6} parent=113 // loop_header
                %s4558 = sphi 0, %s4562
                %p4559 = scmp.ge.s32.totalorder %s4558, 1
                %s4563 = sphi %s4533, %s4533
                %s4564 = sphi %s4544, %s4544
              $region117: #{cnn_forward.6} parent=113 // loop_header_branch
                %4561 = sbr.rel (%p4559) target = $region121
              $region118: #{cnn_forward.6} parent=113 // loop_body
                %v4565 = vld [vmem:[%s4563] sm:%s4556]
                %4566 = vst [vmem:[%s4564] sm:%s4556] %v4565
              $region119: #{cnn_forward.6} parent=113 // loop_footer
                %s4562 = sadd.s32 1, %s4558
              $region120: #{cnn_forward.6} parent=113 // loop_footer_branch
                %4557 = sbr.rel target = $region116
              $region121: #{cnn_forward.6} parent=113 // loop_exit
                _
            $region114: #{cnn_forward.6} parent=105 // pred_fallthru
              _
          $region106: #{cnn_forward.6} parent=101 // pred_fallthru
            _
          %4945 = vnop
        $region102: #{cnn_forward.6} parent=93 // pred_fallthru
          _
      $region94: #{cnn_forward.6} parent=5 // pred_fallthru
        _
      %p4946 = scmp.le.s32.totalorder 2, %s9
      // Predicated region
      $region165: #{cnn_forward.6} parent=5 // pred_check
        %p4947 = pneg %p4946
      $region166: #{cnn_forward.6} parent=5 // pred_check_branch
        %4949 = sbr.rel (%p4947) target = $region168
      $region167: #{cnn_forward.6} parent=5 // pred_region
        %s4950 = ssub.s32 %s9, 2
        // Predicated region
        $region169: #{cnn_forward.6} parent=167 // pred_check
          %p4951 = pneg %p106
        $region170: #{cnn_forward.6} parent=167 // pred_check_branch
          %4953 = sbr.rel (%p4951) target = $region172
        $region171: #{cnn_forward.6} parent=167 // pred_region
          %s4954 = sand.u32 %s91, 1
          %s4955 = sand.u32 %s91, 1
          %s4956 = smul.addr %s4955, 64
          %s4957 = scalar_lea.vmem [#allocation3], %s4956
        $region172: #{cnn_forward.6} parent=167 // pred_fallthru
          _
      $region168: #{cnn_forward.6} parent=5 // pred_fallthru
        _
    $region6: #{cnn_forward.6} parent=1 // loop_footer
      %s13 = sadd.s32 1, %s9
    $region7: #{cnn_forward.6} parent=1 // loop_footer_branch
      %8 = sbr.rel target = $region3
    $region8: #{cnn_forward.6} parent=1 // loop_exit
      _

// kernel: cnn_forward.7
$region0: #{cnn_forward.7}
  #allocation0 [shape = 'u32[]', space=smem, size = 0x4, offset = 0x4, fixed_abs, tag = 'smem constant byte address 0x4 - core index']
  #allocation1 [shape = 'u32[144,128]{1,0:T(1,128)}', space=vmem, size = 0x12000, scoped, tag = 'internal scratch']
  %s0 = inlined_call_operand.vmem [shape: bf16[6,784], index: 0, kind: input, shape index: {}]
  %s1 = inlined_call_operand.vmem [shape: bf16[6,784], index: 1, kind: input, shape index: {}]
  %s2 = inlined_call_operand.vmem [shape: bf16[6,784], index: 2, kind: input, shape index: {}]
  %s3 = inlined_call_operand.vmem [shape: bf16[6,784], index: 3, kind: input, shape index: {}]
  %s4 = inlined_call_operand.vmem [shape: bf16[6,784], index: 4, kind: output, shape index: {}]
  %s5 = sld [smem:[#allocation0]]
  $region26: #{cnn_forward.7} parent=0
    _
  %s7 = ssub.s32 1, %s5
  %s8 = scalar_select 0, %s7, %s5
  // Predicated region
  $region2: #{cnn_forward.7} parent=0 // pred_check
    _
  $region3: #{cnn_forward.7} parent=0 // pred_check_branch
    %10 = sbr.rel (0) target = $region5
  $region4: #{cnn_forward.7} parent=0 // pred_region
    _
  $region5: #{cnn_forward.7} parent=0 // pred_fallthru
    _
  // Predicated region
  $region6: #{cnn_forward.7} parent=0 // pred_check
    _
  $region7: #{cnn_forward.7} parent=0 // pred_check_branch
    %12 = sbr.rel (0) target = $region9
  $region8: #{cnn_forward.7} parent=0 // pred_region
    _
  $region9: #{cnn_forward.7} parent=0 // pred_fallthru
    _
  // Predicated region
  $region10: #{cnn_forward.7} parent=0 // pred_check
    _
  $region11: #{cnn_forward.7} parent=0 // pred_check_branch
    %14 = sbr.rel (0) target = $region13
  $region12: #{cnn_forward.7} parent=0 // pred_region
    _
  $region13: #{cnn_forward.7} parent=0 // pred_fallthru
    _
  // Predicated region
  $region14: #{cnn_forward.7} parent=0 // pred_check
    _
  $region15: #{cnn_forward.7} parent=0 // pred_check_branch
    %16 = sbr.rel (0) target = $region17
  $region16: #{cnn_forward.7} parent=0 // pred_region
    _
  $region17: #{cnn_forward.7} parent=0 // pred_fallthru
    _
  %v17 = vld [vmem:[%s0] sm:$0x77]
  %v18 = vld [vmem:[%s0 + $0x8] sm:$0x77]
  %v19 = vld [vmem:[%s0 + $0x10] sm:$0x77]
  %v20 = vld [vmem:[%s0 + $0x18] sm:$0x7]
  %v21 = vunpack.c.l.bf16 %v17
  %v22 = vunpack.c.h.bf16 %v17
  %v23 = vunpack.c.l.bf16 %v18
  %v24 = vunpack.c.h.bf16 %v18
  %v25 = vunpack.c.l.bf16 %v19
  %v26 = vunpack.c.h.bf16 %v19
  %v27 = vunpack.c.l.bf16 %v20
  %v28 = vld [vmem:[%s1] sm:$0x77]
  %v29 = vld [vmem:[%s1 + $0x8] sm:$0x77]
  %v30 = vld [vmem:[%s1 + $0x10] sm:$0x77]
  %v31 = vld [vmem:[%s1 + $0x18] sm:$0x7]
  %v32 = vunpack.c.l.bf16 %v28
  %v33 = vunpack.c.h.bf16 %v28
  %v34 = vunpack.c.l.bf16 %v29
  %v35 = vunpack.c.h.bf16 %v29
  %v36 = vunpack.c.l.bf16 %v30
  %v37 = vunpack.c.h.bf16 %v30
  %v38 = vunpack.c.l.bf16 %v31
  %v39 = vld [vmem:[%s2] sm:$0x77]
  %v40 = vld [vmem:[%s2 + $0x8] sm:$0x77]
  %v41 = vld [vmem:[%s2 + $0x10] sm:$0x77]
  %v42 = vld [vmem:[%s2 + $0x18] sm:$0x7]
  %v43 = vunpack.c.l.bf16 %v39
  %v44 = vunpack.c.h.bf16 %v39
  %v45 = vunpack.c.l.bf16 %v40
  %v46 = vunpack.c.h.bf16 %v40
  %v47 = vunpack.c.l.bf16 %v41
  %v48 = vunpack.c.h.bf16 %v41
  %v49 = vunpack.c.l.bf16 %v42
  %v50 = vld [vmem:[%s3] sm:$0x77]
  %v51 = vld [vmem:[%s3 + $0x8] sm:$0x77]
  %v52 = vld [vmem:[%s3 + $0x10] sm:$0x77]
  %v53 = vld [vmem:[%s3 + $0x18] sm:$0x7]
  %v54 = vunpack.c.l.bf16 %v50
  %v55 = vunpack.c.h.bf16 %v50
  %v56 = vunpack.c.l.bf16 %v51
  %v57 = vunpack.c.h.bf16 %v51
  %v58 = vunpack.c.l.bf16 %v52
  %v59 = vunpack.c.h.bf16 %v52
  %v60 = vunpack.c.l.bf16 %v53
  %v61 = vmax.f32 %v21, %v32
  %v62 = vmax.f32 %v22, %v33
  %v63 = vmax.f32 %v23, %v34
  %v64 = vmax.f32 %v24, %v35
  %v65 = vmax.f32 %v25, %v36
  %v66 = vmax.f32 %v26, %v37
  %v67 = vmax.f32 %v27, %v38
  %v68 = vmax.f32 %v43, %v54
  %v69 = vmax.f32 %v44, %v55
  %v70 = vmax.f32 %v45, %v56
  %v71 = vmax.f32 %v46, %v57
  %v72 = vmax.f32 %v47, %v58
  %v73 = vmax.f32 %v48, %v59
  %v74 = vmax.f32 %v49, %v60
  %v75 = vmax.f32 %v61, %v68
  %v76 = vmax.f32 %v62, %v69
  %v77 = vmax.f32 %v63, %v70
  %v78 = vmax.f32 %v64, %v71
  %v79 = vmax.f32 %v65, %v72
  %v80 = vmax.f32 %v66, %v73
  %v81 = vmax.f32 %v67, %v74
  %vm82 = vcmp.ge.f32.partialorder %v75, 0.0
  %vm83 = vcmp.ge.f32.partialorder %v76, 0.0
  %vm84 = vcmp.ge.f32.partialorder %v77, 0.0
  %vm85 = vcmp.ge.f32.partialorder %v78, 0.0
  %vm86 = vcmp.ge.f32.partialorder %v79, 0.0
  %vm87 = vcmp.ge.f32.partialorder %v80, 0.0
  %vm88 = vcmp.ge.f32.partialorder %v81, 0.0
  %v89 = vmul.f32 %v75, 0.01
  %v90 = vmul.f32 %v76, 0.01
  %v91 = vmul.f32 %v77, 0.01
  %v92 = vmul.f32 %v78, 0.01
  %v93 = vmul.f32 %v79, 0.01
  %v94 = vmul.f32 %v80, 0.01
  %v95 = vmul.f32 %v81, 0.01
  %v96 = vsel %vm82, %v75, %v89
  %v97 = vsel %vm83, %v76, %v90
  %v98 = vsel %vm84, %v77, %v91
  %v99 = vsel %vm85, %v78, %v92
  %v100 = vsel %vm86, %v79, %v93
  %v101 = vsel %vm87, %v80, %v94
  %v102 = vsel %vm88, %v81, %v95
  %v103 = vpack.c.bf16 %v96, %v96
  %v104 = vpack.c.bf16 %v97, %v97
  %v105 = vpack.c.bf16 %v98, %v98
  %v106 = vpack.c.bf16 %v99, %v99
  %v107 = vpack.c.bf16 %v100, %v100
  %v108 = vpack.c.bf16 %v101, %v101
  %v109 = vpack.c.bf16 %v102, %v102
  %v117 = vunpack.c.l.b16 %v103
  %v118 = vunpack.c.l.b16 %v104
  %v119 = vunpack.c.l.b16 %v105
  %v120 = vunpack.c.l.b16 %v106
  %v121 = vunpack.c.l.b16 %v107
  %v122 = vunpack.c.l.b16 %v108
  %v123 = vunpack.c.l.b16 %v109
  %v124 = vpack.c.b16 %v118, %v117
  %v125 = vpack.c.b16 %v120, %v119
  %v126 = vpack.c.b16 %v122, %v121
  %v127 = vpack.c.b16 %v123, %v123
  %132 = vst [vmem:[%s4] sm:$0x77] %v124
  %133 = vst [vmem:[%s4 + $0x8] sm:$0x77] %v125
  %134 = vst [vmem:[%s4 + $0x10] sm:$0x77] %v126
  %vm135 = vcmask 124928
  %136 = vst.msk [vmem:[%s4 + $0x18] sm:$0x7] %vm135, %v127
  // Predicated region
  $region18: #{cnn_forward.7} parent=0 // pred_check
    _
  $region19: #{cnn_forward.7} parent=0 // pred_check_branch
    %138 = sbr.rel (0) target = $region21
  $region20: #{cnn_forward.7} parent=0 // pred_region
    _
  $region21: #{cnn_forward.7} parent=0 // pred_fallthru
    _
  // Predicated region
  $region22: #{cnn_forward.7} parent=0 // pred_check
    _
  $region23: #{cnn_forward.7} parent=0 // pred_check_branch
    %140 = sbr.rel (0) target = $region25
  $region24: #{cnn_forward.7} parent=0 // pred_region
    _
  $region25: #{cnn_forward.7} parent=0 // pred_fallthru
    _

// kernel: cnn_forward.8
$region0: #{cnn_forward.8}
  #allocation0 [shape = 'u32[]', space=smem, size = 0x4, offset = 0x4, fixed_abs, tag = 'smem constant byte address 0x4 - core index']
  #allocation1 [shape = 'u32[144,128]{1,0:T(1,128)}', space=vmem, size = 0x12000, scoped, tag = 'internal scratch']
  %s0 = inlined_call_operand.vmem [shape: bf16[8,75], index: 0, kind: input, shape index: {}]
  %s1 = inlined_call_operand.vmem [shape: bf16[75,1568], index: 1, kind: input, shape index: {}]
  %s2 = inlined_call_operand.vmem [shape: f32[8,1], index: 2, kind: input, shape index: {}]
  %s3 = inlined_call_operand.vmem [shape: bf16[8,1568], index: 3, kind: output, shape index: {}]
  %s4 = sld [smem:[#allocation0]]
  $region173: #{cnn_forward.8} parent=0
    _
  %s6 = ssub.s32 1, %s4
  %s7 = scalar_select 0, %s6, %s4
  $region1: #{cnn_forward.8} parent=0
    #allocation2 [shape = 'u8[286720]{0}', space=vmem, size = 0x46000, scoped, tag = 'input window, operand 1']
    #allocation3 [shape = 'u8[28672]{0}', space=vmem, size = 0x7000, scoped, tag = 'output window, operand 0']
    loop: start=0, step=1, limit=4
    $region2: #{cnn_forward.8} parent=1 // loop_pre_header
      _
    $region3: #{cnn_forward.8} parent=1 // loop_header
      %s9 = sphi 0, %s13
      %p10 = scmp.ge.s32.totalorder %s9, 4
      %s17 = sphi 0, %s17
      %s19 = sphi 0, %s17
      %s20 = sphi 0, %s19
      %s34 = sphi 0, %s20
      %s40 = sphi 0, %s42
      %s43 = sphi 0, %s40
      %s44 = sphi 0, %s43
      %s60 = sphi 0, %s44
      %s64 = sphi 0, %s64
      %s66 = sphi 0, %s64
      %s67 = sphi 0, %s66
      %s81 = sphi 0, %s67
      %s87 = sphi 0, %s89
      %s90 = sphi 0, %s87
      %s91 = sphi 0, %s90
      %s107 = sphi 0, %s91
    $region4: #{cnn_forward.8} parent=1 // loop_header_branch
      %12 = sbr.rel (%p10) target = $region8
    $region5: #{cnn_forward.8} parent=1 // loop_body
      %s14 = ssub.s32 %s9, 1
      %s15 = ssub.s32 %s9, 2
      %s16 = sadd.s32 %s9, 1
      %s18 = sadd.s32 %s17, 1
      %p21 = scmp.eq.s32.totalorder %s9, 1
      %p22 = scmp.ne.s32.totalorder %s17, %s19
      %p23 = scmp.eq.s32.totalorder %s9, 0
      %p24 = por %p22, %p23
      %p25 = scmp.ne.s32.totalorder %s17, %s19
      %p26 = scmp.eq.s32.totalorder %s14, 1
      %p27 = por %p25, %p26
      %p28 = scmp.ne.s32.totalorder %s19, %s20
      %p29 = scmp.eq.s32.totalorder %s14, 0
      %p30 = por %p28, %p29
      %p31 = scmp.ne.s32.totalorder %s19, %s20
      %p32 = scmp.eq.s32.totalorder %s15, 1
      %p33 = por %p31, %p32
      %p35 = scmp.ne.s32.totalorder %s20, %s34
      %p36 = scmp.eq.s32.totalorder %s15, 0
      %p37 = por %p35, %p36
      %s38 = ssub.s32 %s9, %s16
      %p39 = scmp.eq.s32.totalorder %s38, 0
      %s41 = sadd.s32 %s40, 1
      %s42 = scalar_select %p39, %s40, %s41
      %p45 = pneg %p39
      %p46 = scmp.eq.s32.totalorder %s9, 1
      %p47 = por %p45, %p46
      %p48 = scmp.ne.s32.totalorder %s40, %s43
      %p49 = scmp.eq.s32.totalorder %s9, 0
      %p50 = por %p48, %p49
      %p51 = scmp.ne.s32.totalorder %s40, %s43
      %p52 = scmp.eq.s32.totalorder %s14, 1
      %p53 = por %p51, %p52
      %p54 = scmp.ne.s32.totalorder %s43, %s44
      %p55 = scmp.eq.s32.totalorder %s14, 0
      %p56 = por %p54, %p55
      %p57 = scmp.ne.s32.totalorder %s43, %s44
      %p58 = scmp.eq.s32.totalorder %s15, 1
      %p59 = por %p57, %p58
      %p61 = scmp.ne.s32.totalorder %s44, %s60
      %p62 = scmp.eq.s32.totalorder %s15, 0
      %p63 = por %p61, %p62
      %s65 = sadd.s32 %s64, 1
      %p68 = scmp.eq.s32.totalorder %s9, 1
      %p69 = scmp.ne.s32.totalorder %s64, %s66
      %p70 = scmp.eq.s32.totalorder %s9, 0
      %p71 = por %p69, %p70
      %p72 = scmp.ne.s32.totalorder %s64, %s66
      %p73 = scmp.eq.s32.totalorder %s14, 1
      %p74 = por %p72, %p73
      %p75 = scmp.ne.s32.totalorder %s66, %s67
      %p76 = scmp.eq.s32.totalorder %s14, 0
      %p77 = por %p75, %p76
      %p78 = scmp.ne.s32.totalorder %s66, %s67
      %p79 = scmp.eq.s32.totalorder %s15, 1
      %p80 = por %p78, %p79
      %p82 = scmp.ne.s32.totalorder %s67, %s81
      %p83 = scmp.eq.s32.totalorder %s15, 0
      %p84 = por %p82, %p83
      %s85 = ssub.s32 %s9, %s16
      %p86 = scmp.eq.s32.totalorder %s85, 0
      %s88 = sadd.s32 %s87, 1
      %s89 = scalar_select %p86, %s87, %s88
      %p92 = pneg %p86
      %p93 = scmp.eq.s32.totalorder %s9, 1
      %p94 = por %p92, %p93
      %p95 = scmp.ne.s32.totalorder %s87, %s90
      %p96 = scmp.eq.s32.totalorder %s9, 0
      %p97 = por %p95, %p96
      %p98 = scmp.ne.s32.totalorder %s87, %s90
      %p99 = scmp.eq.s32.totalorder %s14, 1
      %p100 = por %p98, %p99
      %p101 = scmp.ne.s32.totalorder %s90, %s91
      %p102 = scmp.eq.s32.totalorder %s14, 0
      %p103 = por %p101, %p102
      %p104 = scmp.ne.s32.totalorder %s90, %s91
      %p105 = scmp.eq.s32.totalorder %s15, 1
      %p106 = por %p104, %p105
      %p108 = scmp.ne.s32.totalorder %s91, %s107
      %p109 = scmp.eq.s32.totalorder %s15, 0
      %p110 = por %p108, %p109
      %p111 = scmp.le.s32.totalorder 1, %s9
      %p112 = scmp.lt.s32.totalorder %s9, 3
      %p113 = pnand %p111, %p112
      %p114 = pneg %p113
      // Predicated region
      $region9: #{cnn_forward.8} parent=5 // pred_check
        _
      $region10: #{cnn_forward.8} parent=5 // pred_check_branch
        %116 = sbr.rel (%p113) target = $region12
      $region11: #{cnn_forward.8} parent=5 // pred_region
        %s117 = ssub.s32 %s9, 1
        // Predicated region
        $region13: #{cnn_forward.8} parent=11 // pred_check
          %p118 = pneg %p30
        $region14: #{cnn_forward.8} parent=11 // pred_check_branch
          %120 = sbr.rel (%p118) target = $region16
        $region15: #{cnn_forward.8} parent=11 // pred_region
          _
        $region16: #{cnn_forward.8} parent=11 // pred_fallthru
          _
        // Predicated region
        $region17: #{cnn_forward.8} parent=11 // pred_check
          %p121 = pneg %p77
        $region18: #{cnn_forward.8} parent=11 // pred_check_branch
          %123 = sbr.rel (%p121) target = $region20
        $region19: #{cnn_forward.8} parent=11 // pred_region
          _
        $region20: #{cnn_forward.8} parent=11 // pred_fallthru
          _
      $region12: #{cnn_forward.8} parent=5 // pred_fallthru
        _
      %p124 = scmp.lt.s32.totalorder %s9, 2
      // Predicated region
      $region21: #{cnn_forward.8} parent=5 // pred_check
        %p125 = pneg %p124
      $region22: #{cnn_forward.8} parent=5 // pred_check_branch
        %127 = sbr.rel (%p125) target = $region24
      $region23: #{cnn_forward.8} parent=5 // pred_region
        // Predicated region
        $region25: #{cnn_forward.8} parent=23 // pred_check
          %p128 = pneg %p50
        $region26: #{cnn_forward.8} parent=23 // pred_check_branch
          %130 = sbr.rel (%p128) target = $region28
        $region27: #{cnn_forward.8} parent=23 // pred_region
          %s131 = sand.u32 %s40, 1
          %s132 = sand.u32 %s40, 1
          %s133 = smul.addr %s132, 280
          %s134 = scalar_lea.vmem [#allocation2], %s133
          %s135 = smul.u32 7, %s9
          %s136 = ssub.s32 13, %s135
          %p137 = scmp.lt.s32.totalorder %s136, 7
          %s138 = scalar_select %p137, %s136, 7
          %s139 = smul.u32 640, %s138
          %p140 = scmp.ne.s32.totalorder 0, %s139
          %s141 = smul.addr %s135, 4
          %s142 = scalar_lea.vmem %s1, %s141
          %s143 = smul.u32 %s138, 4
          // Predicated region
          $region29: #{cnn_forward.8} parent=27 // pred_check
            %p144 = pneg %p140
          $region30: #{cnn_forward.8} parent=27 // pred_check_branch
            %146 = sbr.rel (%p144) target = $region32
          $region31: #{cnn_forward.8} parent=27 // pred_region
            %p147 = scmp.lt.u32.totalorder %s143, 8
            %p148 = pneg %p147
            // Predicated region
            $region33: #{cnn_forward.8} parent=31 // pred_check
              _
            $region34: #{cnn_forward.8} parent=31 // pred_check_branch
              %150 = sbr.rel (%p147) target = $region36
            $region35: #{cnn_forward.8} parent=31 // pred_region
              %s183 = sand.u32 %s143, 7
              %p184 = scmp.eq.s32.totalorder %s183, 0
              // Predicated region
              $region48: #{cnn_forward.8} parent=35 // pred_check
                %p185 = pneg %p184
              $region49: #{cnn_forward.8} parent=35 // pred_check_branch
                %187 = sbr.rel (%p185) target = $region51
              $region50: #{cnn_forward.8} parent=35 // pred_region
                %s188 = sshrl.u32 %s143, 3
                %s189 = sshrl.u32 %s188, 3
                // While loop
                $region52: #{cnn_forward.8} parent=50 // loop_pre_header
                  _
                $region53: #{cnn_forward.8} parent=50 // loop_header
                  %s193 = sphi 0, %s195
                  %p194 = scmp.ge.s32.totalorder %s193, %s189
                  %s198 = sphi 0, %s363
                  %s199 = sphi %s142, %s366
                  %s200 = sphi %s134, %s367
                $region54: #{cnn_forward.8} parent=50 // loop_header_branch
                  %197 = sbr.rel (%p194) target = $region58
                $region55: #{cnn_forward.8} parent=50 // loop_body
                  %v201 = vld [vmem:[%s199] sm:$0xff]
                  %202 = vst [vmem:[%s200] sm:$0xff] %v201
                  %v203 = vld [vmem:[%s199 + $0x8] sm:$0xff]
                  %204 = vst [vmem:[%s200 + $0x8] sm:$0xff] %v203
                  %v205 = vld [vmem:[%s199 + $0x10] sm:$0xff]
                  %206 = vst [vmem:[%s200 + $0x10] sm:$0xff] %v205
                  %v207 = vld [vmem:[%s199 + $0x18] sm:$0xff]
                  %208 = vst [vmem:[%s200 + $0x18] sm:$0xff] %v207
                  %v209 = vld [vmem:[%s199 + $0x20] sm:$0xff]
                  %210 = vst [vmem:[%s200 + $0x20] sm:$0xff] %v209
                  %v211 = vld [vmem:[%s199 + $0x28] sm:$0xff]
                  %212 = vst [vmem:[%s200 + $0x28] sm:$0xff] %v211
                  %v213 = vld [vmem:[%s199 + $0x30] sm:$0xff]
                  %214 = vst [vmem:[%s200 + $0x30] sm:$0xff] %v213
                  %v215 = vld [vmem:[%s199 + $0x38] sm:$0xff]
                  %216 = vst [vmem:[%s200 + $0x38] sm:$0xff] %v215
                  %v217 = vld [vmem:[%s199 + $0x34] sm:$0xff]
                  %218 = vst [vmem:[%s200 + $0x1c] sm:$0xff] %v217
                  %v219 = vld [vmem:[%s199 + $0x3c] sm:$0xff]
                  %220 = vst [vmem:[%s200 + $0x24] sm:$0xff] %v219
                  %v221 = vld [vmem:[%s199 + $0x44] sm:$0xff]
                  %222 = vst [vmem:[%s200 + $0x2c] sm:$0xff] %v221
                  %v223 = vld [vmem:[%s199 + $0x4c] sm:$0xff]
                  %224 = vst [vmem:[%s200 + $0x34] sm:$0xff] %v223
                  %v225 = vld [vmem:[%s199 + $0x54] sm:$0xff]
                  %226 = vst [vmem:[%s200 + $0x3c] sm:$0xff] %v225
                  %v227 = vld [vmem:[%s199 + $0x5c] sm:$0xff]
                  %228 = vst [vmem:[%s200 + $0x44] sm:$0xff] %v227
                  %v229 = vld [vmem:[%s199 + $0x64] sm:$0xff]
                  %230 = vst [vmem:[%s200 + $0x4c] sm:$0xff] %v229
                  %v231 = vld [vmem:[%s199 + $0x6c] sm:$0xff]
                  %232 = vst [vmem:[%s200 + $0x54] sm:$0xff] %v231
                  %v233 = vld [vmem:[%s199 + $0x68] sm:$0xff]
                  %234 = vst [vmem:[%s200 + $0x38] sm:$0xff] %v233
                  %v235 = vld [vmem:[%s199 + $0x70] sm:$0xff]
                  %236 = vst [vmem:[%s200 + $0x40] sm:$0xff] %v235
                  %v237 = vld [vmem:[%s199 + $0x78] sm:$0xff]
                  %238 = vst [vmem:[%s200 + $0x48] sm:$0xff] %v237
                  %v239 = vld [vmem:[%s199 + $0x80] sm:$0xff]
                  %240 = vst [vmem:[%s200 + $0x50] sm:$0xff] %v239
                  %v241 = vld [vmem:[%s199 + $0x88] sm:$0xff]
                  %242 = vst [vmem:[%s200 + $0x58] sm:$0xff] %v241
                  %v243 = vld [vmem:[%s199 + $0x90] sm:$0xff]
                  %244 = vst [vmem:[%s200 + $0x60] sm:$0xff] %v243
                  %v245 = vld [vmem:[%s199 + $0x98] sm:$0xff]
                  %246 = vst [vmem:[%s200 + $0x68] sm:$0xff] %v245
                  %v247 = vld [vmem:[%s199 + $0xa0] sm:$0xff]
                  %248 = vst [vmem:[%s200 + $0x70] sm:$0xff] %v247
                  %v249 = vld [vmem:[%s199 + $0x9c] sm:$0xff]
                  %250 = vst [vmem:[%s200 + $0x54] sm:$0xff] %v249
                  %v251 = vld [vmem:[%s199 + $0xa4] sm:$0xff]
                  %252 = vst [vmem:[%s200 + $0x5c] sm:$0xff] %v251
                  %v253 = vld [vmem:[%s199 + $0xac] sm:$0xff]
                  %254 = vst [vmem:[%s200 + $0x64] sm:$0xff] %v253
                  %v255 = vld [vmem:[%s199 + $0xb4] sm:$0xff]
                  %256 = vst [vmem:[%s200 + $0x6c] sm:$0xff] %v255
                  %v257 = vld [vmem:[%s199 + $0xbc] sm:$0xff]
                  %258 = vst [vmem:[%s200 + $0x74] sm:$0xff] %v257
                  %v259 = vld [vmem:[%s199 + $0xc4] sm:$0xff]
                  %260 = vst [vmem:[%s200 + $0x7c] sm:$0xff] %v259
                  %v261 = vld [vmem:[%s199 + $0xcc] sm:$0xff]
                  %262 = vst [vmem:[%s200 + $0x84] sm:$0xff] %v261
                  %v263 = vld [vmem:[%s199 + $0xd4] sm:$0xff]
                  %264 = vst [vmem:[%s200 + $0x8c] sm:$0xff] %v263
                  %v265 = vld [vmem:[%s199 + $0xd0] sm:$0xff]
                  %266 = vst [vmem:[%s200 + $0x70] sm:$0xff] %v265
                  %v267 = vld [vmem:[%s199 + $0xd8] sm:$0xff]
                  %268 = vst [vmem:[%s200 + $0x78] sm:$0xff] %v267
                  %v269 = vld [vmem:[%s199 + $0xe0] sm:$0xff]
                  %270 = vst [vmem:[%s200 + $0x80] sm:$0xff] %v269
                  %v271 = vld [vmem:[%s199 + $0xe8] sm:$0xff]
                  %272 = vst [vmem:[%s200 + $0x88] sm:$0xff] %v271
                  %v273 = vld [vmem:[%s199 + $0xf0] sm:$0xff]
                  %274 = vst [vmem:[%s200 + $0x90] sm:$0xff] %v273
                  %v275 = vld [vmem:[%s199 + $0xf8] sm:$0xff]
                  %276 = vst [vmem:[%s200 + $0x98] sm:$0xff] %v275
                  %v277 = vld [vmem:[%s199 + $0x100] sm:$0xff]
                  %278 = vst [vmem:[%s200 + $0xa0] sm:$0xff] %v277
                  %v279 = vld [vmem:[%s199 + $0x108] sm:$0xff]
                  %280 = vst [vmem:[%s200 + $0xa8] sm:$0xff] %v279
                  %v281 = vld [vmem:[%s199 + $0x104] sm:$0xff]
                  %282 = vst [vmem:[%s200 + $0x8c] sm:$0xff] %v281
                  %v283 = vld [vmem:[%s199 + $0x10c] sm:$0xff]
                  %284 = vst [vmem:[%s200 + $0x94] sm:$0xff] %v283
                  %v285 = vld [vmem:[%s199 + $0x114] sm:$0xff]
                  %286 = vst [vmem:[%s200 + $0x9c] sm:$0xff] %v285
                  %v287 = vld [vmem:[%s199 + $0x11c] sm:$0xff]
                  %288 = vst [vmem:[%s200 + $0xa4] sm:$0xff] %v287
                  %v289 = vld [vmem:[%s199 + $0x124] sm:$0xff]
                  %290 = vst [vmem:[%s200 + $0xac] sm:$0xff] %v289
                  %v291 = vld [vmem:[%s199 + $0x12c] sm:$0xff]
                  %292 = vst [vmem:[%s200 + $0xb4] sm:$0xff] %v291
                  %v293 = vld [vmem:[%s199 + $0x134] sm:$0xff]
                  %294 = vst [vmem:[%s200 + $0xbc] sm:$0xff] %v293
                  %v295 = vld [vmem:[%s199 + $0x13c] sm:$0xff]
                  %296 = vst [vmem:[%s200 + $0xc4] sm:$0xff] %v295
                  %v297 = vld [vmem:[%s199 + $0x138] sm:$0xff]
                  %298 = vst [vmem:[%s200 + $0xa8] sm:$0xff] %v297
                  %v299 = vld [vmem:[%s199 + $0x140] sm:$0xff]
                  %300 = vst [vmem:[%s200 + $0xb0] sm:$0xff] %v299
                  %v301 = vld [vmem:[%s199 + $0x148] sm:$0xff]
                  %302 = vst [vmem:[%s200 + $0xb8] sm:$0xff] %v301
                  %v303 = vld [vmem:[%s199 + $0x150] sm:$0xff]
                  %304 = vst [vmem:[%s200 + $0xc0] sm:$0xff] %v303
                  %v305 = vld [vmem:[%s199 + $0x158] sm:$0xff]
                  %306 = vst [vmem:[%s200 + $0xc8] sm:$0xff] %v305
                  %v307 = vld [vmem:[%s199 + $0x160] sm:$0xff]
                  %308 = vst [vmem:[%s200 + $0xd0] sm:$0xff] %v307
                  %v309 = vld [vmem:[%s199 + $0x168] sm:$0xff]
                  %310 = vst [vmem:[%s200 + $0xd8] sm:$0xff] %v309
                  %v311 = vld [vmem:[%s199 + $0x170] sm:$0xff]
                  %312 = vst [vmem:[%s200 + $0xe0] sm:$0xff] %v311
                  %v313 = vld [vmem:[%s199 + $0x16c] sm:$0xff]
                  %314 = vst [vmem:[%s200 + $0xc4] sm:$0xff] %v313
                  %v315 = vld [vmem:[%s199 + $0x174] sm:$0xff]
                  %316 = vst [vmem:[%s200 + $0xcc] sm:$0xff] %v315
                  %v317 = vld [vmem:[%s199 + $0x17c] sm:$0xff]
                  %318 = vst [vmem:[%s200 + $0xd4] sm:$0xff] %v317
                  %v319 = vld [vmem:[%s199 + $0x184] sm:$0xff]
                  %320 = vst [vmem:[%s200 + $0xdc] sm:$0xff] %v319
                  %v321 = vld [vmem:[%s199 + $0x18c] sm:$0xff]
                  %322 = vst [vmem:[%s200 + $0xe4] sm:$0xff] %v321
                  %v323 = vld [vmem:[%s199 + $0x194] sm:$0xff]
                  %324 = vst [vmem:[%s200 + $0xec] sm:$0xff] %v323
                  %v325 = vld [vmem:[%s199 + $0x19c] sm:$0xff]
                  %326 = vst [vmem:[%s200 + $0xf4] sm:$0xff] %v325
                  %v327 = vld [vmem:[%s199 + $0x1a4] sm:$0xff]
                  %328 = vst [vmem:[%s200 + $0xfc] sm:$0xff] %v327
                  %v329 = vld [vmem:[%s199 + $0x1a0] sm:$0xff]
                  %330 = vst [vmem:[%s200 + $0xe0] sm:$0xff] %v329
                  %v331 = vld [vmem:[%s199 + $0x1a8] sm:$0xff]
                  %332 = vst [vmem:[%s200 + $0xe8] sm:$0xff] %v331
                  %v333 = vld [vmem:[%s199 + $0x1b0] sm:$0xff]
                  %334 = vst [vmem:[%s200 + $0xf0] sm:$0xff] %v333
                  %v335 = vld [vmem:[%s199 + $0x1b8] sm:$0xff]
                  %336 = vst [vmem:[%s200 + $0xf8] sm:$0xff] %v335
                  %v337 = vld [vmem:[%s199 + $0x1c0] sm:$0xff]
                  %338 = vst [vmem:[%s200 + $0x100] sm:$0xff] %v337
                  %v339 = vld [vmem:[%s199 + $0x1c8] sm:$0xff]
                  %340 = vst [vmem:[%s200 + $0x108] sm:$0xff] %v339
                  %v341 = vld [vmem:[%s199 + $0x1d0] sm:$0xff]
                  %342 = vst [vmem:[%s200 + $0x110] sm:$0xff] %v341
                  %v343 = vld [vmem:[%s199 + $0x1d8] sm:$0xff]
                  %344 = vst [vmem:[%s200 + $0x118] sm:$0xff] %v343
                  %v345 = vld [vmem:[%s199 + $0x1d4] sm:$0xff]
                  %346 = vst [vmem:[%s200 + $0xfc] sm:$0xff] %v345
                  %v347 = vld [vmem:[%s199 + $0x1dc] sm:$0xff]
                  %348 = vst [vmem:[%s200 + $0x104] sm:$0xff] %v347
                  %v349 = vld [vmem:[%s199 + $0x1e4] sm:$0xff]
                  %350 = vst [vmem:[%s200 + $0x10c] sm:$0xff] %v349
                  %v351 = vld [vmem:[%s199 + $0x1ec] sm:$0xff]
                  %352 = vst [vmem:[%s200 + $0x114] sm:$0xff] %v351
                  %v353 = vld [vmem:[%s199 + $0x1f4] sm:$0xff]
                  %354 = vst [vmem:[%s200 + $0x11c] sm:$0xff] %v353
                  %v355 = vld [vmem:[%s199 + $0x1fc] sm:$0xff]
                  %356 = vst [vmem:[%s200 + $0x124] sm:$0xff] %v355
                  %v357 = vld [vmem:[%s199 + $0x204] sm:$0xff]
                  %358 = vst [vmem:[%s200 + $0x12c] sm:$0xff] %v357
                  %v359 = vld [vmem:[%s199 + $0x20c] sm:$0xff]
                  %360 = vst [vmem:[%s200 + $0x134] sm:$0xff] %v359
                  %s361 = sadd.s32 1, %s198
                  %p362 = scmp.ge.s32.totalorder %s361, %s189
                  %s363 = scalar_select %p362, 0, %s361
                  %s364 = smul.u32 %s363, 64
                  %s365 = smul.u32 %s363, 64
                  %s366 = scalar_lea.vmem %s142, %s364
                  %s367 = scalar_lea.vmem %s134, %s365 [#allocation2]
                $region56: #{cnn_forward.8} parent=50 // loop_footer
                  %s195 = sadd.s32 %s193, 1
                $region57: #{cnn_forward.8} parent=50 // loop_footer_branch
                  %192 = sbr.rel target = $region53
                $region58: #{cnn_forward.8} parent=50 // loop_exit
                  _
                %s368 = sshrl.u32 %s188, 3
                %s369 = sand.u32 %s188, 7
                %s370 = smul.u32 %s368, 8
                %s371 = smul.u32 128, %s370
                %s372 = sshra.s32 %s371, 4
                %s373 = scalar_lea.vmem %s142, %s372
                %s374 = smul.u32 128, %s370
                %s375 = sshra.s32 %s374, 4
                %s376 = scalar_lea.vmem %s134, %s375 [#allocation2]
                // While loop
                $region59: #{cnn_forward.8} parent=50 // loop_pre_header
                  _
                $region60: #{cnn_forward.8} parent=50 // loop_header
                  %s380 = sphi 0, %s382
                  %p381 = scmp.ge.s32.totalorder %s380, %s369
                  %s385 = sphi 0, %s410
                  %s386 = sphi %s373, %s413
                  %s387 = sphi %s376, %s414
                $region61: #{cnn_forward.8} parent=50 // loop_header_branch
                  %384 = sbr.rel (%p381) target = $region65
                $region62: #{cnn_forward.8} parent=50 // loop_body
                  %v388 = vld [vmem:[%s386] sm:$0xff]
                  %389 = vst [vmem:[%s387] sm:$0xff] %v388
                  %v390 = vld [vmem:[%s386 + $0x34] sm:$0xff]
                  %391 = vst [vmem:[%s387 + $0x1c] sm:$0xff] %v390
                  %v392 = vld [vmem:[%s386 + $0x68] sm:$0xff]
                  %393 = vst [vmem:[%s387 + $0x38] sm:$0xff] %v392
                  %v394 = vld [vmem:[%s386 + $0x9c] sm:$0xff]
                  %395 = vst [vmem:[%s387 + $0x54] sm:$0xff] %v394
                  %v396 = vld [vmem:[%s386 + $0xd0] sm:$0xff]
                  %397 = vst [vmem:[%s387 + $0x70] sm:$0xff] %v396
                  %v398 = vld [vmem:[%s386 + $0x104] sm:$0xff]
                  %399 = vst [vmem:[%s387 + $0x8c] sm:$0xff] %v398
                  %v400 = vld [vmem:[%s386 + $0x138] sm:$0xff]
                  %401 = vst [vmem:[%s387 + $0xa8] sm:$0xff] %v400
                  %v402 = vld [vmem:[%s386 + $0x16c] sm:$0xff]
                  %403 = vst [vmem:[%s387 + $0xc4] sm:$0xff] %v402
                  %v404 = vld [vmem:[%s386 + $0x1a0] sm:$0xff]
                  %405 = vst [vmem:[%s387 + $0xe0] sm:$0xff] %v404
                  %v406 = vld [vmem:[%s386 + $0x1d4] sm:$0xff]
                  %407 = vst [vmem:[%s387 + $0xfc] sm:$0xff] %v406
                  %s408 = sadd.s32 1, %s385
                  %p409 = scmp.ge.s32.totalorder %s408, %s369
                  %s410 = scalar_select %p409, 0, %s408
                  %s411 = smul.u32 %s410, 8
                  %s412 = smul.u32 %s410, 8
                  %s413 = scalar_lea.vmem %s373, %s411
                  %s414 = scalar_lea.vmem %s376, %s412 [#allocation2]
                $region63: #{cnn_forward.8} parent=50 // loop_footer
                  %s382 = sadd.s32 %s380, 1
                $region64: #{cnn_forward.8} parent=50 // loop_footer_branch
                  %379 = sbr.rel target = $region60
                $region65: #{cnn_forward.8} parent=50 // loop_exit
                  _
              $region51: #{cnn_forward.8} parent=35 // pred_fallthru
                _
              %p415 = pneg %p184
              // Predicated region
              $region66: #{cnn_forward.8} parent=35 // pred_check
                _
              $region67: #{cnn_forward.8} parent=35 // pred_check_branch
                %417 = sbr.rel (%p184) target = $region69
              $region68: #{cnn_forward.8} parent=35 // pred_region
                %s418 = sand.u32 %s143, 7
                %s419 = ssub.s32 %s143, %s418
                %s420 = scalar_lea.vmem %s142, %s419
                %s421 = ssub.s32 %s143, %s418
                %s422 = scalar_lea.vmem %s134, %s421 [#allocation2]
                %s423 = sshrl.u32 %s143, 3
                %s424 = sshrl.u32 %s423, 3
                // While loop
                $region70: #{cnn_forward.8} parent=68 // loop_pre_header
                  _
                $region71: #{cnn_forward.8} parent=68 // loop_header
                  %s428 = sphi 0, %s430
                  %p429 = scmp.ge.s32.totalorder %s428, %s424
                  %s433 = sphi 0, %s598
                  %s434 = sphi %s142, %s601
                  %s435 = sphi %s134, %s602
                $region72: #{cnn_forward.8} parent=68 // loop_header_branch
                  %432 = sbr.rel (%p429) target = $region76
                $region73: #{cnn_forward.8} parent=68 // loop_body
                  %v436 = vld [vmem:[%s434] sm:$0xff]
                  %437 = vst [vmem:[%s435] sm:$0xff] %v436
                  %v438 = vld [vmem:[%s434 + $0x8] sm:$0xff]
                  %439 = vst [vmem:[%s435 + $0x8] sm:$0xff] %v438
                  %v440 = vld [vmem:[%s434 + $0x10] sm:$0xff]
                  %441 = vst [vmem:[%s435 + $0x10] sm:$0xff] %v440
                  %v442 = vld [vmem:[%s434 + $0x18] sm:$0xff]
                  %443 = vst [vmem:[%s435 + $0x18] sm:$0xff] %v442
                  %v444 = vld [vmem:[%s434 + $0x20] sm:$0xff]
                  %445 = vst [vmem:[%s435 + $0x20] sm:$0xff] %v444
                  %v446 = vld [vmem:[%s434 + $0x28] sm:$0xff]
                  %447 = vst [vmem:[%s435 + $0x28] sm:$0xff] %v446
                  %v448 = vld [vmem:[%s434 + $0x30] sm:$0xff]
                  %449 = vst [vmem:[%s435 + $0x30] sm:$0xff] %v448
                  %v450 = vld [vmem:[%s434 + $0x38] sm:$0xff]
                  %451 = vst [vmem:[%s435 + $0x38] sm:$0xff] %v450
                  %v452 = vld [vmem:[%s434 + $0x34] sm:$0xff]
                  %453 = vst [vmem:[%s435 + $0x1c] sm:$0xff] %v452
                  %v454 = vld [vmem:[%s434 + $0x3c] sm:$0xff]
                  %455 = vst [vmem:[%s435 + $0x24] sm:$0xff] %v454
                  %v456 = vld [vmem:[%s434 + $0x44] sm:$0xff]
                  %457 = vst [vmem:[%s435 + $0x2c] sm:$0xff] %v456
                  %v458 = vld [vmem:[%s434 + $0x4c] sm:$0xff]
                  %459 = vst [vmem:[%s435 + $0x34] sm:$0xff] %v458
                  %v460 = vld [vmem:[%s434 + $0x54] sm:$0xff]
                  %461 = vst [vmem:[%s435 + $0x3c] sm:$0xff] %v460
                  %v462 = vld [vmem:[%s434 + $0x5c] sm:$0xff]
                  %463 = vst [vmem:[%s435 + $0x44] sm:$0xff] %v462
                  %v464 = vld [vmem:[%s434 + $0x64] sm:$0xff]
                  %465 = vst [vmem:[%s435 + $0x4c] sm:$0xff] %v464
                  %v466 = vld [vmem:[%s434 + $0x6c] sm:$0xff]
                  %467 = vst [vmem:[%s435 + $0x54] sm:$0xff] %v466
                  %v468 = vld [vmem:[%s434 + $0x68] sm:$0xff]
                  %469 = vst [vmem:[%s435 + $0x38] sm:$0xff] %v468
                  %v470 = vld [vmem:[%s434 + $0x70] sm:$0xff]
                  %471 = vst [vmem:[%s435 + $0x40] sm:$0xff] %v470
                  %v472 = vld [vmem:[%s434 + $0x78] sm:$0xff]
                  %473 = vst [vmem:[%s435 + $0x48] sm:$0xff] %v472
                  %v474 = vld [vmem:[%s434 + $0x80] sm:$0xff]
                  %475 = vst [vmem:[%s435 + $0x50] sm:$0xff] %v474
                  %v476 = vld [vmem:[%s434 + $0x88] sm:$0xff]
                  %477 = vst [vmem:[%s435 + $0x58] sm:$0xff] %v476
                  %v478 = vld [vmem:[%s434 + $0x90] sm:$0xff]
                  %479 = vst [vmem:[%s435 + $0x60] sm:$0xff] %v478
                  %v480 = vld [vmem:[%s434 + $0x98] sm:$0xff]
                  %481 = vst [vmem:[%s435 + $0x68] sm:$0xff] %v480
                  %v482 = vld [vmem:[%s434 + $0xa0] sm:$0xff]
                  %483 = vst [vmem:[%s435 + $0x70] sm:$0xff] %v482
                  %v484 = vld [vmem:[%s434 + $0x9c] sm:$0xff]
                  %485 = vst [vmem:[%s435 + $0x54] sm:$0xff] %v484
                  %v486 = vld [vmem:[%s434 + $0xa4] sm:$0xff]
                  %487 = vst [vmem:[%s435 + $0x5c] sm:$0xff] %v486
                  %v488 = vld [vmem:[%s434 + $0xac] sm:$0xff]
                  %489 = vst [vmem:[%s435 + $0x64] sm:$0xff] %v488
                  %v490 = vld [vmem:[%s434 + $0xb4] sm:$0xff]
                  %491 = vst [vmem:[%s435 + $0x6c] sm:$0xff] %v490
                  %v492 = vld [vmem:[%s434 + $0xbc] sm:$0xff]
                  %493 = vst [vmem:[%s435 + $0x74] sm:$0xff] %v492
                  %v494 = vld [vmem:[%s434 + $0xc4] sm:$0xff]
                  %495 = vst [vmem:[%s435 + $0x7c] sm:$0xff] %v494
                  %v496 = vld [vmem:[%s434 + $0xcc] sm:$0xff]
                  %497 = vst [vmem:[%s435 + $0x84] sm:$0xff] %v496
                  %v498 = vld [vmem:[%s434 + $0xd4] sm:$0xff]
                  %499 = vst [vmem:[%s435 + $0x8c] sm:$0xff] %v498
                  %v500 = vld [vmem:[%s434 + $0xd0] sm:$0xff]
                  %501 = vst [vmem:[%s435 + $0x70] sm:$0xff] %v500
                  %v502 = vld [vmem:[%s434 + $0xd8] sm:$0xff]
                  %503 = vst [vmem:[%s435 + $0x78] sm:$0xff] %v502
                  %v504 = vld [vmem:[%s434 + $0xe0] sm:$0xff]
                  %505 = vst [vmem:[%s435 + $0x80] sm:$0xff] %v504
                  %v506 = vld [vmem:[%s434 + $0xe8] sm:$0xff]
                  %507 = vst [vmem:[%s435 + $0x88] sm:$0xff] %v506
                  %v508 = vld [vmem:[%s434 + $0xf0] sm:$0xff]
                  %509 = vst [vmem:[%s435 + $0x90] sm:$0xff] %v508
                  %v510 = vld [vmem:[%s434 + $0xf8] sm:$0xff]
                  %511 = vst [vmem:[%s435 + $0x98] sm:$0xff] %v510
                  %v512 = vld [vmem:[%s434 + $0x100] sm:$0xff]
                  %513 = vst [vmem:[%s435 + $0xa0] sm:$0xff] %v512
                  %v514 = vld [vmem:[%s434 + $0x108] sm:$0xff]
                  %515 = vst [vmem:[%s435 + $0xa8] sm:$0xff] %v514
                  %v516 = vld [vmem:[%s434 + $0x104] sm:$0xff]
                  %517 = vst [vmem:[%s435 + $0x8c] sm:$0xff] %v516
                  %v518 = vld [vmem:[%s434 + $0x10c] sm:$0xff]
                  %519 = vst [vmem:[%s435 + $0x94] sm:$0xff] %v518
                  %v520 = vld [vmem:[%s434 + $0x114] sm:$0xff]
                  %521 = vst [vmem:[%s435 + $0x9c] sm:$0xff] %v520
                  %v522 = vld [vmem:[%s434 + $0x11c] sm:$0xff]
                  %523 = vst [vmem:[%s435 + $0xa4] sm:$0xff] %v522
                  %v524 = vld [vmem:[%s434 + $0x124] sm:$0xff]
                  %525 = vst [vmem:[%s435 + $0xac] sm:$0xff] %v524
                  %v526 = vld [vmem:[%s434 + $0x12c] sm:$0xff]
                  %527 = vst [vmem:[%s435 + $0xb4] sm:$0xff] %v526
                  %v528 = vld [vmem:[%s434 + $0x134] sm:$0xff]
                  %529 = vst [vmem:[%s435 + $0xbc] sm:$0xff] %v528
                  %v530 = vld [vmem:[%s434 + $0x13c] sm:$0xff]
                  %531 = vst [vmem:[%s435 + $0xc4] sm:$0xff] %v530
                  %v532 = vld [vmem:[%s434 + $0x138] sm:$0xff]
                  %533 = vst [vmem:[%s435 + $0xa8] sm:$0xff] %v532
                  %v534 = vld [vmem:[%s434 + $0x140] sm:$0xff]
                  %535 = vst [vmem:[%s435 + $0xb0] sm:$0xff] %v534
                  %v536 = vld [vmem:[%s434 + $0x148] sm:$0xff]
                  %537 = vst [vmem:[%s435 + $0xb8] sm:$0xff] %v536
                  %v538 = vld [vmem:[%s434 + $0x150] sm:$0xff]
                  %539 = vst [vmem:[%s435 + $0xc0] sm:$0xff] %v538
                  %v540 = vld [vmem:[%s434 + $0x158] sm:$0xff]
                  %541 = vst [vmem:[%s435 + $0xc8] sm:$0xff] %v540
                  %v542 = vld [vmem:[%s434 + $0x160] sm:$0xff]
                  %543 = vst [vmem:[%s435 + $0xd0] sm:$0xff] %v542
                  %v544 = vld [vmem:[%s434 + $0x168] sm:$0xff]
                  %545 = vst [vmem:[%s435 + $0xd8] sm:$0xff] %v544
                  %v546 = vld [vmem:[%s434 + $0x170] sm:$0xff]
                  %547 = vst [vmem:[%s435 + $0xe0] sm:$0xff] %v546
                  %v548 = vld [vmem:[%s434 + $0x16c] sm:$0xff]
                  %549 = vst [vmem:[%s435 + $0xc4] sm:$0xff] %v548
                  %v550 = vld [vmem:[%s434 + $0x174] sm:$0xff]
                  %551 = vst [vmem:[%s435 + $0xcc] sm:$0xff] %v550
                  %v552 = vld [vmem:[%s434 + $0x17c] sm:$0xff]
                  %553 = vst [vmem:[%s435 + $0xd4] sm:$0xff] %v552
                  %v554 = vld [vmem:[%s434 + $0x184] sm:$0xff]
                  %555 = vst [vmem:[%s435 + $0xdc] sm:$0xff] %v554
                  %v556 = vld [vmem:[%s434 + $0x18c] sm:$0xff]
                  %557 = vst [vmem:[%s435 + $0xe4] sm:$0xff] %v556
                  %v558 = vld [vmem:[%s434 + $0x194] sm:$0xff]
                  %559 = vst [vmem:[%s435 + $0xec] sm:$0xff] %v558
                  %v560 = vld [vmem:[%s434 + $0x19c] sm:$0xff]
                  %561 = vst [vmem:[%s435 + $0xf4] sm:$0xff] %v560
                  %v562 = vld [vmem:[%s434 + $0x1a4] sm:$0xff]
                  %563 = vst [vmem:[%s435 + $0xfc] sm:$0xff] %v562
                  %v564 = vld [vmem:[%s434 + $0x1a0] sm:$0xff]
                  %565 = vst [vmem:[%s435 + $0xe0] sm:$0xff] %v564
                  %v566 = vld [vmem:[%s434 + $0x1a8] sm:$0xff]
                  %567 = vst [vmem:[%s435 + $0xe8] sm:$0xff] %v566
                  %v568 = vld [vmem:[%s434 + $0x1b0] sm:$0xff]
                  %569 = vst [vmem:[%s435 + $0xf0] sm:$0xff] %v568
                  %v570 = vld [vmem:[%s434 + $0x1b8] sm:$0xff]
                  %571 = vst [vmem:[%s435 + $0xf8] sm:$0xff] %v570
                  %v572 = vld [vmem:[%s434 + $0x1c0] sm:$0xff]
                  %573 = vst [vmem:[%s435 + $0x100] sm:$0xff] %v572
                  %v574 = vld [vmem:[%s434 + $0x1c8] sm:$0xff]
                  %575 = vst [vmem:[%s435 + $0x108] sm:$0xff] %v574
                  %v576 = vld [vmem:[%s434 + $0x1d0] sm:$0xff]
                  %577 = vst [vmem:[%s435 + $0x110] sm:$0xff] %v576
                  %v578 = vld [vmem:[%s434 + $0x1d8] sm:$0xff]
                  %579 = vst [vmem:[%s435 + $0x118] sm:$0xff] %v578
                  %v580 = vld [vmem:[%s434 + $0x1d4] sm:$0xff]
                  %581 = vst [vmem:[%s435 + $0xfc] sm:$0xff] %v580
                  %v582 = vld [vmem:[%s434 + $0x1dc] sm:$0xff]
                  %583 = vst [vmem:[%s435 + $0x104] sm:$0xff] %v582
                  %v584 = vld [vmem:[%s434 + $0x1e4] sm:$0xff]
                  %585 = vst [vmem:[%s435 + $0x10c] sm:$0xff] %v584
                  %v586 = vld [vmem:[%s434 + $0x1ec] sm:$0xff]
                  %587 = vst [vmem:[%s435 + $0x114] sm:$0xff] %v586
                  %v588 = vld [vmem:[%s434 + $0x1f4] sm:$0xff]
                  %589 = vst [vmem:[%s435 + $0x11c] sm:$0xff] %v588
                  %v590 = vld [vmem:[%s434 + $0x1fc] sm:$0xff]
                  %591 = vst [vmem:[%s435 + $0x124] sm:$0xff] %v590
                  %v592 = vld [vmem:[%s434 + $0x204] sm:$0xff]
                  %593 = vst [vmem:[%s435 + $0x12c] sm:$0xff] %v592
                  %v594 = vld [vmem:[%s434 + $0x20c] sm:$0xff]
                  %595 = vst [vmem:[%s435 + $0x134] sm:$0xff] %v594
                  %s596 = sadd.s32 1, %s433
                  %p597 = scmp.ge.s32.totalorder %s596, %s424
                  %s598 = scalar_select %p597, 0, %s596
                  %s599 = smul.u32 %s598, 64
                  %s600 = smul.u32 %s598, 64
                  %s601 = scalar_lea.vmem %s142, %s599
                  %s602 = scalar_lea.vmem %s134, %s600 [#allocation2]
                $region74: #{cnn_forward.8} parent=68 // loop_footer
                  %s430 = sadd.s32 %s428, 1
                $region75: #{cnn_forward.8} parent=68 // loop_footer_branch
                  %427 = sbr.rel target = $region71
                $region76: #{cnn_forward.8} parent=68 // loop_exit
                  _
                %s603 = sshrl.u32 %s423, 3
                %s604 = sand.u32 %s423, 7
                %s605 = smul.u32 %s603, 8
                %s606 = smul.u32 128, %s605
                %s607 = sshra.s32 %s606, 4
                %s608 = scalar_lea.vmem %s142, %s607
                %s609 = smul.u32 128, %s605
                %s610 = sshra.s32 %s609, 4
                %s611 = scalar_lea.vmem %s134, %s610 [#allocation2]
                // While loop
                $region77: #{cnn_forward.8} parent=68 // loop_pre_header
                  _
                $region78: #{cnn_forward.8} parent=68 // loop_header
                  %s615 = sphi 0, %s617
                  %p616 = scmp.ge.s32.totalorder %s615, %s604
                  %s620 = sphi 0, %s645
                  %s621 = sphi %s608, %s648
                  %s622 = sphi %s611, %s649
                $region79: #{cnn_forward.8} parent=68 // loop_header_branch
                  %619 = sbr.rel (%p616) target = $region83
                $region80: #{cnn_forward.8} parent=68 // loop_body
                  %v623 = vld [vmem:[%s621] sm:$0xff]
                  %624 = vst [vmem:[%s622] sm:$0xff] %v623
                  %v625 = vld [vmem:[%s621 + $0x34] sm:$0xff]
                  %626 = vst [vmem:[%s622 + $0x1c] sm:$0xff] %v625
                  %v627 = vld [vmem:[%s621 + $0x68] sm:$0xff]
                  %628 = vst [vmem:[%s622 + $0x38] sm:$0xff] %v627
                  %v629 = vld [vmem:[%s621 + $0x9c] sm:$0xff]
                  %630 = vst [vmem:[%s622 + $0x54] sm:$0xff] %v629
                  %v631 = vld [vmem:[%s621 + $0xd0] sm:$0xff]
                  %632 = vst [vmem:[%s622 + $0x70] sm:$0xff] %v631
                  %v633 = vld [vmem:[%s621 + $0x104] sm:$0xff]
                  %634 = vst [vmem:[%s622 + $0x8c] sm:$0xff] %v633
                  %v635 = vld [vmem:[%s621 + $0x138] sm:$0xff]
                  %636 = vst [vmem:[%s622 + $0xa8] sm:$0xff] %v635
                  %v637 = vld [vmem:[%s621 + $0x16c] sm:$0xff]
                  %638 = vst [vmem:[%s622 + $0xc4] sm:$0xff] %v637
                  %v639 = vld [vmem:[%s621 + $0x1a0] sm:$0xff]
                  %640 = vst [vmem:[%s622 + $0xe0] sm:$0xff] %v639
                  %v641 = vld [vmem:[%s621 + $0x1d4] sm:$0xff]
                  %642 = vst [vmem:[%s622 + $0xfc] sm:$0xff] %v641
                  %s643 = sadd.s32 1, %s620
                  %p644 = scmp.ge.s32.totalorder %s643, %s604
                  %s645 = scalar_select %p644, 0, %s643
                  %s646 = smul.u32 %s645, 8
                  %s647 = smul.u32 %s645, 8
                  %s648 = scalar_lea.vmem %s608, %s646
                  %s649 = scalar_lea.vmem %s611, %s647 [#allocation2]
                $region81: #{cnn_forward.8} parent=68 // loop_footer
                  %s617 = sadd.s32 %s615, 1
                $region82: #{cnn_forward.8} parent=68 // loop_footer_branch
                  %614 = sbr.rel target = $region78
                $region83: #{cnn_forward.8} parent=68 // loop_exit
                  _
                %s650 = sshllo.u32 0, %s418
                loop: start=0, step=1, limit=1
                $region84: #{cnn_forward.8} parent=68 // loop_pre_header
                  _
                $region85: #{cnn_forward.8} parent=68 // loop_header
                  %s652 = sphi 0, %s656
                  %p653 = scmp.ge.s32.totalorder %s652, 1
                  %s657 = sphi %s420, %s420
                  %s658 = sphi %s422, %s422
                $region86: #{cnn_forward.8} parent=68 // loop_header_branch
                  %655 = sbr.rel (%p653) target = $region90
                $region87: #{cnn_forward.8} parent=68 // loop_body
                  %v659 = vld [vmem:[%s657] sm:%s650]
                  %660 = vst [vmem:[%s658] sm:%s650] %v659
                  %v661 = vld [vmem:[%s657 + $0x34] sm:%s650]
                  %662 = vst [vmem:[%s658 + $0x1c] sm:%s650] %v661
                  %v663 = vld [vmem:[%s657 + $0x68] sm:%s650]
                  %664 = vst [vmem:[%s658 + $0x38] sm:%s650] %v663
                  %v665 = vld [vmem:[%s657 + $0x9c] sm:%s650]
                  %666 = vst [vmem:[%s658 + $0x54] sm:%s650] %v665
                  %v667 = vld [vmem:[%s657 + $0xd0] sm:%s650]
                  %668 = vst [vmem:[%s658 + $0x70] sm:%s650] %v667
                  %v669 = vld [vmem:[%s657 + $0x104] sm:%s650]
                  %670 = vst [vmem:[%s658 + $0x8c] sm:%s650] %v669
                  %v671 = vld [vmem:[%s657 + $0x138] sm:%s650]
                  %672 = vst [vmem:[%s658 + $0xa8] sm:%s650] %v671
                  %v673 = vld [vmem:[%s657 + $0x16c] sm:%s650]
                  %674 = vst [vmem:[%s658 + $0xc4] sm:%s650] %v673
                  %v675 = vld [vmem:[%s657 + $0x1a0] sm:%s650]
                  %676 = vst [vmem:[%s658 + $0xe0] sm:%s650] %v675
                  %v677 = vld [vmem:[%s657 + $0x1d4] sm:%s650]
                  %678 = vst [vmem:[%s658 + $0xfc] sm:%s650] %v677
                $region88: #{cnn_forward.8} parent=68 // loop_footer
                  %s656 = sadd.s32 1, %s652
                $region89: #{cnn_forward.8} parent=68 // loop_footer_branch
                  %651 = sbr.rel target = $region85
                $region90: #{cnn_forward.8} parent=68 // loop_exit
                  _
              $region69: #{cnn_forward.8} parent=35 // pred_fallthru
                _
            $region36: #{cnn_forward.8} parent=31 // pred_fallthru
              _
            // Predicated region
            $region37: #{cnn_forward.8} parent=31 // pred_check
              %p151 = pneg %p147
            $region38: #{cnn_forward.8} parent=31 // pred_check_branch
              %153 = sbr.rel (%p151) target = $region40
            $region39: #{cnn_forward.8} parent=31 // pred_region
              %s154 = sshllo.u32 0, %s143
              loop: start=0, step=1, limit=1
              $region41: #{cnn_forward.8} parent=39 // loop_pre_header
                _
              $region42: #{cnn_forward.8} parent=39 // loop_header
                %s156 = sphi 0, %s160
                %p157 = scmp.ge.s32.totalorder %s156, 1
                %s161 = sphi %s142, %s142
                %s162 = sphi %s134, %s134
              $region43: #{cnn_forward.8} parent=39 // loop_header_branch
                %159 = sbr.rel (%p157) target = $region47
              $region44: #{cnn_forward.8} parent=39 // loop_body
                %v163 = vld [vmem:[%s161] sm:%s154]
                %164 = vst [vmem:[%s162] sm:%s154] %v163
                %v165 = vld [vmem:[%s161 + $0x34] sm:%s154]
                %166 = vst [vmem:[%s162 + $0x1c] sm:%s154] %v165
                %v167 = vld [vmem:[%s161 + $0x68] sm:%s154]
                %168 = vst [vmem:[%s162 + $0x38] sm:%s154] %v167
                %v169 = vld [vmem:[%s161 + $0x9c] sm:%s154]
                %170 = vst [vmem:[%s162 + $0x54] sm:%s154] %v169
                %v171 = vld [vmem:[%s161 + $0xd0] sm:%s154]
                %172 = vst [vmem:[%s162 + $0x70] sm:%s154] %v171
                %v173 = vld [vmem:[%s161 + $0x104] sm:%s154]
                %174 = vst [vmem:[%s162 + $0x8c] sm:%s154] %v173
                %v175 = vld [vmem:[%s161 + $0x138] sm:%s154]
                %176 = vst [vmem:[%s162 + $0xa8] sm:%s154] %v175
                %v177 = vld [vmem:[%s161 + $0x16c] sm:%s154]
                %178 = vst [vmem:[%s162 + $0xc4] sm:%s154] %v177
                %v179 = vld [vmem:[%s161 + $0x1a0] sm:%s154]
                %180 = vst [vmem:[%s162 + $0xe0] sm:%s154] %v179
                %v181 = vld [vmem:[%s161 + $0x1d4] sm:%s154]
                %182 = vst [vmem:[%s162 + $0xfc] sm:%s154] %v181
              $region45: #{cnn_forward.8} parent=39 // loop_footer
                %s160 = sadd.s32 1, %s156
              $region46: #{cnn_forward.8} parent=39 // loop_footer_branch
                %155 = sbr.rel target = $region42
              $region47: #{cnn_forward.8} parent=39 // loop_exit
                _
            $region40: #{cnn_forward.8} parent=31 // pred_fallthru
              _
          $region32: #{cnn_forward.8} parent=27 // pred_fallthru
            _
          %679 = vnop
        $region28: #{cnn_forward.8} parent=23 // pred_fallthru
          _
      $region24: #{cnn_forward.8} parent=5 // pred_fallthru
        _
      %p680 = scmp.le.s32.totalorder 1, %s9
      %p681 = scmp.lt.s32.totalorder %s9, 3
      %p682 = pnand %p680, %p681
      %p683 = pneg %p682
      // Predicated region
      $region91: #{cnn_forward.8} parent=5 // pred_check
        _
      $region92: #{cnn_forward.8} parent=5 // pred_check_branch
        %685 = sbr.rel (%p682) target = $region94
      $region93: #{cnn_forward.8} parent=5 // pred_region
        %s686 = ssub.s32 %s9, 1
        %s687 = sand.u32 %s43, 1
        %s688 = sand.u32 %s43, 1
        %s689 = smul.addr %s688, 280
        %s690 = scalar_lea.vmem [#allocation2], %s689
        // Predicated region
        $region95: #{cnn_forward.8} parent=93 // pred_check
          %p691 = pneg %p56
        $region96: #{cnn_forward.8} parent=93 // pred_check_branch
          %693 = sbr.rel (%p691) target = $region98
        $region97: #{cnn_forward.8} parent=93 // pred_region
          _
        $region98: #{cnn_forward.8} parent=93 // pred_fallthru
          _
        %p694 = pneg %p30
        %p695 = pneg %p27
        %s696 = sand.u32 %s43, 1
        %s697 = sand.u32 %s43, 1
        %s698 = smul.addr %s697, 280
        %s699 = scalar_lea.vmem [#allocation2], %s698
        %p700 = pneg %p56
        %p701 = pneg %p53
        %p702 = pneg %p77
        %p703 = pneg %p74
        %p704 = pneg %p103
        %p705 = pneg %p100
        %s706 = sand.u32 %s90, 1
        %s707 = sand.u32 %s90, 1
        %s708 = smul.addr %s707, 28
        %s709 = scalar_lea.vmem [#allocation3], %s708
        %s710 = smul.u32 7, %s14
        %s711 = ssub.s32 13, %s710
        %p712 = scmp.lt.s32.totalorder %s711, 7
        %s713 = scalar_select %p712, %s711, 7
        %s714 = smul.u32 640, %s713
        %s715 = smul.u32 7, %s14
        %s716 = ssub.s32 13, %s715
        %p717 = scmp.lt.s32.totalorder %s716, 7
        %s718 = scalar_select %p717, %s716, 7
        %s719 = smul.u32 64, %s718
        %v721 = vld [vmem:[%s0] sm:$0xf]
        %v722 = vld [vmem:[%s690] sm:$0xff]
        %v723 = vld [vmem:[%s690 + $0x8] sm:$0xff]
        %v724 = vld [vmem:[%s690 + $0x10] sm:$0xff]
        %v725 = vld [vmem:[%s690 + $0x18] sm:$0xf]
        %v726 = vld [vmem:[%s690 + $0x1c] sm:$0xff]
        %v727 = vld [vmem:[%s690 + $0x24] sm:$0xff]
        %v728 = vld [vmem:[%s690 + $0x2c] sm:$0xff]
        %v729 = vld [vmem:[%s690 + $0x34] sm:$0xf]
        %v730 = vld [vmem:[%s690 + $0x38] sm:$0xff]
        %v731 = vld [vmem:[%s690 + $0x40] sm:$0xff]
        %v732 = vld [vmem:[%s690 + $0x48] sm:$0xff]
        %v733 = vld [vmem:[%s690 + $0x50] sm:$0xf]
        %v734 = vld [vmem:[%s690 + $0x54] sm:$0xff]
        %v735 = vld [vmem:[%s690 + $0x5c] sm:$0xff]
        %v736 = vld [vmem:[%s690 + $0x64] sm:$0xff]
        %v737 = vld [vmem:[%s690 + $0x6c] sm:$0xf]
        %v738 = vld [vmem:[%s690 + $0x70] sm:$0xff]
        %v739 = vld [vmem:[%s690 + $0x78] sm:$0xff]
        %v740 = vld [vmem:[%s690 + $0x80] sm:$0xff]
        %v741 = vld [vmem:[%s690 + $0x88] sm:$0xf]
        %v742 = vld [vmem:[%s690 + $0x8c] sm:$0xff]
        %v743 = vld [vmem:[%s690 + $0x94] sm:$0xff]
        %v744 = vld [vmem:[%s690 + $0x9c] sm:$0xff]
        %v745 = vld [vmem:[%s690 + $0xa4] sm:$0xf]
        %v746 = vld [vmem:[%s690 + $0xa8] sm:$0xff]
        %v747 = vld [vmem:[%s690 + $0xb0] sm:$0xff]
        %v748 = vld [vmem:[%s690 + $0xb8] sm:$0xff]
        %v749 = vld [vmem:[%s690 + $0xc0] sm:$0xf]
        %v750 = vld [vmem:[%s690 + $0xc4] sm:$0xff]
        %v751 = vld [vmem:[%s690 + $0xcc] sm:$0xff]
        %v752 = vld [vmem:[%s690 + $0xd4] sm:$0xff]
        %v753 = vld [vmem:[%s690 + $0xdc] sm:$0xf]
        %v754 = vld [vmem:[%s690 + $0xe0] sm:$0xff]
        %v755 = vld [vmem:[%s690 + $0xe8] sm:$0xff]
        %v756 = vld [vmem:[%s690 + $0xf0] sm:$0xff]
        %v757 = vld [vmem:[%s690 + $0xf8] sm:$0xf]
        %v758 = vld [vmem:[%s690 + $0xfc] sm:$0x33]
        %v759 = vld [vmem:[%s690 + $0x104] sm:$0x33]
        %v760 = vld [vmem:[%s690 + $0x10c] sm:$0x33]
        %v761 = vld [vmem:[%s690 + $0x114] sm:$0x3]
        %v762 = vld [vmem:[%s2] sm:$0xff]
        %764 = vset.pattern.permute.xlu0 0
        %765 = vperm.xlu0 %764, %v762
        %v766 = vpop.permute.xlu0 %765
        %v808 = vunpack.c.l.b16 %v722
        %v809 = vunpack.c.h.b16 %v722
        %v810 = vunpack.c.l.b16 %v723
        %v811 = vunpack.c.h.b16 %v723
        %v812 = vunpack.c.l.b16 %v724
        %v813 = vunpack.c.h.b16 %v724
        %v814 = vunpack.c.l.b16 %v725
        %v815 = vunpack.c.l.b16 %v726
        %v816 = vunpack.c.h.b16 %v726
        %v817 = vunpack.c.l.b16 %v727
        %v818 = vunpack.c.h.b16 %v727
        %v819 = vunpack.c.l.b16 %v728
        %v820 = vunpack.c.h.b16 %v728
        %v821 = vunpack.c.l.b16 %v729
        %v822 = vunpack.c.l.b16 %v730
        %v823 = vunpack.c.h.b16 %v730
        %v824 = vunpack.c.l.b16 %v731
        %v825 = vunpack.c.h.b16 %v731
        %v826 = vunpack.c.l.b16 %v732
        %v827 = vunpack.c.h.b16 %v732
        %v828 = vunpack.c.l.b16 %v733
        %v829 = vunpack.c.l.b16 %v734
        %v830 = vunpack.c.h.b16 %v734
        %v831 = vunpack.c.l.b16 %v735
        %v832 = vunpack.c.h.b16 %v735
        %v833 = vunpack.c.l.b16 %v736
        %v834 = vunpack.c.h.b16 %v736
        %v835 = vunpack.c.l.b16 %v737
        %v836 = vunpack.c.l.b16 %v738
        %v837 = vunpack.c.h.b16 %v738
        %v838 = vunpack.c.l.b16 %v739
        %v839 = vunpack.c.h.b16 %v739
        %v840 = vunpack.c.l.b16 %v740
        %v841 = vunpack.c.h.b16 %v740
        %v842 = vunpack.c.l.b16 %v741
        %v843 = vunpack.c.l.b16 %v742
        %v844 = vunpack.c.h.b16 %v742
        %v845 = vunpack.c.l.b16 %v743
        %v846 = vunpack.c.h.b16 %v743
        %v847 = vunpack.c.l.b16 %v744
        %v848 = vunpack.c.h.b16 %v744
        %v849 = vunpack.c.l.b16 %v745
        %v850 = vunpack.c.l.b16 %v746
        %v851 = vunpack.c.h.b16 %v746
        %v852 = vunpack.c.l.b16 %v747
        %v853 = vunpack.c.h.b16 %v747
        %v854 = vunpack.c.l.b16 %v748
        %v855 = vunpack.c.h.b16 %v748
        %v856 = vunpack.c.l.b16 %v749
        %v857 = vunpack.c.l.b16 %v750
        %v858 = vunpack.c.h.b16 %v750
        %v859 = vunpack.c.l.b16 %v751
        %v860 = vunpack.c.h.b16 %v751
        %v861 = vunpack.c.l.b16 %v752
        %v862 = vunpack.c.h.b16 %v752
        %v863 = vunpack.c.l.b16 %v753
        %v864 = vunpack.c.l.b16 %v754
        %v865 = vunpack.c.h.b16 %v754
        %v866 = vunpack.c.l.b16 %v755
        %v867 = vunpack.c.h.b16 %v755
        %v868 = vunpack.c.l.b16 %v756
        %v869 = vunpack.c.h.b16 %v756
        %v870 = vunpack.c.l.b16 %v757
        %v871 = vunpack.c.l.b16 %v758
        %v872 = vunpack.c.h.b16 %v758
        %v873 = vunpack.c.l.b16 %v759
        %v874 = vunpack.c.h.b16 %v759
        %v875 = vunpack.c.l.b16 %v760
        %v876 = vunpack.c.h.b16 %v760
        %v877 = vunpack.c.l.b16 %v761
        %v878 = vpack.c.b16 %v815, %v808
        %v879 = vpack.c.b16 %v816, %v809
        %v880 = vpack.c.b16 %v817, %v810
        %v881 = vpack.c.b16 %v818, %v811
        %v882 = vpack.c.b16 %v819, %v812
        %v883 = vpack.c.b16 %v820, %v813
        %v884 = vpack.c.b16 %v821, %v814
        %v885 = vpack.c.b16 %v829, %v822
        %v886 = vpack.c.b16 %v830, %v823
        %v887 = vpack.c.b16 %v831, %v824
        %v888 = vpack.c.b16 %v832, %v825
        %v889 = vpack.c.b16 %v833, %v826
        %v890 = vpack.c.b16 %v834, %v827
        %v891 = vpack.c.b16 %v835, %v828
        %v892 = vpack.c.b16 %v843, %v836
        %v893 = vpack.c.b16 %v844, %v837
        %v894 = vpack.c.b16 %v845, %v838
        %v895 = vpack.c.b16 %v846, %v839
        %v896 = vpack.c.b16 %v847, %v840
        %v897 = vpack.c.b16 %v848, %v841
        %v898 = vpack.c.b16 %v849, %v842
        %v899 = vpack.c.b16 %v857, %v850
        %v900 = vpack.c.b16 %v858, %v851
        %v901 = vpack.c.b16 %v859, %v852
        %v902 = vpack.c.b16 %v860, %v853
        %v903 = vpack.c.b16 %v861, %v854
        %v904 = vpack.c.b16 %v862, %v855
        %v905 = vpack.c.b16 %v863, %v856
        %v906 = vpack.c.b16 %v871, %v864
        %v907 = vpack.c.b16 %v872, %v865
        %v908 = vpack.c.b16 %v873, %v866
        %v909 = vpack.c.b16 %v874, %v867
        %v910 = vpack.c.b16 %v875, %v868
        %v911 = vpack.c.b16 %v876, %v869
        %v912 = vpack.c.b16 %v877, %v870
        %vm941 = vcmask 613376
        %v943 = vsel %vm941, %v721, 0
        %vm945 = vcmask 1044480
        %vm946 = vcmask 1045504
        %v947 = vsel %vm945, 4294967295, 65535
        %v948 = vsel %vm946, %v947, 0
        %v950 = vand.u32 %v906, %v948
        %v953 = vand.u32 %v907, %v948
        %v956 = vand.u32 %v908, %v948
        %v959 = vand.u32 %v909, %v948
        %v962 = vand.u32 %v910, %v948
        %v965 = vand.u32 %v911, %v948
        %v968 = vand.u32 %v912, %v948
        %970 = vmatprep.subr.bf16.mxu0 %v879
        %971 = vmatpush1.bf16.msra.mxu0 %v878
        %972 = vmatprep.subr.bf16.mxu0 %v886
        %973 = vmatpush1.bf16.msra.mxu0 %v885
        %974 = vmatprep.subr.bf16.mxu0 %v893
        %975 = vmatpush1.bf16.msra.mxu0 %v892
        %976 = vmatprep.subr.bf16.mxu0 %v900
        %977 = vmatpush1.bf16.msra.mxu0 %v899
        %978 = vmatprep.subr.bf16.mxu0 %v953
        %979 = vmatpush1.bf16.msra.mxu0 %v950
        %980 = vmatprep.subr.bf16.mxu0 0
        %981 = vmatpush1.bf16.msra.mxu0 0
        %982 = vmatprep.subr.bf16.mxu0 0
        %983 = vmatpush1.bf16.msra.mxu0 0
        %984 = vmatprep.subr.bf16.mxu0 0
        %985 = vmatpush1.bf16.msra.mxu0 0
        %986 = vmatprep.subr.bf16.mxu0 0
        %987 = vmatpush1.bf16.msra.mxu0 0
        %988 = vmatprep.subr.bf16.mxu0 0
        %989 = vmatpush1.bf16.msra.mxu0 0
        %990 = vmatprep.subr.bf16.mxu0 0
        %991 = vmatpush1.bf16.msra.mxu0 0
        %992 = vmatprep.subr.bf16.mxu0 0
        %993 = vmatpush1.bf16.msra.mxu0 0
        %994 = vmatprep.subr.bf16.mxu0 0
        %995 = vmatpush1.bf16.msra.mxu0 0
        %996 = vmatprep.subr.bf16.mxu0 0
        %997 = vmatpush1.bf16.msra.mxu0 0
        %998 = vmatprep.subr.bf16.mxu0 0
        %999 = vmatpush1.bf16.msra.mxu0 0
        %1000 = vmatprep.subr.bf16.mxu0 0
        %1001 = vmatpush1.bf16.msra.mxu0 0
        %1002 = vmatprep.mubr.bf16.mxu0 0
        %1003 = vmatmul.mubr.bf16.gmra.mrb[0].mxu0 %v943
        %v1004 = vpop.f32.mrb[0].mxu0
        %v1005 = vadd.f32 %v766, %v1004
        %v1006 = vpop.f32.mrb[0].mxu0
        %v1007 = vadd.f32 %v766, %v1006
        %v1008 = vpop.f32.mrb[0].mxu0
        %v1009 = vpop.f32.mrb[0].mxu0
        %1010 = vdwg.mxu0
        %1011 = vmatprep.subr.bf16.mxu0 %v881
        %1012 = vmatpush1.bf16.msra.mxu0 %v880
        %1013 = vmatprep.subr.bf16.mxu0 %v888
        %1014 = vmatpush1.bf16.msra.mxu0 %v887
        %1015 = vmatprep.subr.bf16.mxu0 %v895
        %1016 = vmatpush1.bf16.msra.mxu0 %v894
        %1017 = vmatprep.subr.bf16.mxu0 %v902
        %1018 = vmatpush1.bf16.msra.mxu0 %v901
        %1019 = vmatprep.subr.bf16.mxu0 %v959
        %1020 = vmatpush1.bf16.msra.mxu0 %v956
        %1021 = vmatprep.subr.bf16.mxu0 0
        %1022 = vmatpush1.bf16.msra.mxu0 0
        %1023 = vmatprep.subr.bf16.mxu0 0
        %1024 = vmatpush1.bf16.msra.mxu0 0
        %1025 = vmatprep.subr.bf16.mxu0 0
        %1026 = vmatpush1.bf16.msra.mxu0 0
        %1027 = vmatprep.subr.bf16.mxu0 0
        %1028 = vmatpush1.bf16.msra.mxu0 0
        %1029 = vmatprep.subr.bf16.mxu0 0
        %1030 = vmatpush1.bf16.msra.mxu0 0
        %1031 = vmatprep.subr.bf16.mxu0 0
        %1032 = vmatpush1.bf16.msra.mxu0 0
        %1033 = vmatprep.subr.bf16.mxu0 0
        %1034 = vmatpush1.bf16.msra.mxu0 0
        %1035 = vmatprep.subr.bf16.mxu0 0
        %1036 = vmatpush1.bf16.msra.mxu0 0
        %1037 = vmatprep.subr.bf16.mxu0 0
        %1038 = vmatpush1.bf16.msra.mxu0 0
        %1039 = vmatprep.subr.bf16.mxu0 0
        %1040 = vmatpush1.bf16.msra.mxu0 0
        %1041 = vmatprep.subr.bf16.mxu0 0
        %1042 = vmatpush1.bf16.msra.mxu0 0
        %1043 = vmatprep.mubr.bf16.mxu0 0
        %1044 = vmatmul.mubr.bf16.gmra.mrb[0].mxu0 %v943
        %v1045 = vpop.f32.mrb[0].mxu0
        %v1046 = vadd.f32 %v766, %v1045
        %v1047 = vpop.f32.mrb[0].mxu0
        %v1048 = vadd.f32 %v766, %v1047
        %v1049 = vpop.f32.mrb[0].mxu0
        %v1050 = vpop.f32.mrb[0].mxu0
        %1051 = vdwg.mxu0
        %1052 = vmatprep.subr.bf16.mxu0 %v883
        %1053 = vmatpush1.bf16.msra.mxu0 %v882
        %1054 = vmatprep.subr.bf16.mxu0 %v890
        %1055 = vmatpush1.bf16.msra.mxu0 %v889
        %1056 = vmatprep.subr.bf16.mxu0 %v897
        %1057 = vmatpush1.bf16.msra.mxu0 %v896
        %1058 = vmatprep.subr.bf16.mxu0 %v904
        %1059 = vmatpush1.bf16.msra.mxu0 %v903
        %1060 = vmatprep.subr.bf16.mxu0 %v965
        %1061 = vmatpush1.bf16.msra.mxu0 %v962
        %1062 = vmatprep.subr.bf16.mxu0 0
        %1063 = vmatpush1.bf16.msra.mxu0 0
        %1064 = vmatprep.subr.bf16.mxu0 0
        %1065 = vmatpush1.bf16.msra.mxu0 0
        %1066 = vmatprep.subr.bf16.mxu0 0
        %1067 = vmatpush1.bf16.msra.mxu0 0
        %1068 = vmatprep.subr.bf16.mxu0 0
        %1069 = vmatpush1.bf16.msra.mxu0 0
        %1070 = vmatprep.subr.bf16.mxu0 0
        %1071 = vmatpush1.bf16.msra.mxu0 0
        %1072 = vmatprep.subr.bf16.mxu0 0
        %1073 = vmatpush1.bf16.msra.mxu0 0
        %1074 = vmatprep.subr.bf16.mxu0 0
        %1075 = vmatpush1.bf16.msra.mxu0 0
        %1076 = vmatprep.subr.bf16.mxu0 0
        %1077 = vmatpush1.bf16.msra.mxu0 0
        %1078 = vmatprep.subr.bf16.mxu0 0
        %1079 = vmatpush1.bf16.msra.mxu0 0
        %1080 = vmatprep.subr.bf16.mxu0 0
        %1081 = vmatpush1.bf16.msra.mxu0 0
        %1082 = vmatprep.subr.bf16.mxu0 0
        %1083 = vmatpush1.bf16.msra.mxu0 0
        %1084 = vmatprep.mubr.bf16.mxu0 0
        %1085 = vmatmul.mubr.bf16.gmra.mrb[0].mxu0 %v943
        %v1086 = vpop.f32.mrb[0].mxu0
        %v1087 = vadd.f32 %v766, %v1086
        %v1088 = vpop.f32.mrb[0].mxu0
        %v1089 = vadd.f32 %v766, %v1088
        %v1090 = vpop.f32.mrb[0].mxu0
        %v1091 = vpop.f32.mrb[0].mxu0
        %1092 = vdwg.mxu0
        %1093 = vmatprep.subr.bf16.mxu0 0
        %1094 = vmatpush1.bf16.msra.mxu0 %v884
        %1095 = vmatprep.subr.bf16.mxu0 0
        %1096 = vmatpush1.bf16.msra.mxu0 %v891
        %1097 = vmatprep.subr.bf16.mxu0 0
        %1098 = vmatpush1.bf16.msra.mxu0 %v898
        %1099 = vmatprep.subr.bf16.mxu0 0
        %1100 = vmatpush1.bf16.msra.mxu0 %v905
        %1101 = vmatprep.subr.bf16.mxu0 0
        %1102 = vmatpush1.bf16.msra.mxu0 %v968
        %1103 = vmatprep.subr.bf16.mxu0 0
        %1104 = vmatpush1.bf16.msra.mxu0 0
        %1105 = vmatprep.subr.bf16.mxu0 0
        %1106 = vmatpush1.bf16.msra.mxu0 0
        %1107 = vmatprep.subr.bf16.mxu0 0
        %1108 = vmatpush1.bf16.msra.mxu0 0
        %1109 = vmatprep.subr.bf16.mxu0 0
        %1110 = vmatpush1.bf16.msra.mxu0 0
        %1111 = vmatprep.subr.bf16.mxu0 0
        %1112 = vmatpush1.bf16.msra.mxu0 0
        %1113 = vmatprep.subr.bf16.mxu0 0
        %1114 = vmatpush1.bf16.msra.mxu0 0
        %1115 = vmatprep.subr.bf16.mxu0 0
        %1116 = vmatpush1.bf16.msra.mxu0 0
        %1117 = vmatprep.subr.bf16.mxu0 0
        %1118 = vmatpush1.bf16.msra.mxu0 0
        %1119 = vmatprep.subr.bf16.mxu0 0
        %1120 = vmatpush1.bf16.msra.mxu0 0
        %1121 = vmatprep.subr.bf16.mxu0 0
        %1122 = vmatpush1.bf16.msra.mxu0 0
        %1123 = vmatprep.subr.bf16.mxu0 0
        %1124 = vmatpush1.bf16.msra.mxu0 0
        %1125 = vmatprep.mubr.bf16.mxu0 0
        %1126 = vmatmul.mubr.bf16.gmra.mrb[0].mxu0 %v943
        %v1127 = vpop.f32.mrb[0].mxu0
        %v1128 = vadd.f32 %v766, %v1127
        %v1129 = vpop.f32.mrb[0].mxu0
        %v1130 = vpop.f32.mrb[0].mxu0
        %v1131 = vpop.f32.mrb[0].mxu0
        %1132 = vdwg.mxu0
        %v1133 = vpack.c.bf16 %v1005, %v1005
        %v1134 = vpack.c.bf16 %v1007, %v1007
        %v1135 = vpack.c.bf16 %v1046, %v1046
        %v1136 = vpack.c.bf16 %v1048, %v1048
        %v1137 = vpack.c.bf16 %v1087, %v1087
        %v1138 = vpack.c.bf16 %v1089, %v1089
        %v1139 = vpack.c.bf16 %v1128, %v1128
        %v1147 = vunpack.c.l.b16 %v1133
        %v1148 = vunpack.c.l.b16 %v1134
        %v1149 = vunpack.c.l.b16 %v1135
        %v1150 = vunpack.c.l.b16 %v1136
        %v1151 = vunpack.c.l.b16 %v1137
        %v1152 = vunpack.c.l.b16 %v1138
        %v1153 = vunpack.c.l.b16 %v1139
        %v1154 = vpack.c.b16 %v1148, %v1147
        %v1155 = vpack.c.b16 %v1150, %v1149
        %v1156 = vpack.c.b16 %v1152, %v1151
        %v1157 = vpack.c.b16 %v1153, %v1153
        %1162 = vst [vmem:[%s709] sm:$0xff] %v1154
        %1163 = vst [vmem:[%s709 + $0x8] sm:$0xff] %v1155
        %1164 = vst [vmem:[%s709 + $0x10] sm:$0xff] %v1156
        %1165 = vst [vmem:[%s709 + $0x18] sm:$0xf] %v1157
        %s1166 = sand.u32 %s90, 1
        %s1167 = sand.u32 %s90, 1
        %s1168 = smul.addr %s1167, 28
        %s1169 = scalar_lea.vmem [#allocation3], %s1168
        // Predicated region
        $region99: #{cnn_forward.8} parent=93 // pred_check
          %p1170 = pneg %p100
        $region100: #{cnn_forward.8} parent=93 // pred_check_branch
          %1172 = sbr.rel (%p1170) target = $region102
        $region101: #{cnn_forward.8} parent=93 // pred_region
          %s1173 = smul.u32 7, %s14
          %s1174 = ssub.s32 13, %s1173
          %p1175 = scmp.lt.s32.totalorder %s1174, 7
          %s1176 = scalar_select %p1175, %s1174, 7
          %s1177 = smul.u32 64, %s1176
          %p1178 = scmp.ne.s32.totalorder 0, %s1177
          %s1179 = smul.addr %s1173, 4
          %s1180 = scalar_lea.vmem %s3, %s1179
          %s1181 = smul.u32 %s1176, 4
          // Predicated region
          $region103: #{cnn_forward.8} parent=101 // pred_check
            %p1182 = pneg %p1178
          $region104: #{cnn_forward.8} parent=101 // pred_check_branch
            %1184 = sbr.rel (%p1182) target = $region106
          $region105: #{cnn_forward.8} parent=101 // pred_region
            %p1185 = scmp.lt.u32.totalorder %s1181, 8
            %p1186 = pneg %p1185
            // Predicated region
            $region107: #{cnn_forward.8} parent=105 // pred_check
              _
            $region108: #{cnn_forward.8} parent=105 // pred_check_branch
              %1188 = sbr.rel (%p1185) target = $region110
            $region109: #{cnn_forward.8} parent=105 // pred_region
              %s1203 = sand.u32 %s1181, 7
              %p1204 = scmp.eq.s32.totalorder %s1203, 0
              // Predicated region
              $region122: #{cnn_forward.8} parent=109 // pred_check
                %p1205 = pneg %p1204
              $region123: #{cnn_forward.8} parent=109 // pred_check_branch
                %1207 = sbr.rel (%p1205) target = $region125
              $region124: #{cnn_forward.8} parent=109 // pred_region
                %s1208 = sshrl.u32 %s1181, 3
                %s1209 = sshrl.u32 %s1208, 6
                // While loop
                $region126: #{cnn_forward.8} parent=124 // loop_pre_header
                  _
                $region127: #{cnn_forward.8} parent=124 // loop_header
                  %s1213 = sphi 0, %s1215
                  %p1214 = scmp.ge.s32.totalorder %s1213, %s1209
                  %s1218 = sphi 0, %s1351
                  %s1219 = sphi %s1169, %s1354
                  %s1220 = sphi %s1180, %s1355
                $region128: #{cnn_forward.8} parent=124 // loop_header_branch
                  %1217 = sbr.rel (%p1214) target = $region132
                $region129: #{cnn_forward.8} parent=124 // loop_body
                  %v1221 = vld [vmem:[%s1219] sm:$0xff]
                  %1222 = vst [vmem:[%s1220] sm:$0xff] %v1221
                  %v1223 = vld [vmem:[%s1219 + $0x8] sm:$0xff]
                  %1224 = vst [vmem:[%s1220 + $0x8] sm:$0xff] %v1223
                  %v1225 = vld [vmem:[%s1219 + $0x10] sm:$0xff]
                  %1226 = vst [vmem:[%s1220 + $0x10] sm:$0xff] %v1225
                  %v1227 = vld [vmem:[%s1219 + $0x18] sm:$0xff]
                  %1228 = vst [vmem:[%s1220 + $0x18] sm:$0xff] %v1227
                  %v1229 = vld [vmem:[%s1219 + $0x20] sm:$0xff]
                  %1230 = vst [vmem:[%s1220 + $0x20] sm:$0xff] %v1229
                  %v1231 = vld [vmem:[%s1219 + $0x28] sm:$0xff]
                  %1232 = vst [vmem:[%s1220 + $0x28] sm:$0xff] %v1231
                  %v1233 = vld [vmem:[%s1219 + $0x30] sm:$0xff]
                  %1234 = vst [vmem:[%s1220 + $0x30] sm:$0xff] %v1233
                  %v1235 = vld [vmem:[%s1219 + $0x38] sm:$0xff]
                  %1236 = vst [vmem:[%s1220 + $0x38] sm:$0xff] %v1235
                  %v1237 = vld [vmem:[%s1219 + $0x40] sm:$0xff]
                  %1238 = vst [vmem:[%s1220 + $0x40] sm:$0xff] %v1237
                  %v1239 = vld [vmem:[%s1219 + $0x48] sm:$0xff]
                  %1240 = vst [vmem:[%s1220 + $0x48] sm:$0xff] %v1239
                  %v1241 = vld [vmem:[%s1219 + $0x50] sm:$0xff]
                  %1242 = vst [vmem:[%s1220 + $0x50] sm:$0xff] %v1241
                  %v1243 = vld [vmem:[%s1219 + $0x58] sm:$0xff]
                  %1244 = vst [vmem:[%s1220 + $0x58] sm:$0xff] %v1243
                  %v1245 = vld [vmem:[%s1219 + $0x60] sm:$0xff]
                  %1246 = vst [vmem:[%s1220 + $0x60] sm:$0xff] %v1245
                  %v1247 = vld [vmem:[%s1219 + $0x68] sm:$0xff]
                  %1248 = vst [vmem:[%s1220 + $0x68] sm:$0xff] %v1247
                  %v1249 = vld [vmem:[%s1219 + $0x70] sm:$0xff]
                  %1250 = vst [vmem:[%s1220 + $0x70] sm:$0xff] %v1249
                  %v1251 = vld [vmem:[%s1219 + $0x78] sm:$0xff]
                  %1252 = vst [vmem:[%s1220 + $0x78] sm:$0xff] %v1251
                  %v1253 = vld [vmem:[%s1219 + $0x80] sm:$0xff]
                  %1254 = vst [vmem:[%s1220 + $0x80] sm:$0xff] %v1253
                  %v1255 = vld [vmem:[%s1219 + $0x88] sm:$0xff]
                  %1256 = vst [vmem:[%s1220 + $0x88] sm:$0xff] %v1255
                  %v1257 = vld [vmem:[%s1219 + $0x90] sm:$0xff]
                  %1258 = vst [vmem:[%s1220 + $0x90] sm:$0xff] %v1257
                  %v1259 = vld [vmem:[%s1219 + $0x98] sm:$0xff]
                  %1260 = vst [vmem:[%s1220 + $0x98] sm:$0xff] %v1259
                  %v1261 = vld [vmem:[%s1219 + $0xa0] sm:$0xff]
                  %1262 = vst [vmem:[%s1220 + $0xa0] sm:$0xff] %v1261
                  %v1263 = vld [vmem:[%s1219 + $0xa8] sm:$0xff]
                  %1264 = vst [vmem:[%s1220 + $0xa8] sm:$0xff] %v1263
                  %v1265 = vld [vmem:[%s1219 + $0xb0] sm:$0xff]
                  %1266 = vst [vmem:[%s1220 + $0xb0] sm:$0xff] %v1265
                  %v1267 = vld [vmem:[%s1219 + $0xb8] sm:$0xff]
                  %1268 = vst [vmem:[%s1220 + $0xb8] sm:$0xff] %v1267
                  %v1269 = vld [vmem:[%s1219 + $0xc0] sm:$0xff]
                  %1270 = vst [vmem:[%s1220 + $0xc0] sm:$0xff] %v1269
                  %v1271 = vld [vmem:[%s1219 + $0xc8] sm:$0xff]
                  %1272 = vst [vmem:[%s1220 + $0xc8] sm:$0xff] %v1271
                  %v1273 = vld [vmem:[%s1219 + $0xd0] sm:$0xff]
                  %1274 = vst [vmem:[%s1220 + $0xd0] sm:$0xff] %v1273
                  %v1275 = vld [vmem:[%s1219 + $0xd8] sm:$0xff]
                  %1276 = vst [vmem:[%s1220 + $0xd8] sm:$0xff] %v1275
                  %v1277 = vld [vmem:[%s1219 + $0xe0] sm:$0xff]
                  %1278 = vst [vmem:[%s1220 + $0xe0] sm:$0xff] %v1277
                  %v1279 = vld [vmem:[%s1219 + $0xe8] sm:$0xff]
                  %1280 = vst [vmem:[%s1220 + $0xe8] sm:$0xff] %v1279
                  %v1281 = vld [vmem:[%s1219 + $0xf0] sm:$0xff]
                  %1282 = vst [vmem:[%s1220 + $0xf0] sm:$0xff] %v1281
                  %v1283 = vld [vmem:[%s1219 + $0xf8] sm:$0xff]
                  %1284 = vst [vmem:[%s1220 + $0xf8] sm:$0xff] %v1283
                  %v1285 = vld [vmem:[%s1219 + $0x100] sm:$0xff]
                  %1286 = vst [vmem:[%s1220 + $0x100] sm:$0xff] %v1285
                  %v1287 = vld [vmem:[%s1219 + $0x108] sm:$0xff]
                  %1288 = vst [vmem:[%s1220 + $0x108] sm:$0xff] %v1287
                  %v1289 = vld [vmem:[%s1219 + $0x110] sm:$0xff]
                  %1290 = vst [vmem:[%s1220 + $0x110] sm:$0xff] %v1289
                  %v1291 = vld [vmem:[%s1219 + $0x118] sm:$0xff]
                  %1292 = vst [vmem:[%s1220 + $0x118] sm:$0xff] %v1291
                  %v1293 = vld [vmem:[%s1219 + $0x120] sm:$0xff]
                  %1294 = vst [vmem:[%s1220 + $0x120] sm:$0xff] %v1293
                  %v1295 = vld [vmem:[%s1219 + $0x128] sm:$0xff]
                  %1296 = vst [vmem:[%s1220 + $0x128] sm:$0xff] %v1295
                  %v1297 = vld [vmem:[%s1219 + $0x130] sm:$0xff]
                  %1298 = vst [vmem:[%s1220 + $0x130] sm:$0xff] %v1297
                  %v1299 = vld [vmem:[%s1219 + $0x138] sm:$0xff]
                  %1300 = vst [vmem:[%s1220 + $0x138] sm:$0xff] %v1299
                  %v1301 = vld [vmem:[%s1219 + $0x140] sm:$0xff]
                  %1302 = vst [vmem:[%s1220 + $0x140] sm:$0xff] %v1301
                  %v1303 = vld [vmem:[%s1219 + $0x148] sm:$0xff]
                  %1304 = vst [vmem:[%s1220 + $0x148] sm:$0xff] %v1303
                  %v1305 = vld [vmem:[%s1219 + $0x150] sm:$0xff]
                  %1306 = vst [vmem:[%s1220 + $0x150] sm:$0xff] %v1305
                  %v1307 = vld [vmem:[%s1219 + $0x158] sm:$0xff]
                  %1308 = vst [vmem:[%s1220 + $0x158] sm:$0xff] %v1307
                  %v1309 = vld [vmem:[%s1219 + $0x160] sm:$0xff]
                  %1310 = vst [vmem:[%s1220 + $0x160] sm:$0xff] %v1309
                  %v1311 = vld [vmem:[%s1219 + $0x168] sm:$0xff]
                  %1312 = vst [vmem:[%s1220 + $0x168] sm:$0xff] %v1311
                  %v1313 = vld [vmem:[%s1219 + $0x170] sm:$0xff]
                  %1314 = vst [vmem:[%s1220 + $0x170] sm:$0xff] %v1313
                  %v1315 = vld [vmem:[%s1219 + $0x178] sm:$0xff]
                  %1316 = vst [vmem:[%s1220 + $0x178] sm:$0xff] %v1315
                  %v1317 = vld [vmem:[%s1219 + $0x180] sm:$0xff]
                  %1318 = vst [vmem:[%s1220 + $0x180] sm:$0xff] %v1317
                  %v1319 = vld [vmem:[%s1219 + $0x188] sm:$0xff]
                  %1320 = vst [vmem:[%s1220 + $0x188] sm:$0xff] %v1319
                  %v1321 = vld [vmem:[%s1219 + $0x190] sm:$0xff]
                  %1322 = vst [vmem:[%s1220 + $0x190] sm:$0xff] %v1321
                  %v1323 = vld [vmem:[%s1219 + $0x198] sm:$0xff]
                  %1324 = vst [vmem:[%s1220 + $0x198] sm:$0xff] %v1323
                  %v1325 = vld [vmem:[%s1219 + $0x1a0] sm:$0xff]
                  %1326 = vst [vmem:[%s1220 + $0x1a0] sm:$0xff] %v1325
                  %v1327 = vld [vmem:[%s1219 + $0x1a8] sm:$0xff]
                  %1328 = vst [vmem:[%s1220 + $0x1a8] sm:$0xff] %v1327
                  %v1329 = vld [vmem:[%s1219 + $0x1b0] sm:$0xff]
                  %1330 = vst [vmem:[%s1220 + $0x1b0] sm:$0xff] %v1329
                  %v1331 = vld [vmem:[%s1219 + $0x1b8] sm:$0xff]
                  %1332 = vst [vmem:[%s1220 + $0x1b8] sm:$0xff] %v1331
                  %v1333 = vld [vmem:[%s1219 + $0x1c0] sm:$0xff]
                  %1334 = vst [vmem:[%s1220 + $0x1c0] sm:$0xff] %v1333
                  %v1335 = vld [vmem:[%s1219 + $0x1c8] sm:$0xff]
                  %1336 = vst [vmem:[%s1220 + $0x1c8] sm:$0xff] %v1335
                  %v1337 = vld [vmem:[%s1219 + $0x1d0] sm:$0xff]
                  %1338 = vst [vmem:[%s1220 + $0x1d0] sm:$0xff] %v1337
                  %v1339 = vld [vmem:[%s1219 + $0x1d8] sm:$0xff]
                  %1340 = vst [vmem:[%s1220 + $0x1d8] sm:$0xff] %v1339
                  %v1341 = vld [vmem:[%s1219 + $0x1e0] sm:$0xff]
                  %1342 = vst [vmem:[%s1220 + $0x1e0] sm:$0xff] %v1341
                  %v1343 = vld [vmem:[%s1219 + $0x1e8] sm:$0xff]
                  %1344 = vst [vmem:[%s1220 + $0x1e8] sm:$0xff] %v1343
                  %v1345 = vld [vmem:[%s1219 + $0x1f0] sm:$0xff]
                  %1346 = vst [vmem:[%s1220 + $0x1f0] sm:$0xff] %v1345
                  %v1347 = vld [vmem:[%s1219 + $0x1f8] sm:$0xff]
                  %1348 = vst [vmem:[%s1220 + $0x1f8] sm:$0xff] %v1347
                  %s1349 = sadd.s32 1, %s1218
                  %p1350 = scmp.ge.s32.totalorder %s1349, %s1209
                  %s1351 = scalar_select %p1350, 0, %s1349
                  %s1352 = smul.u32 %s1351, 512
                  %s1353 = smul.u32 %s1351, 512
                  %s1354 = scalar_lea.vmem %s1169, %s1352 [#allocation3]
                  %s1355 = scalar_lea.vmem %s1180, %s1353
                $region130: #{cnn_forward.8} parent=124 // loop_footer
                  %s1215 = sadd.s32 %s1213, 1
                $region131: #{cnn_forward.8} parent=124 // loop_footer_branch
                  %1212 = sbr.rel target = $region127
                $region132: #{cnn_forward.8} parent=124 // loop_exit
                  _
                %s1356 = sshrl.u32 %s1208, 6
                %s1357 = sand.u32 %s1208, 63
                %s1358 = smul.u32 %s1356, 64
                %s1359 = smul.u32 128, %s1358
                %s1360 = sshra.s32 %s1359, 4
                %s1361 = scalar_lea.vmem %s1169, %s1360 [#allocation3]
                %s1362 = smul.u32 128, %s1358
                %s1363 = sshra.s32 %s1362, 4
                %s1364 = scalar_lea.vmem %s1180, %s1363
                // While loop
                $region133: #{cnn_forward.8} parent=124 // loop_pre_header
                  _
                $region134: #{cnn_forward.8} parent=124 // loop_header
                  %s1368 = sphi 0, %s1370
                  %p1369 = scmp.ge.s32.totalorder %s1368, %s1357
                  %s1373 = sphi 0, %s1380
                  %s1374 = sphi %s1361, %s1383
                  %s1375 = sphi %s1364, %s1384
                $region135: #{cnn_forward.8} parent=124 // loop_header_branch
                  %1372 = sbr.rel (%p1369) target = $region139
                $region136: #{cnn_forward.8} parent=124 // loop_body
                  %v1376 = vld [vmem:[%s1374] sm:$0xff]
                  %1377 = vst [vmem:[%s1375] sm:$0xff] %v1376
                  %s1378 = sadd.s32 1, %s1373
                  %p1379 = scmp.ge.s32.totalorder %s1378, %s1357
                  %s1380 = scalar_select %p1379, 0, %s1378
                  %s1381 = smul.u32 %s1380, 8
                  %s1382 = smul.u32 %s1380, 8
                  %s1383 = scalar_lea.vmem %s1361, %s1381 [#allocation3]
                  %s1384 = scalar_lea.vmem %s1364, %s1382
                $region137: #{cnn_forward.8} parent=124 // loop_footer
                  %s1370 = sadd.s32 %s1368, 1
                $region138: #{cnn_forward.8} parent=124 // loop_footer_branch
                  %1367 = sbr.rel target = $region134
                $region139: #{cnn_forward.8} parent=124 // loop_exit
                  _
              $region125: #{cnn_forward.8} parent=109 // pred_fallthru
                _
              %p1385 = pneg %p1204
              // Predicated region
              $region140: #{cnn_forward.8} parent=109 // pred_check
                _
              $region141: #{cnn_forward.8} parent=109 // pred_check_branch
                %1387 = sbr.rel (%p1204) target = $region143
              $region142: #{cnn_forward.8} parent=109 // pred_region
                %s1388 = sand.u32 %s1181, 7
                %s1389 = ssub.s32 %s1181, %s1388
                %s1390 = scalar_lea.vmem %s1169, %s1389 [#allocation3]
                %s1391 = ssub.s32 %s1181, %s1388
                %s1392 = scalar_lea.vmem %s1180, %s1391
                %s1393 = sshrl.u32 %s1181, 3
                %s1394 = sshrl.u32 %s1393, 6
                // While loop
                $region144: #{cnn_forward.8} parent=142 // loop_pre_header
                  _
                $region145: #{cnn_forward.8} parent=142 // loop_header
                  %s1398 = sphi 0, %s1400
                  %p1399 = scmp.ge.s32.totalorder %s1398, %s1394
                  %s1403 = sphi 0, %s1536
                  %s1404 = sphi %s1169, %s1539
                  %s1405 = sphi %s1180, %s1540
                $region146: #{cnn_forward.8} parent=142 // loop_header_branch
                  %1402 = sbr.rel (%p1399) target = $region150
                $region147: #{cnn_forward.8} parent=142 // loop_body
                  %v1406 = vld [vmem:[%s1404] sm:$0xff]
                  %1407 = vst [vmem:[%s1405] sm:$0xff] %v1406
                  %v1408 = vld [vmem:[%s1404 + $0x8] sm:$0xff]
                  %1409 = vst [vmem:[%s1405 + $0x8] sm:$0xff] %v1408
                  %v1410 = vld [vmem:[%s1404 + $0x10] sm:$0xff]
                  %1411 = vst [vmem:[%s1405 + $0x10] sm:$0xff] %v1410
                  %v1412 = vld [vmem:[%s1404 + $0x18] sm:$0xff]
                  %1413 = vst [vmem:[%s1405 + $0x18] sm:$0xff] %v1412
                  %v1414 = vld [vmem:[%s1404 + $0x20] sm:$0xff]
                  %1415 = vst [vmem:[%s1405 + $0x20] sm:$0xff] %v1414
                  %v1416 = vld [vmem:[%s1404 + $0x28] sm:$0xff]
                  %1417 = vst [vmem:[%s1405 + $0x28] sm:$0xff] %v1416
                  %v1418 = vld [vmem:[%s1404 + $0x30] sm:$0xff]
                  %1419 = vst [vmem:[%s1405 + $0x30] sm:$0xff] %v1418
                  %v1420 = vld [vmem:[%s1404 + $0x38] sm:$0xff]
                  %1421 = vst [vmem:[%s1405 + $0x38] sm:$0xff] %v1420
                  %v1422 = vld [vmem:[%s1404 + $0x40] sm:$0xff]
                  %1423 = vst [vmem:[%s1405 + $0x40] sm:$0xff] %v1422
                  %v1424 = vld [vmem:[%s1404 + $0x48] sm:$0xff]
                  %1425 = vst [vmem:[%s1405 + $0x48] sm:$0xff] %v1424
                  %v1426 = vld [vmem:[%s1404 + $0x50] sm:$0xff]
                  %1427 = vst [vmem:[%s1405 + $0x50] sm:$0xff] %v1426
                  %v1428 = vld [vmem:[%s1404 + $0x58] sm:$0xff]
                  %1429 = vst [vmem:[%s1405 + $0x58] sm:$0xff] %v1428
                  %v1430 = vld [vmem:[%s1404 + $0x60] sm:$0xff]
                  %1431 = vst [vmem:[%s1405 + $0x60] sm:$0xff] %v1430
                  %v1432 = vld [vmem:[%s1404 + $0x68] sm:$0xff]
                  %1433 = vst [vmem:[%s1405 + $0x68] sm:$0xff] %v1432
                  %v1434 = vld [vmem:[%s1404 + $0x70] sm:$0xff]
                  %1435 = vst [vmem:[%s1405 + $0x70] sm:$0xff] %v1434
                  %v1436 = vld [vmem:[%s1404 + $0x78] sm:$0xff]
                  %1437 = vst [vmem:[%s1405 + $0x78] sm:$0xff] %v1436
                  %v1438 = vld [vmem:[%s1404 + $0x80] sm:$0xff]
                  %1439 = vst [vmem:[%s1405 + $0x80] sm:$0xff] %v1438
                  %v1440 = vld [vmem:[%s1404 + $0x88] sm:$0xff]
                  %1441 = vst [vmem:[%s1405 + $0x88] sm:$0xff] %v1440
                  %v1442 = vld [vmem:[%s1404 + $0x90] sm:$0xff]
                  %1443 = vst [vmem:[%s1405 + $0x90] sm:$0xff] %v1442
                  %v1444 = vld [vmem:[%s1404 + $0x98] sm:$0xff]
                  %1445 = vst [vmem:[%s1405 + $0x98] sm:$0xff] %v1444
                  %v1446 = vld [vmem:[%s1404 + $0xa0] sm:$0xff]
                  %1447 = vst [vmem:[%s1405 + $0xa0] sm:$0xff] %v1446
                  %v1448 = vld [vmem:[%s1404 + $0xa8] sm:$0xff]
                  %1449 = vst [vmem:[%s1405 + $0xa8] sm:$0xff] %v1448
                  %v1450 = vld [vmem:[%s1404 + $0xb0] sm:$0xff]
                  %1451 = vst [vmem:[%s1405 + $0xb0] sm:$0xff] %v1450
                  %v1452 = vld [vmem:[%s1404 + $0xb8] sm:$0xff]
                  %1453 = vst [vmem:[%s1405 + $0xb8] sm:$0xff] %v1452
                  %v1454 = vld [vmem:[%s1404 + $0xc0] sm:$0xff]
                  %1455 = vst [vmem:[%s1405 + $0xc0] sm:$0xff] %v1454
                  %v1456 = vld [vmem:[%s1404 + $0xc8] sm:$0xff]
                  %1457 = vst [vmem:[%s1405 + $0xc8] sm:$0xff] %v1456
                  %v1458 = vld [vmem:[%s1404 + $0xd0] sm:$0xff]
                  %1459 = vst [vmem:[%s1405 + $0xd0] sm:$0xff] %v1458
                  %v1460 = vld [vmem:[%s1404 + $0xd8] sm:$0xff]
                  %1461 = vst [vmem:[%s1405 + $0xd8] sm:$0xff] %v1460
                  %v1462 = vld [vmem:[%s1404 + $0xe0] sm:$0xff]
                  %1463 = vst [vmem:[%s1405 + $0xe0] sm:$0xff] %v1462
                  %v1464 = vld [vmem:[%s1404 + $0xe8] sm:$0xff]
                  %1465 = vst [vmem:[%s1405 + $0xe8] sm:$0xff] %v1464
                  %v1466 = vld [vmem:[%s1404 + $0xf0] sm:$0xff]
                  %1467 = vst [vmem:[%s1405 + $0xf0] sm:$0xff] %v1466
                  %v1468 = vld [vmem:[%s1404 + $0xf8] sm:$0xff]
                  %1469 = vst [vmem:[%s1405 + $0xf8] sm:$0xff] %v1468
                  %v1470 = vld [vmem:[%s1404 + $0x100] sm:$0xff]
                  %1471 = vst [vmem:[%s1405 + $0x100] sm:$0xff] %v1470
                  %v1472 = vld [vmem:[%s1404 + $0x108] sm:$0xff]
                  %1473 = vst [vmem:[%s1405 + $0x108] sm:$0xff] %v1472
                  %v1474 = vld [vmem:[%s1404 + $0x110] sm:$0xff]
                  %1475 = vst [vmem:[%s1405 + $0x110] sm:$0xff] %v1474
                  %v1476 = vld [vmem:[%s1404 + $0x118] sm:$0xff]
                  %1477 = vst [vmem:[%s1405 + $0x118] sm:$0xff] %v1476
                  %v1478 = vld [vmem:[%s1404 + $0x120] sm:$0xff]
                  %1479 = vst [vmem:[%s1405 + $0x120] sm:$0xff] %v1478
                  %v1480 = vld [vmem:[%s1404 + $0x128] sm:$0xff]
                  %1481 = vst [vmem:[%s1405 + $0x128] sm:$0xff] %v1480
                  %v1482 = vld [vmem:[%s1404 + $0x130] sm:$0xff]
                  %1483 = vst [vmem:[%s1405 + $0x130] sm:$0xff] %v1482
                  %v1484 = vld [vmem:[%s1404 + $0x138] sm:$0xff]
                  %1485 = vst [vmem:[%s1405 + $0x138] sm:$0xff] %v1484
                  %v1486 = vld [vmem:[%s1404 + $0x140] sm:$0xff]
                  %1487 = vst [vmem:[%s1405 + $0x140] sm:$0xff] %v1486
                  %v1488 = vld [vmem:[%s1404 + $0x148] sm:$0xff]
                  %1489 = vst [vmem:[%s1405 + $0x148] sm:$0xff] %v1488
                  %v1490 = vld [vmem:[%s1404 + $0x150] sm:$0xff]
                  %1491 = vst [vmem:[%s1405 + $0x150] sm:$0xff] %v1490
                  %v1492 = vld [vmem:[%s1404 + $0x158] sm:$0xff]
                  %1493 = vst [vmem:[%s1405 + $0x158] sm:$0xff] %v1492
                  %v1494 = vld [vmem:[%s1404 + $0x160] sm:$0xff]
                  %1495 = vst [vmem:[%s1405 + $0x160] sm:$0xff] %v1494
                  %v1496 = vld [vmem:[%s1404 + $0x168] sm:$0xff]
                  %1497 = vst [vmem:[%s1405 + $0x168] sm:$0xff] %v1496
                  %v1498 = vld [vmem:[%s1404 + $0x170] sm:$0xff]
                  %1499 = vst [vmem:[%s1405 + $0x170] sm:$0xff] %v1498
                  %v1500 = vld [vmem:[%s1404 + $0x178] sm:$0xff]
                  %1501 = vst [vmem:[%s1405 + $0x178] sm:$0xff] %v1500
                  %v1502 = vld [vmem:[%s1404 + $0x180] sm:$0xff]
                  %1503 = vst [vmem:[%s1405 + $0x180] sm:$0xff] %v1502
                  %v1504 = vld [vmem:[%s1404 + $0x188] sm:$0xff]
                  %1505 = vst [vmem:[%s1405 + $0x188] sm:$0xff] %v1504
                  %v1506 = vld [vmem:[%s1404 + $0x190] sm:$0xff]
                  %1507 = vst [vmem:[%s1405 + $0x190] sm:$0xff] %v1506
                  %v1508 = vld [vmem:[%s1404 + $0x198] sm:$0xff]
                  %1509 = vst [vmem:[%s1405 + $0x198] sm:$0xff] %v1508
                  %v1510 = vld [vmem:[%s1404 + $0x1a0] sm:$0xff]
                  %1511 = vst [vmem:[%s1405 + $0x1a0] sm:$0xff] %v1510
                  %v1512 = vld [vmem:[%s1404 + $0x1a8] sm:$0xff]
                  %1513 = vst [vmem:[%s1405 + $0x1a8] sm:$0xff] %v1512
                  %v1514 = vld [vmem:[%s1404 + $0x1b0] sm:$0xff]
                  %1515 = vst [vmem:[%s1405 + $0x1b0] sm:$0xff] %v1514
                  %v1516 = vld [vmem:[%s1404 + $0x1b8] sm:$0xff]
                  %1517 = vst [vmem:[%s1405 + $0x1b8] sm:$0xff] %v1516
                  %v1518 = vld [vmem:[%s1404 + $0x1c0] sm:$0xff]
                  %1519 = vst [vmem:[%s1405 + $0x1c0] sm:$0xff] %v1518
                  %v1520 = vld [vmem:[%s1404 + $0x1c8] sm:$0xff]
                  %1521 = vst [vmem:[%s1405 + $0x1c8] sm:$0xff] %v1520
                  %v1522 = vld [vmem:[%s1404 + $0x1d0] sm:$0xff]
                  %1523 = vst [vmem:[%s1405 + $0x1d0] sm:$0xff] %v1522
                  %v1524 = vld [vmem:[%s1404 + $0x1d8] sm:$0xff]
                  %1525 = vst [vmem:[%s1405 + $0x1d8] sm:$0xff] %v1524
                  %v1526 = vld [vmem:[%s1404 + $0x1e0] sm:$0xff]
                  %1527 = vst [vmem:[%s1405 + $0x1e0] sm:$0xff] %v1526
                  %v1528 = vld [vmem:[%s1404 + $0x1e8] sm:$0xff]
                  %1529 = vst [vmem:[%s1405 + $0x1e8] sm:$0xff] %v1528
                  %v1530 = vld [vmem:[%s1404 + $0x1f0] sm:$0xff]
                  %1531 = vst [vmem:[%s1405 + $0x1f0] sm:$0xff] %v1530
                  %v1532 = vld [vmem:[%s1404 + $0x1f8] sm:$0xff]
                  %1533 = vst [vmem:[%s1405 + $0x1f8] sm:$0xff] %v1532
                  %s1534 = sadd.s32 1, %s1403
                  %p1535 = scmp.ge.s32.totalorder %s1534, %s1394
                  %s1536 = scalar_select %p1535, 0, %s1534
                  %s1537 = smul.u32 %s1536, 512
                  %s1538 = smul.u32 %s1536, 512
                  %s1539 = scalar_lea.vmem %s1169, %s1537 [#allocation3]
                  %s1540 = scalar_lea.vmem %s1180, %s1538
                $region148: #{cnn_forward.8} parent=142 // loop_footer
                  %s1400 = sadd.s32 %s1398, 1
                $region149: #{cnn_forward.8} parent=142 // loop_footer_branch
                  %1397 = sbr.rel target = $region145
                $region150: #{cnn_forward.8} parent=142 // loop_exit
                  _
                %s1541 = sshrl.u32 %s1393, 6
                %s1542 = sand.u32 %s1393, 63
                %s1543 = smul.u32 %s1541, 64
                %s1544 = smul.u32 128, %s1543
                %s1545 = sshra.s32 %s1544, 4
                %s1546 = scalar_lea.vmem %s1169, %s1545 [#allocation3]
                %s1547 = smul.u32 128, %s1543
                %s1548 = sshra.s32 %s1547, 4
                %s1549 = scalar_lea.vmem %s1180, %s1548
                // While loop
                $region151: #{cnn_forward.8} parent=142 // loop_pre_header
                  _
                $region152: #{cnn_forward.8} parent=142 // loop_header
                  %s1553 = sphi 0, %s1555
                  %p1554 = scmp.ge.s32.totalorder %s1553, %s1542
                  %s1558 = sphi 0, %s1565
                  %s1559 = sphi %s1546, %s1568
                  %s1560 = sphi %s1549, %s1569
                $region153: #{cnn_forward.8} parent=142 // loop_header_branch
                  %1557 = sbr.rel (%p1554) target = $region157
                $region154: #{cnn_forward.8} parent=142 // loop_body
                  %v1561 = vld [vmem:[%s1559] sm:$0xff]
                  %1562 = vst [vmem:[%s1560] sm:$0xff] %v1561
                  %s1563 = sadd.s32 1, %s1558
                  %p1564 = scmp.ge.s32.totalorder %s1563, %s1542
                  %s1565 = scalar_select %p1564, 0, %s1563
                  %s1566 = smul.u32 %s1565, 8
                  %s1567 = smul.u32 %s1565, 8
                  %s1568 = scalar_lea.vmem %s1546, %s1566 [#allocation3]
                  %s1569 = scalar_lea.vmem %s1549, %s1567
                $region155: #{cnn_forward.8} parent=142 // loop_footer
                  %s1555 = sadd.s32 %s1553, 1
                $region156: #{cnn_forward.8} parent=142 // loop_footer_branch
                  %1552 = sbr.rel target = $region152
                $region157: #{cnn_forward.8} parent=142 // loop_exit
                  _
                %s1570 = sshllo.u32 0, %s1388
                loop: start=0, step=1, limit=1
                $region158: #{cnn_forward.8} parent=142 // loop_pre_header
                  _
                $region159: #{cnn_forward.8} parent=142 // loop_header
                  %s1572 = sphi 0, %s1576
                  %p1573 = scmp.ge.s32.totalorder %s1572, 1
                  %s1577 = sphi %s1390, %s1390
                  %s1578 = sphi %s1392, %s1392
                $region160: #{cnn_forward.8} parent=142 // loop_header_branch
                  %1575 = sbr.rel (%p1573) target = $region164
                $region161: #{cnn_forward.8} parent=142 // loop_body
                  %v1579 = vld [vmem:[%s1577] sm:%s1570]
                  %1580 = vst [vmem:[%s1578] sm:%s1570] %v1579
                $region162: #{cnn_forward.8} parent=142 // loop_footer
                  %s1576 = sadd.s32 1, %s1572
                $region163: #{cnn_forward.8} parent=142 // loop_footer_branch
                  %1571 = sbr.rel target = $region159
                $region164: #{cnn_forward.8} parent=142 // loop_exit
                  _
              $region143: #{cnn_forward.8} parent=109 // pred_fallthru
                _
            $region110: #{cnn_forward.8} parent=105 // pred_fallthru
              _
            // Predicated region
            $region111: #{cnn_forward.8} parent=105 // pred_check
              %p1189 = pneg %p1185
            $region112: #{cnn_forward.8} parent=105 // pred_check_branch
              %1191 = sbr.rel (%p1189) target = $region114
            $region113: #{cnn_forward.8} parent=105 // pred_region
              %s1192 = sshllo.u32 0, %s1181
              loop: start=0, step=1, limit=1
              $region115: #{cnn_forward.8} parent=113 // loop_pre_header
                _
              $region116: #{cnn_forward.8} parent=113 // loop_header
                %s1194 = sphi 0, %s1198
                %p1195 = scmp.ge.s32.totalorder %s1194, 1
                %s1199 = sphi %s1169, %s1169
                %s1200 = sphi %s1180, %s1180
              $region117: #{cnn_forward.8} parent=113 // loop_header_branch
                %1197 = sbr.rel (%p1195) target = $region121
              $region118: #{cnn_forward.8} parent=113 // loop_body
                %v1201 = vld [vmem:[%s1199] sm:%s1192]
                %1202 = vst [vmem:[%s1200] sm:%s1192] %v1201
              $region119: #{cnn_forward.8} parent=113 // loop_footer
                %s1198 = sadd.s32 1, %s1194
              $region120: #{cnn_forward.8} parent=113 // loop_footer_branch
                %1193 = sbr.rel target = $region116
              $region121: #{cnn_forward.8} parent=113 // loop_exit
                _
            $region114: #{cnn_forward.8} parent=105 // pred_fallthru
              _
          $region106: #{cnn_forward.8} parent=101 // pred_fallthru
            _
          %1581 = vnop
        $region102: #{cnn_forward.8} parent=93 // pred_fallthru
          _
      $region94: #{cnn_forward.8} parent=5 // pred_fallthru
        _
      %p1582 = scmp.le.s32.totalorder 2, %s9
      // Predicated region
      $region165: #{cnn_forward.8} parent=5 // pred_check
        %p1583 = pneg %p1582
      $region166: #{cnn_forward.8} parent=5 // pred_check_branch
        %1585 = sbr.rel (%p1583) target = $region168
      $region167: #{cnn_forward.8} parent=5 // pred_region
        %s1586 = ssub.s32 %s9, 2
        // Predicated region
        $region169: #{cnn_forward.8} parent=167 // pred_check
          %p1587 = pneg %p106
        $region170: #{cnn_forward.8} parent=167 // pred_check_branch
          %1589 = sbr.rel (%p1587) target = $region172
        $region171: #{cnn_forward.8} parent=167 // pred_region
          %s1590 = sand.u32 %s91, 1
          %s1591 = sand.u32 %s91, 1
          %s1592 = smul.addr %s1591, 28
          %s1593 = scalar_lea.vmem [#allocation3], %s1592
        $region172: #{cnn_forward.8} parent=167 // pred_fallthru
          _
      $region168: #{cnn_forward.8} parent=5 // pred_fallthru
        _
    $region6: #{cnn_forward.8} parent=1 // loop_footer
      %s13 = sadd.s32 1, %s9
    $region7: #{cnn_forward.8} parent=1 // loop_footer_branch
      %8 = sbr.rel target = $region3
    $region8: #{cnn_forward.8} parent=1 // loop_exit
      _

// kernel: cnn_forward.9
$region0: #{cnn_forward.9}
  #allocation0 [shape = 'u32[]', space=smem, size = 0x4, offset = 0x4, fixed_abs, tag = 'smem constant byte address 0x4 - core index']
  #allocation1 [shape = 'u32[144,128]{1,0:T(1,128)}', space=vmem, size = 0x12000, scoped, tag = 'internal scratch']
  %s0 = inlined_call_operand.vmem [shape: bf16[12,196], index: 0, kind: input, shape index: {}]
  %s1 = inlined_call_operand.vmem [shape: bf16[12,196], index: 1, kind: input, shape index: {}]
  %s2 = inlined_call_operand.vmem [shape: bf16[12,196], index: 2, kind: input, shape index: {}]
  %s3 = inlined_call_operand.vmem [shape: bf16[12,196], index: 3, kind: input, shape index: {}]
  %s4 = inlined_call_operand.vmem [shape: bf16[12,196], index: 4, kind: output, shape index: {}]
  %s5 = sld [smem:[#allocation0]]
  $region26: #{cnn_forward.9} parent=0
    _
  %s7 = ssub.s32 1, %s5
  %s8 = scalar_select 0, %s7, %s5
  // Predicated region
  $region2: #{cnn_forward.9} parent=0 // pred_check
    _
  $region3: #{cnn_forward.9} parent=0 // pred_check_branch
    %10 = sbr.rel (0) target = $region5
  $region4: #{cnn_forward.9} parent=0 // pred_region
    _
  $region5: #{cnn_forward.9} parent=0 // pred_fallthru
    _
  // Predicated region
  $region6: #{cnn_forward.9} parent=0 // pred_check
    _
  $region7: #{cnn_forward.9} parent=0 // pred_check_branch
    %12 = sbr.rel (0) target = $region9
  $region8: #{cnn_forward.9} parent=0 // pred_region
    _
  $region9: #{cnn_forward.9} parent=0 // pred_fallthru
    _
  // Predicated region
  $region10: #{cnn_forward.9} parent=0 // pred_check
    _
  $region11: #{cnn_forward.9} parent=0 // pred_check_branch
    %14 = sbr.rel (0) target = $region13
  $region12: #{cnn_forward.9} parent=0 // pred_region
    _
  $region13: #{cnn_forward.9} parent=0 // pred_fallthru
    _
  // Predicated region
  $region14: #{cnn_forward.9} parent=0 // pred_check
    _
  $region15: #{cnn_forward.9} parent=0 // pred_check_branch
    %16 = sbr.rel (0) target = $region17
  $region16: #{cnn_forward.9} parent=0 // pred_region
    _
  $region17: #{cnn_forward.9} parent=0 // pred_fallthru
    _
  %v17 = vld [vmem:[%s0] sm:$0xff]
  %v18 = vld [vmem:[%s0 + $0x8] sm:$0x33]
  %v19 = vunpack.c.l.bf16 %v17
  %v20 = vunpack.c.h.bf16 %v17
  %v21 = vunpack.c.l.bf16 %v18
  %v22 = vunpack.c.h.bf16 %v18
  %v23 = vld [vmem:[%s1] sm:$0xff]
  %v24 = vld [vmem:[%s1 + $0x8] sm:$0x33]
  %v25 = vunpack.c.l.bf16 %v23
  %v26 = vunpack.c.h.bf16 %v23
  %v27 = vunpack.c.l.bf16 %v24
  %v28 = vunpack.c.h.bf16 %v24
  %v29 = vld [vmem:[%s2] sm:$0xff]
  %v30 = vld [vmem:[%s2 + $0x8] sm:$0x33]
  %v31 = vunpack.c.l.bf16 %v29
  %v32 = vunpack.c.h.bf16 %v29
  %v33 = vunpack.c.l.bf16 %v30
  %v34 = vunpack.c.h.bf16 %v30
  %v35 = vld [vmem:[%s3] sm:$0xff]
  %v36 = vld [vmem:[%s3 + $0x8] sm:$0x33]
  %v37 = vunpack.c.l.bf16 %v35
  %v38 = vunpack.c.h.bf16 %v35
  %v39 = vunpack.c.l.bf16 %v36
  %v40 = vunpack.c.h.bf16 %v36
  %v41 = vmax.f32 %v19, %v25
  %v42 = vmax.f32 %v20, %v26
  %v43 = vmax.f32 %v21, %v27
  %v44 = vmax.f32 %v22, %v28
  %v45 = vmax.f32 %v31, %v37
  %v46 = vmax.f32 %v32, %v38
  %v47 = vmax.f32 %v33, %v39
  %v48 = vmax.f32 %v34, %v40
  %v49 = vmax.f32 %v41, %v45
  %v50 = vmax.f32 %v42, %v46
  %v51 = vmax.f32 %v43, %v47
  %v52 = vmax.f32 %v44, %v48
  %vm53 = vcmp.ge.f32.partialorder %v49, 0.0
  %vm54 = vcmp.ge.f32.partialorder %v50, 0.0
  %vm55 = vcmp.ge.f32.partialorder %v51, 0.0
  %vm56 = vcmp.ge.f32.partialorder %v52, 0.0
  %v57 = vmul.f32 %v49, 0.01
  %v58 = vmul.f32 %v50, 0.01
  %v59 = vmul.f32 %v51, 0.01
  %v60 = vmul.f32 %v52, 0.01
  %v61 = vsel %vm53, %v49, %v57
  %v62 = vsel %vm54, %v50, %v58
  %v63 = vsel %vm55, %v51, %v59
  %v64 = vsel %vm56, %v52, %v60
  %v65 = vpack.c.bf16 %v63, %v61
  %v66 = vpack.c.bf16 %v64, %v62
  %v69 = vunpack.c.l.b16 %v65
  %v70 = vunpack.c.l.b16 %v66
  %v71 = vunpack.c.h.b16 %v65
  %v72 = vunpack.c.h.b16 %v66
  %v73 = vpack.c.b16 %v70, %v69
  %v74 = vpack.c.b16 %v72, %v71
  %vm77 = vcmask 1043456
  %vm78 = vcmask 556036
  %vm79 = vmor %vm78, %vm77
  %80 = vst.msk [vmem:[%s4] sm:$0xff] %vm79, %v73
  %vm81 = vcmask 1041408
  %vm82 = vcmask 553988
  %vm83 = vmor %vm82, %vm81
  %84 = vst.msk [vmem:[%s4 + $0x8] sm:$0x33] %vm83, %v74
  // Predicated region
  $region18: #{cnn_forward.9} parent=0 // pred_check
    _
  $region19: #{cnn_forward.9} parent=0 // pred_check_branch
    %86 = sbr.rel (0) target = $region21
  $region20: #{cnn_forward.9} parent=0 // pred_region
    _
  $region21: #{cnn_forward.9} parent=0 // pred_fallthru
    _
  // Predicated region
  $region22: #{cnn_forward.9} parent=0 // pred_check
    _
  $region23: #{cnn_forward.9} parent=0 // pred_check_branch
    %88 = sbr.rel (0) target = $region25
  $region24: #{cnn_forward.9} parent=0 // pred_region
    _
  $region25: #{cnn_forward.9} parent=0 // pred_fallthru
    _

// kernel: cnn_forward.10
$region0: #{cnn_forward.10}
  #allocation0 [shape = 'u32[]', space=smem, size = 0x4, offset = 0x4, fixed_abs, tag = 'smem constant byte address 0x4 - core index']
  #allocation1 [shape = 'u32[144,128]{1,0:T(1,128)}', space=vmem, size = 0x12000, scoped, tag = 'internal scratch']
  %s0 = inlined_call_operand.vmem [shape: bf16[16,150], index: 0, kind: input, shape index: {}]
  %s1 = inlined_call_operand.vmem [shape: bf16[150,200], index: 1, kind: input, shape index: {}]
  %s2 = inlined_call_operand.vmem [shape: f32[16,1], index: 2, kind: input, shape index: {}]
  %s3 = inlined_call_operand.vmem [shape: bf16[16,200], index: 3, kind: output, shape index: {}]
  %s4 = sld [smem:[#allocation0]]
  $region123: #{cnn_forward.10} parent=0
    _
  %s6 = ssub.s32 1, %s4
  %s7 = scalar_select 0, %s6, %s4
  $region1: #{cnn_forward.10} parent=0
    #allocation2 [shape = 'u8[77824]{0}', space=vmem, size = 0x13000, scoped, tag = 'input window, operand 1']
    #allocation3 [shape = 'u8[8192]{0}', space=vmem, size = 0x2000, scoped, tag = 'output window, operand 0']
    loop: start=0, step=1, limit=4
    $region2: #{cnn_forward.10} parent=1 // loop_pre_header
      _
    $region3: #{cnn_forward.10} parent=1 // loop_header
      %s9 = sphi 0, %s13
      %p10 = scmp.ge.s32.totalorder %s9, 4
      %s17 = sphi 0, %s17
      %s19 = sphi 0, %s17
      %s20 = sphi 0, %s19
      %s34 = sphi 0, %s20
      %s40 = sphi 0, %s42
      %s43 = sphi 0, %s40
      %s44 = sphi 0, %s43
      %s60 = sphi 0, %s44
      %s64 = sphi 0, %s64
      %s66 = sphi 0, %s64
      %s67 = sphi 0, %s66
      %s81 = sphi 0, %s67
      %s87 = sphi 0, %s89
      %s90 = sphi 0, %s87
      %s91 = sphi 0, %s90
      %s107 = sphi 0, %s91
    $region4: #{cnn_forward.10} parent=1 // loop_header_branch
      %12 = sbr.rel (%p10) target = $region8
    $region5: #{cnn_forward.10} parent=1 // loop_body
      %s14 = ssub.s32 %s9, 1
      %s15 = ssub.s32 %s9, 2
      %s16 = sadd.s32 %s9, 1
      %s18 = sadd.s32 %s17, 1
      %p21 = scmp.eq.s32.totalorder %s9, 1
      %p22 = scmp.ne.s32.totalorder %s17, %s19
      %p23 = scmp.eq.s32.totalorder %s9, 0
      %p24 = por %p22, %p23
      %p25 = scmp.ne.s32.totalorder %s17, %s19
      %p26 = scmp.eq.s32.totalorder %s14, 1
      %p27 = por %p25, %p26
      %p28 = scmp.ne.s32.totalorder %s19, %s20
      %p29 = scmp.eq.s32.totalorder %s14, 0
      %p30 = por %p28, %p29
      %p31 = scmp.ne.s32.totalorder %s19, %s20
      %p32 = scmp.eq.s32.totalorder %s15, 1
      %p33 = por %p31, %p32
      %p35 = scmp.ne.s32.totalorder %s20, %s34
      %p36 = scmp.eq.s32.totalorder %s15, 0
      %p37 = por %p35, %p36
      %s38 = ssub.s32 %s9, %s16
      %p39 = scmp.eq.s32.totalorder %s38, 0
      %s41 = sadd.s32 %s40, 1
      %s42 = scalar_select %p39, %s40, %s41
      %p45 = pneg %p39
      %p46 = scmp.eq.s32.totalorder %s9, 1
      %p47 = por %p45, %p46
      %p48 = scmp.ne.s32.totalorder %s40, %s43
      %p49 = scmp.eq.s32.totalorder %s9, 0
      %p50 = por %p48, %p49
      %p51 = scmp.ne.s32.totalorder %s40, %s43
      %p52 = scmp.eq.s32.totalorder %s14, 1
      %p53 = por %p51, %p52
      %p54 = scmp.ne.s32.totalorder %s43, %s44
      %p55 = scmp.eq.s32.totalorder %s14, 0
      %p56 = por %p54, %p55
      %p57 = scmp.ne.s32.totalorder %s43, %s44
      %p58 = scmp.eq.s32.totalorder %s15, 1
      %p59 = por %p57, %p58
      %p61 = scmp.ne.s32.totalorder %s44, %s60
      %p62 = scmp.eq.s32.totalorder %s15, 0
      %p63 = por %p61, %p62
      %s65 = sadd.s32 %s64, 1
      %p68 = scmp.eq.s32.totalorder %s9, 1
      %p69 = scmp.ne.s32.totalorder %s64, %s66
      %p70 = scmp.eq.s32.totalorder %s9, 0
      %p71 = por %p69, %p70
      %p72 = scmp.ne.s32.totalorder %s64, %s66
      %p73 = scmp.eq.s32.totalorder %s14, 1
      %p74 = por %p72, %p73
      %p75 = scmp.ne.s32.totalorder %s66, %s67
      %p76 = scmp.eq.s32.totalorder %s14, 0
      %p77 = por %p75, %p76
      %p78 = scmp.ne.s32.totalorder %s66, %s67
      %p79 = scmp.eq.s32.totalorder %s15, 1
      %p80 = por %p78, %p79
      %p82 = scmp.ne.s32.totalorder %s67, %s81
      %p83 = scmp.eq.s32.totalorder %s15, 0
      %p84 = por %p82, %p83
      %s85 = ssub.s32 %s9, %s16
      %p86 = scmp.eq.s32.totalorder %s85, 0
      %s88 = sadd.s32 %s87, 1
      %s89 = scalar_select %p86, %s87, %s88
      %p92 = pneg %p86
      %p93 = scmp.eq.s32.totalorder %s9, 1
      %p94 = por %p92, %p93
      %p95 = scmp.ne.s32.totalorder %s87, %s90
      %p96 = scmp.eq.s32.totalorder %s9, 0
      %p97 = por %p95, %p96
      %p98 = scmp.ne.s32.totalorder %s87, %s90
      %p99 = scmp.eq.s32.totalorder %s14, 1
      %p100 = por %p98, %p99
      %p101 = scmp.ne.s32.totalorder %s90, %s91
      %p102 = scmp.eq.s32.totalorder %s14, 0
      %p103 = por %p101, %p102
      %p104 = scmp.ne.s32.totalorder %s90, %s91
      %p105 = scmp.eq.s32.totalorder %s15, 1
      %p106 = por %p104, %p105
      %p108 = scmp.ne.s32.totalorder %s91, %s107
      %p109 = scmp.eq.s32.totalorder %s15, 0
      %p110 = por %p108, %p109
      %p111 = scmp.le.s32.totalorder 1, %s9
      %p112 = scmp.lt.s32.totalorder %s9, 3
      %p113 = pnand %p111, %p112
      %p114 = pneg %p113
      // Predicated region
      $region9: #{cnn_forward.10} parent=5 // pred_check
        _
      $region10: #{cnn_forward.10} parent=5 // pred_check_branch
        %116 = sbr.rel (%p113) target = $region12
      $region11: #{cnn_forward.10} parent=5 // pred_region
        %s117 = ssub.s32 %s9, 1
        // Predicated region
        $region13: #{cnn_forward.10} parent=11 // pred_check
          %p118 = pneg %p30
        $region14: #{cnn_forward.10} parent=11 // pred_check_branch
          %120 = sbr.rel (%p118) target = $region16
        $region15: #{cnn_forward.10} parent=11 // pred_region
          _
        $region16: #{cnn_forward.10} parent=11 // pred_fallthru
          _
        // Predicated region
        $region17: #{cnn_forward.10} parent=11 // pred_check
          %p121 = pneg %p77
        $region18: #{cnn_forward.10} parent=11 // pred_check_branch
          %123 = sbr.rel (%p121) target = $region20
        $region19: #{cnn_forward.10} parent=11 // pred_region
          _
        $region20: #{cnn_forward.10} parent=11 // pred_fallthru
          _
      $region12: #{cnn_forward.10} parent=5 // pred_fallthru
        _
      %p124 = scmp.lt.s32.totalorder %s9, 2
      // Predicated region
      $region21: #{cnn_forward.10} parent=5 // pred_check
        %p125 = pneg %p124
      $region22: #{cnn_forward.10} parent=5 // pred_check_branch
        %127 = sbr.rel (%p125) target = $region24
      $region23: #{cnn_forward.10} parent=5 // pred_region
        // Predicated region
        $region25: #{cnn_forward.10} parent=23 // pred_check
          %p128 = pneg %p50
        $region26: #{cnn_forward.10} parent=23 // pred_check_branch
          %130 = sbr.rel (%p128) target = $region28
        $region27: #{cnn_forward.10} parent=23 // pred_region
          %s131 = sand.u32 %s40, 1
          %s132 = sand.u32 %s40, 1
          %s133 = smul.addr %s132, 76
          %s134 = scalar_lea.vmem [#allocation2], %s133
          %s135 = smul.addr %s9, 4
          %s136 = scalar_lea.vmem %s1, %s135
          // Predicated region
          $region29: #{cnn_forward.10} parent=27 // pred_check
            _
          $region30: #{cnn_forward.10} parent=27 // pred_check_branch
            %138 = sbr.rel (0) target = $region32
          $region31: #{cnn_forward.10} parent=27 // pred_region
            // Predicated region
            $region33: #{cnn_forward.10} parent=31 // pred_check
              _
            $region34: #{cnn_forward.10} parent=31 // pred_check_branch
              %140 = sbr.rel target = $region36
            $region35: #{cnn_forward.10} parent=31 // pred_region
              // Predicated region
              $region48: #{cnn_forward.10} parent=35 // pred_check
                _
              $region49: #{cnn_forward.10} parent=35 // pred_check_branch
                %191 = sbr.rel (0) target = $region51
              $region50: #{cnn_forward.10} parent=35 // pred_region
                loop: start=0, step=1, limit=1
                $region52: #{cnn_forward.10} parent=50 // loop_pre_header
                  _
                $region53: #{cnn_forward.10} parent=50 // loop_header
                  %s193 = sphi 0, %s197
                  %p194 = scmp.ge.s32.totalorder %s193, 1
                  %s198 = sphi %s136, %s136
                  %s199 = sphi %s134, %s134
                $region54: #{cnn_forward.10} parent=50 // loop_header_branch
                  %196 = sbr.rel (%p194) target = $region58
                $region55: #{cnn_forward.10} parent=50 // loop_body
                  _
                $region56: #{cnn_forward.10} parent=50 // loop_footer
                  %s197 = sadd.s32 1, %s193
                $region57: #{cnn_forward.10} parent=50 // loop_footer_branch
                  %192 = sbr.rel target = $region53
                $region58: #{cnn_forward.10} parent=50 // loop_exit
                  _
                loop: start=0, step=1, limit=1
                $region59: #{cnn_forward.10} parent=50 // loop_pre_header
                  _
                $region60: #{cnn_forward.10} parent=50 // loop_header
                  %s202 = sphi 0, %s206
                  %p203 = scmp.ge.s32.totalorder %s202, 1
                  %s207 = sphi %s136, %s136
                  %s208 = sphi %s134, %s134
                $region61: #{cnn_forward.10} parent=50 // loop_header_branch
                  %205 = sbr.rel (%p203) target = $region65
                $region62: #{cnn_forward.10} parent=50 // loop_body
                  %v209 = vld [vmem:[%s207] sm:$0xf]
                  %210 = vst [vmem:[%s208] sm:$0xf] %v209
                  %v211 = vld [vmem:[%s207 + $0x8] sm:$0xf]
                  %212 = vst [vmem:[%s208 + $0x4] sm:$0xf] %v211
                  %v213 = vld [vmem:[%s207 + $0x10] sm:$0xf]
                  %214 = vst [vmem:[%s208 + $0x8] sm:$0xf] %v213
                  %v215 = vld [vmem:[%s207 + $0x18] sm:$0xf]
                  %216 = vst [vmem:[%s208 + $0xc] sm:$0xf] %v215
                  %v217 = vld [vmem:[%s207 + $0x20] sm:$0xf]
                  %218 = vst [vmem:[%s208 + $0x10] sm:$0xf] %v217
                  %v219 = vld [vmem:[%s207 + $0x28] sm:$0xf]
                  %220 = vst [vmem:[%s208 + $0x14] sm:$0xf] %v219
                  %v221 = vld [vmem:[%s207 + $0x30] sm:$0xf]
                  %222 = vst [vmem:[%s208 + $0x18] sm:$0xf] %v221
                  %v223 = vld [vmem:[%s207 + $0x38] sm:$0xf]
                  %224 = vst [vmem:[%s208 + $0x1c] sm:$0xf] %v223
                  %v225 = vld [vmem:[%s207 + $0x40] sm:$0xf]
                  %226 = vst [vmem:[%s208 + $0x20] sm:$0xf] %v225
                  %v227 = vld [vmem:[%s207 + $0x48] sm:$0xf]
                  %228 = vst [vmem:[%s208 + $0x24] sm:$0xf] %v227
                  %v229 = vld [vmem:[%s207 + $0x50] sm:$0xf]
                  %230 = vst [vmem:[%s208 + $0x28] sm:$0xf] %v229
                  %v231 = vld [vmem:[%s207 + $0x58] sm:$0xf]
                  %232 = vst [vmem:[%s208 + $0x2c] sm:$0xf] %v231
                  %v233 = vld [vmem:[%s207 + $0x60] sm:$0xf]
                  %234 = vst [vmem:[%s208 + $0x30] sm:$0xf] %v233
                  %v235 = vld [vmem:[%s207 + $0x68] sm:$0xf]
                  %236 = vst [vmem:[%s208 + $0x34] sm:$0xf] %v235
                  %v237 = vld [vmem:[%s207 + $0x70] sm:$0xf]
                  %238 = vst [vmem:[%s208 + $0x38] sm:$0xf] %v237
                  %v239 = vld [vmem:[%s207 + $0x78] sm:$0xf]
                  %240 = vst [vmem:[%s208 + $0x3c] sm:$0xf] %v239
                  %v241 = vld [vmem:[%s207 + $0x80] sm:$0xf]
                  %242 = vst [vmem:[%s208 + $0x40] sm:$0xf] %v241
                  %v243 = vld [vmem:[%s207 + $0x88] sm:$0xf]
                  %244 = vst [vmem:[%s208 + $0x44] sm:$0xf] %v243
                  %v245 = vld [vmem:[%s207 + $0x90] sm:$0xf]
                  %246 = vst [vmem:[%s208 + $0x48] sm:$0xf] %v245
                $region63: #{cnn_forward.10} parent=50 // loop_footer
                  %s206 = sadd.s32 1, %s202
                $region64: #{cnn_forward.10} parent=50 // loop_footer_branch
                  %201 = sbr.rel target = $region60
                $region65: #{cnn_forward.10} parent=50 // loop_exit
                  _
              $region51: #{cnn_forward.10} parent=35 // pred_fallthru
                _
            $region36: #{cnn_forward.10} parent=31 // pred_fallthru
              _
            // Predicated region
            $region37: #{cnn_forward.10} parent=31 // pred_check
              _
            $region38: #{cnn_forward.10} parent=31 // pred_check_branch
              %142 = sbr.rel (0) target = $region40
            $region39: #{cnn_forward.10} parent=31 // pred_region
              loop: start=0, step=1, limit=1
              $region41: #{cnn_forward.10} parent=39 // loop_pre_header
                _
              $region42: #{cnn_forward.10} parent=39 // loop_header
                %s145 = sphi 0, %s149
                %p146 = scmp.ge.s32.totalorder %s145, 1
                %s150 = sphi %s136, %s136
                %s151 = sphi %s134, %s134
              $region43: #{cnn_forward.10} parent=39 // loop_header_branch
                %148 = sbr.rel (%p146) target = $region47
              $region44: #{cnn_forward.10} parent=39 // loop_body
                %v152 = vld [vmem:[%s150] sm:$0xf]
                %153 = vst [vmem:[%s151] sm:$0xf] %v152
                %v154 = vld [vmem:[%s150 + $0x8] sm:$0xf]
                %155 = vst [vmem:[%s151 + $0x4] sm:$0xf] %v154
                %v156 = vld [vmem:[%s150 + $0x10] sm:$0xf]
                %157 = vst [vmem:[%s151 + $0x8] sm:$0xf] %v156
                %v158 = vld [vmem:[%s150 + $0x18] sm:$0xf]
                %159 = vst [vmem:[%s151 + $0xc] sm:$0xf] %v158
                %v160 = vld [vmem:[%s150 + $0x20] sm:$0xf]
                %161 = vst [vmem:[%s151 + $0x10] sm:$0xf] %v160
                %v162 = vld [vmem:[%s150 + $0x28] sm:$0xf]
                %163 = vst [vmem:[%s151 + $0x14] sm:$0xf] %v162
                %v164 = vld [vmem:[%s150 + $0x30] sm:$0xf]
                %165 = vst [vmem:[%s151 + $0x18] sm:$0xf] %v164
                %v166 = vld [vmem:[%s150 + $0x38] sm:$0xf]
                %167 = vst [vmem:[%s151 + $0x1c] sm:$0xf] %v166
                %v168 = vld [vmem:[%s150 + $0x40] sm:$0xf]
                %169 = vst [vmem:[%s151 + $0x20] sm:$0xf] %v168
                %v170 = vld [vmem:[%s150 + $0x48] sm:$0xf]
                %171 = vst [vmem:[%s151 + $0x24] sm:$0xf] %v170
                %v172 = vld [vmem:[%s150 + $0x50] sm:$0xf]
                %173 = vst [vmem:[%s151 + $0x28] sm:$0xf] %v172
                %v174 = vld [vmem:[%s150 + $0x58] sm:$0xf]
                %175 = vst [vmem:[%s151 + $0x2c] sm:$0xf] %v174
                %v176 = vld [vmem:[%s150 + $0x60] sm:$0xf]
                %177 = vst [vmem:[%s151 + $0x30] sm:$0xf] %v176
                %v178 = vld [vmem:[%s150 + $0x68] sm:$0xf]
                %179 = vst [vmem:[%s151 + $0x34] sm:$0xf] %v178
                %v180 = vld [vmem:[%s150 + $0x70] sm:$0xf]
                %181 = vst [vmem:[%s151 + $0x38] sm:$0xf] %v180
                %v182 = vld [vmem:[%s150 + $0x78] sm:$0xf]
                %183 = vst [vmem:[%s151 + $0x3c] sm:$0xf] %v182
                %v184 = vld [vmem:[%s150 + $0x80] sm:$0xf]
                %185 = vst [vmem:[%s151 + $0x40] sm:$0xf] %v184
                %v186 = vld [vmem:[%s150 + $0x88] sm:$0xf]
                %187 = vst [vmem:[%s151 + $0x44] sm:$0xf] %v186
                %v188 = vld [vmem:[%s150 + $0x90] sm:$0xf]
                %189 = vst [vmem:[%s151 + $0x48] sm:$0xf] %v188
              $region45: #{cnn_forward.10} parent=39 // loop_footer
                %s149 = sadd.s32 1, %s145
              $region46: #{cnn_forward.10} parent=39 // loop_footer_branch
                %144 = sbr.rel target = $region42
              $region47: #{cnn_forward.10} parent=39 // loop_exit
                _
            $region40: #{cnn_forward.10} parent=31 // pred_fallthru
              _
          $region32: #{cnn_forward.10} parent=27 // pred_fallthru
            _
          %247 = vnop
        $region28: #{cnn_forward.10} parent=23 // pred_fallthru
          _
      $region24: #{cnn_forward.10} parent=5 // pred_fallthru
        _
      %p248 = scmp.le.s32.totalorder 1, %s9
      %p249 = scmp.lt.s32.totalorder %s9, 3
      %p250 = pnand %p248, %p249
      %p251 = pneg %p250
      // Predicated region
      $region66: #{cnn_forward.10} parent=5 // pred_check
        _
      $region67: #{cnn_forward.10} parent=5 // pred_check_branch
        %253 = sbr.rel (%p250) target = $region69
      $region68: #{cnn_forward.10} parent=5 // pred_region
        %s254 = ssub.s32 %s9, 1
        %s255 = sand.u32 %s43, 1
        %s256 = sand.u32 %s43, 1
        %s257 = smul.addr %s256, 76
        %s258 = scalar_lea.vmem [#allocation2], %s257
        // Predicated region
        $region70: #{cnn_forward.10} parent=68 // pred_check
          %p259 = pneg %p56
        $region71: #{cnn_forward.10} parent=68 // pred_check_branch
          %261 = sbr.rel (%p259) target = $region73
        $region72: #{cnn_forward.10} parent=68 // pred_region
          _
        $region73: #{cnn_forward.10} parent=68 // pred_fallthru
          _
        %p262 = pneg %p30
        %p263 = pneg %p27
        %s264 = sand.u32 %s43, 1
        %s265 = sand.u32 %s43, 1
        %s266 = smul.addr %s265, 76
        %s267 = scalar_lea.vmem [#allocation2], %s266
        %p268 = pneg %p56
        %p269 = pneg %p53
        %p270 = pneg %p77
        %p271 = pneg %p74
        %p272 = pneg %p103
        %p273 = pneg %p100
        %s274 = sand.u32 %s90, 1
        %s275 = sand.u32 %s90, 1
        %s276 = smul.addr %s275, 8
        %s277 = scalar_lea.vmem [#allocation3], %s276
        %v279 = vld [vmem:[%s0] sm:$0xff]
        %v280 = vld [vmem:[%s0 + $0x8] sm:$0xff]
        %v281 = vld [vmem:[%s258] sm:$0xf]
        %v282 = vld [vmem:[%s258 + $0x4] sm:$0xf]
        %v283 = vld [vmem:[%s258 + $0x8] sm:$0xf]
        %v284 = vld [vmem:[%s258 + $0xc] sm:$0xf]
        %v285 = vld [vmem:[%s258 + $0x10] sm:$0xf]
        %v286 = vld [vmem:[%s258 + $0x14] sm:$0xf]
        %v287 = vld [vmem:[%s258 + $0x18] sm:$0xf]
        %v288 = vld [vmem:[%s258 + $0x1c] sm:$0xf]
        %v289 = vld [vmem:[%s258 + $0x20] sm:$0xf]
        %v290 = vld [vmem:[%s258 + $0x24] sm:$0xf]
        %v291 = vld [vmem:[%s258 + $0x28] sm:$0xf]
        %v292 = vld [vmem:[%s258 + $0x2c] sm:$0xf]
        %v293 = vld [vmem:[%s258 + $0x30] sm:$0xf]
        %v294 = vld [vmem:[%s258 + $0x34] sm:$0xf]
        %v295 = vld [vmem:[%s258 + $0x38] sm:$0xf]
        %v296 = vld [vmem:[%s258 + $0x3c] sm:$0xf]
        %v297 = vld [vmem:[%s258 + $0x40] sm:$0xf]
        %v298 = vld [vmem:[%s258 + $0x44] sm:$0xf]
        %v299 = vld [vmem:[%s258 + $0x48] sm:$0x7]
        %v300 = vld [vmem:[%s2] sm:$0xff]
        %v301 = vld [vmem:[%s2 + $0x8] sm:$0xff]
        %303 = vset.pattern.permute.xlu0 0
        %304 = vperm.xlu0 %303, %v300
        %v305 = vpop.permute.xlu0 %304
        %308 = vset.pattern.permute.xlu0 0
        %309 = vperm.xlu0 %308, %v301
        %v310 = vpop.permute.xlu0 %309
        %v314 = vunpack.c.l.b16 %v279
        %v315 = vunpack.c.h.b16 %v279
        %v316 = vunpack.c.l.b16 %v280
        %v317 = vunpack.c.h.b16 %v280
        %v318 = vpack.c.b16 %v316, %v314
        %v319 = vpack.c.b16 %v317, %v315
        %v340 = vunpack.c.l.b16 %v281
        %v341 = vunpack.c.l.b16 %v282
        %v342 = vunpack.c.l.b16 %v283
        %v343 = vunpack.c.l.b16 %v284
        %v344 = vunpack.c.l.b16 %v285
        %v345 = vunpack.c.l.b16 %v286
        %v346 = vunpack.c.l.b16 %v287
        %v347 = vunpack.c.l.b16 %v288
        %v348 = vunpack.c.l.b16 %v289
        %v349 = vunpack.c.l.b16 %v290
        %v350 = vunpack.c.l.b16 %v291
        %v351 = vunpack.c.l.b16 %v292
        %v352 = vunpack.c.l.b16 %v293
        %v353 = vunpack.c.l.b16 %v294
        %v354 = vunpack.c.l.b16 %v295
        %v355 = vunpack.c.l.b16 %v296
        %v356 = vunpack.c.l.b16 %v297
        %v357 = vunpack.c.l.b16 %v298
        %v358 = vunpack.c.l.b16 %v299
        %v359 = vpack.c.b16 %v341, %v340
        %v360 = vpack.c.b16 %v343, %v342
        %v361 = vpack.c.b16 %v345, %v344
        %v362 = vpack.c.b16 %v347, %v346
        %v363 = vpack.c.b16 %v349, %v348
        %v364 = vpack.c.b16 %v351, %v350
        %v365 = vpack.c.b16 %v353, %v352
        %v366 = vpack.c.b16 %v355, %v354
        %v367 = vpack.c.b16 %v357, %v356
        %v368 = vpack.c.b16 %v358, %v358
        %vm378 = vcmask 179200
        %v380 = vsel %vm378, %v319, 0
        %vm382 = vcmask 1042432
        %v384 = vsel %vm382, %v368, 0
        %386 = vmatprep.subr.bf16.mxu0 0
        %387 = vmatpush1.bf16.msra.mxu0 %v359
        %388 = vmatprep.subr.bf16.mxu0 0
        %389 = vmatpush1.bf16.msra.mxu0 %v360
        %390 = vmatprep.subr.bf16.mxu0 0
        %391 = vmatpush1.bf16.msra.mxu0 %v361
        %392 = vmatprep.subr.bf16.mxu0 0
        %393 = vmatpush1.bf16.msra.mxu0 %v362
        %394 = vmatprep.subr.bf16.mxu0 0
        %395 = vmatpush1.bf16.msra.mxu0 %v363
        %396 = vmatprep.subr.bf16.mxu0 0
        %397 = vmatpush1.bf16.msra.mxu0 %v364
        %398 = vmatprep.subr.bf16.mxu0 0
        %399 = vmatpush1.bf16.msra.mxu0 %v365
        %400 = vmatprep.subr.bf16.mxu0 0
        %401 = vmatpush1.bf16.msra.mxu0 %v366
        %402 = vmatprep.subr.bf16.mxu0 0
        %403 = vmatpush1.bf16.msra.mxu0 %v367
        %404 = vmatprep.subr.bf16.mxu0 0
        %405 = vmatpush1.bf16.msra.mxu0 %v384
        %406 = vmatprep.subr.bf16.mxu0 0
        %407 = vmatpush1.bf16.msra.mxu0 0
        %408 = vmatprep.subr.bf16.mxu0 0
        %409 = vmatpush1.bf16.msra.mxu0 0
        %410 = vmatprep.subr.bf16.mxu0 0
        %411 = vmatpush1.bf16.msra.mxu0 0
        %412 = vmatprep.subr.bf16.mxu0 0
        %413 = vmatpush1.bf16.msra.mxu0 0
        %414 = vmatprep.subr.bf16.mxu0 0
        %415 = vmatpush1.bf16.msra.mxu0 0
        %416 = vmatprep.subr.bf16.mxu0 0
        %417 = vmatpush1.bf16.msra.mxu0 0
        %418 = vmatprep.mubr.bf16.mxu0 %v380
        %419 = vmatmul.mubr.bf16.gmra.mrb[0].mxu0 %v318
        %v420 = vpop.f32.mrb[0].mxu0
        %v421 = vadd.f32 %v305, %v420
        %v422 = vpop.f32.mrb[0].mxu0
        %v423 = vpop.f32.mrb[0].mxu0
        %v424 = vadd.f32 %v310, %v423
        %v425 = vpop.f32.mrb[0].mxu0
        %426 = vdwg.mxu0
        %v427 = vpack.c.bf16 %v424, %v421
        %v429 = vunpack.c.l.b16 %v427
        %v430 = vunpack.c.h.b16 %v427
        %v431 = vpack.c.b16 %v429, %v429
        %v432 = vpack.c.b16 %v430, %v430
        %435 = vst [vmem:[%s277] sm:$0xf] %v431
        %436 = vst [vmem:[%s277 + $0x4] sm:$0xf] %v432
        %s437 = sand.u32 %s90, 1
        %s438 = sand.u32 %s90, 1
        %s439 = smul.addr %s438, 8
        %s440 = scalar_lea.vmem [#allocation3], %s439
        // Predicated region
        $region74: #{cnn_forward.10} parent=68 // pred_check
          %p441 = pneg %p100
        $region75: #{cnn_forward.10} parent=68 // pred_check_branch
          %443 = sbr.rel (%p441) target = $region77
        $region76: #{cnn_forward.10} parent=68 // pred_region
          %s444 = smul.addr %s14, 4
          %s445 = scalar_lea.vmem %s3, %s444
          // Predicated region
          $region78: #{cnn_forward.10} parent=76 // pred_check
            _
          $region79: #{cnn_forward.10} parent=76 // pred_check_branch
            %447 = sbr.rel (0) target = $region81
          $region80: #{cnn_forward.10} parent=76 // pred_region
            // Predicated region
            $region82: #{cnn_forward.10} parent=80 // pred_check
              _
            $region83: #{cnn_forward.10} parent=80 // pred_check_branch
              %449 = sbr.rel target = $region85
            $region84: #{cnn_forward.10} parent=80 // pred_region
              // Predicated region
              $region97: #{cnn_forward.10} parent=84 // pred_check
                _
              $region98: #{cnn_forward.10} parent=84 // pred_check_branch
                %466 = sbr.rel (0) target = $region100
              $region99: #{cnn_forward.10} parent=84 // pred_region
                loop: start=0, step=1, limit=1
                $region101: #{cnn_forward.10} parent=99 // loop_pre_header
                  _
                $region102: #{cnn_forward.10} parent=99 // loop_header
                  %s468 = sphi 0, %s472
                  %p469 = scmp.ge.s32.totalorder %s468, 1
                  %s473 = sphi %s440, %s440
                  %s474 = sphi %s445, %s445
                $region103: #{cnn_forward.10} parent=99 // loop_header_branch
                  %471 = sbr.rel (%p469) target = $region107
                $region104: #{cnn_forward.10} parent=99 // loop_body
                  _
                $region105: #{cnn_forward.10} parent=99 // loop_footer
                  %s472 = sadd.s32 1, %s468
                $region106: #{cnn_forward.10} parent=99 // loop_footer_branch
                  %467 = sbr.rel target = $region102
                $region107: #{cnn_forward.10} parent=99 // loop_exit
                  _
                loop: start=0, step=1, limit=1
                $region108: #{cnn_forward.10} parent=99 // loop_pre_header
                  _
                $region109: #{cnn_forward.10} parent=99 // loop_header
                  %s477 = sphi 0, %s481
                  %p478 = scmp.ge.s32.totalorder %s477, 1
                  %s482 = sphi %s440, %s440
                  %s483 = sphi %s445, %s445
                $region110: #{cnn_forward.10} parent=99 // loop_header_branch
                  %480 = sbr.rel (%p478) target = $region114
                $region111: #{cnn_forward.10} parent=99 // loop_body
                  %v484 = vld [vmem:[%s482] sm:$0xf]
                  %485 = vst [vmem:[%s483] sm:$0xf] %v484
                  %v486 = vld [vmem:[%s482 + $0x4] sm:$0xf]
                  %487 = vst [vmem:[%s483 + $0x8] sm:$0xf] %v486
                $region112: #{cnn_forward.10} parent=99 // loop_footer
                  %s481 = sadd.s32 1, %s477
                $region113: #{cnn_forward.10} parent=99 // loop_footer_branch
                  %476 = sbr.rel target = $region109
                $region114: #{cnn_forward.10} parent=99 // loop_exit
                  _
              $region100: #{cnn_forward.10} parent=84 // pred_fallthru
                _
            $region85: #{cnn_forward.10} parent=80 // pred_fallthru
              _
            // Predicated region
            $region86: #{cnn_forward.10} parent=80 // pred_check
              _
            $region87: #{cnn_forward.10} parent=80 // pred_check_branch
              %451 = sbr.rel (0) target = $region89
            $region88: #{cnn_forward.10} parent=80 // pred_region
              loop: start=0, step=1, limit=1
              $region90: #{cnn_forward.10} parent=88 // loop_pre_header
                _
              $region91: #{cnn_forward.10} parent=88 // loop_header
                %s454 = sphi 0, %s458
                %p455 = scmp.ge.s32.totalorder %s454, 1
                %s459 = sphi %s440, %s440
                %s460 = sphi %s445, %s445
              $region92: #{cnn_forward.10} parent=88 // loop_header_branch
                %457 = sbr.rel (%p455) target = $region96
              $region93: #{cnn_forward.10} parent=88 // loop_body
                %v461 = vld [vmem:[%s459] sm:$0xf]
                %462 = vst [vmem:[%s460] sm:$0xf] %v461
                %v463 = vld [vmem:[%s459 + $0x4] sm:$0xf]
                %464 = vst [vmem:[%s460 + $0x8] sm:$0xf] %v463
              $region94: #{cnn_forward.10} parent=88 // loop_footer
                %s458 = sadd.s32 1, %s454
              $region95: #{cnn_forward.10} parent=88 // loop_footer_branch
                %453 = sbr.rel target = $region91
              $region96: #{cnn_forward.10} parent=88 // loop_exit
                _
            $region89: #{cnn_forward.10} parent=80 // pred_fallthru
              _
          $region81: #{cnn_forward.10} parent=76 // pred_fallthru
            _
          %488 = vnop
        $region77: #{cnn_forward.10} parent=68 // pred_fallthru
          _
      $region69: #{cnn_forward.10} parent=5 // pred_fallthru
        _
      %p489 = scmp.le.s32.totalorder 2, %s9
      // Predicated region
      $region115: #{cnn_forward.10} parent=5 // pred_check
        %p490 = pneg %p489
      $region116: #{cnn_forward.10} parent=5 // pred_check_branch
        %492 = sbr.rel (%p490) target = $region118
      $region117: #{cnn_forward.10} parent=5 // pred_region
        %s493 = ssub.s32 %s9, 2
        // Predicated region
        $region119: #{cnn_forward.10} parent=117 // pred_check
          %p494 = pneg %p106
        $region120: #{cnn_forward.10} parent=117 // pred_check_branch
          %496 = sbr.rel (%p494) target = $region122
        $region121: #{cnn_forward.10} parent=117 // pred_region
          %s497 = sand.u32 %s91, 1
          %s498 = sand.u32 %s91, 1
          %s499 = smul.addr %s498, 8
          %s500 = scalar_lea.vmem [#allocation3], %s499
        $region122: #{cnn_forward.10} parent=117 // pred_fallthru
          _
      $region118: #{cnn_forward.10} parent=5 // pred_fallthru
        _
    $region6: #{cnn_forward.10} parent=1 // loop_footer
      %s13 = sadd.s32 1, %s9
    $region7: #{cnn_forward.10} parent=1 // loop_footer_branch
      %8 = sbr.rel target = $region3
    $region8: #{cnn_forward.10} parent=1 // loop_exit
      _

// kernel: cnn_forward.11
$region0: #{cnn_forward.11}
  #allocation0 [shape = 'u32[]', space=smem, size = 0x4, offset = 0x4, fixed_abs, tag = 'smem constant byte address 0x4 - core index']
  #allocation1 [shape = 'u32[144,128]{1,0:T(1,128)}', space=vmem, size = 0x12000, scoped, tag = 'internal scratch']
  %s0 = inlined_call_operand.vmem [shape: bf16[2,400], index: 0, kind: input, shape index: {}]
  %s1 = inlined_call_operand.vmem [shape: bf16[2,400], index: 1, kind: input, shape index: {}]
  %s2 = inlined_call_operand.vmem [shape: bf16[2,400], index: 2, kind: input, shape index: {}]
  %s3 = inlined_call_operand.vmem [shape: bf16[2,400], index: 3, kind: input, shape index: {}]
  %s4 = inlined_call_operand.vmem [shape: f32[400,120], index: 4, kind: input, shape index: {}]
  %s5 = inlined_call_operand.vmem [shape: f32[1,120], index: 5, kind: input, shape index: {}]
  %s6 = inlined_call_operand.vmem [shape: f32[120,60], index: 6, kind: input, shape index: {}]
  %s7 = inlined_call_operand.vmem [shape: f32[1,60], index: 7, kind: input, shape index: {}]
  %s8 = inlined_call_operand.vmem [shape: f32[1,60], index: 8, kind: input, shape index: {}]
  %s9 = inlined_call_operand.vmem [shape: f32[1,60], index: 9, kind: input, shape index: {}]
  %s10 = inlined_call_operand.vmem [shape: f32[60,2], index: 10, kind: input, shape index: {}]
  %s11 = inlined_call_operand.vmem [shape: f32[1,2], index: 11, kind: input, shape index: {}]
  %s12 = inlined_call_operand.hbm [shape: f32[2,2], index: 12, kind: output, shape index: {}]
  %s13 = sld [smem:[#allocation0]]
  $region58: #{cnn_forward.11} parent=0
    _
  %s15 = ssub.s32 1, %s13
  %s16 = scalar_select 0, %s15, %s13
  $region1: #{cnn_forward.11} parent=0
    #allocation2 [shape = 'u8[1024]{0}', space=vmem, size = 0x400, scoped, tag = 'output window, operand 0, single buffered']
    #allocation3 [shape = 's32[1]{0}', space=sflag, size = 0x4, scoped, tag = 'scoped memory for cnn_forward.11']
    %17 = vsyncpa [#allocation3], 0
    // Predicated region
    $region2: #{cnn_forward.11} parent=1 // pred_check
      _
    $region3: #{cnn_forward.11} parent=1 // pred_check_branch
      %19 = sbr.rel (0) target = $region5
    $region4: #{cnn_forward.11} parent=1 // pred_region
      _
    $region5: #{cnn_forward.11} parent=1 // pred_fallthru
      _
    // Predicated region
    $region6: #{cnn_forward.11} parent=1 // pred_check
      _
    $region7: #{cnn_forward.11} parent=1 // pred_check_branch
      %21 = sbr.rel (0) target = $region9
    $region8: #{cnn_forward.11} parent=1 // pred_region
      _
    $region9: #{cnn_forward.11} parent=1 // pred_fallthru
      _
    // Predicated region
    $region10: #{cnn_forward.11} parent=1 // pred_check
      _
    $region11: #{cnn_forward.11} parent=1 // pred_check_branch
      %23 = sbr.rel (0) target = $region13
    $region12: #{cnn_forward.11} parent=1 // pred_region
      _
    $region13: #{cnn_forward.11} parent=1 // pred_fallthru
      _
    // Predicated region
    $region14: #{cnn_forward.11} parent=1 // pred_check
      _
    $region15: #{cnn_forward.11} parent=1 // pred_check_branch
      %25 = sbr.rel (0) target = $region17
    $region16: #{cnn_forward.11} parent=1 // pred_region
      _
    $region17: #{cnn_forward.11} parent=1 // pred_fallthru
      _
    // Predicated region
    $region18: #{cnn_forward.11} parent=1 // pred_check
      _
    $region19: #{cnn_forward.11} parent=1 // pred_check_branch
      %27 = sbr.rel (0) target = $region21
    $region20: #{cnn_forward.11} parent=1 // pred_region
      _
    $region21: #{cnn_forward.11} parent=1 // pred_fallthru
      _
    // Predicated region
    $region22: #{cnn_forward.11} parent=1 // pred_check
      _
    $region23: #{cnn_forward.11} parent=1 // pred_check_branch
      %29 = sbr.rel (0) target = $region25
    $region24: #{cnn_forward.11} parent=1 // pred_region
      _
    $region25: #{cnn_forward.11} parent=1 // pred_fallthru
      _
    // Predicated region
    $region26: #{cnn_forward.11} parent=1 // pred_check
      _
    $region27: #{cnn_forward.11} parent=1 // pred_check_branch
      %31 = sbr.rel (0) target = $region29
    $region28: #{cnn_forward.11} parent=1 // pred_region
      _
    $region29: #{cnn_forward.11} parent=1 // pred_fallthru
      _
    // Predicated region
    $region30: #{cnn_forward.11} parent=1 // pred_check
      _
    $region31: #{cnn_forward.11} parent=1 // pred_check_branch
      %33 = sbr.rel (0) target = $region33
    $region32: #{cnn_forward.11} parent=1 // pred_region
      _
    $region33: #{cnn_forward.11} parent=1 // pred_fallthru
      _
    // Predicated region
    $region34: #{cnn_forward.11} parent=1 // pred_check
      _
    $region35: #{cnn_forward.11} parent=1 // pred_check_branch
      %35 = sbr.rel (0) target = $region37
    $region36: #{cnn_forward.11} parent=1 // pred_region
      _
    $region37: #{cnn_forward.11} parent=1 // pred_fallthru
      _
    // Predicated region
    $region38: #{cnn_forward.11} parent=1 // pred_check
      _
    $region39: #{cnn_forward.11} parent=1 // pred_check_branch
      %37 = sbr.rel (0) target = $region41
    $region40: #{cnn_forward.11} parent=1 // pred_region
      _
    $region41: #{cnn_forward.11} parent=1 // pred_fallthru
      _
    // Predicated region
    $region42: #{cnn_forward.11} parent=1 // pred_check
      _
    $region43: #{cnn_forward.11} parent=1 // pred_check_branch
      %39 = sbr.rel (0) target = $region45
    $region44: #{cnn_forward.11} parent=1 // pred_region
      _
    $region45: #{cnn_forward.11} parent=1 // pred_fallthru
      _
    // Predicated region
    $region46: #{cnn_forward.11} parent=1 // pred_check
      _
    $region47: #{cnn_forward.11} parent=1 // pred_check_branch
      %41 = sbr.rel (0) target = $region49
    $region48: #{cnn_forward.11} parent=1 // pred_region
      _
    $region49: #{cnn_forward.11} parent=1 // pred_fallthru
      _
    %v42 = vld [vmem:[%s0] sm:$0xf]
    %v43 = vunpack.c.l.bf16 %v42
    %v44 = vld [vmem:[%s1] sm:$0xf]
    %v45 = vunpack.c.l.bf16 %v44
    %v46 = vld [vmem:[%s2] sm:$0xf]
    %v47 = vunpack.c.l.bf16 %v46
    %v48 = vld [vmem:[%s3] sm:$0xf]
    %v49 = vunpack.c.l.bf16 %v48
    %v50 = vmax.f32 %v43, %v45
    %v51 = vmax.f32 %v47, %v49
    %v52 = vmax.f32 %v50, %v51
    %vm53 = vcmp.ge.f32.partialorder %v52, 0.0
    %v54 = vmul.f32 %v52, 0.01
    %v55 = vsel %vm53, %v52, %v54
    %v56 = vld [vmem:[%s4] sm:$0xff]
    %v57 = vld [vmem:[%s4 + $0x8] sm:$0xff]
    %v58 = vld [vmem:[%s4 + $0x10] sm:$0xff]
    %v59 = vld [vmem:[%s4 + $0x18] sm:$0xff]
    %v60 = vld [vmem:[%s4 + $0x20] sm:$0xff]
    %v61 = vld [vmem:[%s4 + $0x28] sm:$0xff]
    %v62 = vld [vmem:[%s4 + $0x30] sm:$0xff]
    %v63 = vld [vmem:[%s4 + $0x38] sm:$0xff]
    %v64 = vld [vmem:[%s4 + $0x40] sm:$0xff]
    %v65 = vld [vmem:[%s4 + $0x48] sm:$0xff]
    %v66 = vld [vmem:[%s4 + $0x50] sm:$0xff]
    %v67 = vld [vmem:[%s4 + $0x58] sm:$0xff]
    %v68 = vld [vmem:[%s4 + $0x60] sm:$0xff]
    %v69 = vld [vmem:[%s4 + $0x68] sm:$0xff]
    %v70 = vld [vmem:[%s4 + $0x70] sm:$0xff]
    %v71 = vld [vmem:[%s4 + $0x78] sm:$0xff]
    %v72 = vld [vmem:[%s4 + $0x80] sm:$0xff]
    %v73 = vld [vmem:[%s4 + $0x88] sm:$0xff]
    %v74 = vld [vmem:[%s4 + $0x90] sm:$0xff]
    %v75 = vld [vmem:[%s4 + $0x98] sm:$0xff]
    %v76 = vld [vmem:[%s4 + $0xa0] sm:$0xff]
    %v77 = vld [vmem:[%s4 + $0xa8] sm:$0xff]
    %v78 = vld [vmem:[%s4 + $0xb0] sm:$0xff]
    %v79 = vld [vmem:[%s4 + $0xb8] sm:$0xff]
    %v80 = vld [vmem:[%s4 + $0xc0] sm:$0xff]
    %v81 = vld [vmem:[%s4 + $0xc8] sm:$0xff]
    %v82 = vld [vmem:[%s4 + $0xd0] sm:$0xff]
    %v83 = vld [vmem:[%s4 + $0xd8] sm:$0xff]
    %v84 = vld [vmem:[%s4 + $0xe0] sm:$0xff]
    %v85 = vld [vmem:[%s4 + $0xe8] sm:$0xff]
    %v86 = vld [vmem:[%s4 + $0xf0] sm:$0xff]
    %v87 = vld [vmem:[%s4 + $0xf8] sm:$0xff]
    %v88 = vld [vmem:[%s4 + $0x100] sm:$0xff]
    %v89 = vld [vmem:[%s4 + $0x108] sm:$0xff]
    %v90 = vld [vmem:[%s4 + $0x110] sm:$0xff]
    %v91 = vld [vmem:[%s4 + $0x118] sm:$0xff]
    %v92 = vld [vmem:[%s4 + $0x120] sm:$0xff]
    %v93 = vld [vmem:[%s4 + $0x128] sm:$0xff]
    %v94 = vld [vmem:[%s4 + $0x130] sm:$0xff]
    %v95 = vld [vmem:[%s4 + $0x138] sm:$0xff]
    %v96 = vld [vmem:[%s4 + $0x140] sm:$0xff]
    %v97 = vld [vmem:[%s4 + $0x148] sm:$0xff]
    %v98 = vld [vmem:[%s4 + $0x150] sm:$0xff]
    %v99 = vld [vmem:[%s4 + $0x158] sm:$0xff]
    %v100 = vld [vmem:[%s4 + $0x160] sm:$0xff]
    %v101 = vld [vmem:[%s4 + $0x168] sm:$0xff]
    %v102 = vld [vmem:[%s4 + $0x170] sm:$0xff]
    %v103 = vld [vmem:[%s4 + $0x178] sm:$0xff]
    %v104 = vld [vmem:[%s4 + $0x180] sm:$0xff]
    %v105 = vld [vmem:[%s4 + $0x188] sm:$0xff]
    %v106 = vld [vmem:[%s5] sm:$0x1]
    %v108 = vlaneseq
    %v109 = vshrl.u32 %v108, 7
    %v110 = vsub.s32 0, %v109
    %v111 = vrot.slane %v106, %v110
    %v114 = vcombine.high %v55, %v55
    %v116 = vunpack.c.l.s4 1983009808
    %v117 = vunpack.c.0.s8 %v116
    %v118 = vlaneseq
    %v119 = vshrl.u32 %v118, 7
    %v120 = vsub.s32 %v117, %v119
    %v121 = vrot.slane %v55, %v120
    %v123 = vunpack.c.l.s4 1983009808
    %v124 = vunpack.c.0.s8 %v123
    %v125 = vlaneseq
    %v126 = vshrl.u32 %v125, 7
    %v127 = vsub.s32 %v124, %v126
    %v128 = vrot.slane %v114, %v127
    %v129 = vcombine.high %v121, %v121
    %v130 = vcombine.high %v128, %v128
    %vm134 = vcmask 130048
    %v135 = vsel %vm134, %v130, 0
    %137 = vmatprep.subr.mxu0 0.0
    %138 = vmatpush1.msra.mxu0 %v56
    %139 = vmatprep.subr.mxu0 0.0
    %140 = vmatpush1.msra.mxu0 %v57
    %141 = vmatprep.subr.mxu0 0.0
    %142 = vmatpush1.msra.mxu0 %v58
    %143 = vmatprep.subr.mxu0 0.0
    %144 = vmatpush1.msra.mxu0 %v59
    %145 = vmatprep.subr.mxu0 0.0
    %146 = vmatpush1.msra.mxu0 %v60
    %147 = vmatprep.subr.mxu0 0.0
    %148 = vmatpush1.msra.mxu0 %v61
    %149 = vmatprep.subr.mxu0 0.0
    %150 = vmatpush1.msra.mxu0 %v62
    %151 = vmatprep.subr.mxu0 0.0
    %152 = vmatpush1.msra.mxu0 %v63
    %153 = vmatprep.subr.mxu0 0.0
    %154 = vmatpush1.msra.mxu0 %v64
    %155 = vmatprep.subr.mxu0 0.0
    %156 = vmatpush1.msra.mxu0 %v65
    %157 = vmatprep.subr.mxu0 0.0
    %158 = vmatpush1.msra.mxu0 %v66
    %159 = vmatprep.subr.mxu0 0.0
    %160 = vmatpush1.msra.mxu0 %v67
    %161 = vmatprep.subr.mxu0 0.0
    %162 = vmatpush1.msra.mxu0 %v68
    %163 = vmatprep.subr.mxu0 0.0
    %164 = vmatpush1.msra.mxu0 %v69
    %165 = vmatprep.subr.mxu0 0.0
    %166 = vmatpush1.msra.mxu0 %v70
    %167 = vmatprep.subr.mxu0 0.0
    %168 = vmatpush1.msra.mxu0 %v71
    %169 = vmatprep.subr.mxu0 0.0
    %170 = vmatpush1.msra.mxu0 %v72
    %171 = vmatprep.subr.mxu0 0.0
    %172 = vmatpush1.msra.mxu0 %v73
    %173 = vmatprep.subr.mxu0 0.0
    %174 = vmatpush1.msra.mxu0 %v74
    %175 = vmatprep.subr.mxu0 0.0
    %176 = vmatpush1.msra.mxu0 %v75
    %177 = vmatprep.subr.mxu0 0.0
    %178 = vmatpush1.msra.mxu0 %v76
    %179 = vmatprep.subr.mxu0 0.0
    %180 = vmatpush1.msra.mxu0 %v77
    %181 = vmatprep.subr.mxu0 0.0
    %182 = vmatpush1.msra.mxu0 %v78
    %183 = vmatprep.subr.mxu0 0.0
    %184 = vmatpush1.msra.mxu0 %v79
    %185 = vmatprep.subr.mxu0 0.0
    %186 = vmatpush1.msra.mxu0 %v80
    %187 = vmatprep.subr.mxu0 0.0
    %188 = vmatpush1.msra.mxu0 %v81
    %189 = vmatprep.subr.mxu0 0.0
    %190 = vmatpush1.msra.mxu0 %v82
    %191 = vmatprep.subr.mxu0 0.0
    %192 = vmatpush1.msra.mxu0 %v83
    %193 = vmatprep.subr.mxu0 0.0
    %194 = vmatpush1.msra.mxu0 %v84
    %195 = vmatprep.subr.mxu0 0.0
    %196 = vmatpush1.msra.mxu0 %v85
    %197 = vmatprep.subr.mxu0 0.0
    %198 = vmatpush1.msra.mxu0 %v86
    %199 = vmatprep.subr.mxu0 0.0
    %200 = vmatpush1.msra.mxu0 %v87
    %201 = vmatprep.mubr.f32.mxu0 %v129
    %202 = vmatmul.mubr.f32.gmra.mrb[0].mxu0 %v121
    %v203 = vpop.f32.mrb[0].mxu0
    %v204 = vadd.f32 %v111, %v203
    %v205 = vpop.f32.mrb[0].mxu0
    %206 = vdwg.mxu0
    %207 = vmatprep.subr.mxu0 0.0
    %208 = vmatpush1.msra.mxu0 %v88
    %209 = vmatprep.subr.mxu0 0.0
    %210 = vmatpush1.msra.mxu0 %v89
    %211 = vmatprep.subr.mxu0 0.0
    %212 = vmatpush1.msra.mxu0 %v90
    %213 = vmatprep.subr.mxu0 0.0
    %214 = vmatpush1.msra.mxu0 %v91
    %215 = vmatprep.subr.mxu0 0.0
    %216 = vmatpush1.msra.mxu0 %v92
    %217 = vmatprep.subr.mxu0 0.0
    %218 = vmatpush1.msra.mxu0 %v93
    %219 = vmatprep.subr.mxu0 0.0
    %220 = vmatpush1.msra.mxu0 %v94
    %221 = vmatprep.subr.mxu0 0.0
    %222 = vmatpush1.msra.mxu0 %v95
    %223 = vmatprep.subr.mxu0 0.0
    %224 = vmatpush1.msra.mxu0 %v96
    %225 = vmatprep.subr.mxu0 0.0
    %226 = vmatpush1.msra.mxu0 %v97
    %227 = vmatprep.subr.mxu0 0.0
    %228 = vmatpush1.msra.mxu0 %v98
    %229 = vmatprep.subr.mxu0 0.0
    %230 = vmatpush1.msra.mxu0 %v99
    %231 = vmatprep.subr.mxu0 0.0
    %232 = vmatpush1.msra.mxu0 %v100
    %233 = vmatprep.subr.mxu0 0.0
    %234 = vmatpush1.msra.mxu0 %v101
    %235 = vmatprep.subr.mxu0 0.0
    %236 = vmatpush1.msra.mxu0 %v102
    %237 = vmatprep.subr.mxu0 0.0
    %238 = vmatpush1.msra.mxu0 %v103
    %239 = vmatprep.subr.mxu0 0.0
    %240 = vmatpush1.msra.mxu0 %v104
    %241 = vmatprep.subr.mxu0 0.0
    %242 = vmatpush1.msra.mxu0 %v105
    %243 = vmatprep.subr.mxu0 0.0
    %244 = vmatpush1.msra.mxu0 0.0
    %245 = vmatprep.subr.mxu0 0.0
    %246 = vmatpush1.msra.mxu0 0.0
    %247 = vmatprep.subr.mxu0 0.0
    %248 = vmatpush1.msra.mxu0 0.0
    %249 = vmatprep.subr.mxu0 0.0
    %250 = vmatpush1.msra.mxu0 0.0
    %251 = vmatprep.subr.mxu0 0.0
    %252 = vmatpush1.msra.mxu0 0.0
    %253 = vmatprep.subr.mxu0 0.0
    %254 = vmatpush1.msra.mxu0 0.0
    %255 = vmatprep.subr.mxu0 0.0
    %256 = vmatpush1.msra.mxu0 0.0
    %257 = vmatprep.subr.mxu0 0.0
    %258 = vmatpush1.msra.mxu0 0.0
    %259 = vmatprep.subr.mxu0 0.0
    %260 = vmatpush1.msra.mxu0 0.0
    %261 = vmatprep.subr.mxu0 0.0
    %262 = vmatpush1.msra.mxu0 0.0
    %263 = vmatprep.subr.mxu0 0.0
    %264 = vmatpush1.msra.mxu0 0.0
    %265 = vmatprep.subr.mxu0 0.0
    %266 = vmatpush1.msra.mxu0 0.0
    %267 = vmatprep.subr.mxu0 0.0
    %268 = vmatpush1.msra.mxu0 0.0
    %269 = vmatprep.subr.mxu0 0.0
    %270 = vmatpush1.msra.mxu0 0.0
    %271 = vmatprep.mubr.f32.mxu0 %v135
    %272 = vmatmul.mubr.f32.gmra.mrb[0].mxu0 %v128
    %v273 = vpop.f32.mrb[0].mxu0
    %v274 = vadd.f32 %v204, %v273
    %v275 = vpop.f32.mrb[0].mxu0
    %276 = vdwg.mxu0
    %vm277 = vcmp.ge.f32.partialorder %v274, 0.0
    %v278 = vmul.f32 %v274, 0.01
    %v279 = vsel %vm277, %v274, %v278
    %v280 = vld [vmem:[%s6] sm:$0xff]
    %v281 = vld [vmem:[%s6 + $0x8] sm:$0xff]
    %v282 = vld [vmem:[%s6 + $0x10] sm:$0xff]
    %v283 = vld [vmem:[%s6 + $0x18] sm:$0xff]
    %v284 = vld [vmem:[%s6 + $0x20] sm:$0xff]
    %v285 = vld [vmem:[%s6 + $0x28] sm:$0xff]
    %v286 = vld [vmem:[%s6 + $0x30] sm:$0xff]
    %v287 = vld [vmem:[%s6 + $0x38] sm:$0xff]
    %v288 = vld [vmem:[%s6 + $0x40] sm:$0xff]
    %v289 = vld [vmem:[%s6 + $0x48] sm:$0xff]
    %v290 = vld [vmem:[%s6 + $0x50] sm:$0xff]
    %v291 = vld [vmem:[%s6 + $0x58] sm:$0xff]
    %v292 = vld [vmem:[%s6 + $0x60] sm:$0xff]
    %v293 = vld [vmem:[%s6 + $0x68] sm:$0xff]
    %v294 = vld [vmem:[%s6 + $0x70] sm:$0xff]
    %v295 = vld [vmem:[%s7] sm:$0x1]
    %v297 = vlaneseq
    %v298 = vshrl.u32 %v297, 7
    %v299 = vsub.s32 0, %v298
    %v300 = vrot.slane %v295, %v299
    %vm302 = vcmask 982016
    %v304 = vsel %vm302, %v279, 0
    %306 = vmatprep.subr.mxu0 0.0
    %307 = vmatpush1.msra.mxu0 %v280
    %308 = vmatprep.subr.mxu0 0.0
    %309 = vmatpush1.msra.mxu0 %v281
    %310 = vmatprep.subr.mxu0 0.0
    %311 = vmatpush1.msra.mxu0 %v282
    %312 = vmatprep.subr.mxu0 0.0
    %313 = vmatpush1.msra.mxu0 %v283
    %314 = vmatprep.subr.mxu0 0.0
    %315 = vmatpush1.msra.mxu0 %v284
    %316 = vmatprep.subr.mxu0 0.0
    %317 = vmatpush1.msra.mxu0 %v285
    %318 = vmatprep.subr.mxu0 0.0
    %319 = vmatpush1.msra.mxu0 %v286
    %320 = vmatprep.subr.mxu0 0.0
    %321 = vmatpush1.msra.mxu0 %v287
    %322 = vmatprep.subr.mxu0 0.0
    %323 = vmatpush1.msra.mxu0 %v288
    %324 = vmatprep.subr.mxu0 0.0
    %325 = vmatpush1.msra.mxu0 %v289
    %326 = vmatprep.subr.mxu0 0.0
    %327 = vmatpush1.msra.mxu0 %v290
    %328 = vmatprep.subr.mxu0 0.0
    %329 = vmatpush1.msra.mxu0 %v291
    %330 = vmatprep.subr.mxu0 0.0
    %331 = vmatpush1.msra.mxu0 %v292
    %332 = vmatprep.subr.mxu0 0.0
    %333 = vmatpush1.msra.mxu0 %v293
    %334 = vmatprep.subr.mxu0 0.0
    %335 = vmatpush1.msra.mxu0 %v294
    %336 = vmatprep.subr.mxu0 0.0
    %337 = vmatpush1.msra.mxu0 0.0
    %338 = vmatprep.subr.mxu0 0.0
    %339 = vmatpush1.msra.mxu0 0.0
    %340 = vmatprep.subr.mxu0 0.0
    %341 = vmatpush1.msra.mxu0 0.0
    %342 = vmatprep.subr.mxu0 0.0
    %343 = vmatpush1.msra.mxu0 0.0
    %344 = vmatprep.subr.mxu0 0.0
    %345 = vmatpush1.msra.mxu0 0.0
    %346 = vmatprep.subr.mxu0 0.0
    %347 = vmatpush1.msra.mxu0 0.0
    %348 = vmatprep.subr.mxu0 0.0
    %349 = vmatpush1.msra.mxu0 0.0
    %350 = vmatprep.subr.mxu0 0.0
    %351 = vmatpush1.msra.mxu0 0.0
    %352 = vmatprep.subr.mxu0 0.0
    %353 = vmatpush1.msra.mxu0 0.0
    %354 = vmatprep.subr.mxu0 0.0
    %355 = vmatpush1.msra.mxu0 0.0
    %356 = vmatprep.subr.mxu0 0.0
    %357 = vmatpush1.msra.mxu0 0.0
    %358 = vmatprep.subr.mxu0 0.0
    %359 = vmatpush1.msra.mxu0 0.0
    %360 = vmatprep.subr.mxu0 0.0
    %361 = vmatpush1.msra.mxu0 0.0
    %362 = vmatprep.subr.mxu0 0.0
    %363 = vmatpush1.msra.mxu0 0.0
    %364 = vmatprep.subr.mxu0 0.0
    %365 = vmatpush1.msra.mxu0 0.0
    %366 = vmatprep.subr.mxu0 0.0
    %367 = vmatpush1.msra.mxu0 0.0
    %368 = vmatprep.subr.mxu0 0.0
    %369 = vmatpush1.msra.mxu0 0.0
    %370 = vmatprep.mubr.f32.mxu0 0.0
    %371 = vmatmul.mubr.f32.gmra.mrb[0].mxu0 %v304
    %v372 = vpop.f32.mrb[0].mxu0
    %v373 = vadd.f32 %v300, %v372
    %v374 = vpop.f32.mrb[0].mxu0
    %375 = vdwg.mxu0
    %vm376 = vcmp.ge.f32.partialorder %v373, 0.0
    %v377 = vmul.f32 %v373, 0.01
    %v378 = vsel %vm376, %v373, %v377
    %v379 = vld [vmem:[%s8] sm:$0x1]
    %v381 = vlaneseq
    %v382 = vshrl.u32 %v381, 7
    %v383 = vsub.s32 0, %v382
    %v384 = vrot.slane %v379, %v383
    %v386 = vmul.f32 %v378, %v384
    %v387 = vld [vmem:[%s9] sm:$0x1]
    %v389 = vlaneseq
    %v390 = vshrl.u32 %v389, 7
    %v391 = vsub.s32 0, %v390
    %v392 = vrot.slane %v387, %v391
    %v394 = vadd.f32 %v386, %v392
    %vm395 = vcmp.ge.f32.partialorder %v394, 0.0
    %v396 = vmul.f32 %v394, 0.01
    %v397 = vsel %vm395, %v394, %v396
    %v398 = vld [vmem:[%s10] sm:$0xff]
    %v399 = vld [vmem:[%s10 + $0x8] sm:$0xff]
    %v400 = vld [vmem:[%s10 + $0x10] sm:$0xff]
    %v401 = vld [vmem:[%s10 + $0x18] sm:$0xff]
    %v402 = vld [vmem:[%s10 + $0x20] sm:$0xff]
    %v403 = vld [vmem:[%s10 + $0x28] sm:$0xff]
    %v404 = vld [vmem:[%s10 + $0x30] sm:$0xff]
    %v405 = vld [vmem:[%s10 + $0x38] sm:$0xf]
    %v406 = vld [vmem:[%s11] sm:$0x1]
    %v408 = vlaneseq
    %v409 = vshrl.u32 %v408, 7
    %v410 = vsub.s32 0, %v409
    %v411 = vrot.slane %v406, %v410
    %vm413 = vcmask 490496
    %v415 = vsel %vm413, %v397, 0
    %vm417 = vcmask 1043456
    %v419 = vsel %vm417, %v405, 0
    %421 = vmatprep.subr.mxu0 0.0
    %422 = vmatpush1.msra.mxu0 %v398
    %423 = vmatprep.subr.mxu0 0.0
    %424 = vmatpush1.msra.mxu0 %v399
    %425 = vmatprep.subr.mxu0 0.0
    %426 = vmatpush1.msra.mxu0 %v400
    %427 = vmatprep.subr.mxu0 0.0
    %428 = vmatpush1.msra.mxu0 %v401
    %429 = vmatprep.subr.mxu0 0.0
    %430 = vmatpush1.msra.mxu0 %v402
    %431 = vmatprep.subr.mxu0 0.0
    %432 = vmatpush1.msra.mxu0 %v403
    %433 = vmatprep.subr.mxu0 0.0
    %434 = vmatpush1.msra.mxu0 %v404
    %435 = vmatprep.subr.mxu0 0.0
    %436 = vmatpush1.msra.mxu0 %v419
    %437 = vmatprep.subr.mxu0 0.0
    %438 = vmatpush1.msra.mxu0 0.0
    %439 = vmatprep.subr.mxu0 0.0
    %440 = vmatpush1.msra.mxu0 0.0
    %441 = vmatprep.subr.mxu0 0.0
    %442 = vmatpush1.msra.mxu0 0.0
    %443 = vmatprep.subr.mxu0 0.0
    %444 = vmatpush1.msra.mxu0 0.0
    %445 = vmatprep.subr.mxu0 0.0
    %446 = vmatpush1.msra.mxu0 0.0
    %447 = vmatprep.subr.mxu0 0.0
    %448 = vmatpush1.msra.mxu0 0.0
    %449 = vmatprep.subr.mxu0 0.0
    %450 = vmatpush1.msra.mxu0 0.0
    %451 = vmatprep.subr.mxu0 0.0
    %452 = vmatpush1.msra.mxu0 0.0
    %453 = vmatprep.subr.mxu0 0.0
    %454 = vmatpush1.msra.mxu0 0.0
    %455 = vmatprep.subr.mxu0 0.0
    %456 = vmatpush1.msra.mxu0 0.0
    %457 = vmatprep.subr.mxu0 0.0
    %458 = vmatpush1.msra.mxu0 0.0
    %459 = vmatprep.subr.mxu0 0.0
    %460 = vmatpush1.msra.mxu0 0.0
    %461 = vmatprep.subr.mxu0 0.0
    %462 = vmatpush1.msra.mxu0 0.0
    %463 = vmatprep.subr.mxu0 0.0
    %464 = vmatpush1.msra.mxu0 0.0
    %465 = vmatprep.subr.mxu0 0.0
    %466 = vmatpush1.msra.mxu0 0.0
    %467 = vmatprep.subr.mxu0 0.0
    %468 = vmatpush1.msra.mxu0 0.0
    %469 = vmatprep.subr.mxu0 0.0
    %470 = vmatpush1.msra.mxu0 0.0
    %471 = vmatprep.subr.mxu0 0.0
    %472 = vmatpush1.msra.mxu0 0.0
    %473 = vmatprep.subr.mxu0 0.0
    %474 = vmatpush1.msra.mxu0 0.0
    %475 = vmatprep.subr.mxu0 0.0
    %476 = vmatpush1.msra.mxu0 0.0
    %477 = vmatprep.subr.mxu0 0.0
    %478 = vmatpush1.msra.mxu0 0.0
    %479 = vmatprep.subr.mxu0 0.0
    %480 = vmatpush1.msra.mxu0 0.0
    %481 = vmatprep.subr.mxu0 0.0
    %482 = vmatpush1.msra.mxu0 0.0
    %483 = vmatprep.subr.mxu0 0.0
    %484 = vmatpush1.msra.mxu0 0.0
    %485 = vmatprep.mubr.f32.mxu0 0.0
    %486 = vmatmul.mubr.f32.gmra.mrb[0].mxu0 %v415
    %v487 = vpop.f32.mrb[0].mxu0
    %v488 = vadd.f32 %v411, %v487
    %v489 = vpop.f32.mrb[0].mxu0
    %490 = vdwg.mxu0
    %vm491 = vcmask 9216
    %492 = vst.msk [vmem:[#allocation2] sm:$0x3] %vm491, %v488
    // Predicated region
    $region50: #{cnn_forward.11} parent=1 // pred_check
      _
    $region51: #{cnn_forward.11} parent=1 // pred_check_branch
      %494 = sbr.rel (0) target = $region53
    $region52: #{cnn_forward.11} parent=1 // pred_region
      %s496 = ssub.s32 32, 32
      %497 = vsyncadd [#allocation3], %s496
      %s499 = sshll.u32 [#allocation2], 4
      %s500 = int_to_ptr.vmem [resolvable:$true] %s499
      %502 = dma.vmem_to_hbm [thread:$0]  %s500, 32, %s12, [#allocation3]
    $region53: #{cnn_forward.11} parent=1 // pred_fallthru
      _
    // Predicated region
    $region54: #{cnn_forward.11} parent=1 // pred_check
      _
    $region55: #{cnn_forward.11} parent=1 // pred_check_branch
      %504 = sbr.rel (0) target = $region57
    $region56: #{cnn_forward.11} parent=1 // pred_region
      %505 = dma.done [#allocation3], 32
    $region57: #{cnn_forward.11} parent=1 // pred_fallthru
      _
    %506 = vsyncpa [#allocation3], 1

</llo_original>
